<compile_context>
chip_gen: v5e
topology: v5e:2x2
jax: 0.10.0
libtpu: 0.0.40
codegen_flags: <defaults>
</compile_context>

<pallas_src>
import functools
import math

import jax
import jax.numpy as jnp
from jax import lax
from jax.experimental import pallas as pl
from jax.experimental.pallas import tpu as pltpu

LN_EPS = 1e-5                    # nn.LayerNorm default eps
WEIGHT_DTYPE = jnp.bfloat16      # storage dtype for all matmul weights


# ----------------------------------------------------------------------------
# In-kernel helpers (f32 elementwise math, bf16 MXU operands)
# ----------------------------------------------------------------------------
def _ln(x, g, b):
    mu = jnp.mean(x, axis=-1, keepdims=True)
    var = jnp.mean((x - mu) ** 2, axis=-1, keepdims=True)
    return (x - mu) * lax.rsqrt(var + LN_EPS) * g + b


def _sigmoid(x):
    # numerically stable sigmoid on the EUP (tanh)
    return 0.5 * (jnp.tanh(0.5 * x) + 1.0)


def _softmax(s):
    m = jnp.max(s, axis=-1, keepdims=True)
    p = jnp.exp(s - m)
    return p / jnp.sum(p, axis=-1, keepdims=True)


def _dot(a, b):
    return jnp.dot(a, b, preferred_element_type=jnp.float32)


def _dot_nt(a, b):
    # a @ b.T with the transpose folded into the MXU operand
    return lax.dot_general(a, b, (((1,), (1,)), ((), ())),
                           preferred_element_type=jnp.float32)


def _wdot(x, w):
    # weight matmul: cast the activation to the (bf16) weight dtype, f32 acc
    return jnp.dot(x.astype(w.dtype), w, preferred_element_type=jnp.float32)


# ----------------------------------------------------------------------------
# Fused kernel. grid = (num_layers,): one post-norm decoder layer per step,
# prologue at l==0, epilogue at l==num_layers-1, state carried in VMEM scratch.
# ----------------------------------------------------------------------------
def fused_block_kernel(*refs, down_num, up_num, num_layers, C, H,
                       samp_meta, in_offsets, epi_offsets):
    refs = list(refs)
    xin_sc = refs.pop()          # (B, H) scratch: mlp_input output (x_in)
    x_sc = refs.pop()            # (B, H) scratch: decoder carry
    o_ref = refs.pop()           # (B, C) output
    it = iter(refs)
    nxt = lambda: next(it)

    n_samplers = down_num + up_num

    down_refs = [nxt() for _ in range(down_num)]
    up_refs = [nxt() for _ in range(up_num)]
    mid_ref = nxt()
    ctx_ref = nxt()
    samp_w = [(nxt(), nxt(), nxt()) for _ in range(n_samplers)]
    samp_vec = nxt()                                   # (1, *) packed sampler vecs
    in_w1 = nxt()                                      # (n_parts, C, 2*fin_in) bf16
    in_w2 = nxt()                                      # (2*fin_in, fin_in) bf16
    in_w3 = nxt()                                      # (fin_in, H) bf16
    in_vec = nxt()                                     # (1, *) packed input-MLP vecs
    (wqkv_r, wo_sa_r, wq_ca_r, wkv_ca_r, wo_ca_r,
     fw1_r, fw2_r, lvec_r, fb1_r) = [nxt() for _ in range(9)]   # per-layer (squeezed L)
    aoa_w_r = nxt()                                    # (2H, 2H) bf16
    head_w_r = nxt()                                   # (H, C) bf16
    epi_vec = nxt()                                    # (1, *) packed epilogue vecs
    leftover = list(it)
    assert not leftover, f"unconsumed kernel refs: {len(leftover)}"

    l = pl.program_id(0)

    # ---- prologue (layer 0 only): sampler MLPs + TransAoA input MLP ---------
    @pl.when(l == 0)
    def _prologue():
        def sampler_mlp(x, ws, meta):
            w1, w2, w3 = ws
            og, obe, ob1, ob2, ob3, fin = meta
            g = samp_vec[:, og:og + fin]
            be = samp_vec[:, obe:obe + fin]
            b1 = samp_vec[:, ob1:ob1 + 2 * fin]
            b2 = samp_vec[:, ob2:ob2 + fin]
            b3 = samp_vec[:, ob3:ob3 + C]
            h = _ln(x, g, be)
            h = jnp.maximum(_wdot(h, w1[...]) + b1, 0.0)
            h = jnp.maximum(_wdot(h, w2[...]) + b2, 0.0)
            return _wdot(h, w3[...]) + b3

        down_out = [sampler_mlp(down_refs[i][...], samp_w[i], samp_meta[i])
                    for i in range(down_num)]
        up_out = [sampler_mlp(up_refs[i][...], samp_w[down_num + i],
                              samp_meta[down_num + i]) for i in range(up_num)]
        # torch.stack(up + [mid] + down, dim=1).view(-1, n*C) == feature concat
        parts = up_out + [mid_ref[...]] + down_out
        n_parts = len(parts)
        fin_in = n_parts * C

        og, obe, ob1, ob2, ob3 = in_offsets
        g_full = in_vec[:, og:og + fin_in]
        be_full = in_vec[:, obe:obe + fin_in]
        b1 = in_vec[:, ob1:ob1 + 2 * fin_in]
        b2 = in_vec[:, ob2:ob2 + fin_in]
        b3 = in_vec[:, ob3:ob3 + H]

        # LayerNorm over the virtual n_parts*C concat, computed block-wise
        mu = sum(jnp.sum(p, axis=-1, keepdims=True) for p in parts) * (1.0 / fin_in)
        var = sum(jnp.sum((p - mu) ** 2, axis=-1, keepdims=True)
                  for p in parts) * (1.0 / fin_in)
        inv = lax.rsqrt(var + LN_EPS)
        h = b1
        for pi, p in enumerate(parts):
            gp = g_full[:, pi * C:(pi + 1) * C]
            bep = be_full[:, pi * C:(pi + 1) * C]
            h = h + _wdot((p - mu) * inv * gp + bep, in_w1[pi])
        h = jnp.maximum(h, 0.0)
        h = jnp.maximum(_wdot(h, in_w2[...]) + b2, 0.0)
        x_in = _wdot(h, in_w3[...]) + b3               # (B, H)
        xin_sc[...] = x_in
        x_sc[...] = x_in

    # ---- one post-norm decoder layer (nhead=1, ReLU FFN) per grid step ------
    def row(i):                                        # (1, H) vector param
        return lvec_r[i:i + 1, :]

    x = x_sc[...]
    ctx = ctx_ref[...]

    # self-attention: packed QKV, 1/sqrt(H) pre-folded into the Q block
    qkv = _wdot(x, wqkv_r[...])
    q = qkv[:, :H] + row(0)
    k = qkv[:, H:2 * H] + row(1)
    v = qkv[:, 2 * H:] + row(2)
    sa = _wdot(_dot(_softmax(_dot_nt(q, k)), v), wo_sa_r[...]) + row(3)
    x = _ln(x + sa, row(4), row(5))

    # cross-attention against ctx: packed KV, scaled Q
    q = _wdot(x, wq_ca_r[...]) + row(6)
    kv = _wdot(ctx, wkv_ca_r[...])
    k = kv[:, :H] + row(7)
    v = kv[:, H:] + row(8)
    ca = _wdot(_dot(_softmax(_dot_nt(q, k)), v), wo_ca_r[...]) + row(9)
    x = _ln(x + ca, row(10), row(11))

    # feed-forward: Linear(H,4H) -> ReLU -> Linear(4H,H)
    ff = jnp.maximum(_wdot(x, fw1_r[...]) + fb1_r[...], 0.0)
    ff = _wdot(ff, fw2_r[...]) + row(12)
    x = _ln(x + ff, row(13), row(14))
    x_sc[...] = x

    # ---- epilogue (last layer): final LN -> AoA GLU -> residual LN -> head --
    @pl.when(l == num_layers - 1)
    def _epilogue():
        ofg, ofb, oab, org, orb, ohb = epi_offsets
        final_g = epi_vec[:, ofg:ofg + H]
        final_b = epi_vec[:, ofb:ofb + H]
        aoa_b = epi_vec[:, oab:oab + 2 * H]
        res_g = epi_vec[:, org:org + H]
        res_b = epi_vec[:, orb:orb + H]
        head_b = epi_vec[:, ohb:ohb + C]

        x_in = xin_sc[...]
        encoded = _ln(x_sc[...], final_g, final_b)
        # AoA Linear(2H,2H) over [encoded, x_in] split into two (H,2H) halves
        z = _wdot(encoded, aoa_w_r[:H]) + _wdot(x_in, aoa_w_r[H:]) + aoa_b
        aoa = z[:, :H] * _sigmoid(z[:, H:])            # GLU
        res = x_in + _ln(aoa, res_g, res_b)            # ResidualConnection
        o_ref[...] = _wdot(res, head_w_r[...]) + head_b


# ----------------------------------------------------------------------------
# Parameter init (deterministic, PyTorch-style uniform fan-in init).
# ----------------------------------------------------------------------------
def init_linear(key, fan_in, fan_out):
    k1, k2 = jax.random.split(key)
    bound = 1.0 / math.sqrt(fan_in)
    w = jax.random.uniform(k1, (fan_in, fan_out), jnp.float32, -bound, bound)
    b = jax.random.uniform(k2, (1, fan_out), jnp.float32, -bound, bound)
    return w, b


def init_mlp(key, fin, fout):
    k1, k2, k3 = jax.random.split(key, 3)
    w1, b1 = init_linear(k1, fin, 2 * fin)
    w2, b2 = init_linear(k2, 2 * fin, fin)
    w3, b3 = init_linear(k3, fin, fout)
    return dict(g=jnp.ones((1, fin), jnp.float32), be=jnp.zeros((1, fin), jnp.float32),
                w1=w1, b1=b1, w2=w2, b2=b2, w3=w3, b3=b3)


def init_mha(key, h):
    ks = jax.random.split(key, 4)
    wq, bq = init_linear(ks[0], h, h)
    wk, bk = init_linear(ks[1], h, h)
    wv, bv = init_linear(ks[2], h, h)
    wo, bo = init_linear(ks[3], h, h)
    return dict(wq=wq, bq=bq, wk=wk, bk=bk, wv=wv, bv=bv, wo=wo, bo=bo)


def init_decoder_layer(key, h):
    ks = jax.random.split(key, 4)
    w1, b1 = init_linear(ks[2], h, 4 * h)
    w2, b2 = init_linear(ks[3], 4 * h, h)
    ones = lambda: jnp.ones((1, h), jnp.float32)
    zeros = lambda: jnp.zeros((1, h), jnp.float32)
    return dict(sa=init_mha(ks[0], h), ca=init_mha(ks[1], h),
                w1=w1, b1=b1, w2=w2, b2=b2,
                n1g=ones(), n1b=zeros(), n2g=ones(), n2b=zeros(),
                n3g=ones(), n3b=zeros())


def init_trans_aoa(key, input_size, output_size, num_layers, h):
    ks = jax.random.split(key, 3 + num_layers)
    aoa_w, aoa_b = init_linear(ks[1], 2 * h, 2 * h)
    head_w, head_b = init_linear(ks[2], h, output_size)
    layers = [init_decoder_layer(ks[3 + i], h) for i in range(num_layers)]
    return dict(
        mlp_input=init_mlp(ks[0], input_size, h),
        layers=layers,
        final_g=jnp.ones((1, h), jnp.float32), final_b=jnp.zeros((1, h), jnp.float32),
        aoa_w=aoa_w, aoa_b=aoa_b,
        res_g=jnp.ones((1, h), jnp.float32), res_b=jnp.zeros((1, h), jnp.float32),
        head_w=head_w, head_b=head_b,
    )


def init_block(key, down_num, up_num, filters, reversed_filters, num_layers, h):
    c = reversed_filters[down_num]
    ks = jax.random.split(key, down_num + up_num + 1)
    down = [init_mlp(ks[i], reversed_filters[i], c) for i in range(down_num)]
    up = [init_mlp(ks[down_num + i], filters[i], c) for i in range(up_num)]
    output = init_trans_aoa(ks[-1], c * 4, c, num_layers, h)
    return dict(down=down, up=up, output=output, hidden=h)


# ----------------------------------------------------------------------------
# One-time parameter packing (hoisted out of the hot path per perf review).
# ----------------------------------------------------------------------------
def _pack_vec(fields, align=128):
    """Concat (1, w_i) f32 rows into one lane-aligned (1, total) row."""
    cols, offs, cur = [], [], 0
    for a in fields:
        a = a.reshape(1, -1).astype(jnp.float32)
        w = a.shape[1]
        pad = (-w) % align
        cols.append(jnp.pad(a, ((0, 0), (0, pad))))
        offs.append(cur)
        cur += w + pad
    return jnp.concatenate(cols, axis=1), tuple(int(o) for o in offs)


def _vmem_limit_bytes():
    try:
        cap = int(pltpu.get_tpu_info().vmem_capacity_bytes)
    except Exception:
        cap = 64 * 1024 * 1024
    return int(min(cap // 2, 32 * 1024 * 1024))


def prepare_params(params):
    """Pack/fold/cast all weights ONCE; reuse the result across forward calls."""
    down_num = len(params["down"])
    up_num = len(params["up"])
    outp = params["output"]
    mp = outp["mlp_input"]
    num_layers = len(outp["layers"])
    H = params["hidden"]
    C = outp["head_w"].shape[1]
    n_parts = up_num + 1 + down_num
    scale = 1.0 / math.sqrt(H)
    wd = WEIGHT_DTYPE

    # -- sampler MLPs: bf16 weights + one packed vector row --------------------
    samplers = params["down"] + params["up"]
    pre_layer = []
    samp_fields, sampler_fins = [], []
    for p in samplers:
        pre_layer += [p["w1"].astype(wd), p["w2"].astype(wd), p["w3"].astype(wd)]
        samp_fields += [p["g"], p["be"], p["b1"], p["b2"], p["b3"]]
        sampler_fins.append(int(p["g"].shape[1]))
    samp_vec, samp_offs = _pack_vec(samp_fields)
    samp_meta = tuple(
        (samp_offs[5 * i], samp_offs[5 * i + 1], samp_offs[5 * i + 2],
         samp_offs[5 * i + 3], samp_offs[5 * i + 4], sampler_fins[i])
        for i in range(len(samplers)))
    pre_layer.append(samp_vec)

    # -- TransAoA input MLP: first Linear split per stacked part ---------------
    in_w1 = jnp.stack(jnp.split(mp["w1"], n_parts, axis=0), axis=0).astype(wd)
    in_vec, in_offs = _pack_vec([mp["g"], mp["be"], mp["b1"], mp["b2"], mp["b3"]])
    pre_layer += [in_w1, mp["w2"].astype(wd), mp["w3"].astype(wd), in_vec]

    # -- decoder layers stacked along a leading L axis (streamed by the grid) --
    def stack(fn, dtype=None):
        a = jnp.stack([fn(lp) for lp in outp["layers"]], axis=0)
        return a.astype(dtype) if dtype is not None else a

    per_layer = [
        stack(lambda lp: jnp.concatenate(
            [lp["sa"]["wq"] * scale, lp["sa"]["wk"], lp["sa"]["wv"]], axis=1), wd),
        stack(lambda lp: lp["sa"]["wo"], wd),
        stack(lambda lp: lp["ca"]["wq"] * scale, wd),
        stack(lambda lp: jnp.concatenate([lp["ca"]["wk"], lp["ca"]["wv"]], axis=1), wd),
        stack(lambda lp: lp["ca"]["wo"], wd),
        stack(lambda lp: lp["w1"], wd),
        stack(lambda lp: lp["w2"], wd),
        stack(lambda lp: jnp.concatenate([            # (15, H) vector rows, f32
            lp["sa"]["bq"] * scale, lp["sa"]["bk"], lp["sa"]["bv"], lp["sa"]["bo"],
            lp["n1g"], lp["n1b"],
            lp["ca"]["bq"] * scale, lp["ca"]["bk"], lp["ca"]["bv"], lp["ca"]["bo"],
            lp["n2g"], lp["n2b"],
            lp["b2"], lp["n3g"], lp["n3b"]], axis=0)),
        stack(lambda lp: lp["b1"]),                   # (1, 4H) f32
    ]

    # -- epilogue ---------------------------------------------------------------
    epi_vec, epi_offs = _pack_vec([outp["final_g"], outp["final_b"], outp["aoa_b"],
                                   outp["res_g"], outp["res_b"], outp["head_b"]])
    post_layer = [outp["aoa_w"].astype(wd), outp["head_w"].astype(wd), epi_vec]

    static = dict(down_num=down_num, up_num=up_num, num_layers=num_layers,
                  C=int(C), H=int(H), n_parts=n_parts,
                  samp_meta=samp_meta, in_offsets=in_offs, epi_offsets=epi_offs,
                  sampler_fins=tuple(sampler_fins),
                  vmem_limit=_vmem_limit_bytes())
    return dict(pre_layer=pre_layer, per_layer=per_layer, post_layer=post_layer,
                static=static)


# ----------------------------------------------------------------------------
# Forward wrapper: no array ops here, just spec assembly + the pallas_call.
# ----------------------------------------------------------------------------
def _const_spec(a):
    zeros = (0,) * a.ndim
    return pl.BlockSpec(a.shape, lambda l, z=zeros: z)


def _layer_spec(a):
    zeros = (0,) * (a.ndim - 1)
    return pl.BlockSpec((None,) + a.shape[1:], lambda l, z=zeros: (l,) + z)


def block_forward(down_samples, up_samples, mid_samples, ctx,
                  pre_layer, per_layer, post_layer, *, static):
    B = mid_samples.shape[0]
    S = ctx.shape[0]
    C, H, L = static["C"], static["H"], static["num_layers"]

    args = (list(down_samples) + list(up_samples) + [mid_samples, ctx]
            + list(pre_layer) + list(per_layer) + list(post_layer))
    n_const_head = len(down_samples) + len(up_samples) + 2 + len(pre_layer)
    in_specs = ([_const_spec(a) for a in args[:n_const_head]]
                + [_layer_spec(a) for a in per_layer]
                + [_const_spec(a) for a in post_layer])

    # advisory cost estimate (lets XLA overlap the weight fetch with neighbors)
    fin_in = static["n_parts"] * C
    flops = 0
    for fin in static["sampler_fins"]:
        flops += 2 * B * (fin * 2 * fin + 2 * fin * fin + fin * C)
    flops += 2 * B * (fin_in * 2 * fin_in + 2 * fin_in * fin_in + fin_in * H)
    per_layer_flops = (2 * B * H * 3 * H + 4 * B * B * H + 2 * B * H * H          # self-attn
                       + 2 * B * H * H + 4 * S * H * H + 4 * B * S * H + 2 * B * H * H  # cross
                       + 16 * B * H * H)                                            # FFN
    flops += L * per_layer_flops + 8 * B * H * H + 2 * B * H * C
    transcendentals = L * (B * B + B * S) + B * H
    bytes_accessed = sum(int(a.size) * a.dtype.itemsize for a in args) + B * C * 4

    kern = functools.partial(
        fused_block_kernel,
        down_num=static["down_num"], up_num=static["up_num"],
        num_layers=L, C=C, H=H,
        samp_meta=static["samp_meta"], in_offsets=static["in_offsets"],
        epi_offsets=static["epi_offsets"])

    return pl.pallas_call(
        kern,
        out_shape=jax.ShapeDtypeStruct((B, C), jnp.float32),
        grid=(L,),
        in_specs=in_specs,
        out_specs=pl.BlockSpec((B, C), lambda l: (0, 0)),
        scratch_shapes=[pltpu.VMEM((B, H), jnp.float32),   # decoder carry x
                        pltpu.VMEM((B, H), jnp.float32)],  # saved x_in
        compiler_params=pltpu.CompilerParams(
            dimension_semantics=("arbitrary",),
            vmem_limit_bytes=static["vmem_limit"]),
        cost_estimate=pl.CostEstimate(flops=int(flops),
                                      transcendentals=int(transcendentals),
                                      bytes_accessed=int(bytes_accessed)),
    )(*args)


# ----------------------------------------------------------------------------
if __name__ == "__main__":
    key = jax.random.PRNGKey(0)

    # Config matching input_size = reversed_filters[down_num] * 4:
    # up_num + 1 (mid) + down_num = 4 stacked features.
    down_num, up_num, mid_num = 2, 1, 1
    reversed_filters = [16, 32, 8]
    filters = [24]
    num_layers = 2        # exercises the layer-streaming grid
    hidden = 256          # TransAoA default hidden_size (block never overrides it)
    C = reversed_filters[down_num]
    B, S = 8, 8           # batch rows (= transformer seq len) / memory length

    kp, kd0, kd1, ku0, km, kc = jax.random.split(key, 6)
    params = init_block(kp, down_num, up_num, filters, reversed_filters,
                        num_layers, hidden)
    prep = prepare_params(params)      # one-time packing, reused across calls

    down_samples = [
        jax.random.normal(kd0, (B, reversed_filters[0]), jnp.float32),
        jax.random.normal(kd1, (B, reversed_filters[1]), jnp.float32),
    ]
    up_samples = [jax.random.normal(ku0, (B, filters[0]), jnp.float32)]
    mid_samples = jax.random.normal(km, (B, C), jnp.float32)
    ctx = jax.random.normal(kc, (S, hidden), jnp.float32)

    fwd = jax.jit(functools.partial(block_forward, static=prep["static"]))
    out = fwd(down_samples, up_samples, mid_samples, ctx,
              prep["pre_layer"], prep["per_layer"], prep["post_layer"])
    out = jax.block_until_ready(out)
    assert out.shape == (B, C) and out.dtype == jnp.float32
    assert bool(jnp.all(jnp.isfinite(out)))
    print("KERNEL_OK")
</pallas_src>

<mosaic_0001>
module attributes {stable_mosaic.version = 11 : i64} {
  func.func @fused_block_kernel(%arg0: i32, %arg1: memref<8x16xf32, #tpu.memory_space<vmem>>, %arg2: memref<8x32xf32, #tpu.memory_space<vmem>>, %arg3: memref<8x24xf32, #tpu.memory_space<vmem>>, %arg4: memref<8x8xf32, #tpu.memory_space<vmem>>, %arg5: memref<8x256xf32, #tpu.memory_space<vmem>>, %arg6: memref<16x32xbf16, #tpu.memory_space<vmem>>, %arg7: memref<32x16xbf16, #tpu.memory_space<vmem>>, %arg8: memref<16x8xbf16, #tpu.memory_space<vmem>>, %arg9: memref<32x64xbf16, #tpu.memory_space<vmem>>, %arg10: memref<64x32xbf16, #tpu.memory_space<vmem>>, %arg11: memref<32x8xbf16, #tpu.memory_space<vmem>>, %arg12: memref<24x48xbf16, #tpu.memory_space<vmem>>, %arg13: memref<48x24xbf16, #tpu.memory_space<vmem>>, %arg14: memref<24x8xbf16, #tpu.memory_space<vmem>>, %arg15: memref<1x1920xf32, #tpu.memory_space<vmem>>, %arg16: memref<4x8x64xbf16, #tpu.memory_space<vmem>>, %arg17: memref<64x32xbf16, #tpu.memory_space<vmem>>, %arg18: memref<32x256xbf16, #tpu.memory_space<vmem>>, %arg19: memref<1x768xf32, #tpu.memory_space<vmem>>, %arg20: memref<1x256x768xbf16, #tpu.memory_space<vmem>>, %arg21: memref<1x256x256xbf16, #tpu.memory_space<vmem>>, %arg22: memref<1x256x256xbf16, #tpu.memory_space<vmem>>, %arg23: memref<1x256x512xbf16, #tpu.memory_space<vmem>>, %arg24: memref<1x256x256xbf16, #tpu.memory_space<vmem>>, %arg25: memref<1x256x1024xbf16, #tpu.memory_space<vmem>>, %arg26: memref<1x1024x256xbf16, #tpu.memory_space<vmem>>, %arg27: memref<1x15x256xf32, #tpu.memory_space<vmem>>, %arg28: memref<1x1x1024xf32, #tpu.memory_space<vmem>>, %arg29: memref<512x512xbf16, #tpu.memory_space<vmem>>, %arg30: memref<256x8xbf16, #tpu.memory_space<vmem>>, %arg31: memref<1x1664xf32, #tpu.memory_space<vmem>>, %arg32: memref<8x8xf32, #tpu.memory_space<vmem>>, %arg33: memref<8x256xf32, #tpu.memory_space<vmem>>, %arg34: memref<8x256xf32, #tpu.memory_space<vmem>>) attributes {dimension_semantics = [#tpu.dimension_semantics<arbitrary>], iteration_bounds = array<i64: 2>, scalar_prefetch = 0 : i64, scratch_operands = 2 : i64, tpu.core_type = #tpu.core_type<tc>, window_params = [{pipeline_mode = #tpu.pipeline_mode<synchronous>, transform_indices = @transform_0, window_bounds = array<i64: 8, 16>}, {pipeline_mode = #tpu.pipeline_mode<synchronous>, transform_indices = @transform_1, window_bounds = array<i64: 8, 32>}, {pipeline_mode = #tpu.pipeline_mode<synchronous>, transform_indices = @transform_2, window_bounds = array<i64: 8, 24>}, {pipeline_mode = #tpu.pipeline_mode<synchronous>, transform_indices = @transform_3, window_bounds = array<i64: 8, 8>}, {pipeline_mode = #tpu.pipeline_mode<synchronous>, transform_indices = @transform_4, window_bounds = array<i64: 8, 256>}, {pipeline_mode = #tpu.pipeline_mode<synchronous>, transform_indices = @transform_5, window_bounds = array<i64: 16, 32>}, {pipeline_mode = #tpu.pipeline_mode<synchronous>, transform_indices = @transform_6, window_bounds = array<i64: 32, 16>}, {pipeline_mode = #tpu.pipeline_mode<synchronous>, transform_indices = @transform_7, window_bounds = array<i64: 16, 8>}, {pipeline_mode = #tpu.pipeline_mode<synchronous>, transform_indices = @transform_8, window_bounds = array<i64: 32, 64>}, {pipeline_mode = #tpu.pipeline_mode<synchronous>, transform_indices = @transform_9, window_bounds = array<i64: 64, 32>}, {pipeline_mode = #tpu.pipeline_mode<synchronous>, transform_indices = @transform_10, window_bounds = array<i64: 32, 8>}, {pipeline_mode = #tpu.pipeline_mode<synchronous>, transform_indices = @transform_11, window_bounds = array<i64: 24, 48>}, {pipeline_mode = #tpu.pipeline_mode<synchronous>, transform_indices = @transform_12, window_bounds = array<i64: 48, 24>}, {pipeline_mode = #tpu.pipeline_mode<synchronous>, transform_indices = @transform_13, window_bounds = array<i64: 24, 8>}, {pipeline_mode = #tpu.pipeline_mode<synchronous>, transform_indices = @transform_14, window_bounds = array<i64: 1, 1920>}, {pipeline_mode = #tpu.pipeline_mode<synchronous>, transform_indices = @transform_15, window_bounds = array<i64: 4, 8, 64>}, {pipeline_mode = #tpu.pipeline_mode<synchronous>, transform_indices = @transform_16, window_bounds = array<i64: 64, 32>}, {pipeline_mode = #tpu.pipeline_mode<synchronous>, transform_indices = @transform_17, window_bounds = array<i64: 32, 256>}, {pipeline_mode = #tpu.pipeline_mode<synchronous>, transform_indices = @transform_18, window_bounds = array<i64: 1, 768>}, {transform_indices = @transform_19, window_bounds = array<i64: 1, 256, 768>}, {transform_indices = @transform_20, window_bounds = array<i64: 1, 256, 256>}, {transform_indices = @transform_21, window_bounds = array<i64: 1, 256, 256>}, {transform_indices = @transform_22, window_bounds = array<i64: 1, 256, 512>}, {transform_indices = @transform_23, window_bounds = array<i64: 1, 256, 256>}, {transform_indices = @transform_24, window_bounds = array<i64: 1, 256, 1024>}, {transform_indices = @transform_25, window_bounds = array<i64: 1, 1024, 256>}, {transform_indices = @transform_26, window_bounds = array<i64: 1, 15, 256>}, {transform_indices = @transform_27, window_bounds = array<i64: 1, 1, 1024>}, {pipeline_mode = #tpu.pipeline_mode<synchronous>, transform_indices = @transform_28, window_bounds = array<i64: 512, 512>}, {pipeline_mode = #tpu.pipeline_mode<synchronous>, transform_indices = @transform_29, window_bounds = array<i64: 256, 8>}, {pipeline_mode = #tpu.pipeline_mode<synchronous>, transform_indices = @transform_30, window_bounds = array<i64: 1, 1664>}, {pipeline_mode = #tpu.pipeline_mode<synchronous>, transform_indices = @transform_31, window_bounds = array<i64: 8, 8>}]} {
    %c0_i32 = arith.constant 0 : i32
    %0 = arith.cmpi eq, %arg0, %c0_i32 : i32
    %1 = arith.extui %0 : i1 to i32
    %c0_i32_0 = arith.constant 0 : i32
    %2 = arith.cmpi ne, %1, %c0_i32_0 : i32
    scf.if %2 {
      %c0_92 = arith.constant 0 : index
      %c0_93 = arith.constant 0 : index
      %187 = vector.load %arg1[%c0_92, %c0_93] : memref<8x16xf32, #tpu.memory_space<vmem>>, vector<8x16xf32>
      %c0_94 = arith.constant 0 : index
      %c0_95 = arith.constant 0 : index
      %188 = vector.load %arg15[%c0_94, %c0_95] : memref<1x1920xf32, #tpu.memory_space<vmem>>, vector<1x16xf32>
      %c0_96 = arith.constant 0 : index
      %c128 = arith.constant 128 : index
      %189 = vector.load %arg15[%c0_96, %c128] : memref<1x1920xf32, #tpu.memory_space<vmem>>, vector<1x16xf32>
      %c0_97 = arith.constant 0 : index
      %c256 = arith.constant 256 : index
      %190 = vector.load %arg15[%c0_97, %c256] : memref<1x1920xf32, #tpu.memory_space<vmem>>, vector<1x32xf32>
      %c0_98 = arith.constant 0 : index
      %c384 = arith.constant 384 : index
      %191 = vector.load %arg15[%c0_98, %c384] : memref<1x1920xf32, #tpu.memory_space<vmem>>, vector<1x16xf32>
      %c0_99 = arith.constant 0 : index
      %c512 = arith.constant 512 : index
      %192 = vector.load %arg15[%c0_99, %c512] : memref<1x1920xf32, #tpu.memory_space<vmem>>, vector<1x8xf32>
      %cst_100 = arith.constant dense<0.000000e+00> : vector<8xf32>
      %193 = vector.multi_reduction <add>, %187, %cst_100 [1] : vector<8x16xf32> to vector<8xf32>
      %194 = vector.shape_cast %193 : vector<8xf32> to vector<8x1xf32>
      %cst_101 = arith.constant 1.600000e+01 : f32
      %195 = vector.broadcast %cst_101 : f32 to vector<8x1xf32>
      %196 = arith.divf %194, %195 : vector<8x1xf32>
      %197 = vector.broadcast %196 : vector<8x1xf32> to vector<8x16xf32>
      %198 = arith.subf %187, %197 : vector<8x16xf32>
      %199 = arith.mulf %198, %198 : vector<8x16xf32>
      %cst_102 = arith.constant dense<0.000000e+00> : vector<8xf32>
      %200 = vector.multi_reduction <add>, %199, %cst_102 [1] : vector<8x16xf32> to vector<8xf32>
      %201 = vector.shape_cast %200 : vector<8xf32> to vector<8x1xf32>
      %cst_103 = arith.constant 1.600000e+01 : f32
      %202 = vector.broadcast %cst_103 : f32 to vector<8x1xf32>
      %203 = arith.divf %201, %202 : vector<8x1xf32>
      %204 = vector.broadcast %196 : vector<8x1xf32> to vector<8x16xf32>
      %205 = arith.subf %187, %204 : vector<8x16xf32>
      %cst_104 = arith.constant 9.99999974E-6 : f32
      %206 = vector.broadcast %cst_104 : f32 to vector<8x1xf32>
      %207 = arith.addf %203, %206 : vector<8x1xf32>
      %208 = math.rsqrt %207 : vector<8x1xf32>
      %209 = vector.broadcast %208 : vector<8x1xf32> to vector<8x16xf32>
      %210 = arith.mulf %205, %209 : vector<8x16xf32>
      %211 = vector.broadcast %188 : vector<1x16xf32> to vector<8x16xf32>
      %212 = arith.mulf %210, %211 : vector<8x16xf32>
      %213 = vector.broadcast %189 : vector<1x16xf32> to vector<8x16xf32>
      %214 = arith.addf %212, %213 : vector<8x16xf32>
      %c0_105 = arith.constant 0 : index
      %c0_106 = arith.constant 0 : index
      %215 = vector.load %arg6[%c0_105, %c0_106] : memref<16x32xbf16, #tpu.memory_space<vmem>>, vector<16x32xbf16>
      %216 = arith.truncf %214 : vector<8x16xf32> to vector<8x16xbf16>
      %cst_107 = arith.constant dense<0.000000e+00> : vector<8x32xf32>
      %217 = tpu.matmul %216, %215, %cst_107 {dimension_numbers = #tpu.dot_dimension_numbers<[1], [0], [0], [1], [0, 0, 1, 1], [], []>} : vector<8x16xbf16>, vector<16x32xbf16>, vector<8x32xf32> -> vector<8x32xf32>
      %218 = vector.broadcast %190 : vector<1x32xf32> to vector<8x32xf32>
      %219 = arith.addf %217, %218 : vector<8x32xf32>
      %cst_108 = arith.constant 0.000000e+00 : f32
      %220 = vector.broadcast %cst_108 : f32 to vector<8x32xf32>
      %221 = arith.maximumf %219, %220 : vector<8x32xf32>
      %c0_109 = arith.constant 0 : index
      %c0_110 = arith.constant 0 : index
      %222 = vector.load %arg7[%c0_109, %c0_110] : memref<32x16xbf16, #tpu.memory_space<vmem>>, vector<32x16xbf16>
      %223 = arith.truncf %221 : vector<8x32xf32> to vector<8x32xbf16>
      %cst_111 = arith.constant dense<0.000000e+00> : vector<8x16xf32>
      %224 = tpu.matmul %223, %222, %cst_111 {dimension_numbers = #tpu.dot_dimension_numbers<[1], [0], [0], [1], [0, 0, 1, 1], [], []>} : vector<8x32xbf16>, vector<32x16xbf16>, vector<8x16xf32> -> vector<8x16xf32>
      %225 = vector.broadcast %191 : vector<1x16xf32> to vector<8x16xf32>
      %226 = arith.addf %224, %225 : vector<8x16xf32>
      %cst_112 = arith.constant 0.000000e+00 : f32
      %227 = vector.broadcast %cst_112 : f32 to vector<8x16xf32>
      %228 = arith.maximumf %226, %227 : vector<8x16xf32>
      %c0_113 = arith.constant 0 : index
      %c0_114 = arith.constant 0 : index
      %229 = vector.load %arg8[%c0_113, %c0_114] : memref<16x8xbf16, #tpu.memory_space<vmem>>, vector<16x8xbf16>
      %230 = arith.truncf %228 : vector<8x16xf32> to vector<8x16xbf16>
      %cst_115 = arith.constant dense<0.000000e+00> : vector<8x8xf32>
      %231 = tpu.matmul %230, %229, %cst_115 {dimension_numbers = #tpu.dot_dimension_numbers<[1], [0], [0], [1], [0, 0, 1, 1], [], []>} : vector<8x16xbf16>, vector<16x8xbf16>, vector<8x8xf32> -> vector<8x8xf32>
      %232 = vector.broadcast %192 : vector<1x8xf32> to vector<8x8xf32>
      %233 = arith.addf %231, %232 : vector<8x8xf32>
      %c0_116 = arith.constant 0 : index
      %c0_117 = arith.constant 0 : index
      %234 = vector.load %arg2[%c0_116, %c0_117] : memref<8x32xf32, #tpu.memory_space<vmem>>, vector<8x32xf32>
      %c0_118 = arith.constant 0 : index
      %c640 = arith.constant 640 : index
      %235 = vector.load %arg15[%c0_118, %c640] : memref<1x1920xf32, #tpu.memory_space<vmem>>, vector<1x32xf32>
      %c0_119 = arith.constant 0 : index
      %c768 = arith.constant 768 : index
      %236 = vector.load %arg15[%c0_119, %c768] : memref<1x1920xf32, #tpu.memory_space<vmem>>, vector<1x32xf32>
      %c0_120 = arith.constant 0 : index
      %c896 = arith.constant 896 : index
      %237 = vector.load %arg15[%c0_120, %c896] : memref<1x1920xf32, #tpu.memory_space<vmem>>, vector<1x64xf32>
      %c0_121 = arith.constant 0 : index
      %c1024 = arith.constant 1024 : index
      %238 = vector.load %arg15[%c0_121, %c1024] : memref<1x1920xf32, #tpu.memory_space<vmem>>, vector<1x32xf32>
      %c0_122 = arith.constant 0 : index
      %c1152 = arith.constant 1152 : index
      %239 = vector.load %arg15[%c0_122, %c1152] : memref<1x1920xf32, #tpu.memory_space<vmem>>, vector<1x8xf32>
      %cst_123 = arith.constant dense<0.000000e+00> : vector<8xf32>
      %240 = vector.multi_reduction <add>, %234, %cst_123 [1] : vector<8x32xf32> to vector<8xf32>
      %241 = vector.shape_cast %240 : vector<8xf32> to vector<8x1xf32>
      %cst_124 = arith.constant 3.200000e+01 : f32
      %242 = vector.broadcast %cst_124 : f32 to vector<8x1xf32>
      %243 = arith.divf %241, %242 : vector<8x1xf32>
      %244 = vector.broadcast %243 : vector<8x1xf32> to vector<8x32xf32>
      %245 = arith.subf %234, %244 : vector<8x32xf32>
      %246 = arith.mulf %245, %245 : vector<8x32xf32>
      %cst_125 = arith.constant dense<0.000000e+00> : vector<8xf32>
      %247 = vector.multi_reduction <add>, %246, %cst_125 [1] : vector<8x32xf32> to vector<8xf32>
      %248 = vector.shape_cast %247 : vector<8xf32> to vector<8x1xf32>
      %cst_126 = arith.constant 3.200000e+01 : f32
      %249 = vector.broadcast %cst_126 : f32 to vector<8x1xf32>
      %250 = arith.divf %248, %249 : vector<8x1xf32>
      %251 = vector.broadcast %243 : vector<8x1xf32> to vector<8x32xf32>
      %252 = arith.subf %234, %251 : vector<8x32xf32>
      %cst_127 = arith.constant 9.99999974E-6 : f32
      %253 = vector.broadcast %cst_127 : f32 to vector<8x1xf32>
      %254 = arith.addf %250, %253 : vector<8x1xf32>
      %255 = math.rsqrt %254 : vector<8x1xf32>
      %256 = vector.broadcast %255 : vector<8x1xf32> to vector<8x32xf32>
      %257 = arith.mulf %252, %256 : vector<8x32xf32>
      %258 = vector.broadcast %235 : vector<1x32xf32> to vector<8x32xf32>
      %259 = arith.mulf %257, %258 : vector<8x32xf32>
      %260 = vector.broadcast %236 : vector<1x32xf32> to vector<8x32xf32>
      %261 = arith.addf %259, %260 : vector<8x32xf32>
      %c0_128 = arith.constant 0 : index
      %c0_129 = arith.constant 0 : index
      %262 = vector.load %arg9[%c0_128, %c0_129] : memref<32x64xbf16, #tpu.memory_space<vmem>>, vector<32x64xbf16>
      %263 = arith.truncf %261 : vector<8x32xf32> to vector<8x32xbf16>
      %cst_130 = arith.constant dense<0.000000e+00> : vector<8x64xf32>
      %264 = tpu.matmul %263, %262, %cst_130 {dimension_numbers = #tpu.dot_dimension_numbers<[1], [0], [0], [1], [0, 0, 1, 1], [], []>} : vector<8x32xbf16>, vector<32x64xbf16>, vector<8x64xf32> -> vector<8x64xf32>
      %265 = vector.broadcast %237 : vector<1x64xf32> to vector<8x64xf32>
      %266 = arith.addf %264, %265 : vector<8x64xf32>
      %cst_131 = arith.constant 0.000000e+00 : f32
      %267 = vector.broadcast %cst_131 : f32 to vector<8x64xf32>
      %268 = arith.maximumf %266, %267 : vector<8x64xf32>
      %c0_132 = arith.constant 0 : index
      %c0_133 = arith.constant 0 : index
      %269 = vector.load %arg10[%c0_132, %c0_133] : memref<64x32xbf16, #tpu.memory_space<vmem>>, vector<64x32xbf16>
      %270 = arith.truncf %268 : vector<8x64xf32> to vector<8x64xbf16>
      %cst_134 = arith.constant dense<0.000000e+00> : vector<8x32xf32>
      %271 = tpu.matmul %270, %269, %cst_134 {dimension_numbers = #tpu.dot_dimension_numbers<[1], [0], [0], [1], [0, 0, 1, 1], [], []>} : vector<8x64xbf16>, vector<64x32xbf16>, vector<8x32xf32> -> vector<8x32xf32>
      %272 = vector.broadcast %238 : vector<1x32xf32> to vector<8x32xf32>
      %273 = arith.addf %271, %272 : vector<8x32xf32>
      %cst_135 = arith.constant 0.000000e+00 : f32
      %274 = vector.broadcast %cst_135 : f32 to vector<8x32xf32>
      %275 = arith.maximumf %273, %274 : vector<8x32xf32>
      %c0_136 = arith.constant 0 : index
      %c0_137 = arith.constant 0 : index
      %276 = vector.load %arg11[%c0_136, %c0_137] : memref<32x8xbf16, #tpu.memory_space<vmem>>, vector<32x8xbf16>
      %277 = arith.truncf %275 : vector<8x32xf32> to vector<8x32xbf16>
      %cst_138 = arith.constant dense<0.000000e+00> : vector<8x8xf32>
      %278 = tpu.matmul %277, %276, %cst_138 {dimension_numbers = #tpu.dot_dimension_numbers<[1], [0], [0], [1], [0, 0, 1, 1], [], []>} : vector<8x32xbf16>, vector<32x8xbf16>, vector<8x8xf32> -> vector<8x8xf32>
      %279 = vector.broadcast %239 : vector<1x8xf32> to vector<8x8xf32>
      %280 = arith.addf %278, %279 : vector<8x8xf32>
      %c0_139 = arith.constant 0 : index
      %c0_140 = arith.constant 0 : index
      %281 = vector.load %arg3[%c0_139, %c0_140] : memref<8x24xf32, #tpu.memory_space<vmem>>, vector<8x24xf32>
      %c0_141 = arith.constant 0 : index
      %c1280 = arith.constant 1280 : index
      %282 = vector.load %arg15[%c0_141, %c1280] : memref<1x1920xf32, #tpu.memory_space<vmem>>, vector<1x24xf32>
      %c0_142 = arith.constant 0 : index
      %c1408 = arith.constant 1408 : index
      %283 = vector.load %arg15[%c0_142, %c1408] : memref<1x1920xf32, #tpu.memory_space<vmem>>, vector<1x24xf32>
      %c0_143 = arith.constant 0 : index
      %c1536 = arith.constant 1536 : index
      %284 = vector.load %arg15[%c0_143, %c1536] : memref<1x1920xf32, #tpu.memory_space<vmem>>, vector<1x48xf32>
      %c0_144 = arith.constant 0 : index
      %c1664 = arith.constant 1664 : index
      %285 = vector.load %arg15[%c0_144, %c1664] : memref<1x1920xf32, #tpu.memory_space<vmem>>, vector<1x24xf32>
      %c0_145 = arith.constant 0 : index
      %c1792 = arith.constant 1792 : index
      %286 = vector.load %arg15[%c0_145, %c1792] : memref<1x1920xf32, #tpu.memory_space<vmem>>, vector<1x8xf32>
      %cst_146 = arith.constant dense<0.000000e+00> : vector<8xf32>
      %287 = vector.multi_reduction <add>, %281, %cst_146 [1] : vector<8x24xf32> to vector<8xf32>
      %288 = vector.shape_cast %287 : vector<8xf32> to vector<8x1xf32>
      %cst_147 = arith.constant 2.400000e+01 : f32
      %289 = vector.broadcast %cst_147 : f32 to vector<8x1xf32>
      %290 = arith.divf %288, %289 : vector<8x1xf32>
      %291 = vector.broadcast %290 : vector<8x1xf32> to vector<8x24xf32>
      %292 = arith.subf %281, %291 : vector<8x24xf32>
      %293 = arith.mulf %292, %292 : vector<8x24xf32>
      %cst_148 = arith.constant dense<0.000000e+00> : vector<8xf32>
      %294 = vector.multi_reduction <add>, %293, %cst_148 [1] : vector<8x24xf32> to vector<8xf32>
      %295 = vector.shape_cast %294 : vector<8xf32> to vector<8x1xf32>
      %cst_149 = arith.constant 2.400000e+01 : f32
      %296 = vector.broadcast %cst_149 : f32 to vector<8x1xf32>
      %297 = arith.divf %295, %296 : vector<8x1xf32>
      %298 = vector.broadcast %290 : vector<8x1xf32> to vector<8x24xf32>
      %299 = arith.subf %281, %298 : vector<8x24xf32>
      %cst_150 = arith.constant 9.99999974E-6 : f32
      %300 = vector.broadcast %cst_150 : f32 to vector<8x1xf32>
      %301 = arith.addf %297, %300 : vector<8x1xf32>
      %302 = math.rsqrt %301 : vector<8x1xf32>
      %303 = vector.broadcast %302 : vector<8x1xf32> to vector<8x24xf32>
      %304 = arith.mulf %299, %303 : vector<8x24xf32>
      %305 = vector.broadcast %282 : vector<1x24xf32> to vector<8x24xf32>
      %306 = arith.mulf %304, %305 : vector<8x24xf32>
      %307 = vector.broadcast %283 : vector<1x24xf32> to vector<8x24xf32>
      %308 = arith.addf %306, %307 : vector<8x24xf32>
      %c0_151 = arith.constant 0 : index
      %c0_152 = arith.constant 0 : index
      %309 = vector.load %arg12[%c0_151, %c0_152] : memref<24x48xbf16, #tpu.memory_space<vmem>>, vector<24x48xbf16>
      %310 = arith.truncf %308 : vector<8x24xf32> to vector<8x24xbf16>
      %cst_153 = arith.constant dense<0.000000e+00> : vector<8x48xf32>
      %311 = tpu.matmul %310, %309, %cst_153 {dimension_numbers = #tpu.dot_dimension_numbers<[1], [0], [0], [1], [0, 0, 1, 1], [], []>} : vector<8x24xbf16>, vector<24x48xbf16>, vector<8x48xf32> -> vector<8x48xf32>
      %312 = vector.broadcast %284 : vector<1x48xf32> to vector<8x48xf32>
      %313 = arith.addf %311, %312 : vector<8x48xf32>
      %cst_154 = arith.constant 0.000000e+00 : f32
      %314 = vector.broadcast %cst_154 : f32 to vector<8x48xf32>
      %315 = arith.maximumf %313, %314 : vector<8x48xf32>
      %c0_155 = arith.constant 0 : index
      %c0_156 = arith.constant 0 : index
      %316 = vector.load %arg13[%c0_155, %c0_156] : memref<48x24xbf16, #tpu.memory_space<vmem>>, vector<48x24xbf16>
      %317 = arith.truncf %315 : vector<8x48xf32> to vector<8x48xbf16>
      %cst_157 = arith.constant dense<0.000000e+00> : vector<8x24xf32>
      %318 = tpu.matmul %317, %316, %cst_157 {dimension_numbers = #tpu.dot_dimension_numbers<[1], [0], [0], [1], [0, 0, 1, 1], [], []>} : vector<8x48xbf16>, vector<48x24xbf16>, vector<8x24xf32> -> vector<8x24xf32>
      %319 = vector.broadcast %285 : vector<1x24xf32> to vector<8x24xf32>
      %320 = arith.addf %318, %319 : vector<8x24xf32>
      %cst_158 = arith.constant 0.000000e+00 : f32
      %321 = vector.broadcast %cst_158 : f32 to vector<8x24xf32>
      %322 = arith.maximumf %320, %321 : vector<8x24xf32>
      %c0_159 = arith.constant 0 : index
      %c0_160 = arith.constant 0 : index
      %323 = vector.load %arg14[%c0_159, %c0_160] : memref<24x8xbf16, #tpu.memory_space<vmem>>, vector<24x8xbf16>
      %324 = arith.truncf %322 : vector<8x24xf32> to vector<8x24xbf16>
      %cst_161 = arith.constant dense<0.000000e+00> : vector<8x8xf32>
      %325 = tpu.matmul %324, %323, %cst_161 {dimension_numbers = #tpu.dot_dimension_numbers<[1], [0], [0], [1], [0, 0, 1, 1], [], []>} : vector<8x24xbf16>, vector<24x8xbf16>, vector<8x8xf32> -> vector<8x8xf32>
      %326 = vector.broadcast %286 : vector<1x8xf32> to vector<8x8xf32>
      %327 = arith.addf %325, %326 : vector<8x8xf32>
      %c0_162 = arith.constant 0 : index
      %c0_163 = arith.constant 0 : index
      %328 = vector.load %arg4[%c0_162, %c0_163] : memref<8x8xf32, #tpu.memory_space<vmem>>, vector<8x8xf32>
      %c0_164 = arith.constant 0 : index
      %c0_165 = arith.constant 0 : index
      %329 = vector.load %arg19[%c0_164, %c0_165] : memref<1x768xf32, #tpu.memory_space<vmem>>, vector<1x32xf32>
      %c0_166 = arith.constant 0 : index
      %c128_167 = arith.constant 128 : index
      %330 = vector.load %arg19[%c0_166, %c128_167] : memref<1x768xf32, #tpu.memory_space<vmem>>, vector<1x32xf32>
      %c0_168 = arith.constant 0 : index
      %c256_169 = arith.constant 256 : index
      %331 = vector.load %arg19[%c0_168, %c256_169] : memref<1x768xf32, #tpu.memory_space<vmem>>, vector<1x64xf32>
      %c0_170 = arith.constant 0 : index
      %c384_171 = arith.constant 384 : index
      %332 = vector.load %arg19[%c0_170, %c384_171] : memref<1x768xf32, #tpu.memory_space<vmem>>, vector<1x32xf32>
      %c0_172 = arith.constant 0 : index
      %c512_173 = arith.constant 512 : index
      %333 = vector.load %arg19[%c0_172, %c512_173] : memref<1x768xf32, #tpu.memory_space<vmem>>, vector<1x256xf32>
      %cst_174 = arith.constant dense<0.000000e+00> : vector<8xf32>
      %334 = vector.multi_reduction <add>, %327, %cst_174 [1] : vector<8x8xf32> to vector<8xf32>
      %335 = vector.shape_cast %334 : vector<8xf32> to vector<8x1xf32>
      %cst_175 = arith.constant 0.000000e+00 : f32
      %336 = vector.broadcast %cst_175 : f32 to vector<8x1xf32>
      %337 = arith.addf %336, %335 : vector<8x1xf32>
      %cst_176 = arith.constant dense<0.000000e+00> : vector<8xf32>
      %338 = vector.multi_reduction <add>, %328, %cst_176 [1] : vector<8x8xf32> to vector<8xf32>
      %339 = vector.shape_cast %338 : vector<8xf32> to vector<8x1xf32>
      %340 = arith.addf %337, %339 : vector<8x1xf32>
      %cst_177 = arith.constant dense<0.000000e+00> : vector<8xf32>
      %341 = vector.multi_reduction <add>, %233, %cst_177 [1] : vector<8x8xf32> to vector<8xf32>
      %342 = vector.shape_cast %341 : vector<8xf32> to vector<8x1xf32>
      %343 = arith.addf %340, %342 : vector<8x1xf32>
      %cst_178 = arith.constant dense<0.000000e+00> : vector<8xf32>
      %344 = vector.multi_reduction <add>, %280, %cst_178 [1] : vector<8x8xf32> to vector<8xf32>
      %345 = vector.shape_cast %344 : vector<8xf32> to vector<8x1xf32>
      %346 = arith.addf %343, %345 : vector<8x1xf32>
      %cst_179 = arith.constant 3.125000e-02 : f32
      %347 = vector.broadcast %cst_179 : f32 to vector<8x1xf32>
      %348 = arith.mulf %346, %347 : vector<8x1xf32>
      %349 = vector.broadcast %348 : vector<8x1xf32> to vector<8x8xf32>
      %350 = arith.subf %327, %349 : vector<8x8xf32>
      %351 = arith.mulf %350, %350 : vector<8x8xf32>
      %cst_180 = arith.constant dense<0.000000e+00> : vector<8xf32>
      %352 = vector.multi_reduction <add>, %351, %cst_180 [1] : vector<8x8xf32> to vector<8xf32>
      %353 = vector.shape_cast %352 : vector<8xf32> to vector<8x1xf32>
      %cst_181 = arith.constant 0.000000e+00 : f32
      %354 = vector.broadcast %cst_181 : f32 to vector<8x1xf32>
      %355 = arith.addf %354, %353 : vector<8x1xf32>
      %356 = vector.broadcast %348 : vector<8x1xf32> to vector<8x8xf32>
      %357 = arith.subf %328, %356 : vector<8x8xf32>
      %358 = arith.mulf %357, %357 : vector<8x8xf32>
      %cst_182 = arith.constant dense<0.000000e+00> : vector<8xf32>
      %359 = vector.multi_reduction <add>, %358, %cst_182 [1] : vector<8x8xf32> to vector<8xf32>
      %360 = vector.shape_cast %359 : vector<8xf32> to vector<8x1xf32>
      %361 = arith.addf %355, %360 : vector<8x1xf32>
      %362 = vector.broadcast %348 : vector<8x1xf32> to vector<8x8xf32>
      %363 = arith.subf %233, %362 : vector<8x8xf32>
      %364 = arith.mulf %363, %363 : vector<8x8xf32>
      %cst_183 = arith.constant dense<0.000000e+00> : vector<8xf32>
      %365 = vector.multi_reduction <add>, %364, %cst_183 [1] : vector<8x8xf32> to vector<8xf32>
      %366 = vector.shape_cast %365 : vector<8xf32> to vector<8x1xf32>
      %367 = arith.addf %361, %366 : vector<8x1xf32>
      %368 = vector.broadcast %348 : vector<8x1xf32> to vector<8x8xf32>
      %369 = arith.subf %280, %368 : vector<8x8xf32>
      %370 = arith.mulf %369, %369 : vector<8x8xf32>
      %cst_184 = arith.constant dense<0.000000e+00> : vector<8xf32>
      %371 = vector.multi_reduction <add>, %370, %cst_184 [1] : vector<8x8xf32> to vector<8xf32>
      %372 = vector.shape_cast %371 : vector<8xf32> to vector<8x1xf32>
      %373 = arith.addf %367, %372 : vector<8x1xf32>
      %cst_185 = arith.constant 3.125000e-02 : f32
      %374 = vector.broadcast %cst_185 : f32 to vector<8x1xf32>
      %375 = arith.mulf %373, %374 : vector<8x1xf32>
      %cst_186 = arith.constant 9.99999974E-6 : f32
      %376 = vector.broadcast %cst_186 : f32 to vector<8x1xf32>
      %377 = arith.addf %375, %376 : vector<8x1xf32>
      %378 = math.rsqrt %377 : vector<8x1xf32>
      %379 = vector.extract_strided_slice %329 {offsets = [0, 0], sizes = [1, 8], strides = [1, 1]} : vector<1x32xf32> to vector<1x8xf32>
      %380 = vector.extract_strided_slice %330 {offsets = [0, 0], sizes = [1, 8], strides = [1, 1]} : vector<1x32xf32> to vector<1x8xf32>
      %381 = vector.broadcast %348 : vector<8x1xf32> to vector<8x8xf32>
      %382 = arith.subf %327, %381 : vector<8x8xf32>
      %383 = vector.broadcast %378 : vector<8x1xf32> to vector<8x8xf32>
      %384 = arith.mulf %382, %383 : vector<8x8xf32>
      %385 = vector.broadcast %379 : vector<1x8xf32> to vector<8x8xf32>
      %386 = arith.mulf %384, %385 : vector<8x8xf32>
      %387 = vector.broadcast %380 : vector<1x8xf32> to vector<8x8xf32>
      %388 = arith.addf %386, %387 : vector<8x8xf32>
      %c0_187 = arith.constant 0 : index
      %c0_188 = arith.constant 0 : index
      %c0_189 = arith.constant 0 : index
      %389 = vector.load %arg16[%c0_187, %c0_188, %c0_189] : memref<4x8x64xbf16, #tpu.memory_space<vmem>>, vector<1x8x64xbf16>
      %390 = vector.shape_cast %389 : vector<1x8x64xbf16> to vector<8x64xbf16>
      %391 = arith.truncf %388 : vector<8x8xf32> to vector<8x8xbf16>
      %cst_190 = arith.constant dense<0.000000e+00> : vector<8x64xf32>
      %392 = tpu.matmul %391, %390, %cst_190 {dimension_numbers = #tpu.dot_dimension_numbers<[1], [0], [0], [1], [0, 0, 1, 1], [], []>} : vector<8x8xbf16>, vector<8x64xbf16>, vector<8x64xf32> -> vector<8x64xf32>
      %393 = vector.broadcast %331 : vector<1x64xf32> to vector<8x64xf32>
      %394 = arith.addf %393, %392 : vector<8x64xf32>
      %395 = vector.extract_strided_slice %329 {offsets = [0, 8], sizes = [1, 8], strides = [1, 1]} : vector<1x32xf32> to vector<1x8xf32>
      %396 = vector.extract_strided_slice %330 {offsets = [0, 8], sizes = [1, 8], strides = [1, 1]} : vector<1x32xf32> to vector<1x8xf32>
      %397 = vector.broadcast %348 : vector<8x1xf32> to vector<8x8xf32>
      %398 = arith.subf %328, %397 : vector<8x8xf32>
      %399 = vector.broadcast %378 : vector<8x1xf32> to vector<8x8xf32>
      %400 = arith.mulf %398, %399 : vector<8x8xf32>
      %401 = vector.broadcast %395 : vector<1x8xf32> to vector<8x8xf32>
      %402 = arith.mulf %400, %401 : vector<8x8xf32>
      %403 = vector.broadcast %396 : vector<1x8xf32> to vector<8x8xf32>
      %404 = arith.addf %402, %403 : vector<8x8xf32>
      %c1_191 = arith.constant 1 : index
      %c0_192 = arith.constant 0 : index
      %c0_193 = arith.constant 0 : index
      %405 = vector.load %arg16[%c1_191, %c0_192, %c0_193] : memref<4x8x64xbf16, #tpu.memory_space<vmem>>, vector<1x8x64xbf16>
      %406 = vector.shape_cast %405 : vector<1x8x64xbf16> to vector<8x64xbf16>
      %407 = arith.truncf %404 : vector<8x8xf32> to vector<8x8xbf16>
      %cst_194 = arith.constant dense<0.000000e+00> : vector<8x64xf32>
      %408 = tpu.matmul %407, %406, %cst_194 {dimension_numbers = #tpu.dot_dimension_numbers<[1], [0], [0], [1], [0, 0, 1, 1], [], []>} : vector<8x8xbf16>, vector<8x64xbf16>, vector<8x64xf32> -> vector<8x64xf32>
      %409 = arith.addf %394, %408 : vector<8x64xf32>
      %410 = vector.extract_strided_slice %329 {offsets = [0, 16], sizes = [1, 8], strides = [1, 1]} : vector<1x32xf32> to vector<1x8xf32>
      %411 = vector.extract_strided_slice %330 {offsets = [0, 16], sizes = [1, 8], strides = [1, 1]} : vector<1x32xf32> to vector<1x8xf32>
      %412 = vector.broadcast %348 : vector<8x1xf32> to vector<8x8xf32>
      %413 = arith.subf %233, %412 : vector<8x8xf32>
      %414 = vector.broadcast %378 : vector<8x1xf32> to vector<8x8xf32>
      %415 = arith.mulf %413, %414 : vector<8x8xf32>
      %416 = vector.broadcast %410 : vector<1x8xf32> to vector<8x8xf32>
      %417 = arith.mulf %415, %416 : vector<8x8xf32>
      %418 = vector.broadcast %411 : vector<1x8xf32> to vector<8x8xf32>
      %419 = arith.addf %417, %418 : vector<8x8xf32>
      %c2_195 = arith.constant 2 : index
      %c0_196 = arith.constant 0 : index
      %c0_197 = arith.constant 0 : index
      %420 = vector.load %arg16[%c2_195, %c0_196, %c0_197] : memref<4x8x64xbf16, #tpu.memory_space<vmem>>, vector<1x8x64xbf16>
      %421 = vector.shape_cast %420 : vector<1x8x64xbf16> to vector<8x64xbf16>
      %422 = arith.truncf %419 : vector<8x8xf32> to vector<8x8xbf16>
      %cst_198 = arith.constant dense<0.000000e+00> : vector<8x64xf32>
      %423 = tpu.matmul %422, %421, %cst_198 {dimension_numbers = #tpu.dot_dimension_numbers<[1], [0], [0], [1], [0, 0, 1, 1], [], []>} : vector<8x8xbf16>, vector<8x64xbf16>, vector<8x64xf32> -> vector<8x64xf32>
      %424 = arith.addf %409, %423 : vector<8x64xf32>
      %425 = vector.extract_strided_slice %329 {offsets = [0, 24], sizes = [1, 8], strides = [1, 1]} : vector<1x32xf32> to vector<1x8xf32>
      %426 = vector.extract_strided_slice %330 {offsets = [0, 24], sizes = [1, 8], strides = [1, 1]} : vector<1x32xf32> to vector<1x8xf32>
      %427 = vector.broadcast %348 : vector<8x1xf32> to vector<8x8xf32>
      %428 = arith.subf %280, %427 : vector<8x8xf32>
      %429 = vector.broadcast %378 : vector<8x1xf32> to vector<8x8xf32>
      %430 = arith.mulf %428, %429 : vector<8x8xf32>
      %431 = vector.broadcast %425 : vector<1x8xf32> to vector<8x8xf32>
      %432 = arith.mulf %430, %431 : vector<8x8xf32>
      %433 = vector.broadcast %426 : vector<1x8xf32> to vector<8x8xf32>
      %434 = arith.addf %432, %433 : vector<8x8xf32>
      %c3_199 = arith.constant 3 : index
      %c0_200 = arith.constant 0 : index
      %c0_201 = arith.constant 0 : index
      %435 = vector.load %arg16[%c3_199, %c0_200, %c0_201] : memref<4x8x64xbf16, #tpu.memory_space<vmem>>, vector<1x8x64xbf16>
      %436 = vector.shape_cast %435 : vector<1x8x64xbf16> to vector<8x64xbf16>
      %437 = arith.truncf %434 : vector<8x8xf32> to vector<8x8xbf16>
      %cst_202 = arith.constant dense<0.000000e+00> : vector<8x64xf32>
      %438 = tpu.matmul %437, %436, %cst_202 {dimension_numbers = #tpu.dot_dimension_numbers<[1], [0], [0], [1], [0, 0, 1, 1], [], []>} : vector<8x8xbf16>, vector<8x64xbf16>, vector<8x64xf32> -> vector<8x64xf32>
      %439 = arith.addf %424, %438 : vector<8x64xf32>
      %cst_203 = arith.constant 0.000000e+00 : f32
      %440 = vector.broadcast %cst_203 : f32 to vector<8x64xf32>
      %441 = arith.maximumf %439, %440 : vector<8x64xf32>
      %c0_204 = arith.constant 0 : index
      %c0_205 = arith.constant 0 : index
      %442 = vector.load %arg17[%c0_204, %c0_205] : memref<64x32xbf16, #tpu.memory_space<vmem>>, vector<64x32xbf16>
      %443 = arith.truncf %441 : vector<8x64xf32> to vector<8x64xbf16>
      %cst_206 = arith.constant dense<0.000000e+00> : vector<8x32xf32>
      %444 = tpu.matmul %443, %442, %cst_206 {dimension_numbers = #tpu.dot_dimension_numbers<[1], [0], [0], [1], [0, 0, 1, 1], [], []>} : vector<8x64xbf16>, vector<64x32xbf16>, vector<8x32xf32> -> vector<8x32xf32>
      %445 = vector.broadcast %332 : vector<1x32xf32> to vector<8x32xf32>
      %446 = arith.addf %444, %445 : vector<8x32xf32>
      %cst_207 = arith.constant 0.000000e+00 : f32
      %447 = vector.broadcast %cst_207 : f32 to vector<8x32xf32>
      %448 = arith.maximumf %446, %447 : vector<8x32xf32>
      %c0_208 = arith.constant 0 : index
      %c0_209 = arith.constant 0 : index
      %449 = vector.load %arg18[%c0_208, %c0_209] : memref<32x256xbf16, #tpu.memory_space<vmem>>, vector<32x256xbf16>
      %450 = arith.truncf %448 : vector<8x32xf32> to vector<8x32xbf16>
      %cst_210 = arith.constant dense<0.000000e+00> : vector<8x256xf32>
      %451 = tpu.matmul %450, %449, %cst_210 {dimension_numbers = #tpu.dot_dimension_numbers<[1], [0], [0], [1], [0, 0, 1, 1], [], []>} : vector<8x32xbf16>, vector<32x256xbf16>, vector<8x256xf32> -> vector<8x256xf32>
      %452 = vector.broadcast %333 : vector<1x256xf32> to vector<8x256xf32>
      %453 = arith.addf %451, %452 : vector<8x256xf32>
      %c0_211 = arith.constant 0 : index
      %c0_212 = arith.constant 0 : index
      %454 = vector.load %arg34[%c0_211, %c0_212] : memref<8x256xf32, #tpu.memory_space<vmem>>, vector<8x256xf32>
      tpu.vector_store %arg34[%c0_211, %c0_212], %453 {strides = array<i32>} : memref<8x256xf32, #tpu.memory_space<vmem>>, vector<8x256xf32>,
      %c0_213 = arith.constant 0 : index
      %c0_214 = arith.constant 0 : index
      %455 = vector.load %arg33[%c0_213, %c0_214] : memref<8x256xf32, #tpu.memory_space<vmem>>, vector<8x256xf32>
      tpu.vector_store %arg33[%c0_213, %c0_214], %453 {strides = array<i32>} : memref<8x256xf32, #tpu.memory_space<vmem>>, vector<8x256xf32>,
    } else {
    }
    %c0 = arith.constant 0 : index
    %c0_1 = arith.constant 0 : index
    %3 = vector.load %arg33[%c0, %c0_1] : memref<8x256xf32, #tpu.memory_space<vmem>>, vector<8x256xf32>
    %c0_2 = arith.constant 0 : index
    %c0_3 = arith.constant 0 : index
    %4 = vector.load %arg5[%c0_2, %c0_3] : memref<8x256xf32, #tpu.memory_space<vmem>>, vector<8x256xf32>
    %c0_4 = arith.constant 0 : index
    %c0_5 = arith.constant 0 : index
    %c0_6 = arith.constant 0 : index
    %5 = vector.load %arg20[%c0_4, %c0_5, %c0_6] : memref<1x256x768xbf16, #tpu.memory_space<vmem>>, vector<1x256x768xbf16>
    %6 = vector.shape_cast %5 : vector<1x256x768xbf16> to vector<256x768xbf16>
    %7 = arith.truncf %3 : vector<8x256xf32> to vector<8x256xbf16>
    %cst = arith.constant dense<0.000000e+00> : vector<8x768xf32>
    %8 = tpu.matmul %7, %6, %cst {dimension_numbers = #tpu.dot_dimension_numbers<[1], [0], [0], [1], [0, 0, 1, 1], [], []>} : vector<8x256xbf16>, vector<256x768xbf16>, vector<8x768xf32> -> vector<8x768xf32>
    %9 = vector.extract_strided_slice %8 {offsets = [0, 0], sizes = [8, 256], strides = [1, 1]} : vector<8x768xf32> to vector<8x256xf32>
    %c0_7 = arith.constant 0 : index
    %c0_8 = arith.constant 0 : index
    %c0_9 = arith.constant 0 : index
    %10 = vector.load %arg27[%c0_7, %c0_8, %c0_9] : memref<1x15x256xf32, #tpu.memory_space<vmem>>, vector<1x1x256xf32>
    %11 = vector.shape_cast %10 : vector<1x1x256xf32> to vector<1x256xf32>
    %12 = vector.broadcast %11 : vector<1x256xf32> to vector<8x256xf32>
    %13 = arith.addf %9, %12 : vector<8x256xf32>
    %14 = vector.extract_strided_slice %8 {offsets = [0, 256], sizes = [8, 256], strides = [1, 1]} : vector<8x768xf32> to vector<8x256xf32>
    %c0_10 = arith.constant 0 : index
    %c1 = arith.constant 1 : index
    %c0_11 = arith.constant 0 : index
    %15 = vector.load %arg27[%c0_10, %c1, %c0_11] : memref<1x15x256xf32, #tpu.memory_space<vmem>>, vector<1x1x256xf32>
    %16 = vector.shape_cast %15 : vector<1x1x256xf32> to vector<1x256xf32>
    %17 = vector.broadcast %16 : vector<1x256xf32> to vector<8x256xf32>
    %18 = arith.addf %14, %17 : vector<8x256xf32>
    %19 = vector.extract_strided_slice %8 {offsets = [0, 512], sizes = [8, 256], strides = [1, 1]} : vector<8x768xf32> to vector<8x256xf32>
    %c0_12 = arith.constant 0 : index
    %c2 = arith.constant 2 : index
    %c0_13 = arith.constant 0 : index
    %20 = vector.load %arg27[%c0_12, %c2, %c0_13] : memref<1x15x256xf32, #tpu.memory_space<vmem>>, vector<1x1x256xf32>
    %21 = vector.shape_cast %20 : vector<1x1x256xf32> to vector<1x256xf32>
    %22 = vector.broadcast %21 : vector<1x256xf32> to vector<8x256xf32>
    %23 = arith.addf %19, %22 : vector<8x256xf32>
    %cst_14 = arith.constant dense<0.000000e+00> : vector<8x8xf32>
    %24 = tpu.matmul %13, %18, %cst_14 {dimension_numbers = #tpu.dot_dimension_numbers<[1], [1], [0], [0], [0, 0, 1, 0], [], []>} : vector<8x256xf32>, vector<8x256xf32>, vector<8x8xf32> -> vector<8x8xf32>
    %cst_15 = arith.constant dense<0xFF800000> : vector<8xf32>
    %25 = vector.multi_reduction <maximumf>, %24, %cst_15 [1] : vector<8x8xf32> to vector<8xf32>
    %26 = vector.shape_cast %25 : vector<8xf32> to vector<8x1xf32>
    %27 = vector.broadcast %26 : vector<8x1xf32> to vector<8x8xf32>
    %28 = arith.subf %24, %27 : vector<8x8xf32>
    %29 = math.exp %28 : vector<8x8xf32>
    %cst_16 = arith.constant dense<0.000000e+00> : vector<8xf32>
    %30 = vector.multi_reduction <add>, %29, %cst_16 [1] : vector<8x8xf32> to vector<8xf32>
    %31 = vector.shape_cast %30 : vector<8xf32> to vector<8x1xf32>
    %32 = vector.broadcast %31 : vector<8x1xf32> to vector<8x8xf32>
    %33 = arith.divf %29, %32 : vector<8x8xf32>
    %cst_17 = arith.constant dense<0.000000e+00> : vector<8x256xf32>
    %34 = tpu.matmul %33, %23, %cst_17 {dimension_numbers = #tpu.dot_dimension_numbers<[1], [0], [0], [1], [0, 0, 1, 1], [], []>} : vector<8x8xf32>, vector<8x256xf32>, vector<8x256xf32> -> vector<8x256xf32>
    %c0_18 = arith.constant 0 : index
    %c0_19 = arith.constant 0 : index
    %c0_20 = arith.constant 0 : index
    %35 = vector.load %arg21[%c0_18, %c0_19, %c0_20] : memref<1x256x256xbf16, #tpu.memory_space<vmem>>, vector<1x256x256xbf16>
    %36 = vector.shape_cast %35 : vector<1x256x256xbf16> to vector<256x256xbf16>
    %37 = arith.truncf %34 : vector<8x256xf32> to vector<8x256xbf16>
    %cst_21 = arith.constant dense<0.000000e+00> : vector<8x256xf32>
    %38 = tpu.matmul %37, %36, %cst_21 {dimension_numbers = #tpu.dot_dimension_numbers<[1], [0], [0], [1], [0, 0, 1, 1], [], []>} : vector<8x256xbf16>, vector<256x256xbf16>, vector<8x256xf32> -> vector<8x256xf32>
    %c0_22 = arith.constant 0 : index
    %c3 = arith.constant 3 : index
    %c0_23 = arith.constant 0 : index
    %39 = vector.load %arg27[%c0_22, %c3, %c0_23] : memref<1x15x256xf32, #tpu.memory_space<vmem>>, vector<1x1x256xf32>
    %40 = vector.shape_cast %39 : vector<1x1x256xf32> to vector<1x256xf32>
    %41 = vector.broadcast %40 : vector<1x256xf32> to vector<8x256xf32>
    %42 = arith.addf %38, %41 : vector<8x256xf32>
    %43 = arith.addf %3, %42 : vector<8x256xf32>
    %c0_24 = arith.constant 0 : index
    %c4 = arith.constant 4 : index
    %c0_25 = arith.constant 0 : index
    %44 = vector.load %arg27[%c0_24, %c4, %c0_25] : memref<1x15x256xf32, #tpu.memory_space<vmem>>, vector<1x1x256xf32>
    %45 = vector.shape_cast %44 : vector<1x1x256xf32> to vector<1x256xf32>
    %c0_26 = arith.constant 0 : index
    %c5 = arith.constant 5 : index
    %c0_27 = arith.constant 0 : index
    %46 = vector.load %arg27[%c0_26, %c5, %c0_27] : memref<1x15x256xf32, #tpu.memory_space<vmem>>, vector<1x1x256xf32>
    %47 = vector.shape_cast %46 : vector<1x1x256xf32> to vector<1x256xf32>
    %cst_28 = arith.constant dense<0.000000e+00> : vector<8xf32>
    %48 = vector.multi_reduction <add>, %43, %cst_28 [1] : vector<8x256xf32> to vector<8xf32>
    %49 = vector.shape_cast %48 : vector<8xf32> to vector<8x1xf32>
    %cst_29 = arith.constant 2.560000e+02 : f32
    %50 = vector.broadcast %cst_29 : f32 to vector<8x1xf32>
    %51 = arith.divf %49, %50 : vector<8x1xf32>
    %52 = vector.broadcast %51 : vector<8x1xf32> to vector<8x256xf32>
    %53 = arith.subf %43, %52 : vector<8x256xf32>
    %54 = arith.mulf %53, %53 : vector<8x256xf32>
    %cst_30 = arith.constant dense<0.000000e+00> : vector<8xf32>
    %55 = vector.multi_reduction <add>, %54, %cst_30 [1] : vector<8x256xf32> to vector<8xf32>
    %56 = vector.shape_cast %55 : vector<8xf32> to vector<8x1xf32>
    %cst_31 = arith.constant 2.560000e+02 : f32
    %57 = vector.broadcast %cst_31 : f32 to vector<8x1xf32>
    %58 = arith.divf %56, %57 : vector<8x1xf32>
    %59 = vector.broadcast %51 : vector<8x1xf32> to vector<8x256xf32>
    %60 = arith.subf %43, %59 : vector<8x256xf32>
    %cst_32 = arith.constant 9.99999974E-6 : f32
    %61 = vector.broadcast %cst_32 : f32 to vector<8x1xf32>
    %62 = arith.addf %58, %61 : vector<8x1xf32>
    %63 = math.rsqrt %62 : vector<8x1xf32>
    %64 = vector.broadcast %63 : vector<8x1xf32> to vector<8x256xf32>
    %65 = arith.mulf %60, %64 : vector<8x256xf32>
    %66 = vector.broadcast %45 : vector<1x256xf32> to vector<8x256xf32>
    %67 = arith.mulf %65, %66 : vector<8x256xf32>
    %68 = vector.broadcast %47 : vector<1x256xf32> to vector<8x256xf32>
    %69 = arith.addf %67, %68 : vector<8x256xf32>
    %c0_33 = arith.constant 0 : index
    %c0_34 = arith.constant 0 : index
    %c0_35 = arith.constant 0 : index
    %70 = vector.load %arg22[%c0_33, %c0_34, %c0_35] : memref<1x256x256xbf16, #tpu.memory_space<vmem>>, vector<1x256x256xbf16>
    %71 = vector.shape_cast %70 : vector<1x256x256xbf16> to vector<256x256xbf16>
    %72 = arith.truncf %69 : vector<8x256xf32> to vector<8x256xbf16>
    %cst_36 = arith.constant dense<0.000000e+00> : vector<8x256xf32>
    %73 = tpu.matmul %72, %71, %cst_36 {dimension_numbers = #tpu.dot_dimension_numbers<[1], [0], [0], [1], [0, 0, 1, 1], [], []>} : vector<8x256xbf16>, vector<256x256xbf16>, vector<8x256xf32> -> vector<8x256xf32>
    %c0_37 = arith.constant 0 : index
    %c6 = arith.constant 6 : index
    %c0_38 = arith.constant 0 : index
    %74 = vector.load %arg27[%c0_37, %c6, %c0_38] : memref<1x15x256xf32, #tpu.memory_space<vmem>>, vector<1x1x256xf32>
    %75 = vector.shape_cast %74 : vector<1x1x256xf32> to vector<1x256xf32>
    %76 = vector.broadcast %75 : vector<1x256xf32> to vector<8x256xf32>
    %77 = arith.addf %73, %76 : vector<8x256xf32>
    %c0_39 = arith.constant 0 : index
    %c0_40 = arith.constant 0 : index
    %c0_41 = arith.constant 0 : index
    %78 = vector.load %arg23[%c0_39, %c0_40, %c0_41] : memref<1x256x512xbf16, #tpu.memory_space<vmem>>, vector<1x256x512xbf16>
    %79 = vector.shape_cast %78 : vector<1x256x512xbf16> to vector<256x512xbf16>
    %80 = arith.truncf %4 : vector<8x256xf32> to vector<8x256xbf16>
    %cst_42 = arith.constant dense<0.000000e+00> : vector<8x512xf32>
    %81 = tpu.matmul %80, %79, %cst_42 {dimension_numbers = #tpu.dot_dimension_numbers<[1], [0], [0], [1], [0, 0, 1, 1], [], []>} : vector<8x256xbf16>, vector<256x512xbf16>, vector<8x512xf32> -> vector<8x512xf32>
    %82 = vector.extract_strided_slice %81 {offsets = [0, 0], sizes = [8, 256], strides = [1, 1]} : vector<8x512xf32> to vector<8x256xf32>
    %c0_43 = arith.constant 0 : index
    %c7 = arith.constant 7 : index
    %c0_44 = arith.constant 0 : index
    %83 = vector.load %arg27[%c0_43, %c7, %c0_44] : memref<1x15x256xf32, #tpu.memory_space<vmem>>, vector<1x1x256xf32>
    %84 = vector.shape_cast %83 : vector<1x1x256xf32> to vector<1x256xf32>
    %85 = vector.broadcast %84 : vector<1x256xf32> to vector<8x256xf32>
    %86 = arith.addf %82, %85 : vector<8x256xf32>
    %87 = vector.extract_strided_slice %81 {offsets = [0, 256], sizes = [8, 256], strides = [1, 1]} : vector<8x512xf32> to vector<8x256xf32>
    %c0_45 = arith.constant 0 : index
    %c8 = arith.constant 8 : index
    %c0_46 = arith.constant 0 : index
    %88 = vector.load %arg27[%c0_45, %c8, %c0_46] : memref<1x15x256xf32, #tpu.memory_space<vmem>>, vector<1x1x256xf32>
    %89 = vector.shape_cast %88 : vector<1x1x256xf32> to vector<1x256xf32>
    %90 = vector.broadcast %89 : vector<1x256xf32> to vector<8x256xf32>
    %91 = arith.addf %87, %90 : vector<8x256xf32>
    %cst_47 = arith.constant dense<0.000000e+00> : vector<8x8xf32>
    %92 = tpu.matmul %77, %86, %cst_47 {dimension_numbers = #tpu.dot_dimension_numbers<[1], [1], [0], [0], [0, 0, 1, 0], [], []>} : vector<8x256xf32>, vector<8x256xf32>, vector<8x8xf32> -> vector<8x8xf32>
    %cst_48 = arith.constant dense<0xFF800000> : vector<8xf32>
    %93 = vector.multi_reduction <maximumf>, %92, %cst_48 [1] : vector<8x8xf32> to vector<8xf32>
    %94 = vector.shape_cast %93 : vector<8xf32> to vector<8x1xf32>
    %95 = vector.broadcast %94 : vector<8x1xf32> to vector<8x8xf32>
    %96 = arith.subf %92, %95 : vector<8x8xf32>
    %97 = math.exp %96 : vector<8x8xf32>
    %cst_49 = arith.constant dense<0.000000e+00> : vector<8xf32>
    %98 = vector.multi_reduction <add>, %97, %cst_49 [1] : vector<8x8xf32> to vector<8xf32>
    %99 = vector.shape_cast %98 : vector<8xf32> to vector<8x1xf32>
    %100 = vector.broadcast %99 : vector<8x1xf32> to vector<8x8xf32>
    %101 = arith.divf %97, %100 : vector<8x8xf32>
    %cst_50 = arith.constant dense<0.000000e+00> : vector<8x256xf32>
    %102 = tpu.matmul %101, %91, %cst_50 {dimension_numbers = #tpu.dot_dimension_numbers<[1], [0], [0], [1], [0, 0, 1, 1], [], []>} : vector<8x8xf32>, vector<8x256xf32>, vector<8x256xf32> -> vector<8x256xf32>
    %c0_51 = arith.constant 0 : index
    %c0_52 = arith.constant 0 : index
    %c0_53 = arith.constant 0 : index
    %103 = vector.load %arg24[%c0_51, %c0_52, %c0_53] : memref<1x256x256xbf16, #tpu.memory_space<vmem>>, vector<1x256x256xbf16>
    %104 = vector.shape_cast %103 : vector<1x256x256xbf16> to vector<256x256xbf16>
    %105 = arith.truncf %102 : vector<8x256xf32> to vector<8x256xbf16>
    %cst_54 = arith.constant dense<0.000000e+00> : vector<8x256xf32>
    %106 = tpu.matmul %105, %104, %cst_54 {dimension_numbers = #tpu.dot_dimension_numbers<[1], [0], [0], [1], [0, 0, 1, 1], [], []>} : vector<8x256xbf16>, vector<256x256xbf16>, vector<8x256xf32> -> vector<8x256xf32>
    %c0_55 = arith.constant 0 : index
    %c9 = arith.constant 9 : index
    %c0_56 = arith.constant 0 : index
    %107 = vector.load %arg27[%c0_55, %c9, %c0_56] : memref<1x15x256xf32, #tpu.memory_space<vmem>>, vector<1x1x256xf32>
    %108 = vector.shape_cast %107 : vector<1x1x256xf32> to vector<1x256xf32>
    %109 = vector.broadcast %108 : vector<1x256xf32> to vector<8x256xf32>
    %110 = arith.addf %106, %109 : vector<8x256xf32>
    %111 = arith.addf %69, %110 : vector<8x256xf32>
    %c0_57 = arith.constant 0 : index
    %c10 = arith.constant 10 : index
    %c0_58 = arith.constant 0 : index
    %112 = vector.load %arg27[%c0_57, %c10, %c0_58] : memref<1x15x256xf32, #tpu.memory_space<vmem>>, vector<1x1x256xf32>
    %113 = vector.shape_cast %112 : vector<1x1x256xf32> to vector<1x256xf32>
    %c0_59 = arith.constant 0 : index
    %c11 = arith.constant 11 : index
    %c0_60 = arith.constant 0 : index
    %114 = vector.load %arg27[%c0_59, %c11, %c0_60] : memref<1x15x256xf32, #tpu.memory_space<vmem>>, vector<1x1x256xf32>
    %115 = vector.shape_cast %114 : vector<1x1x256xf32> to vector<1x256xf32>
    %cst_61 = arith.constant dense<0.000000e+00> : vector<8xf32>
    %116 = vector.multi_reduction <add>, %111, %cst_61 [1] : vector<8x256xf32> to vector<8xf32>
    %117 = vector.shape_cast %116 : vector<8xf32> to vector<8x1xf32>
    %cst_62 = arith.constant 2.560000e+02 : f32
    %118 = vector.broadcast %cst_62 : f32 to vector<8x1xf32>
    %119 = arith.divf %117, %118 : vector<8x1xf32>
    %120 = vector.broadcast %119 : vector<8x1xf32> to vector<8x256xf32>
    %121 = arith.subf %111, %120 : vector<8x256xf32>
    %122 = arith.mulf %121, %121 : vector<8x256xf32>
    %cst_63 = arith.constant dense<0.000000e+00> : vector<8xf32>
    %123 = vector.multi_reduction <add>, %122, %cst_63 [1] : vector<8x256xf32> to vector<8xf32>
    %124 = vector.shape_cast %123 : vector<8xf32> to vector<8x1xf32>
    %cst_64 = arith.constant 2.560000e+02 : f32
    %125 = vector.broadcast %cst_64 : f32 to vector<8x1xf32>
    %126 = arith.divf %124, %125 : vector<8x1xf32>
    %127 = vector.broadcast %119 : vector<8x1xf32> to vector<8x256xf32>
    %128 = arith.subf %111, %127 : vector<8x256xf32>
    %cst_65 = arith.constant 9.99999974E-6 : f32
    %129 = vector.broadcast %cst_65 : f32 to vector<8x1xf32>
    %130 = arith.addf %126, %129 : vector<8x1xf32>
    %131 = math.rsqrt %130 : vector<8x1xf32>
    %132 = vector.broadcast %131 : vector<8x1xf32> to vector<8x256xf32>
    %133 = arith.mulf %128, %132 : vector<8x256xf32>
    %134 = vector.broadcast %113 : vector<1x256xf32> to vector<8x256xf32>
    %135 = arith.mulf %133, %134 : vector<8x256xf32>
    %136 = vector.broadcast %115 : vector<1x256xf32> to vector<8x256xf32>
    %137 = arith.addf %135, %136 : vector<8x256xf32>
    %c0_66 = arith.constant 0 : index
    %c0_67 = arith.constant 0 : index
    %c0_68 = arith.constant 0 : index
    %138 = vector.load %arg25[%c0_66, %c0_67, %c0_68] : memref<1x256x1024xbf16, #tpu.memory_space<vmem>>, vector<1x256x1024xbf16>
    %139 = vector.shape_cast %138 : vector<1x256x1024xbf16> to vector<256x1024xbf16>
    %140 = arith.truncf %137 : vector<8x256xf32> to vector<8x256xbf16>
    %cst_69 = arith.constant dense<0.000000e+00> : vector<8x1024xf32>
    %141 = tpu.matmul %140, %139, %cst_69 {dimension_numbers = #tpu.dot_dimension_numbers<[1], [0], [0], [1], [0, 0, 1, 1], [], []>} : vector<8x256xbf16>, vector<256x1024xbf16>, vector<8x1024xf32> -> vector<8x1024xf32>
    %c0_70 = arith.constant 0 : index
    %c0_71 = arith.constant 0 : index
    %c0_72 = arith.constant 0 : index
    %142 = vector.load %arg28[%c0_70, %c0_71, %c0_72] : memref<1x1x1024xf32, #tpu.memory_space<vmem>>, vector<1x1x1024xf32>
    %143 = vector.shape_cast %142 : vector<1x1x1024xf32> to vector<1x1024xf32>
    %144 = vector.broadcast %143 : vector<1x1024xf32> to vector<8x1024xf32>
    %145 = arith.addf %141, %144 : vector<8x1024xf32>
    %cst_73 = arith.constant 0.000000e+00 : f32
    %146 = vector.broadcast %cst_73 : f32 to vector<8x1024xf32>
    %147 = arith.maximumf %145, %146 : vector<8x1024xf32>
    %c0_74 = arith.constant 0 : index
    %c0_75 = arith.constant 0 : index
    %c0_76 = arith.constant 0 : index
    %148 = vector.load %arg26[%c0_74, %c0_75, %c0_76] : memref<1x1024x256xbf16, #tpu.memory_space<vmem>>, vector<1x1024x256xbf16>
    %149 = vector.shape_cast %148 : vector<1x1024x256xbf16> to vector<1024x256xbf16>
    %150 = arith.truncf %147 : vector<8x1024xf32> to vector<8x1024xbf16>
    %cst_77 = arith.constant dense<0.000000e+00> : vector<8x256xf32>
    %151 = tpu.matmul %150, %149, %cst_77 {dimension_numbers = #tpu.dot_dimension_numbers<[1], [0], [0], [1], [0, 0, 1, 1], [], []>} : vector<8x1024xbf16>, vector<1024x256xbf16>, vector<8x256xf32> -> vector<8x256xf32>
    %c0_78 = arith.constant 0 : index
    %c12 = arith.constant 12 : index
    %c0_79 = arith.constant 0 : index
    %152 = vector.load %arg27[%c0_78, %c12, %c0_79] : memref<1x15x256xf32, #tpu.memory_space<vmem>>, vector<1x1x256xf32>
    %153 = vector.shape_cast %152 : vector<1x1x256xf32> to vector<1x256xf32>
    %154 = vector.broadcast %153 : vector<1x256xf32> to vector<8x256xf32>
    %155 = arith.addf %151, %154 : vector<8x256xf32>
    %156 = arith.addf %137, %155 : vector<8x256xf32>
    %c0_80 = arith.constant 0 : index
    %c13 = arith.constant 13 : index
    %c0_81 = arith.constant 0 : index
    %157 = vector.load %arg27[%c0_80, %c13, %c0_81] : memref<1x15x256xf32, #tpu.memory_space<vmem>>, vector<1x1x256xf32>
    %158 = vector.shape_cast %157 : vector<1x1x256xf32> to vector<1x256xf32>
    %c0_82 = arith.constant 0 : index
    %c14 = arith.constant 14 : index
    %c0_83 = arith.constant 0 : index
    %159 = vector.load %arg27[%c0_82, %c14, %c0_83] : memref<1x15x256xf32, #tpu.memory_space<vmem>>, vector<1x1x256xf32>
    %160 = vector.shape_cast %159 : vector<1x1x256xf32> to vector<1x256xf32>
    %cst_84 = arith.constant dense<0.000000e+00> : vector<8xf32>
    %161 = vector.multi_reduction <add>, %156, %cst_84 [1] : vector<8x256xf32> to vector<8xf32>
    %162 = vector.shape_cast %161 : vector<8xf32> to vector<8x1xf32>
    %cst_85 = arith.constant 2.560000e+02 : f32
    %163 = vector.broadcast %cst_85 : f32 to vector<8x1xf32>
    %164 = arith.divf %162, %163 : vector<8x1xf32>
    %165 = vector.broadcast %164 : vector<8x1xf32> to vector<8x256xf32>
    %166 = arith.subf %156, %165 : vector<8x256xf32>
    %167 = arith.mulf %166, %166 : vector<8x256xf32>
    %cst_86 = arith.constant dense<0.000000e+00> : vector<8xf32>
    %168 = vector.multi_reduction <add>, %167, %cst_86 [1] : vector<8x256xf32> to vector<8xf32>
    %169 = vector.shape_cast %168 : vector<8xf32> to vector<8x1xf32>
    %cst_87 = arith.constant 2.560000e+02 : f32
    %170 = vector.broadcast %cst_87 : f32 to vector<8x1xf32>
    %171 = arith.divf %169, %170 : vector<8x1xf32>
    %172 = vector.broadcast %164 : vector<8x1xf32> to vector<8x256xf32>
    %173 = arith.subf %156, %172 : vector<8x256xf32>
    %cst_88 = arith.constant 9.99999974E-6 : f32
    %174 = vector.broadcast %cst_88 : f32 to vector<8x1xf32>
    %175 = arith.addf %171, %174 : vector<8x1xf32>
    %176 = math.rsqrt %175 : vector<8x1xf32>
    %177 = vector.broadcast %176 : vector<8x1xf32> to vector<8x256xf32>
    %178 = arith.mulf %173, %177 : vector<8x256xf32>
    %179 = vector.broadcast %158 : vector<1x256xf32> to vector<8x256xf32>
    %180 = arith.mulf %178, %179 : vector<8x256xf32>
    %181 = vector.broadcast %160 : vector<1x256xf32> to vector<8x256xf32>
    %182 = arith.addf %180, %181 : vector<8x256xf32>
    %c0_89 = arith.constant 0 : index
    %c0_90 = arith.constant 0 : index
    %183 = vector.load %arg33[%c0_89, %c0_90] : memref<8x256xf32, #tpu.memory_space<vmem>>, vector<8x256xf32>
    tpu.vector_store %arg33[%c0_89, %c0_90], %182 {strides = array<i32>} : memref<8x256xf32, #tpu.memory_space<vmem>>, vector<8x256xf32>,
    %c1_i32 = arith.constant 1 : i32
    %184 = arith.cmpi eq, %arg0, %c1_i32 : i32
    %185 = arith.extui %184 : i1 to i32
    %c0_i32_91 = arith.constant 0 : i32
    %186 = arith.cmpi ne, %185, %c0_i32_91 : i32
    scf.if %186 {
      %c0_92 = arith.constant 0 : index
      %c0_93 = arith.constant 0 : index
      %187 = vector.load %arg31[%c0_92, %c0_93] : memref<1x1664xf32, #tpu.memory_space<vmem>>, vector<1x256xf32>
      %c0_94 = arith.constant 0 : index
      %c256 = arith.constant 256 : index
      %188 = vector.load %arg31[%c0_94, %c256] : memref<1x1664xf32, #tpu.memory_space<vmem>>, vector<1x256xf32>
      %c0_95 = arith.constant 0 : index
      %c512 = arith.constant 512 : index
      %189 = vector.load %arg31[%c0_95, %c512] : memref<1x1664xf32, #tpu.memory_space<vmem>>, vector<1x512xf32>
      %c0_96 = arith.constant 0 : index
      %c1024 = arith.constant 1024 : index
      %190 = vector.load %arg31[%c0_96, %c1024] : memref<1x1664xf32, #tpu.memory_space<vmem>>, vector<1x256xf32>
      %c0_97 = arith.constant 0 : index
      %c1280 = arith.constant 1280 : index
      %191 = vector.load %arg31[%c0_97, %c1280] : memref<1x1664xf32, #tpu.memory_space<vmem>>, vector<1x256xf32>
      %c0_98 = arith.constant 0 : index
      %c1536 = arith.constant 1536 : index
      %192 = vector.load %arg31[%c0_98, %c1536] : memref<1x1664xf32, #tpu.memory_space<vmem>>, vector<1x8xf32>
      %c0_99 = arith.constant 0 : index
      %c0_100 = arith.constant 0 : index
      %193 = vector.load %arg34[%c0_99, %c0_100] : memref<8x256xf32, #tpu.memory_space<vmem>>, vector<8x256xf32>
      %c0_101 = arith.constant 0 : index
      %c0_102 = arith.constant 0 : index
      %194 = vector.load %arg33[%c0_101, %c0_102] : memref<8x256xf32, #tpu.memory_space<vmem>>, vector<8x256xf32>
      %cst_103 = arith.constant dense<0.000000e+00> : vector<8xf32>
      %195 = vector.multi_reduction <add>, %194, %cst_103 [1] : vector<8x256xf32> to vector<8xf32>
      %196 = vector.shape_cast %195 : vector<8xf32> to vector<8x1xf32>
      %cst_104 = arith.constant 2.560000e+02 : f32
      %197 = vector.broadcast %cst_104 : f32 to vector<8x1xf32>
      %198 = arith.divf %196, %197 : vector<8x1xf32>
      %199 = vector.broadcast %198 : vector<8x1xf32> to vector<8x256xf32>
      %200 = arith.subf %194, %199 : vector<8x256xf32>
      %201 = arith.mulf %200, %200 : vector<8x256xf32>
      %cst_105 = arith.constant dense<0.000000e+00> : vector<8xf32>
      %202 = vector.multi_reduction <add>, %201, %cst_105 [1] : vector<8x256xf32> to vector<8xf32>
      %203 = vector.shape_cast %202 : vector<8xf32> to vector<8x1xf32>
      %cst_106 = arith.constant 2.560000e+02 : f32
      %204 = vector.broadcast %cst_106 : f32 to vector<8x1xf32>
      %205 = arith.divf %203, %204 : vector<8x1xf32>
      %206 = vector.broadcast %198 : vector<8x1xf32> to vector<8x256xf32>
      %207 = arith.subf %194, %206 : vector<8x256xf32>
      %cst_107 = arith.constant 9.99999974E-6 : f32
      %208 = vector.broadcast %cst_107 : f32 to vector<8x1xf32>
      %209 = arith.addf %205, %208 : vector<8x1xf32>
      %210 = math.rsqrt %209 : vector<8x1xf32>
      %211 = vector.broadcast %210 : vector<8x1xf32> to vector<8x256xf32>
      %212 = arith.mulf %207, %211 : vector<8x256xf32>
      %213 = vector.broadcast %187 : vector<1x256xf32> to vector<8x256xf32>
      %214 = arith.mulf %212, %213 : vector<8x256xf32>
      %215 = vector.broadcast %188 : vector<1x256xf32> to vector<8x256xf32>
      %216 = arith.addf %214, %215 : vector<8x256xf32>
      %c0_108 = arith.constant 0 : index
      %c0_109 = arith.constant 0 : index
      %217 = vector.load %arg29[%c0_108, %c0_109] : memref<512x512xbf16, #tpu.memory_space<vmem>>, vector<256x512xbf16>
      %218 = arith.truncf %216 : vector<8x256xf32> to vector<8x256xbf16>
      %cst_110 = arith.constant dense<0.000000e+00> : vector<8x512xf32>
      %219 = tpu.matmul %218, %217, %cst_110 {dimension_numbers = #tpu.dot_dimension_numbers<[1], [0], [0], [1], [0, 0, 1, 1], [], []>} : vector<8x256xbf16>, vector<256x512xbf16>, vector<8x512xf32> -> vector<8x512xf32>
      %c256_111 = arith.constant 256 : index
      %c0_112 = arith.constant 0 : index
      %220 = vector.load %arg29[%c256_111, %c0_112] : memref<512x512xbf16, #tpu.memory_space<vmem>>, vector<256x512xbf16>
      %221 = arith.truncf %193 : vector<8x256xf32> to vector<8x256xbf16>
      %cst_113 = arith.constant dense<0.000000e+00> : vector<8x512xf32>
      %222 = tpu.matmul %221, %220, %cst_113 {dimension_numbers = #tpu.dot_dimension_numbers<[1], [0], [0], [1], [0, 0, 1, 1], [], []>} : vector<8x256xbf16>, vector<256x512xbf16>, vector<8x512xf32> -> vector<8x512xf32>
      %223 = arith.addf %219, %222 : vector<8x512xf32>
      %224 = vector.broadcast %189 : vector<1x512xf32> to vector<8x512xf32>
      %225 = arith.addf %223, %224 : vector<8x512xf32>
      %226 = vector.extract_strided_slice %225 {offsets = [0, 0], sizes = [8, 256], strides = [1, 1]} : vector<8x512xf32> to vector<8x256xf32>
      %227 = vector.extract_strided_slice %225 {offsets = [0, 256], sizes = [8, 256], strides = [1, 1]} : vector<8x512xf32> to vector<8x256xf32>
      %cst_114 = arith.constant 5.000000e-01 : f32
      %228 = vector.broadcast %cst_114 : f32 to vector<8x256xf32>
      %229 = arith.mulf %228, %227 : vector<8x256xf32>
      %230 = math.tanh %229 : vector<8x256xf32>
      %cst_115 = arith.constant 1.000000e+00 : f32
      %231 = vector.broadcast %cst_115 : f32 to vector<8x256xf32>
      %232 = arith.addf %230, %231 : vector<8x256xf32>
      %cst_116 = arith.constant 5.000000e-01 : f32
      %233 = vector.broadcast %cst_116 : f32 to vector<8x256xf32>
      %234 = arith.mulf %233, %232 : vector<8x256xf32>
      %235 = arith.mulf %226, %234 : vector<8x256xf32>
      %cst_117 = arith.constant dense<0.000000e+00> : vector<8xf32>
      %236 = vector.multi_reduction <add>, %235, %cst_117 [1] : vector<8x256xf32> to vector<8xf32>
      %237 = vector.shape_cast %236 : vector<8xf32> to vector<8x1xf32>
      %cst_118 = arith.constant 2.560000e+02 : f32
      %238 = vector.broadcast %cst_118 : f32 to vector<8x1xf32>
      %239 = arith.divf %237, %238 : vector<8x1xf32>
      %240 = vector.broadcast %239 : vector<8x1xf32> to vector<8x256xf32>
      %241 = arith.subf %235, %240 : vector<8x256xf32>
      %242 = arith.mulf %241, %241 : vector<8x256xf32>
      %cst_119 = arith.constant dense<0.000000e+00> : vector<8xf32>
      %243 = vector.multi_reduction <add>, %242, %cst_119 [1] : vector<8x256xf32> to vector<8xf32>
      %244 = vector.shape_cast %243 : vector<8xf32> to vector<8x1xf32>
      %cst_120 = arith.constant 2.560000e+02 : f32
      %245 = vector.broadcast %cst_120 : f32 to vector<8x1xf32>
      %246 = arith.divf %244, %245 : vector<8x1xf32>
      %247 = vector.broadcast %239 : vector<8x1xf32> to vector<8x256xf32>
      %248 = arith.subf %235, %247 : vector<8x256xf32>
      %cst_121 = arith.constant 9.99999974E-6 : f32
      %249 = vector.broadcast %cst_121 : f32 to vector<8x1xf32>
      %250 = arith.addf %246, %249 : vector<8x1xf32>
      %251 = math.rsqrt %250 : vector<8x1xf32>
      %252 = vector.broadcast %251 : vector<8x1xf32> to vector<8x256xf32>
      %253 = arith.mulf %248, %252 : vector<8x256xf32>
      %254 = vector.broadcast %190 : vector<1x256xf32> to vector<8x256xf32>
      %255 = arith.mulf %253, %254 : vector<8x256xf32>
      %256 = vector.broadcast %191 : vector<1x256xf32> to vector<8x256xf32>
      %257 = arith.addf %255, %256 : vector<8x256xf32>
      %258 = arith.addf %193, %257 : vector<8x256xf32>
      %c0_122 = arith.constant 0 : index
      %c0_123 = arith.constant 0 : index
      %259 = vector.load %arg30[%c0_122, %c0_123] : memref<256x8xbf16, #tpu.memory_space<vmem>>, vector<256x8xbf16>
      %260 = arith.truncf %258 : vector<8x256xf32> to vector<8x256xbf16>
      %cst_124 = arith.constant dense<0.000000e+00> : vector<8x8xf32>
      %261 = tpu.matmul %260, %259, %cst_124 {dimension_numbers = #tpu.dot_dimension_numbers<[1], [0], [0], [1], [0, 0, 1, 1], [], []>} : vector<8x256xbf16>, vector<256x8xbf16>, vector<8x8xf32> -> vector<8x8xf32>
      %262 = vector.broadcast %192 : vector<1x8xf32> to vector<8x8xf32>
      %263 = arith.addf %261, %262 : vector<8x8xf32>
      %c0_125 = arith.constant 0 : index
      %c0_126 = arith.constant 0 : index
      %264 = vector.load %arg32[%c0_125, %c0_126] : memref<8x8xf32, #tpu.memory_space<vmem>>, vector<8x8xf32>
      tpu.vector_store %arg32[%c0_125, %c0_126], %263 {strides = array<i32>} : memref<8x8xf32, #tpu.memory_space<vmem>>, vector<8x8xf32>,
    } else {
    }
    return
  }
  func.func @transform_0(%arg0: i32) -> (i32, i32) {
    %c0_i32 = arith.constant 0 : i32
    %c0_i32_0 = arith.constant 0 : i32
    %c0_i32_1 = arith.constant 0 : i32
    return %c0_i32, %c0_i32_0 : i32, i32
  }
  func.func @transform_1(%arg0: i32) -> (i32, i32) {
    %c0_i32 = arith.constant 0 : i32
    %c0_i32_0 = arith.constant 0 : i32
    %c0_i32_1 = arith.constant 0 : i32
    return %c0_i32, %c0_i32_0 : i32, i32
  }
  func.func @transform_2(%arg0: i32) -> (i32, i32) {
    %c0_i32 = arith.constant 0 : i32
    %c0_i32_0 = arith.constant 0 : i32
    %c0_i32_1 = arith.constant 0 : i32
    return %c0_i32, %c0_i32_0 : i32, i32
  }
  func.func @transform_3(%arg0: i32) -> (i32, i32) {
    %c0_i32 = arith.constant 0 : i32
    %c0_i32_0 = arith.constant 0 : i32
    %c0_i32_1 = arith.constant 0 : i32
    return %c0_i32, %c0_i32_0 : i32, i32
  }
  func.func @transform_4(%arg0: i32) -> (i32, i32) {
    %c0_i32 = arith.constant 0 : i32
    %c0_i32_0 = arith.constant 0 : i32
    %c0_i32_1 = arith.constant 0 : i32
    return %c0_i32, %c0_i32_0 : i32, i32
  }
  func.func @transform_5(%arg0: i32) -> (i32, i32) {
    %c0_i32 = arith.constant 0 : i32
    %c0_i32_0 = arith.constant 0 : i32
    %c0_i32_1 = arith.constant 0 : i32
    return %c0_i32, %c0_i32_0 : i32, i32
  }
  func.func @transform_6(%arg0: i32) -> (i32, i32) {
    %c0_i32 = arith.constant 0 : i32
    %c0_i32_0 = arith.constant 0 : i32
    %c0_i32_1 = arith.constant 0 : i32
    return %c0_i32, %c0_i32_0 : i32, i32
  }
  func.func @transform_7(%arg0: i32) -> (i32, i32) {
    %c0_i32 = arith.constant 0 : i32
    %c0_i32_0 = arith.constant 0 : i32
    %c0_i32_1 = arith.constant 0 : i32
    return %c0_i32, %c0_i32_0 : i32, i32
  }
  func.func @transform_8(%arg0: i32) -> (i32, i32) {
    %c0_i32 = arith.constant 0 : i32
    %c0_i32_0 = arith.constant 0 : i32
    %c0_i32_1 = arith.constant 0 : i32
    return %c0_i32, %c0_i32_0 : i32, i32
  }
  func.func @transform_9(%arg0: i32) -> (i32, i32) {
    %c0_i32 = arith.constant 0 : i32
    %c0_i32_0 = arith.constant 0 : i32
    %c0_i32_1 = arith.constant 0 : i32
    return %c0_i32, %c0_i32_0 : i32, i32
  }
  func.func @transform_10(%arg0: i32) -> (i32, i32) {
    %c0_i32 = arith.constant 0 : i32
    %c0_i32_0 = arith.constant 0 : i32
    %c0_i32_1 = arith.constant 0 : i32
    return %c0_i32, %c0_i32_0 : i32, i32
  }
  func.func @transform_11(%arg0: i32) -> (i32, i32) {
    %c0_i32 = arith.constant 0 : i32
    %c0_i32_0 = arith.constant 0 : i32
    %c0_i32_1 = arith.constant 0 : i32
    return %c0_i32, %c0_i32_0 : i32, i32
  }
  func.func @transform_12(%arg0: i32) -> (i32, i32) {
    %c0_i32 = arith.constant 0 : i32
    %c0_i32_0 = arith.constant 0 : i32
    %c0_i32_1 = arith.constant 0 : i32
    return %c0_i32, %c0_i32_0 : i32, i32
  }
  func.func @transform_13(%arg0: i32) -> (i32, i32) {
    %c0_i32 = arith.constant 0 : i32
    %c0_i32_0 = arith.constant 0 : i32
    %c0_i32_1 = arith.constant 0 : i32
    return %c0_i32, %c0_i32_0 : i32, i32
  }
  func.func @transform_14(%arg0: i32) -> (i32, i32) {
    %c0_i32 = arith.constant 0 : i32
    %c0_i32_0 = arith.constant 0 : i32
    %c0_i32_1 = arith.constant 0 : i32
    return %c0_i32, %c0_i32_0 : i32, i32
  }
  func.func @transform_15(%arg0: i32) -> (i32, i32, i32) {
    %c0_i32 = arith.constant 0 : i32
    %c0_i32_0 = arith.constant 0 : i32
    %c0_i32_1 = arith.constant 0 : i32
    %c0_i32_2 = arith.constant 0 : i32
    return %c0_i32, %c0_i32_0, %c0_i32_1 : i32, i32, i32
  }
  func.func @transform_16(%arg0: i32) -> (i32, i32) {
    %c0_i32 = arith.constant 0 : i32
    %c0_i32_0 = arith.constant 0 : i32
    %c0_i32_1 = arith.constant 0 : i32
    return %c0_i32, %c0_i32_0 : i32, i32
  }
  func.func @transform_17(%arg0: i32) -> (i32, i32) {
    %c0_i32 = arith.constant 0 : i32
    %c0_i32_0 = arith.constant 0 : i32
    %c0_i32_1 = arith.constant 0 : i32
    return %c0_i32, %c0_i32_0 : i32, i32
  }
  func.func @transform_18(%arg0: i32) -> (i32, i32) {
    %c0_i32 = arith.constant 0 : i32
    %c0_i32_0 = arith.constant 0 : i32
    %c0_i32_1 = arith.constant 0 : i32
    return %c0_i32, %c0_i32_0 : i32, i32
  }
  func.func @transform_19(%arg0: i32) -> (i32, i32, i32) {
    %c0_i32 = arith.constant 0 : i32
    %c0_i32_0 = arith.constant 0 : i32
    %c0_i32_1 = arith.constant 0 : i32
    return %arg0, %c0_i32, %c0_i32_0 : i32, i32, i32
  }
  func.func @transform_20(%arg0: i32) -> (i32, i32, i32) {
    %c0_i32 = arith.constant 0 : i32
    %c0_i32_0 = arith.constant 0 : i32
    %c0_i32_1 = arith.constant 0 : i32
    return %arg0, %c0_i32, %c0_i32_0 : i32, i32, i32
  }
  func.func @transform_21(%arg0: i32) -> (i32, i32, i32) {
    %c0_i32 = arith.constant 0 : i32
    %c0_i32_0 = arith.constant 0 : i32
    %c0_i32_1 = arith.constant 0 : i32
    return %arg0, %c0_i32, %c0_i32_0 : i32, i32, i32
  }
  func.func @transform_22(%arg0: i32) -> (i32, i32, i32) {
    %c0_i32 = arith.constant 0 : i32
    %c0_i32_0 = arith.constant 0 : i32
    %c0_i32_1 = arith.constant 0 : i32
    return %arg0, %c0_i32, %c0_i32_0 : i32, i32, i32
  }
  func.func @transform_23(%arg0: i32) -> (i32, i32, i32) {
    %c0_i32 = arith.constant 0 : i32
    %c0_i32_0 = arith.constant 0 : i32
    %c0_i32_1 = arith.constant 0 : i32
    return %arg0, %c0_i32, %c0_i32_0 : i32, i32, i32
  }
  func.func @transform_24(%arg0: i32) -> (i32, i32, i32) {
    %c0_i32 = arith.constant 0 : i32
    %c0_i32_0 = arith.constant 0 : i32
    %c0_i32_1 = arith.constant 0 : i32
    return %arg0, %c0_i32, %c0_i32_0 : i32, i32, i32
  }
  func.func @transform_25(%arg0: i32) -> (i32, i32, i32) {
    %c0_i32 = arith.constant 0 : i32
    %c0_i32_0 = arith.constant 0 : i32
    %c0_i32_1 = arith.constant 0 : i32
    return %arg0, %c0_i32, %c0_i32_0 : i32, i32, i32
  }
  func.func @transform_26(%arg0: i32) -> (i32, i32, i32) {
    %c0_i32 = arith.constant 0 : i32
    %c0_i32_0 = arith.constant 0 : i32
    %c0_i32_1 = arith.constant 0 : i32
    return %arg0, %c0_i32, %c0_i32_0 : i32, i32, i32
  }
  func.func @transform_27(%arg0: i32) -> (i32, i32, i32) {
    %c0_i32 = arith.constant 0 : i32
    %c0_i32_0 = arith.constant 0 : i32
    %c0_i32_1 = arith.constant 0 : i32
    return %arg0, %c0_i32, %c0_i32_0 : i32, i32, i32
  }
  func.func @transform_28(%arg0: i32) -> (i32, i32) {
    %c0_i32 = arith.constant 0 : i32
    %c0_i32_0 = arith.constant 0 : i32
    %c0_i32_1 = arith.constant 0 : i32
    return %c0_i32, %c0_i32_0 : i32, i32
  }
  func.func @transform_29(%arg0: i32) -> (i32, i32) {
    %c0_i32 = arith.constant 0 : i32
    %c0_i32_0 = arith.constant 0 : i32
    %c0_i32_1 = arith.constant 0 : i32
    return %c0_i32, %c0_i32_0 : i32, i32
  }
  func.func @transform_30(%arg0: i32) -> (i32, i32) {
    %c0_i32 = arith.constant 0 : i32
    %c0_i32_0 = arith.constant 0 : i32
    %c0_i32_1 = arith.constant 0 : i32
    return %c0_i32, %c0_i32_0 : i32, i32
  }
  func.func @transform_31(%arg0: i32) -> (i32, i32) {
    %c0_i32 = arith.constant 0 : i32
    %c0_i32_0 = arith.constant 0 : i32
    %c0_i32_1 = arith.constant 0 : i32
    return %c0_i32, %c0_i32_0 : i32, i32
  }
}

</mosaic_0001>

<llo_original>
// kernel: block_forward.1
$region0: #{block_forward.1}
  #allocation0 [shape = 'u32[]', space=smem, size = 0x4, offset = 0x4, fixed_abs, tag = 'smem constant byte address 0x4 - core index']
  #allocation1 [shape = 'u32[72,128]{1,0:T(1,128)}', space=vmem, size = 0x9000, scoped, tag = 'internal scratch']
  #allocation2 [shape = 'f32[8,256]{1,0:T(8,128)}', space=vmem, size = 0x2000, scoped, tag = 'scratch operand']
  #allocation3 [shape = 'f32[8,256]{1,0:T(8,128)}', space=vmem, size = 0x2000, scoped, tag = 'scratch operand']
  %s0 = inlined_call_operand.smem [shape: u32[32], index: -1, kind: input, shape index: {}]
  %s1 = sld [smem:[%s0]]
  %s2 = scalar_lea.smem %s0, 1
  %s3 = sld [smem:[%s2]]
  %s4 = scalar_lea.smem %s0, 2
  %s5 = sld [smem:[%s4]]
  %s6 = scalar_lea.smem %s0, 3
  %s7 = sld [smem:[%s6]]
  %s8 = scalar_lea.smem %s0, 4
  %s9 = sld [smem:[%s8]]
  %s10 = scalar_lea.smem %s0, 5
  %s11 = sld [smem:[%s10]]
  %s12 = scalar_lea.smem %s0, 6
  %s13 = sld [smem:[%s12]]
  %s14 = scalar_lea.smem %s0, 7
  %s15 = sld [smem:[%s14]]
  %s16 = scalar_lea.smem %s0, 8
  %s17 = sld [smem:[%s16]]
  %s18 = scalar_lea.smem %s0, 9
  %s19 = sld [smem:[%s18]]
  %s20 = scalar_lea.smem %s0, 10
  %s21 = sld [smem:[%s20]]
  %s22 = scalar_lea.smem %s0, 11
  %s23 = sld [smem:[%s22]]
  %s24 = scalar_lea.smem %s0, 12
  %s25 = sld [smem:[%s24]]
  %s26 = scalar_lea.smem %s0, 13
  %s27 = sld [smem:[%s26]]
  %s28 = scalar_lea.smem %s0, 14
  %s29 = sld [smem:[%s28]]
  %s30 = scalar_lea.smem %s0, 15
  %s31 = sld [smem:[%s30]]
  %s32 = scalar_lea.smem %s0, 16
  %s33 = sld [smem:[%s32]]
  %s34 = scalar_lea.smem %s0, 17
  %s35 = sld [smem:[%s34]]
  %s36 = scalar_lea.smem %s0, 18
  %s37 = sld [smem:[%s36]]
  %s38 = scalar_lea.smem %s0, 19
  %s39 = sld [smem:[%s38]]
  %s40 = scalar_lea.smem %s0, 20
  %s41 = sld [smem:[%s40]]
  %s42 = scalar_lea.smem %s0, 21
  %s43 = sld [smem:[%s42]]
  %s44 = scalar_lea.smem %s0, 22
  %s45 = sld [smem:[%s44]]
  %s46 = scalar_lea.smem %s0, 23
  %s47 = sld [smem:[%s46]]
  %s48 = scalar_lea.smem %s0, 24
  %s49 = sld [smem:[%s48]]
  %s50 = scalar_lea.smem %s0, 25
  %s51 = sld [smem:[%s50]]
  %s52 = scalar_lea.smem %s0, 26
  %s53 = sld [smem:[%s52]]
  %s54 = scalar_lea.smem %s0, 27
  %s55 = sld [smem:[%s54]]
  %s56 = scalar_lea.smem %s0, 28
  %s57 = sld [smem:[%s56]]
  %s58 = scalar_lea.smem %s0, 29
  %s59 = sld [smem:[%s58]]
  %s60 = scalar_lea.smem %s0, 30
  %s61 = sld [smem:[%s60]]
  %s62 = scalar_lea.smem %s0, 31
  %s63 = sld [smem:[%s62]]
  %s64 = sld [smem:[#allocation0]]
  $region197: #{block_forward.1} parent=0
    _
  %s66 = ssub.s32 1, %s64
  %s67 = scalar_select 0, %s66, %s64
  $region1: #{block_forward.1} parent=0
    #allocation4 [shape = 'u8[786432]{0}', space=vmem, size = 0xc0000, scoped, tag = 'input window, operand 19']
    #allocation5 [shape = 's32[2]{0}', space=sflag, size = 0x8, scoped, tag = 'scoped memory for block_forward.1']
    #allocation6 [shape = 's32[2]{0}', space=sflag, size = 0x8, scoped, tag = 'scoped memory for block_forward.1']
    #allocation7 [shape = 'u8[262144]{0}', space=vmem, size = 0x40000, scoped, tag = 'input window, operand 20']
    #allocation8 [shape = 's32[2]{0}', space=sflag, size = 0x8, scoped, tag = 'scoped memory for block_forward.1']
    #allocation9 [shape = 'u8[262144]{0}', space=vmem, size = 0x40000, scoped, tag = 'input window, operand 21']
    #allocation10 [shape = 'u8[524288]{0}', space=vmem, size = 0x80000, scoped, tag = 'input window, operand 22']
    #allocation11 [shape = 's32[2]{0}', space=sflag, size = 0x8, scoped, tag = 'scoped memory for block_forward.1']
    #allocation12 [shape = 'u8[262144]{0}', space=vmem, size = 0x40000, scoped, tag = 'input window, operand 23']
    #allocation13 [shape = 'u8[1048576]{0}', space=vmem, size = 0x100000, scoped, tag = 'input window, operand 24']
    #allocation14 [shape = 's32[2]{0}', space=sflag, size = 0x8, scoped, tag = 'scoped memory for block_forward.1']
    #allocation15 [shape = 'u8[1048576]{0}', space=vmem, size = 0x100000, scoped, tag = 'input window, operand 25']
    #allocation16 [shape = 'u8[524288]{0}', space=vmem, size = 0x80000, scoped, tag = 'input window, operand 28, single buffered']
    #allocation17 [shape = 's32[1]{0}', space=sflag, size = 0x4, scoped, tag = 'scoped memory for block_forward.1']
    #allocation18 [shape = 'u8[4096]{0}', space=vmem, size = 0x1000, scoped, tag = 'output window, operand 0, single buffered']
    %68 = vsyncpa [#allocation5], 0
    %s69 = scalar_lea.sflag [#allocation5], 1
    %70 = vsyncpa %s69, 0
    %71 = vsyncpa [#allocation8], 0
    %s72 = scalar_lea.sflag [#allocation8], 1
    %73 = vsyncpa %s72, 0
    %74 = vsyncpa [#allocation11], 0
    %s75 = scalar_lea.sflag [#allocation11], 1
    %76 = vsyncpa %s75, 0
    %77 = vsyncpa [#allocation14], 0
    %s78 = scalar_lea.sflag [#allocation14], 1
    %79 = vsyncpa %s78, 0
    %80 = vsyncpa [#allocation17], 0
    %81 = vsyncpa [#allocation6], 0
    loop: start=0, step=1, limit=4
    $region2: #{block_forward.1} parent=1 // loop_pre_header
      _
    $region3: #{block_forward.1} parent=1 // loop_header
      %s83 = sphi 0, %s87
      %p84 = scmp.ge.s32.totalorder %s83, 4
      %s91 = sphi 0, %s91
      %s93 = sphi 0, %s91
      %s94 = sphi 0, %s93
      %s108 = sphi 0, %s94
      %s112 = sphi 0, %s112
      %s114 = sphi 0, %s112
      %s115 = sphi 0, %s114
      %s129 = sphi 0, %s115
      %s133 = sphi 0, %s133
      %s135 = sphi 0, %s133
      %s136 = sphi 0, %s135
      %s150 = sphi 0, %s136
      %s154 = sphi 0, %s154
      %s156 = sphi 0, %s154
      %s157 = sphi 0, %s156
      %s171 = sphi 0, %s157
      %s175 = sphi 0, %s175
      %s177 = sphi 0, %s175
      %s178 = sphi 0, %s177
      %s192 = sphi 0, %s178
      %s196 = sphi 0, %s196
      %s198 = sphi 0, %s196
      %s199 = sphi 0, %s198
      %s213 = sphi 0, %s199
      %s217 = sphi 0, %s217
      %s219 = sphi 0, %s217
      %s220 = sphi 0, %s219
      %s234 = sphi 0, %s220
      %s238 = sphi 0, %s238
      %s240 = sphi 0, %s238
      %s241 = sphi 0, %s240
      %s255 = sphi 0, %s241
      %s259 = sphi 0, %s259
      %s261 = sphi 0, %s259
      %s262 = sphi 0, %s261
      %s276 = sphi 0, %s262
      %s280 = sphi 0, %s280
      %s282 = sphi 0, %s280
      %s283 = sphi 0, %s282
      %s297 = sphi 0, %s283
      %s301 = sphi 0, %s301
      %s303 = sphi 0, %s301
      %s304 = sphi 0, %s303
      %s318 = sphi 0, %s304
      %s322 = sphi 0, %s322
      %s324 = sphi 0, %s322
      %s325 = sphi 0, %s324
      %s339 = sphi 0, %s325
      %s343 = sphi 0, %s343
      %s345 = sphi 0, %s343
      %s346 = sphi 0, %s345
      %s360 = sphi 0, %s346
      %s364 = sphi 0, %s364
      %s366 = sphi 0, %s364
      %s367 = sphi 0, %s366
      %s381 = sphi 0, %s367
      %s385 = sphi 0, %s385
      %s387 = sphi 0, %s385
      %s388 = sphi 0, %s387
      %s402 = sphi 0, %s388
      %s406 = sphi 0, %s406
      %s408 = sphi 0, %s406
      %s409 = sphi 0, %s408
      %s423 = sphi 0, %s409
      %s427 = sphi 0, %s427
      %s429 = sphi 0, %s427
      %s430 = sphi 0, %s429
      %s444 = sphi 0, %s430
      %s448 = sphi 0, %s448
      %s450 = sphi 0, %s448
      %s451 = sphi 0, %s450
      %s465 = sphi 0, %s451
      %s469 = sphi 0, %s469
      %s471 = sphi 0, %s469
      %s472 = sphi 0, %s471
      %s486 = sphi 0, %s472
      %s492 = sphi 0, %s494
      %s495 = sphi 0, %s492
      %s496 = sphi 0, %s495
      %s512 = sphi 0, %s496
      %s518 = sphi 0, %s520
      %s521 = sphi 0, %s518
      %s522 = sphi 0, %s521
      %s538 = sphi 0, %s522
      %s544 = sphi 0, %s546
      %s547 = sphi 0, %s544
      %s548 = sphi 0, %s547
      %s564 = sphi 0, %s548
      %s570 = sphi 0, %s572
      %s573 = sphi 0, %s570
      %s574 = sphi 0, %s573
      %s590 = sphi 0, %s574
      %s596 = sphi 0, %s598
      %s599 = sphi 0, %s596
      %s600 = sphi 0, %s599
      %s616 = sphi 0, %s600
      %s622 = sphi 0, %s624
      %s625 = sphi 0, %s622
      %s626 = sphi 0, %s625
      %s642 = sphi 0, %s626
      %s648 = sphi 0, %s650
      %s651 = sphi 0, %s648
      %s652 = sphi 0, %s651
      %s668 = sphi 0, %s652
      %s674 = sphi 0, %s676
      %s677 = sphi 0, %s674
      %s678 = sphi 0, %s677
      %s694 = sphi 0, %s678
      %s700 = sphi 0, %s702
      %s703 = sphi 0, %s700
      %s704 = sphi 0, %s703
      %s720 = sphi 0, %s704
      %s724 = sphi 0, %s724
      %s726 = sphi 0, %s724
      %s727 = sphi 0, %s726
      %s741 = sphi 0, %s727
      %s745 = sphi 0, %s745
      %s747 = sphi 0, %s745
      %s748 = sphi 0, %s747
      %s762 = sphi 0, %s748
      %s766 = sphi 0, %s766
      %s768 = sphi 0, %s766
      %s769 = sphi 0, %s768
      %s783 = sphi 0, %s769
      %s787 = sphi 0, %s787
      %s789 = sphi 0, %s787
      %s790 = sphi 0, %s789
      %s804 = sphi 0, %s790
    $region4: #{block_forward.1} parent=1 // loop_header_branch
      %86 = sbr.rel (%p84) target = $region8
    $region5: #{block_forward.1} parent=1 // loop_body
      %s88 = ssub.s32 %s83, 1
      %s89 = ssub.s32 %s83, 2
      %s90 = sadd.s32 %s83, 1
      %s92 = sadd.s32 %s91, 1
      %p95 = scmp.eq.s32.totalorder %s83, 1
      %p96 = scmp.ne.s32.totalorder %s91, %s93
      %p97 = scmp.eq.s32.totalorder %s83, 0
      %p98 = por %p96, %p97
      %p99 = scmp.ne.s32.totalorder %s91, %s93
      %p100 = scmp.eq.s32.totalorder %s88, 1
      %p101 = por %p99, %p100
      %p102 = scmp.ne.s32.totalorder %s93, %s94
      %p103 = scmp.eq.s32.totalorder %s88, 0
      %p104 = por %p102, %p103
      %p105 = scmp.ne.s32.totalorder %s93, %s94
      %p106 = scmp.eq.s32.totalorder %s89, 1
      %p107 = por %p105, %p106
      %p109 = scmp.ne.s32.totalorder %s94, %s108
      %p110 = scmp.eq.s32.totalorder %s89, 0
      %p111 = por %p109, %p110
      %s113 = sadd.s32 %s112, 1
      %p116 = scmp.eq.s32.totalorder %s83, 1
      %p117 = scmp.ne.s32.totalorder %s112, %s114
      %p118 = scmp.eq.s32.totalorder %s83, 0
      %p119 = por %p117, %p118
      %p120 = scmp.ne.s32.totalorder %s112, %s114
      %p121 = scmp.eq.s32.totalorder %s88, 1
      %p122 = por %p120, %p121
      %p123 = scmp.ne.s32.totalorder %s114, %s115
      %p124 = scmp.eq.s32.totalorder %s88, 0
      %p125 = por %p123, %p124
      %p126 = scmp.ne.s32.totalorder %s114, %s115
      %p127 = scmp.eq.s32.totalorder %s89, 1
      %p128 = por %p126, %p127
      %p130 = scmp.ne.s32.totalorder %s115, %s129
      %p131 = scmp.eq.s32.totalorder %s89, 0
      %p132 = por %p130, %p131
      %s134 = sadd.s32 %s133, 1
      %p137 = scmp.eq.s32.totalorder %s83, 1
      %p138 = scmp.ne.s32.totalorder %s133, %s135
      %p139 = scmp.eq.s32.totalorder %s83, 0
      %p140 = por %p138, %p139
      %p141 = scmp.ne.s32.totalorder %s133, %s135
      %p142 = scmp.eq.s32.totalorder %s88, 1
      %p143 = por %p141, %p142
      %p144 = scmp.ne.s32.totalorder %s135, %s136
      %p145 = scmp.eq.s32.totalorder %s88, 0
      %p146 = por %p144, %p145
      %p147 = scmp.ne.s32.totalorder %s135, %s136
      %p148 = scmp.eq.s32.totalorder %s89, 1
      %p149 = por %p147, %p148
      %p151 = scmp.ne.s32.totalorder %s136, %s150
      %p152 = scmp.eq.s32.totalorder %s89, 0
      %p153 = por %p151, %p152
      %s155 = sadd.s32 %s154, 1
      %p158 = scmp.eq.s32.totalorder %s83, 1
      %p159 = scmp.ne.s32.totalorder %s154, %s156
      %p160 = scmp.eq.s32.totalorder %s83, 0
      %p161 = por %p159, %p160
      %p162 = scmp.ne.s32.totalorder %s154, %s156
      %p163 = scmp.eq.s32.totalorder %s88, 1
      %p164 = por %p162, %p163
      %p165 = scmp.ne.s32.totalorder %s156, %s157
      %p166 = scmp.eq.s32.totalorder %s88, 0
      %p167 = por %p165, %p166
      %p168 = scmp.ne.s32.totalorder %s156, %s157
      %p169 = scmp.eq.s32.totalorder %s89, 1
      %p170 = por %p168, %p169
      %p172 = scmp.ne.s32.totalorder %s157, %s171
      %p173 = scmp.eq.s32.totalorder %s89, 0
      %p174 = por %p172, %p173
      %s176 = sadd.s32 %s175, 1
      %p179 = scmp.eq.s32.totalorder %s83, 1
      %p180 = scmp.ne.s32.totalorder %s175, %s177
      %p181 = scmp.eq.s32.totalorder %s83, 0
      %p182 = por %p180, %p181
      %p183 = scmp.ne.s32.totalorder %s175, %s177
      %p184 = scmp.eq.s32.totalorder %s88, 1
      %p185 = por %p183, %p184
      %p186 = scmp.ne.s32.totalorder %s177, %s178
      %p187 = scmp.eq.s32.totalorder %s88, 0
      %p188 = por %p186, %p187
      %p189 = scmp.ne.s32.totalorder %s177, %s178
      %p190 = scmp.eq.s32.totalorder %s89, 1
      %p191 = por %p189, %p190
      %p193 = scmp.ne.s32.totalorder %s178, %s192
      %p194 = scmp.eq.s32.totalorder %s89, 0
      %p195 = por %p193, %p194
      %s197 = sadd.s32 %s196, 1
      %p200 = scmp.eq.s32.totalorder %s83, 1
      %p201 = scmp.ne.s32.totalorder %s196, %s198
      %p202 = scmp.eq.s32.totalorder %s83, 0
      %p203 = por %p201, %p202
      %p204 = scmp.ne.s32.totalorder %s196, %s198
      %p205 = scmp.eq.s32.totalorder %s88, 1
      %p206 = por %p204, %p205
      %p207 = scmp.ne.s32.totalorder %s198, %s199
      %p208 = scmp.eq.s32.totalorder %s88, 0
      %p209 = por %p207, %p208
      %p210 = scmp.ne.s32.totalorder %s198, %s199
      %p211 = scmp.eq.s32.totalorder %s89, 1
      %p212 = por %p210, %p211
      %p214 = scmp.ne.s32.totalorder %s199, %s213
      %p215 = scmp.eq.s32.totalorder %s89, 0
      %p216 = por %p214, %p215
      %s218 = sadd.s32 %s217, 1
      %p221 = scmp.eq.s32.totalorder %s83, 1
      %p222 = scmp.ne.s32.totalorder %s217, %s219
      %p223 = scmp.eq.s32.totalorder %s83, 0
      %p224 = por %p222, %p223
      %p225 = scmp.ne.s32.totalorder %s217, %s219
      %p226 = scmp.eq.s32.totalorder %s88, 1
      %p227 = por %p225, %p226
      %p228 = scmp.ne.s32.totalorder %s219, %s220
      %p229 = scmp.eq.s32.totalorder %s88, 0
      %p230 = por %p228, %p229
      %p231 = scmp.ne.s32.totalorder %s219, %s220
      %p232 = scmp.eq.s32.totalorder %s89, 1
      %p233 = por %p231, %p232
      %p235 = scmp.ne.s32.totalorder %s220, %s234
      %p236 = scmp.eq.s32.totalorder %s89, 0
      %p237 = por %p235, %p236
      %s239 = sadd.s32 %s238, 1
      %p242 = scmp.eq.s32.totalorder %s83, 1
      %p243 = scmp.ne.s32.totalorder %s238, %s240
      %p244 = scmp.eq.s32.totalorder %s83, 0
      %p245 = por %p243, %p244
      %p246 = scmp.ne.s32.totalorder %s238, %s240
      %p247 = scmp.eq.s32.totalorder %s88, 1
      %p248 = por %p246, %p247
      %p249 = scmp.ne.s32.totalorder %s240, %s241
      %p250 = scmp.eq.s32.totalorder %s88, 0
      %p251 = por %p249, %p250
      %p252 = scmp.ne.s32.totalorder %s240, %s241
      %p253 = scmp.eq.s32.totalorder %s89, 1
      %p254 = por %p252, %p253
      %p256 = scmp.ne.s32.totalorder %s241, %s255
      %p257 = scmp.eq.s32.totalorder %s89, 0
      %p258 = por %p256, %p257
      %s260 = sadd.s32 %s259, 1
      %p263 = scmp.eq.s32.totalorder %s83, 1
      %p264 = scmp.ne.s32.totalorder %s259, %s261
      %p265 = scmp.eq.s32.totalorder %s83, 0
      %p266 = por %p264, %p265
      %p267 = scmp.ne.s32.totalorder %s259, %s261
      %p268 = scmp.eq.s32.totalorder %s88, 1
      %p269 = por %p267, %p268
      %p270 = scmp.ne.s32.totalorder %s261, %s262
      %p271 = scmp.eq.s32.totalorder %s88, 0
      %p272 = por %p270, %p271
      %p273 = scmp.ne.s32.totalorder %s261, %s262
      %p274 = scmp.eq.s32.totalorder %s89, 1
      %p275 = por %p273, %p274
      %p277 = scmp.ne.s32.totalorder %s262, %s276
      %p278 = scmp.eq.s32.totalorder %s89, 0
      %p279 = por %p277, %p278
      %s281 = sadd.s32 %s280, 1
      %p284 = scmp.eq.s32.totalorder %s83, 1
      %p285 = scmp.ne.s32.totalorder %s280, %s282
      %p286 = scmp.eq.s32.totalorder %s83, 0
      %p287 = por %p285, %p286
      %p288 = scmp.ne.s32.totalorder %s280, %s282
      %p289 = scmp.eq.s32.totalorder %s88, 1
      %p290 = por %p288, %p289
      %p291 = scmp.ne.s32.totalorder %s282, %s283
      %p292 = scmp.eq.s32.totalorder %s88, 0
      %p293 = por %p291, %p292
      %p294 = scmp.ne.s32.totalorder %s282, %s283
      %p295 = scmp.eq.s32.totalorder %s89, 1
      %p296 = por %p294, %p295
      %p298 = scmp.ne.s32.totalorder %s283, %s297
      %p299 = scmp.eq.s32.totalorder %s89, 0
      %p300 = por %p298, %p299
      %s302 = sadd.s32 %s301, 1
      %p305 = scmp.eq.s32.totalorder %s83, 1
      %p306 = scmp.ne.s32.totalorder %s301, %s303
      %p307 = scmp.eq.s32.totalorder %s83, 0
      %p308 = por %p306, %p307
      %p309 = scmp.ne.s32.totalorder %s301, %s303
      %p310 = scmp.eq.s32.totalorder %s88, 1
      %p311 = por %p309, %p310
      %p312 = scmp.ne.s32.totalorder %s303, %s304
      %p313 = scmp.eq.s32.totalorder %s88, 0
      %p314 = por %p312, %p313
      %p315 = scmp.ne.s32.totalorder %s303, %s304
      %p316 = scmp.eq.s32.totalorder %s89, 1
      %p317 = por %p315, %p316
      %p319 = scmp.ne.s32.totalorder %s304, %s318
      %p320 = scmp.eq.s32.totalorder %s89, 0
      %p321 = por %p319, %p320
      %s323 = sadd.s32 %s322, 1
      %p326 = scmp.eq.s32.totalorder %s83, 1
      %p327 = scmp.ne.s32.totalorder %s322, %s324
      %p328 = scmp.eq.s32.totalorder %s83, 0
      %p329 = por %p327, %p328
      %p330 = scmp.ne.s32.totalorder %s322, %s324
      %p331 = scmp.eq.s32.totalorder %s88, 1
      %p332 = por %p330, %p331
      %p333 = scmp.ne.s32.totalorder %s324, %s325
      %p334 = scmp.eq.s32.totalorder %s88, 0
      %p335 = por %p333, %p334
      %p336 = scmp.ne.s32.totalorder %s324, %s325
      %p337 = scmp.eq.s32.totalorder %s89, 1
      %p338 = por %p336, %p337
      %p340 = scmp.ne.s32.totalorder %s325, %s339
      %p341 = scmp.eq.s32.totalorder %s89, 0
      %p342 = por %p340, %p341
      %s344 = sadd.s32 %s343, 1
      %p347 = scmp.eq.s32.totalorder %s83, 1
      %p348 = scmp.ne.s32.totalorder %s343, %s345
      %p349 = scmp.eq.s32.totalorder %s83, 0
      %p350 = por %p348, %p349
      %p351 = scmp.ne.s32.totalorder %s343, %s345
      %p352 = scmp.eq.s32.totalorder %s88, 1
      %p353 = por %p351, %p352
      %p354 = scmp.ne.s32.totalorder %s345, %s346
      %p355 = scmp.eq.s32.totalorder %s88, 0
      %p356 = por %p354, %p355
      %p357 = scmp.ne.s32.totalorder %s345, %s346
      %p358 = scmp.eq.s32.totalorder %s89, 1
      %p359 = por %p357, %p358
      %p361 = scmp.ne.s32.totalorder %s346, %s360
      %p362 = scmp.eq.s32.totalorder %s89, 0
      %p363 = por %p361, %p362
      %s365 = sadd.s32 %s364, 1
      %p368 = scmp.eq.s32.totalorder %s83, 1
      %p369 = scmp.ne.s32.totalorder %s364, %s366
      %p370 = scmp.eq.s32.totalorder %s83, 0
      %p371 = por %p369, %p370
      %p372 = scmp.ne.s32.totalorder %s364, %s366
      %p373 = scmp.eq.s32.totalorder %s88, 1
      %p374 = por %p372, %p373
      %p375 = scmp.ne.s32.totalorder %s366, %s367
      %p376 = scmp.eq.s32.totalorder %s88, 0
      %p377 = por %p375, %p376
      %p378 = scmp.ne.s32.totalorder %s366, %s367
      %p379 = scmp.eq.s32.totalorder %s89, 1
      %p380 = por %p378, %p379
      %p382 = scmp.ne.s32.totalorder %s367, %s381
      %p383 = scmp.eq.s32.totalorder %s89, 0
      %p384 = por %p382, %p383
      %s386 = sadd.s32 %s385, 1
      %p389 = scmp.eq.s32.totalorder %s83, 1
      %p390 = scmp.ne.s32.totalorder %s385, %s387
      %p391 = scmp.eq.s32.totalorder %s83, 0
      %p392 = por %p390, %p391
      %p393 = scmp.ne.s32.totalorder %s385, %s387
      %p394 = scmp.eq.s32.totalorder %s88, 1
      %p395 = por %p393, %p394
      %p396 = scmp.ne.s32.totalorder %s387, %s388
      %p397 = scmp.eq.s32.totalorder %s88, 0
      %p398 = por %p396, %p397
      %p399 = scmp.ne.s32.totalorder %s387, %s388
      %p400 = scmp.eq.s32.totalorder %s89, 1
      %p401 = por %p399, %p400
      %p403 = scmp.ne.s32.totalorder %s388, %s402
      %p404 = scmp.eq.s32.totalorder %s89, 0
      %p405 = por %p403, %p404
      %s407 = sadd.s32 %s406, 1
      %p410 = scmp.eq.s32.totalorder %s83, 1
      %p411 = scmp.ne.s32.totalorder %s406, %s408
      %p412 = scmp.eq.s32.totalorder %s83, 0
      %p413 = por %p411, %p412
      %p414 = scmp.ne.s32.totalorder %s406, %s408
      %p415 = scmp.eq.s32.totalorder %s88, 1
      %p416 = por %p414, %p415
      %p417 = scmp.ne.s32.totalorder %s408, %s409
      %p418 = scmp.eq.s32.totalorder %s88, 0
      %p419 = por %p417, %p418
      %p420 = scmp.ne.s32.totalorder %s408, %s409
      %p421 = scmp.eq.s32.totalorder %s89, 1
      %p422 = por %p420, %p421
      %p424 = scmp.ne.s32.totalorder %s409, %s423
      %p425 = scmp.eq.s32.totalorder %s89, 0
      %p426 = por %p424, %p425
      %s428 = sadd.s32 %s427, 1
      %p431 = scmp.eq.s32.totalorder %s83, 1
      %p432 = scmp.ne.s32.totalorder %s427, %s429
      %p433 = scmp.eq.s32.totalorder %s83, 0
      %p434 = por %p432, %p433
      %p435 = scmp.ne.s32.totalorder %s427, %s429
      %p436 = scmp.eq.s32.totalorder %s88, 1
      %p437 = por %p435, %p436
      %p438 = scmp.ne.s32.totalorder %s429, %s430
      %p439 = scmp.eq.s32.totalorder %s88, 0
      %p440 = por %p438, %p439
      %p441 = scmp.ne.s32.totalorder %s429, %s430
      %p442 = scmp.eq.s32.totalorder %s89, 1
      %p443 = por %p441, %p442
      %p445 = scmp.ne.s32.totalorder %s430, %s444
      %p446 = scmp.eq.s32.totalorder %s89, 0
      %p447 = por %p445, %p446
      %s449 = sadd.s32 %s448, 1
      %p452 = scmp.eq.s32.totalorder %s83, 1
      %p453 = scmp.ne.s32.totalorder %s448, %s450
      %p454 = scmp.eq.s32.totalorder %s83, 0
      %p455 = por %p453, %p454
      %p456 = scmp.ne.s32.totalorder %s448, %s450
      %p457 = scmp.eq.s32.totalorder %s88, 1
      %p458 = por %p456, %p457
      %p459 = scmp.ne.s32.totalorder %s450, %s451
      %p460 = scmp.eq.s32.totalorder %s88, 0
      %p461 = por %p459, %p460
      %p462 = scmp.ne.s32.totalorder %s450, %s451
      %p463 = scmp.eq.s32.totalorder %s89, 1
      %p464 = por %p462, %p463
      %p466 = scmp.ne.s32.totalorder %s451, %s465
      %p467 = scmp.eq.s32.totalorder %s89, 0
      %p468 = por %p466, %p467
      %s470 = sadd.s32 %s469, 1
      %p473 = scmp.eq.s32.totalorder %s83, 1
      %p474 = scmp.ne.s32.totalorder %s469, %s471
      %p475 = scmp.eq.s32.totalorder %s83, 0
      %p476 = por %p474, %p475
      %p477 = scmp.ne.s32.totalorder %s469, %s471
      %p478 = scmp.eq.s32.totalorder %s88, 1
      %p479 = por %p477, %p478
      %p480 = scmp.ne.s32.totalorder %s471, %s472
      %p481 = scmp.eq.s32.totalorder %s88, 0
      %p482 = por %p480, %p481
      %p483 = scmp.ne.s32.totalorder %s471, %s472
      %p484 = scmp.eq.s32.totalorder %s89, 1
      %p485 = por %p483, %p484
      %p487 = scmp.ne.s32.totalorder %s472, %s486
      %p488 = scmp.eq.s32.totalorder %s89, 0
      %p489 = por %p487, %p488
      %s490 = ssub.s32 %s83, %s90
      %p491 = scmp.eq.s32.totalorder %s490, 0
      %s493 = sadd.s32 %s492, 1
      %s494 = scalar_select %p491, %s492, %s493
      %p497 = pneg %p491
      %p498 = scmp.eq.s32.totalorder %s83, 1
      %p499 = por %p497, %p498
      %p500 = scmp.ne.s32.totalorder %s492, %s495
      %p501 = scmp.eq.s32.totalorder %s83, 0
      %p502 = por %p500, %p501
      %p503 = scmp.ne.s32.totalorder %s492, %s495
      %p504 = scmp.eq.s32.totalorder %s88, 1
      %p505 = por %p503, %p504
      %p506 = scmp.ne.s32.totalorder %s495, %s496
      %p507 = scmp.eq.s32.totalorder %s88, 0
      %p508 = por %p506, %p507
      %p509 = scmp.ne.s32.totalorder %s495, %s496
      %p510 = scmp.eq.s32.totalorder %s89, 1
      %p511 = por %p509, %p510
      %p513 = scmp.ne.s32.totalorder %s496, %s512
      %p514 = scmp.eq.s32.totalorder %s89, 0
      %p515 = por %p513, %p514
      %s516 = ssub.s32 %s83, %s90
      %p517 = scmp.eq.s32.totalorder %s516, 0
      %s519 = sadd.s32 %s518, 1
      %s520 = scalar_select %p517, %s518, %s519
      %p523 = pneg %p517
      %p524 = scmp.eq.s32.totalorder %s83, 1
      %p525 = por %p523, %p524
      %p526 = scmp.ne.s32.totalorder %s518, %s521
      %p527 = scmp.eq.s32.totalorder %s83, 0
      %p528 = por %p526, %p527
      %p529 = scmp.ne.s32.totalorder %s518, %s521
      %p530 = scmp.eq.s32.totalorder %s88, 1
      %p531 = por %p529, %p530
      %p532 = scmp.ne.s32.totalorder %s521, %s522
      %p533 = scmp.eq.s32.totalorder %s88, 0
      %p534 = por %p532, %p533
      %p535 = scmp.ne.s32.totalorder %s521, %s522
      %p536 = scmp.eq.s32.totalorder %s89, 1
      %p537 = por %p535, %p536
      %p539 = scmp.ne.s32.totalorder %s522, %s538
      %p540 = scmp.eq.s32.totalorder %s89, 0
      %p541 = por %p539, %p540
      %s542 = ssub.s32 %s83, %s90
      %p543 = scmp.eq.s32.totalorder %s542, 0
      %s545 = sadd.s32 %s544, 1
      %s546 = scalar_select %p543, %s544, %s545
      %p549 = pneg %p543
      %p550 = scmp.eq.s32.totalorder %s83, 1
      %p551 = por %p549, %p550
      %p552 = scmp.ne.s32.totalorder %s544, %s547
      %p553 = scmp.eq.s32.totalorder %s83, 0
      %p554 = por %p552, %p553
      %p555 = scmp.ne.s32.totalorder %s544, %s547
      %p556 = scmp.eq.s32.totalorder %s88, 1
      %p557 = por %p555, %p556
      %p558 = scmp.ne.s32.totalorder %s547, %s548
      %p559 = scmp.eq.s32.totalorder %s88, 0
      %p560 = por %p558, %p559
      %p561 = scmp.ne.s32.totalorder %s547, %s548
      %p562 = scmp.eq.s32.totalorder %s89, 1
      %p563 = por %p561, %p562
      %p565 = scmp.ne.s32.totalorder %s548, %s564
      %p566 = scmp.eq.s32.totalorder %s89, 0
      %p567 = por %p565, %p566
      %s568 = ssub.s32 %s83, %s90
      %p569 = scmp.eq.s32.totalorder %s568, 0
      %s571 = sadd.s32 %s570, 1
      %s572 = scalar_select %p569, %s570, %s571
      %p575 = pneg %p569
      %p576 = scmp.eq.s32.totalorder %s83, 1
      %p577 = por %p575, %p576
      %p578 = scmp.ne.s32.totalorder %s570, %s573
      %p579 = scmp.eq.s32.totalorder %s83, 0
      %p580 = por %p578, %p579
      %p581 = scmp.ne.s32.totalorder %s570, %s573
      %p582 = scmp.eq.s32.totalorder %s88, 1
      %p583 = por %p581, %p582
      %p584 = scmp.ne.s32.totalorder %s573, %s574
      %p585 = scmp.eq.s32.totalorder %s88, 0
      %p586 = por %p584, %p585
      %p587 = scmp.ne.s32.totalorder %s573, %s574
      %p588 = scmp.eq.s32.totalorder %s89, 1
      %p589 = por %p587, %p588
      %p591 = scmp.ne.s32.totalorder %s574, %s590
      %p592 = scmp.eq.s32.totalorder %s89, 0
      %p593 = por %p591, %p592
      %s594 = ssub.s32 %s83, %s90
      %p595 = scmp.eq.s32.totalorder %s594, 0
      %s597 = sadd.s32 %s596, 1
      %s598 = scalar_select %p595, %s596, %s597
      %p601 = pneg %p595
      %p602 = scmp.eq.s32.totalorder %s83, 1
      %p603 = por %p601, %p602
      %p604 = scmp.ne.s32.totalorder %s596, %s599
      %p605 = scmp.eq.s32.totalorder %s83, 0
      %p606 = por %p604, %p605
      %p607 = scmp.ne.s32.totalorder %s596, %s599
      %p608 = scmp.eq.s32.totalorder %s88, 1
      %p609 = por %p607, %p608
      %p610 = scmp.ne.s32.totalorder %s599, %s600
      %p611 = scmp.eq.s32.totalorder %s88, 0
      %p612 = por %p610, %p611
      %p613 = scmp.ne.s32.totalorder %s599, %s600
      %p614 = scmp.eq.s32.totalorder %s89, 1
      %p615 = por %p613, %p614
      %p617 = scmp.ne.s32.totalorder %s600, %s616
      %p618 = scmp.eq.s32.totalorder %s89, 0
      %p619 = por %p617, %p618
      %s620 = ssub.s32 %s83, %s90
      %p621 = scmp.eq.s32.totalorder %s620, 0
      %s623 = sadd.s32 %s622, 1
      %s624 = scalar_select %p621, %s622, %s623
      %p627 = pneg %p621
      %p628 = scmp.eq.s32.totalorder %s83, 1
      %p629 = por %p627, %p628
      %p630 = scmp.ne.s32.totalorder %s622, %s625
      %p631 = scmp.eq.s32.totalorder %s83, 0
      %p632 = por %p630, %p631
      %p633 = scmp.ne.s32.totalorder %s622, %s625
      %p634 = scmp.eq.s32.totalorder %s88, 1
      %p635 = por %p633, %p634
      %p636 = scmp.ne.s32.totalorder %s625, %s626
      %p637 = scmp.eq.s32.totalorder %s88, 0
      %p638 = por %p636, %p637
      %p639 = scmp.ne.s32.totalorder %s625, %s626
      %p640 = scmp.eq.s32.totalorder %s89, 1
      %p641 = por %p639, %p640
      %p643 = scmp.ne.s32.totalorder %s626, %s642
      %p644 = scmp.eq.s32.totalorder %s89, 0
      %p645 = por %p643, %p644
      %s646 = ssub.s32 %s83, %s90
      %p647 = scmp.eq.s32.totalorder %s646, 0
      %s649 = sadd.s32 %s648, 1
      %s650 = scalar_select %p647, %s648, %s649
      %p653 = pneg %p647
      %p654 = scmp.eq.s32.totalorder %s83, 1
      %p655 = por %p653, %p654
      %p656 = scmp.ne.s32.totalorder %s648, %s651
      %p657 = scmp.eq.s32.totalorder %s83, 0
      %p658 = por %p656, %p657
      %p659 = scmp.ne.s32.totalorder %s648, %s651
      %p660 = scmp.eq.s32.totalorder %s88, 1
      %p661 = por %p659, %p660
      %p662 = scmp.ne.s32.totalorder %s651, %s652
      %p663 = scmp.eq.s32.totalorder %s88, 0
      %p664 = por %p662, %p663
      %p665 = scmp.ne.s32.totalorder %s651, %s652
      %p666 = scmp.eq.s32.totalorder %s89, 1
      %p667 = por %p665, %p666
      %p669 = scmp.ne.s32.totalorder %s652, %s668
      %p670 = scmp.eq.s32.totalorder %s89, 0
      %p671 = por %p669, %p670
      %s672 = ssub.s32 %s83, %s90
      %p673 = scmp.eq.s32.totalorder %s672, 0
      %s675 = sadd.s32 %s674, 1
      %s676 = scalar_select %p673, %s674, %s675
      %p679 = pneg %p673
      %p680 = scmp.eq.s32.totalorder %s83, 1
      %p681 = por %p679, %p680
      %p682 = scmp.ne.s32.totalorder %s674, %s677
      %p683 = scmp.eq.s32.totalorder %s83, 0
      %p684 = por %p682, %p683
      %p685 = scmp.ne.s32.totalorder %s674, %s677
      %p686 = scmp.eq.s32.totalorder %s88, 1
      %p687 = por %p685, %p686
      %p688 = scmp.ne.s32.totalorder %s677, %s678
      %p689 = scmp.eq.s32.totalorder %s88, 0
      %p690 = por %p688, %p689
      %p691 = scmp.ne.s32.totalorder %s677, %s678
      %p692 = scmp.eq.s32.totalorder %s89, 1
      %p693 = por %p691, %p692
      %p695 = scmp.ne.s32.totalorder %s678, %s694
      %p696 = scmp.eq.s32.totalorder %s89, 0
      %p697 = por %p695, %p696
      %s698 = ssub.s32 %s83, %s90
      %p699 = scmp.eq.s32.totalorder %s698, 0
      %s701 = sadd.s32 %s700, 1
      %s702 = scalar_select %p699, %s700, %s701
      %p705 = pneg %p699
      %p706 = scmp.eq.s32.totalorder %s83, 1
      %p707 = por %p705, %p706
      %p708 = scmp.ne.s32.totalorder %s700, %s703
      %p709 = scmp.eq.s32.totalorder %s83, 0
      %p710 = por %p708, %p709
      %p711 = scmp.ne.s32.totalorder %s700, %s703
      %p712 = scmp.eq.s32.totalorder %s88, 1
      %p713 = por %p711, %p712
      %p714 = scmp.ne.s32.totalorder %s703, %s704
      %p715 = scmp.eq.s32.totalorder %s88, 0
      %p716 = por %p714, %p715
      %p717 = scmp.ne.s32.totalorder %s703, %s704
      %p718 = scmp.eq.s32.totalorder %s89, 1
      %p719 = por %p717, %p718
      %p721 = scmp.ne.s32.totalorder %s704, %s720
      %p722 = scmp.eq.s32.totalorder %s89, 0
      %p723 = por %p721, %p722
      %s725 = sadd.s32 %s724, 1
      %p728 = scmp.eq.s32.totalorder %s83, 1
      %p729 = scmp.ne.s32.totalorder %s724, %s726
      %p730 = scmp.eq.s32.totalorder %s83, 0
      %p731 = por %p729, %p730
      %p732 = scmp.ne.s32.totalorder %s724, %s726
      %p733 = scmp.eq.s32.totalorder %s88, 1
      %p734 = por %p732, %p733
      %p735 = scmp.ne.s32.totalorder %s726, %s727
      %p736 = scmp.eq.s32.totalorder %s88, 0
      %p737 = por %p735, %p736
      %p738 = scmp.ne.s32.totalorder %s726, %s727
      %p739 = scmp.eq.s32.totalorder %s89, 1
      %p740 = por %p738, %p739
      %p742 = scmp.ne.s32.totalorder %s727, %s741
      %p743 = scmp.eq.s32.totalorder %s89, 0
      %p744 = por %p742, %p743
      %s746 = sadd.s32 %s745, 1
      %p749 = scmp.eq.s32.totalorder %s83, 1
      %p750 = scmp.ne.s32.totalorder %s745, %s747
      %p751 = scmp.eq.s32.totalorder %s83, 0
      %p752 = por %p750, %p751
      %p753 = scmp.ne.s32.totalorder %s745, %s747
      %p754 = scmp.eq.s32.totalorder %s88, 1
      %p755 = por %p753, %p754
      %p756 = scmp.ne.s32.totalorder %s747, %s748
      %p757 = scmp.eq.s32.totalorder %s88, 0
      %p758 = por %p756, %p757
      %p759 = scmp.ne.s32.totalorder %s747, %s748
      %p760 = scmp.eq.s32.totalorder %s89, 1
      %p761 = por %p759, %p760
      %p763 = scmp.ne.s32.totalorder %s748, %s762
      %p764 = scmp.eq.s32.totalorder %s89, 0
      %p765 = por %p763, %p764
      %s767 = sadd.s32 %s766, 1
      %p770 = scmp.eq.s32.totalorder %s83, 1
      %p771 = scmp.ne.s32.totalorder %s766, %s768
      %p772 = scmp.eq.s32.totalorder %s83, 0
      %p773 = por %p771, %p772
      %p774 = scmp.ne.s32.totalorder %s766, %s768
      %p775 = scmp.eq.s32.totalorder %s88, 1
      %p776 = por %p774, %p775
      %p777 = scmp.ne.s32.totalorder %s768, %s769
      %p778 = scmp.eq.s32.totalorder %s88, 0
      %p779 = por %p777, %p778
      %p780 = scmp.ne.s32.totalorder %s768, %s769
      %p781 = scmp.eq.s32.totalorder %s89, 1
      %p782 = por %p780, %p781
      %p784 = scmp.ne.s32.totalorder %s769, %s783
      %p785 = scmp.eq.s32.totalorder %s89, 0
      %p786 = por %p784, %p785
      %s788 = sadd.s32 %s787, 1
      %p791 = scmp.eq.s32.totalorder %s83, 1
      %p792 = scmp.ne.s32.totalorder %s787, %s789
      %p793 = scmp.eq.s32.totalorder %s83, 0
      %p794 = por %p792, %p793
      %p795 = scmp.ne.s32.totalorder %s787, %s789
      %p796 = scmp.eq.s32.totalorder %s88, 1
      %p797 = por %p795, %p796
      %p798 = scmp.ne.s32.totalorder %s789, %s790
      %p799 = scmp.eq.s32.totalorder %s88, 0
      %p800 = por %p798, %p799
      %p801 = scmp.ne.s32.totalorder %s789, %s790
      %p802 = scmp.eq.s32.totalorder %s89, 1
      %p803 = por %p801, %p802
      %p805 = scmp.ne.s32.totalorder %s790, %s804
      %p806 = scmp.eq.s32.totalorder %s89, 0
      %p807 = por %p805, %p806
      %p808 = scmp.le.s32.totalorder 1, %s83
      %p809 = scmp.lt.s32.totalorder %s83, 3
      %p810 = pnand %p808, %p809
      %p811 = pneg %p810
      // Predicated region
      $region9: #{block_forward.1} parent=5 // pred_check
        _
      $region10: #{block_forward.1} parent=5 // pred_check_branch
        %813 = sbr.rel (%p810) target = $region12
      $region11: #{block_forward.1} parent=5 // pred_region
        %s814 = ssub.s32 %s83, 1
        // Predicated region
        $region13: #{block_forward.1} parent=11 // pred_check
          %p815 = pneg %p104
        $region14: #{block_forward.1} parent=11 // pred_check_branch
          %817 = sbr.rel (%p815) target = $region16
        $region15: #{block_forward.1} parent=11 // pred_region
          _
        $region16: #{block_forward.1} parent=11 // pred_fallthru
          _
        // Predicated region
        $region17: #{block_forward.1} parent=11 // pred_check
          %p818 = pneg %p125
        $region18: #{block_forward.1} parent=11 // pred_check_branch
          %820 = sbr.rel (%p818) target = $region20
        $region19: #{block_forward.1} parent=11 // pred_region
          _
        $region20: #{block_forward.1} parent=11 // pred_fallthru
          _
        // Predicated region
        $region21: #{block_forward.1} parent=11 // pred_check
          %p821 = pneg %p146
        $region22: #{block_forward.1} parent=11 // pred_check_branch
          %823 = sbr.rel (%p821) target = $region24
        $region23: #{block_forward.1} parent=11 // pred_region
          _
        $region24: #{block_forward.1} parent=11 // pred_fallthru
          _
        // Predicated region
        $region25: #{block_forward.1} parent=11 // pred_check
          %p824 = pneg %p167
        $region26: #{block_forward.1} parent=11 // pred_check_branch
          %826 = sbr.rel (%p824) target = $region28
        $region27: #{block_forward.1} parent=11 // pred_region
          _
        $region28: #{block_forward.1} parent=11 // pred_fallthru
          _
        // Predicated region
        $region29: #{block_forward.1} parent=11 // pred_check
          %p827 = pneg %p188
        $region30: #{block_forward.1} parent=11 // pred_check_branch
          %829 = sbr.rel (%p827) target = $region32
        $region31: #{block_forward.1} parent=11 // pred_region
          _
        $region32: #{block_forward.1} parent=11 // pred_fallthru
          _
        // Predicated region
        $region33: #{block_forward.1} parent=11 // pred_check
          %p830 = pneg %p209
        $region34: #{block_forward.1} parent=11 // pred_check_branch
          %832 = sbr.rel (%p830) target = $region36
        $region35: #{block_forward.1} parent=11 // pred_region
          _
        $region36: #{block_forward.1} parent=11 // pred_fallthru
          _
        // Predicated region
        $region37: #{block_forward.1} parent=11 // pred_check
          %p833 = pneg %p230
        $region38: #{block_forward.1} parent=11 // pred_check_branch
          %835 = sbr.rel (%p833) target = $region40
        $region39: #{block_forward.1} parent=11 // pred_region
          _
        $region40: #{block_forward.1} parent=11 // pred_fallthru
          _
        // Predicated region
        $region41: #{block_forward.1} parent=11 // pred_check
          %p836 = pneg %p251
        $region42: #{block_forward.1} parent=11 // pred_check_branch
          %838 = sbr.rel (%p836) target = $region44
        $region43: #{block_forward.1} parent=11 // pred_region
          _
        $region44: #{block_forward.1} parent=11 // pred_fallthru
          _
        // Predicated region
        $region45: #{block_forward.1} parent=11 // pred_check
          %p839 = pneg %p272
        $region46: #{block_forward.1} parent=11 // pred_check_branch
          %841 = sbr.rel (%p839) target = $region48
        $region47: #{block_forward.1} parent=11 // pred_region
          _
        $region48: #{block_forward.1} parent=11 // pred_fallthru
          _
        // Predicated region
        $region49: #{block_forward.1} parent=11 // pred_check
          %p842 = pneg %p293
        $region50: #{block_forward.1} parent=11 // pred_check_branch
          %844 = sbr.rel (%p842) target = $region52
        $region51: #{block_forward.1} parent=11 // pred_region
          _
        $region52: #{block_forward.1} parent=11 // pred_fallthru
          _
        // Predicated region
        $region53: #{block_forward.1} parent=11 // pred_check
          %p845 = pneg %p314
        $region54: #{block_forward.1} parent=11 // pred_check_branch
          %847 = sbr.rel (%p845) target = $region56
        $region55: #{block_forward.1} parent=11 // pred_region
          _
        $region56: #{block_forward.1} parent=11 // pred_fallthru
          _
        // Predicated region
        $region57: #{block_forward.1} parent=11 // pred_check
          %p848 = pneg %p335
        $region58: #{block_forward.1} parent=11 // pred_check_branch
          %850 = sbr.rel (%p848) target = $region60
        $region59: #{block_forward.1} parent=11 // pred_region
          _
        $region60: #{block_forward.1} parent=11 // pred_fallthru
          _
        // Predicated region
        $region61: #{block_forward.1} parent=11 // pred_check
          %p851 = pneg %p356
        $region62: #{block_forward.1} parent=11 // pred_check_branch
          %853 = sbr.rel (%p851) target = $region64
        $region63: #{block_forward.1} parent=11 // pred_region
          _
        $region64: #{block_forward.1} parent=11 // pred_fallthru
          _
        // Predicated region
        $region65: #{block_forward.1} parent=11 // pred_check
          %p854 = pneg %p377
        $region66: #{block_forward.1} parent=11 // pred_check_branch
          %856 = sbr.rel (%p854) target = $region68
        $region67: #{block_forward.1} parent=11 // pred_region
          _
        $region68: #{block_forward.1} parent=11 // pred_fallthru
          _
        // Predicated region
        $region69: #{block_forward.1} parent=11 // pred_check
          %p857 = pneg %p398
        $region70: #{block_forward.1} parent=11 // pred_check_branch
          %859 = sbr.rel (%p857) target = $region72
        $region71: #{block_forward.1} parent=11 // pred_region
          _
        $region72: #{block_forward.1} parent=11 // pred_fallthru
          _
        // Predicated region
        $region73: #{block_forward.1} parent=11 // pred_check
          %p860 = pneg %p419
        $region74: #{block_forward.1} parent=11 // pred_check_branch
          %862 = sbr.rel (%p860) target = $region76
        $region75: #{block_forward.1} parent=11 // pred_region
          _
        $region76: #{block_forward.1} parent=11 // pred_fallthru
          _
        // Predicated region
        $region77: #{block_forward.1} parent=11 // pred_check
          %p863 = pneg %p440
        $region78: #{block_forward.1} parent=11 // pred_check_branch
          %865 = sbr.rel (%p863) target = $region80
        $region79: #{block_forward.1} parent=11 // pred_region
          _
        $region80: #{block_forward.1} parent=11 // pred_fallthru
          _
        // Predicated region
        $region81: #{block_forward.1} parent=11 // pred_check
          %p866 = pneg %p461
        $region82: #{block_forward.1} parent=11 // pred_check_branch
          %868 = sbr.rel (%p866) target = $region84
        $region83: #{block_forward.1} parent=11 // pred_region
          _
        $region84: #{block_forward.1} parent=11 // pred_fallthru
          _
        // Predicated region
        $region85: #{block_forward.1} parent=11 // pred_check
          %p869 = pneg %p482
        $region86: #{block_forward.1} parent=11 // pred_check_branch
          %871 = sbr.rel (%p869) target = $region88
        $region87: #{block_forward.1} parent=11 // pred_region
          _
        $region88: #{block_forward.1} parent=11 // pred_fallthru
          _
        // Predicated region
        $region89: #{block_forward.1} parent=11 // pred_check
          %p872 = pneg %p737
        $region90: #{block_forward.1} parent=11 // pred_check_branch
          %874 = sbr.rel (%p872) target = $region92
        $region91: #{block_forward.1} parent=11 // pred_region
          %876 = vsyncadd [#allocation17], 0
          %s877 = sshll.u32 %s57, 4
          %s878 = int_to_ptr.hbm [resolvable:$true] %s877
          %s879 = sshll.u32 [#allocation16], 4
          %s880 = int_to_ptr.vmem [resolvable:$true] %s879
          %885 = dma.hbm_to_vmem [thread:$0]  %s878, 16384, %s880, [#allocation17], 256, 256, 16
        $region92: #{block_forward.1} parent=11 // pred_fallthru
          _
        // Predicated region
        $region93: #{block_forward.1} parent=11 // pred_check
          %p886 = pneg %p758
        $region94: #{block_forward.1} parent=11 // pred_check_branch
          %888 = sbr.rel (%p886) target = $region96
        $region95: #{block_forward.1} parent=11 // pred_region
          _
        $region96: #{block_forward.1} parent=11 // pred_fallthru
          _
        // Predicated region
        $region97: #{block_forward.1} parent=11 // pred_check
          %p889 = pneg %p779
        $region98: #{block_forward.1} parent=11 // pred_check_branch
          %891 = sbr.rel (%p889) target = $region100
        $region99: #{block_forward.1} parent=11 // pred_region
          _
        $region100: #{block_forward.1} parent=11 // pred_fallthru
          _
      $region12: #{block_forward.1} parent=5 // pred_fallthru
        _
      %p892 = scmp.lt.s32.totalorder %s83, 2
      // Predicated region
      $region101: #{block_forward.1} parent=5 // pred_check
        %p893 = pneg %p892
      $region102: #{block_forward.1} parent=5 // pred_check_branch
        %895 = sbr.rel (%p893) target = $region104
      $region103: #{block_forward.1} parent=5 // pred_region
        // Predicated region
        $region105: #{block_forward.1} parent=103 // pred_check
          %p896 = pneg %p502
        $region106: #{block_forward.1} parent=103 // pred_check_branch
          %898 = sbr.rel (%p896) target = $region108
        $region107: #{block_forward.1} parent=103 // pred_region
          %s899 = sand.u32 %s492, 1
          %s900 = scalar_lea.sflag [#allocation5], %s899
          %s901 = sand.u32 %s492, 1
          %s902 = smul.addr %s901, 768
          %s903 = scalar_lea.vmem [#allocation4], %s902
          %905 = vsyncadd %s900, 0
          %s906 = smul.addr %s83, 192
          %s907 = smul.addr %s906, 4
          %s908 = scalar_lea.hbm %s39, %s907
          %s909 = sshll.u32 %s908, 4
          %s910 = int_to_ptr.hbm [resolvable:$true] %s909
          %s911 = sshll.u32 %s903, 4
          %s912 = int_to_ptr.vmem [resolvable:$true] %s911
          %917 = dma.hbm_to_vmem [thread:$0]  %s910, 12288, %s912, %s900, 384, 384, 24
        $region108: #{block_forward.1} parent=103 // pred_fallthru
          _
        // Predicated region
        $region109: #{block_forward.1} parent=103 // pred_check
          %p918 = pneg %p528
        $region110: #{block_forward.1} parent=103 // pred_check_branch
          %920 = sbr.rel (%p918) target = $region112
        $region111: #{block_forward.1} parent=103 // pred_region
          %s921 = sand.u32 %s83, 1
          %s922 = scalar_lea.sflag [#allocation8], %s921
          %s923 = sand.u32 %s518, 1
          %s924 = smul.addr %s923, 256
          %s925 = scalar_lea.vmem [#allocation7], %s924
          %927 = vsyncadd %s922, 0
          %s928 = smul.addr %s83, 64
          %s929 = smul.addr %s928, 4
          %s930 = scalar_lea.hbm %s41, %s929
          %s931 = sshll.u32 %s930, 4
          %s932 = int_to_ptr.hbm [resolvable:$true] %s931
          %s933 = sshll.u32 %s925, 4
          %s934 = int_to_ptr.vmem [resolvable:$true] %s933
          %939 = dma.hbm_to_vmem [thread:$0]  %s932, 4096, %s934, %s922, 128, 128, 8
        $region112: #{block_forward.1} parent=103 // pred_fallthru
          _
        // Predicated region
        $region113: #{block_forward.1} parent=103 // pred_check
          %p940 = pneg %p554
        $region114: #{block_forward.1} parent=103 // pred_check_branch
          %942 = sbr.rel (%p940) target = $region116
        $region115: #{block_forward.1} parent=103 // pred_region
          %s943 = sand.u32 %s83, 1
          %s944 = scalar_lea.sflag [#allocation8], %s943
          %s945 = sand.u32 %s544, 1
          %s946 = smul.addr %s945, 256
          %s947 = scalar_lea.vmem [#allocation9], %s946
          %949 = vsyncadd %s944, 0
          %s950 = smul.addr %s83, 64
          %s951 = smul.addr %s950, 4
          %s952 = scalar_lea.hbm %s43, %s951
          %s953 = sshll.u32 %s952, 4
          %s954 = int_to_ptr.hbm [resolvable:$true] %s953
          %s955 = sshll.u32 %s947, 4
          %s956 = int_to_ptr.vmem [resolvable:$true] %s955
          %961 = dma.hbm_to_vmem [thread:$0]  %s954, 4096, %s956, %s944, 128, 128, 8
        $region116: #{block_forward.1} parent=103 // pred_fallthru
          _
        // Predicated region
        $region117: #{block_forward.1} parent=103 // pred_check
          %p962 = pneg %p580
        $region118: #{block_forward.1} parent=103 // pred_check_branch
          %964 = sbr.rel (%p962) target = $region120
        $region119: #{block_forward.1} parent=103 // pred_region
          %s965 = sand.u32 %s83, 1
          %s966 = scalar_lea.sflag [#allocation11], %s965
          %s967 = sand.u32 %s570, 1
          %s968 = smul.addr %s967, 512
          %s969 = scalar_lea.vmem [#allocation10], %s968
          %971 = vsyncadd %s966, 0
          %s972 = smul.addr %s83, 128
          %s973 = smul.addr %s972, 4
          %s974 = scalar_lea.hbm %s45, %s973
          %s975 = sshll.u32 %s974, 4
          %s976 = int_to_ptr.hbm [resolvable:$true] %s975
          %s977 = sshll.u32 %s969, 4
          %s978 = int_to_ptr.vmem [resolvable:$true] %s977
          %983 = dma.hbm_to_vmem [thread:$0]  %s976, 8192, %s978, %s966, 256, 256, 16
        $region120: #{block_forward.1} parent=103 // pred_fallthru
          _
        // Predicated region
        $region121: #{block_forward.1} parent=103 // pred_check
          %p984 = pneg %p606
        $region122: #{block_forward.1} parent=103 // pred_check_branch
          %986 = sbr.rel (%p984) target = $region124
        $region123: #{block_forward.1} parent=103 // pred_region
          %s987 = sand.u32 %s83, 1
          %s988 = scalar_lea.sflag [#allocation11], %s987
          %s989 = sand.u32 %s596, 1
          %s990 = smul.addr %s989, 256
          %s991 = scalar_lea.vmem [#allocation12], %s990
          %993 = vsyncadd %s988, 0
          %s994 = smul.addr %s83, 64
          %s995 = smul.addr %s994, 4
          %s996 = scalar_lea.hbm %s47, %s995
          %s997 = sshll.u32 %s996, 4
          %s998 = int_to_ptr.hbm [resolvable:$true] %s997
          %s999 = sshll.u32 %s991, 4
          %s1000 = int_to_ptr.vmem [resolvable:$true] %s999
          %1005 = dma.hbm_to_vmem [thread:$0]  %s998, 4096, %s1000, %s988, 128, 128, 8
        $region124: #{block_forward.1} parent=103 // pred_fallthru
          _
        // Predicated region
        $region125: #{block_forward.1} parent=103 // pred_check
          %p1006 = pneg %p632
        $region126: #{block_forward.1} parent=103 // pred_check_branch
          %1008 = sbr.rel (%p1006) target = $region128
        $region127: #{block_forward.1} parent=103 // pred_region
          %s1009 = sand.u32 %s83, 1
          %s1010 = scalar_lea.sflag [#allocation14], %s1009
          %s1011 = sand.u32 %s622, 1
          %s1012 = smul.addr %s1011, 1024
          %s1013 = scalar_lea.vmem [#allocation13], %s1012
          %1015 = vsyncadd %s1010, 0
          %s1016 = smul.addr %s83, 256
          %s1017 = smul.addr %s1016, 4
          %s1018 = scalar_lea.hbm %s49, %s1017
          %s1019 = sshll.u32 %s1018, 4
          %s1020 = int_to_ptr.hbm [resolvable:$true] %s1019
          %s1021 = sshll.u32 %s1013, 4
          %s1022 = int_to_ptr.vmem [resolvable:$true] %s1021
          %1027 = dma.hbm_to_vmem [thread:$0]  %s1020, 16384, %s1022, %s1010, 512, 512, 32
        $region128: #{block_forward.1} parent=103 // pred_fallthru
          _
        // Predicated region
        $region129: #{block_forward.1} parent=103 // pred_check
          %p1028 = pneg %p658
        $region130: #{block_forward.1} parent=103 // pred_check_branch
          %1030 = sbr.rel (%p1028) target = $region132
        $region131: #{block_forward.1} parent=103 // pred_region
          %s1031 = sand.u32 %s83, 1
          %s1032 = scalar_lea.sflag [#allocation14], %s1031
          %s1033 = sand.u32 %s648, 1
          %s1034 = smul.addr %s1033, 1024
          %s1035 = scalar_lea.vmem [#allocation15], %s1034
          %1037 = vsyncadd %s1032, 0
          %s1038 = smul.addr %s83, 256
          %s1039 = smul.addr %s1038, 4
          %s1040 = scalar_lea.hbm %s51, %s1039
          %s1041 = sshll.u32 %s1040, 4
          %s1042 = int_to_ptr.hbm [resolvable:$true] %s1041
          %s1043 = sshll.u32 %s1035, 4
          %s1044 = int_to_ptr.vmem [resolvable:$true] %s1043
          %1049 = dma.hbm_to_vmem [thread:$0]  %s1042, 16384, %s1044, %s1032, 128, 128, 8
        $region132: #{block_forward.1} parent=103 // pred_fallthru
          _
        // Predicated region
        $region133: #{block_forward.1} parent=103 // pred_check
          %p1050 = pneg %p684
        $region134: #{block_forward.1} parent=103 // pred_check_branch
          %1052 = sbr.rel (%p1050) target = $region136
        $region135: #{block_forward.1} parent=103 // pred_region
          %p1053 = scmp.lt.s32.totalorder %s83, 1
          %s1054 = scalar_select %p1053, %s83, 1
          %s1055 = smul.addr %s1054, 4
          %s1056 = smul.addr %s1055, 8
          %s1057 = scalar_lea.vmem %s53, %s1056
        $region136: #{block_forward.1} parent=103 // pred_fallthru
          _
        // Predicated region
        $region137: #{block_forward.1} parent=103 // pred_check
          %p1058 = pneg %p710
        $region138: #{block_forward.1} parent=103 // pred_check_branch
          %1060 = sbr.rel (%p1058) target = $region140
        $region139: #{block_forward.1} parent=103 // pred_region
          %p1061 = scmp.lt.s32.totalorder %s83, 1
          %s1062 = scalar_select %p1061, %s83, 1
          %s1063 = smul.addr %s1062, 8
          %s1064 = scalar_lea.vmem %s55, %s1063
        $region140: #{block_forward.1} parent=103 // pred_fallthru
          _
      $region104: #{block_forward.1} parent=5 // pred_fallthru
        _
      %p1065 = scmp.le.s32.totalorder 1, %s83
      %p1066 = scmp.lt.s32.totalorder %s83, 3
      %p1067 = pnand %p1065, %p1066
      %p1068 = pneg %p1067
      // Predicated region
      $region141: #{block_forward.1} parent=5 // pred_check
        _
      $region142: #{block_forward.1} parent=5 // pred_check_branch
        %1070 = sbr.rel (%p1067) target = $region144
      $region143: #{block_forward.1} parent=5 // pred_region
        %s1071 = ssub.s32 %s83, 1
        %s1072 = sand.u32 %s495, 1
        %s1073 = scalar_lea.sflag [#allocation5], %s1072
        %s1074 = sand.u32 %s495, 1
        %s1075 = smul.addr %s1074, 768
        %s1076 = scalar_lea.vmem [#allocation4], %s1075
        // Predicated region
        $region145: #{block_forward.1} parent=143 // pred_check
          %p1077 = pneg %p508
        $region146: #{block_forward.1} parent=143 // pred_check_branch
          %1079 = sbr.rel (%p1077) target = $region148
        $region147: #{block_forward.1} parent=143 // pred_region
          %1081 = dma.done %s1073, 12288
        $region148: #{block_forward.1} parent=143 // pred_fallthru
          _
        %s1082 = sand.u32 %s88, 1
        %s1083 = scalar_lea.sflag [#allocation8], %s1082
        %s1084 = sand.u32 %s521, 1
        %s1085 = smul.addr %s1084, 256
        %s1086 = scalar_lea.vmem [#allocation7], %s1085
        // Predicated region
        $region149: #{block_forward.1} parent=143 // pred_check
          %p1087 = pneg %p534
        $region150: #{block_forward.1} parent=143 // pred_check_branch
          %1089 = sbr.rel (%p1087) target = $region152
        $region151: #{block_forward.1} parent=143 // pred_region
          %1091 = dma.done %s1083, 4096
        $region152: #{block_forward.1} parent=143 // pred_fallthru
          _
        %s1092 = sand.u32 %s88, 1
        %s1093 = scalar_lea.sflag [#allocation8], %s1092
        %s1094 = sand.u32 %s547, 1
        %s1095 = smul.addr %s1094, 256
        %s1096 = scalar_lea.vmem [#allocation9], %s1095
        // Predicated region
        $region153: #{block_forward.1} parent=143 // pred_check
          %p1097 = pneg %p560
        $region154: #{block_forward.1} parent=143 // pred_check_branch
          %1099 = sbr.rel (%p1097) target = $region156
        $region155: #{block_forward.1} parent=143 // pred_region
          %1101 = dma.done %s1093, 4096
        $region156: #{block_forward.1} parent=143 // pred_fallthru
          _
        %s1102 = sand.u32 %s88, 1
        %s1103 = scalar_lea.sflag [#allocation11], %s1102
        %s1104 = sand.u32 %s573, 1
        %s1105 = smul.addr %s1104, 512
        %s1106 = scalar_lea.vmem [#allocation10], %s1105
        // Predicated region
        $region157: #{block_forward.1} parent=143 // pred_check
          %p1107 = pneg %p586
        $region158: #{block_forward.1} parent=143 // pred_check_branch
          %1109 = sbr.rel (%p1107) target = $region160
        $region159: #{block_forward.1} parent=143 // pred_region
          %1111 = dma.done %s1103, 8192
        $region160: #{block_forward.1} parent=143 // pred_fallthru
          _
        %s1112 = sand.u32 %s88, 1
        %s1113 = scalar_lea.sflag [#allocation11], %s1112
        %s1114 = sand.u32 %s599, 1
        %s1115 = smul.addr %s1114, 256
        %s1116 = scalar_lea.vmem [#allocation12], %s1115
        // Predicated region
        $region161: #{block_forward.1} parent=143 // pred_check
          %p1117 = pneg %p612
        $region162: #{block_forward.1} parent=143 // pred_check_branch
          %1119 = sbr.rel (%p1117) target = $region164
        $region163: #{block_forward.1} parent=143 // pred_region
          %1121 = dma.done %s1113, 4096
        $region164: #{block_forward.1} parent=143 // pred_fallthru
          _
        %s1122 = sand.u32 %s88, 1
        %s1123 = scalar_lea.sflag [#allocation14], %s1122
        %s1124 = sand.u32 %s625, 1
        %s1125 = smul.addr %s1124, 1024
        %s1126 = scalar_lea.vmem [#allocation13], %s1125
        // Predicated region
        $region165: #{block_forward.1} parent=143 // pred_check
          %p1127 = pneg %p638
        $region166: #{block_forward.1} parent=143 // pred_check_branch
          %1129 = sbr.rel (%p1127) target = $region168
        $region167: #{block_forward.1} parent=143 // pred_region
          %1131 = dma.done %s1123, 16384
        $region168: #{block_forward.1} parent=143 // pred_fallthru
          _
        %s1132 = sand.u32 %s88, 1
        %s1133 = scalar_lea.sflag [#allocation14], %s1132
        %s1134 = sand.u32 %s651, 1
        %s1135 = smul.addr %s1134, 1024
        %s1136 = scalar_lea.vmem [#allocation15], %s1135
        // Predicated region
        $region169: #{block_forward.1} parent=143 // pred_check
          %p1137 = pneg %p664
        $region170: #{block_forward.1} parent=143 // pred_check_branch
          %1139 = sbr.rel (%p1137) target = $region172
        $region171: #{block_forward.1} parent=143 // pred_region
          %1141 = dma.done %s1133, 16384
        $region172: #{block_forward.1} parent=143 // pred_fallthru
          _
        // Predicated region
        $region173: #{block_forward.1} parent=143 // pred_check
          %p1142 = pneg %p737
        $region174: #{block_forward.1} parent=143 // pred_check_branch
          %1144 = sbr.rel (%p1142) target = $region176
        $region175: #{block_forward.1} parent=143 // pred_region
          %1146 = dma.done [#allocation17], 16384
        $region176: #{block_forward.1} parent=143 // pred_fallthru
          _
        %p1147 = pneg %p104
        %p1148 = pneg %p101
        %p1149 = pneg %p125
        %p1150 = pneg %p122
        %p1151 = pneg %p146
        %p1152 = pneg %p143
        %p1153 = pneg %p167
        %p1154 = pneg %p164
        %p1155 = pneg %p188
        %p1156 = pneg %p185
        %p1157 = pneg %p209
        %p1158 = pneg %p206
        %p1159 = pneg %p230
        %p1160 = pneg %p227
        %p1161 = pneg %p251
        %p1162 = pneg %p248
        %p1163 = pneg %p272
        %p1164 = pneg %p269
        %p1165 = pneg %p293
        %p1166 = pneg %p290
        %p1167 = pneg %p314
        %p1168 = pneg %p311
        %p1169 = pneg %p335
        %p1170 = pneg %p332
        %p1171 = pneg %p356
        %p1172 = pneg %p353
        %p1173 = pneg %p377
        %p1174 = pneg %p374
        %p1175 = pneg %p398
        %p1176 = pneg %p395
        %p1177 = pneg %p419
        %p1178 = pneg %p416
        %p1179 = pneg %p440
        %p1180 = pneg %p437
        %p1181 = pneg %p461
        %p1182 = pneg %p458
        %p1183 = pneg %p482
        %p1184 = pneg %p479
        %s1185 = sand.u32 %s495, 1
        %s1186 = scalar_lea.sflag [#allocation5], %s1185
        %s1187 = sand.u32 %s495, 1
        %s1188 = smul.addr %s1187, 768
        %s1189 = scalar_lea.vmem [#allocation4], %s1188
        %p1190 = pneg %p508
        %p1191 = pneg %p505
        %s1192 = sand.u32 %s88, 1
        %s1193 = scalar_lea.sflag [#allocation8], %s1192
        %s1194 = sand.u32 %s521, 1
        %s1195 = smul.addr %s1194, 256
        %s1196 = scalar_lea.vmem [#allocation7], %s1195
        %p1197 = pneg %p534
        %p1198 = pneg %p531
        %s1199 = sand.u32 %s88, 1
        %s1200 = scalar_lea.sflag [#allocation8], %s1199
        %s1201 = sand.u32 %s547, 1
        %s1202 = smul.addr %s1201, 256
        %s1203 = scalar_lea.vmem [#allocation9], %s1202
        %p1204 = pneg %p560
        %p1205 = pneg %p557
        %s1206 = sand.u32 %s88, 1
        %s1207 = scalar_lea.sflag [#allocation11], %s1206
        %s1208 = sand.u32 %s573, 1
        %s1209 = smul.addr %s1208, 512
        %s1210 = scalar_lea.vmem [#allocation10], %s1209
        %p1211 = pneg %p586
        %p1212 = pneg %p583
        %s1213 = sand.u32 %s88, 1
        %s1214 = scalar_lea.sflag [#allocation11], %s1213
        %s1215 = sand.u32 %s599, 1
        %s1216 = smul.addr %s1215, 256
        %s1217 = scalar_lea.vmem [#allocation12], %s1216
        %p1218 = pneg %p612
        %p1219 = pneg %p609
        %s1220 = sand.u32 %s88, 1
        %s1221 = scalar_lea.sflag [#allocation14], %s1220
        %s1222 = sand.u32 %s625, 1
        %s1223 = smul.addr %s1222, 1024
        %s1224 = scalar_lea.vmem [#allocation13], %s1223
        %p1225 = pneg %p638
        %p1226 = pneg %p635
        %s1227 = sand.u32 %s88, 1
        %s1228 = scalar_lea.sflag [#allocation14], %s1227
        %s1229 = sand.u32 %s651, 1
        %s1230 = smul.addr %s1229, 1024
        %s1231 = scalar_lea.vmem [#allocation15], %s1230
        %p1232 = pneg %p664
        %p1233 = pneg %p661
        %p1234 = scmp.lt.s32.totalorder %s88, 1
        %s1235 = scalar_select %p1234, %s88, 1
        %s1236 = smul.addr %s1235, 4
        %s1237 = smul.addr %s1236, 8
        %s1238 = scalar_lea.vmem %s53, %s1237
        %p1239 = pneg %p690
        %p1240 = pneg %p687
        %p1241 = scmp.lt.s32.totalorder %s88, 1
        %s1242 = scalar_select %p1241, %s88, 1
        %s1243 = smul.addr %s1242, 8
        %s1244 = scalar_lea.vmem %s55, %s1243
        %p1245 = pneg %p716
        %p1246 = pneg %p713
        %p1247 = pneg %p737
        %p1248 = pneg %p734
        %p1249 = pneg %p758
        %p1250 = pneg %p755
        %p1251 = pneg %p779
        %p1252 = pneg %p776
        %p1253 = pneg %p800
        %p1254 = pneg %p797
        %p1255 = scmp.lt.s32.totalorder %s88, 1
        %s1256 = scalar_select %p1255, %s88, 1
        %s1257 = smul.addr %s1256, 4
        %s1258 = smul.addr %s1257, 8
        %s1259 = scalar_lea.vmem %s53, %s1258
        %p1260 = scmp.lt.s32.totalorder %s88, 1
        %s1261 = scalar_select %p1260, %s88, 1
        %s1262 = smul.addr %s1261, 8
        %s1263 = scalar_lea.vmem %s55, %s1262
        %p1265 = scmp.eq.s32.totalorder %s88, 0
        // Predicated region
        $region177: #{block_forward.1} parent=143 // pred_check
          %p1266 = pneg %p1265
        $region178: #{block_forward.1} parent=143 // pred_check_branch
          %1268 = sbr.rel (%p1266) target = $region180
        $region179: #{block_forward.1} parent=143 // pred_region
          %v1269 = vld [vmem:[%s1] sm:$0xff]
          %v1270 = vld [vmem:[%s29] sm:$0x1]
          %v1271 = vld [vmem:[%s29 + $0x1] sm:$0x1]
          %v1272 = vld [vmem:[%s29 + $0x2] sm:$0x1]
          %v1273 = vld [vmem:[%s29 + $0x3] sm:$0x1]
          %v1274 = vld [vmem:[%s29 + $0x4] sm:$0x1]
          %vm1275 = vcmask 130048
          %v1276 = vsel %vm1275, %v1269, 0.0
          %1277 = vadd.xlane.f32.xlu0 %v1276
          %v1278 = vpop.xlane.xlu0 %1277
          %v1279 = vrcp.pop 16.0
          %v1280 = vmul.f32 16.0, %v1279
          %v1281 = vsub.f32 1.0, %v1280
          %v1282 = vmul.f32 %v1279, %v1281
          %v1283 = vadd.f32 %v1279, %v1282
          %vm1284 = vweird.f32 %v1279
          %v1285 = vsel %vm1284, %v1279, %v1283
          %v1286 = vmul.f32 %v1278, %v1285
          %v1287 = vsub.f32 %v1269, %v1286
          %v1288 = vmul.f32 %v1287, %v1287
          %v1289 = vsel %vm1275, %v1288, 0.0
          %1290 = vadd.xlane.f32.xlu0 %v1289
          %v1291 = vpop.xlane.xlu0 %1290
          %v1292 = vmul.f32 %v1291, %v1285
          %v1293 = vadd.f32 %v1292, 1e-05
          %v1294 = vrsqrt.pop %v1293
          %v1295 = vmul.f32 %v1294, %v1293
          %v1296 = vmul.f32 %v1295, %v1294
          %v1297 = vmul.f32 0.5, %v1296
          %v1298 = vsub.f32 1.5, %v1297
          %v1299 = vmul.f32 %v1294, %v1298
          %vm1300 = vweird.f32 %v1293
          %vm1301 = vweird.f32 %v1294
          %vm1302 = vmor %vm1300, %vm1301
          %v1303 = vsel %vm1302, %v1294, %v1299
          %v1304 = vmul.f32 %v1287, %v1303
          %v1306 = vperm.slane %v1270, 0
          %v1308 = vmul.f32 %v1304, %v1306
          %v1310 = vperm.slane %v1271, 0
          %v1312 = vadd.f32 %v1308, %v1310
          %v1313 = vld [vmem:[%s11] sm:$0xf]
          %v1314 = vld [vmem:[%s11 + $0x4] sm:$0xf]
          %v1315 = vpack.c.bf16 %v1312, %v1312
          %v1317 = vperm.slane %v1272, 0
          %v1321 = vunpack.c.l.b16 %v1313
          %v1322 = vunpack.c.l.b16 %v1314
          %v1323 = vpack.c.b16 %v1322, %v1321
          %v1326 = vsel %vm1275, %v1315, 0
          %1328 = vmatpush.bf16.msra.mxu0 0
          %1329 = vmatpush.bf16.msra.mxu0 0
          %1330 = vmatpush.bf16.msra.mxu0 0
          %1331 = vmatpush.bf16.msra.mxu0 0
          %1332 = vmatpush.bf16.msra.mxu0 0
          %1333 = vmatpush.bf16.msra.mxu0 0
          %1334 = vmatpush.bf16.msra.mxu0 0
          %1335 = vmatpush.bf16.msra.mxu0 %v1323
          %1336 = vmatmul.bf16.gmra.mxu0 %v1326
          %v1337 = vpop.f32.mrf.mxu0
          %v1338 = vadd.f32 %v1317, %v1337
          %v1339 = vpop.f32.mrf.mxu0
          %1340 = vdwg.mxu0
          %v1341 = vmax.f32 %v1338, 0.0
          %v1342 = vld [vmem:[%s13] sm:$0xf]
          %v1343 = vld [vmem:[%s13 + $0x4] sm:$0xf]
          %v1344 = vld [vmem:[%s13 + $0x8] sm:$0xf]
          %v1345 = vld [vmem:[%s13 + $0xc] sm:$0xf]
          %v1346 = vpack.c.bf16 %v1341, %v1341
          %v1348 = vperm.slane %v1273, 0
          %v1354 = vunpack.c.l.b16 %v1342
          %v1355 = vunpack.c.l.b16 %v1343
          %v1356 = vunpack.c.l.b16 %v1344
          %v1357 = vunpack.c.l.b16 %v1345
          %v1358 = vpack.c.b16 %v1355, %v1354
          %v1359 = vpack.c.b16 %v1357, %v1356
          %vm1362 = vcmask 261120
          %v1364 = vsel %vm1362, %v1346, 0
          %1366 = vmatpush.bf16.msra.mxu0 0
          %1367 = vmatpush.bf16.msra.mxu0 0
          %1368 = vmatpush.bf16.msra.mxu0 0
          %1369 = vmatpush.bf16.msra.mxu0 0
          %1370 = vmatpush.bf16.msra.mxu0 0
          %1371 = vmatpush.bf16.msra.mxu0 0
          %1372 = vmatpush.bf16.msra.mxu0 %v1359
          %1373 = vmatpush.bf16.msra.mxu0 %v1358
          %1374 = vmatmul.bf16.gmra.mxu0 %v1364
          %v1375 = vpop.f32.mrf.mxu0
          %v1376 = vadd.f32 %v1348, %v1375
          %v1377 = vpop.f32.mrf.mxu0
          %1378 = vdwg.mxu0
          %v1379 = vmax.f32 %v1376, 0.0
          %v1380 = vld [vmem:[%s15] sm:$0xf]
          %v1381 = vld [vmem:[%s15 + $0x4] sm:$0xf]
          %v1382 = vpack.c.bf16 %v1379, %v1379
          %v1384 = vperm.slane %v1274, 0
          %v1388 = vunpack.c.l.b16 %v1380
          %v1389 = vunpack.c.l.b16 %v1381
          %v1390 = vpack.c.b16 %v1389, %v1388
          %v1393 = vsel %vm1275, %v1382, 0
          %1395 = vmatpush.bf16.msra.mxu0 0
          %1396 = vmatpush.bf16.msra.mxu0 0
          %1397 = vmatpush.bf16.msra.mxu0 0
          %1398 = vmatpush.bf16.msra.mxu0 0
          %1399 = vmatpush.bf16.msra.mxu0 0
          %1400 = vmatpush.bf16.msra.mxu0 0
          %1401 = vmatpush.bf16.msra.mxu0 0
          %1402 = vmatpush.bf16.msra.mxu0 %v1390
          %1403 = vmatmul.bf16.gmra.mxu0 %v1393
          %v1404 = vpop.f32.mrf.mxu0
          %v1405 = vadd.f32 %v1384, %v1404
          %v1406 = vpop.f32.mrf.mxu0
          %1407 = vdwg.mxu0
          %v1408 = vld [vmem:[%s3] sm:$0xff]
          %v1409 = vld [vmem:[%s29 + $0x5] sm:$0x1]
          %v1410 = vld [vmem:[%s29 + $0x6] sm:$0x1]
          %v1411 = vld [vmem:[%s29 + $0x7] sm:$0x1]
          %v1412 = vld [vmem:[%s29 + $0x8] sm:$0x1]
          %v1413 = vld [vmem:[%s29 + $0x9] sm:$0x1]
          %v1414 = vsel %vm1362, %v1408, 0.0
          %1415 = vadd.xlane.f32.xlu0 %v1414
          %v1416 = vpop.xlane.xlu0 %1415
          %v1417 = vrcp.pop 32.0
          %v1418 = vmul.f32 32.0, %v1417
          %v1419 = vsub.f32 1.0, %v1418
          %v1420 = vmul.f32 %v1417, %v1419
          %v1421 = vadd.f32 %v1417, %v1420
          %vm1422 = vweird.f32 %v1417
          %v1423 = vsel %vm1422, %v1417, %v1421
          %v1424 = vmul.f32 %v1416, %v1423
          %v1425 = vsub.f32 %v1408, %v1424
          %v1426 = vmul.f32 %v1425, %v1425
          %v1427 = vsel %vm1362, %v1426, 0.0
          %1428 = vadd.xlane.f32.xlu0 %v1427
          %v1429 = vpop.xlane.xlu0 %1428
          %v1430 = vmul.f32 %v1429, %v1423
          %v1431 = vadd.f32 %v1430, 1e-05
          %v1432 = vrsqrt.pop %v1431
          %v1433 = vmul.f32 %v1432, %v1431
          %v1434 = vmul.f32 %v1433, %v1432
          %v1435 = vmul.f32 0.5, %v1434
          %v1436 = vsub.f32 1.5, %v1435
          %v1437 = vmul.f32 %v1432, %v1436
          %vm1438 = vweird.f32 %v1431
          %vm1439 = vweird.f32 %v1432
          %vm1440 = vmor %vm1438, %vm1439
          %v1441 = vsel %vm1440, %v1432, %v1437
          %v1442 = vmul.f32 %v1425, %v1441
          %v1444 = vperm.slane %v1409, 0
          %v1446 = vmul.f32 %v1442, %v1444
          %v1448 = vperm.slane %v1410, 0
          %v1450 = vadd.f32 %v1446, %v1448
          %v1451 = vld [vmem:[%s17] sm:$0xf]
          %v1452 = vld [vmem:[%s17 + $0x4] sm:$0xf]
          %v1453 = vld [vmem:[%s17 + $0x8] sm:$0xf]
          %v1454 = vld [vmem:[%s17 + $0xc] sm:$0xf]
          %v1455 = vpack.c.bf16 %v1450, %v1450
          %v1457 = vperm.slane %v1411, 0
          %v1463 = vunpack.c.l.b16 %v1451
          %v1464 = vunpack.c.l.b16 %v1452
          %v1465 = vunpack.c.l.b16 %v1453
          %v1466 = vunpack.c.l.b16 %v1454
          %v1467 = vpack.c.b16 %v1464, %v1463
          %v1468 = vpack.c.b16 %v1466, %v1465
          %v1472 = vsel %vm1362, %v1455, 0
          %1474 = vmatpush.bf16.msra.mxu0 0
          %1475 = vmatpush.bf16.msra.mxu0 0
          %1476 = vmatpush.bf16.msra.mxu0 0
          %1477 = vmatpush.bf16.msra.mxu0 0
          %1478 = vmatpush.bf16.msra.mxu0 0
          %1479 = vmatpush.bf16.msra.mxu0 0
          %1480 = vmatpush.bf16.msra.mxu0 %v1468
          %1481 = vmatpush.bf16.msra.mxu0 %v1467
          %1482 = vmatmul.bf16.gmra.mxu0 %v1472
          %v1483 = vpop.f32.mrf.mxu0
          %v1484 = vadd.f32 %v1457, %v1483
          %v1485 = vpop.f32.mrf.mxu0
          %1486 = vdwg.mxu0
          %v1487 = vmax.f32 %v1484, 0.0
          %v1488 = vld [vmem:[%s19] sm:$0xf]
          %v1489 = vld [vmem:[%s19 + $0x4] sm:$0xf]
          %v1490 = vld [vmem:[%s19 + $0x8] sm:$0xf]
          %v1491 = vld [vmem:[%s19 + $0xc] sm:$0xf]
          %v1492 = vld [vmem:[%s19 + $0x10] sm:$0xf]
          %v1493 = vld [vmem:[%s19 + $0x14] sm:$0xf]
          %v1494 = vld [vmem:[%s19 + $0x18] sm:$0xf]
          %v1495 = vld [vmem:[%s19 + $0x1c] sm:$0xf]
          %v1496 = vpack.c.bf16 %v1487, %v1487
          %v1498 = vperm.slane %v1412, 0
          %v1508 = vunpack.c.l.b16 %v1488
          %v1509 = vunpack.c.l.b16 %v1489
          %v1510 = vunpack.c.l.b16 %v1490
          %v1511 = vunpack.c.l.b16 %v1491
          %v1512 = vunpack.c.l.b16 %v1492
          %v1513 = vunpack.c.l.b16 %v1493
          %v1514 = vunpack.c.l.b16 %v1494
          %v1515 = vunpack.c.l.b16 %v1495
          %v1516 = vpack.c.b16 %v1509, %v1508
          %v1517 = vpack.c.b16 %v1511, %v1510
          %v1518 = vpack.c.b16 %v1513, %v1512
          %v1519 = vpack.c.b16 %v1515, %v1514
          %vm1524 = vcmask 523264
          %v1526 = vsel %vm1524, %v1496, 0
          %1528 = vmatpush.bf16.msra.mxu0 0
          %1529 = vmatpush.bf16.msra.mxu0 0
          %1530 = vmatpush.bf16.msra.mxu0 0
          %1531 = vmatpush.bf16.msra.mxu0 0
          %1532 = vmatpush.bf16.msra.mxu0 %v1519
          %1533 = vmatpush.bf16.msra.mxu0 %v1518
          %1534 = vmatpush.bf16.msra.mxu0 %v1517
          %1535 = vmatpush.bf16.msra.mxu0 %v1516
          %1536 = vmatmul.bf16.gmra.mxu0 %v1526
          %v1537 = vpop.f32.mrf.mxu0
          %v1538 = vadd.f32 %v1498, %v1537
          %v1539 = vpop.f32.mrf.mxu0
          %1540 = vdwg.mxu0
          %v1541 = vmax.f32 %v1538, 0.0
          %v1542 = vld [vmem:[%s21] sm:$0xf]
          %v1543 = vld [vmem:[%s21 + $0x4] sm:$0xf]
          %v1544 = vld [vmem:[%s21 + $0x8] sm:$0xf]
          %v1545 = vld [vmem:[%s21 + $0xc] sm:$0xf]
          %v1546 = vpack.c.bf16 %v1541, %v1541
          %v1548 = vperm.slane %v1413, 0
          %v1554 = vunpack.c.l.b16 %v1542
          %v1555 = vunpack.c.l.b16 %v1543
          %v1556 = vunpack.c.l.b16 %v1544
          %v1557 = vunpack.c.l.b16 %v1545
          %v1558 = vpack.c.b16 %v1555, %v1554
          %v1559 = vpack.c.b16 %v1557, %v1556
          %v1563 = vsel %vm1362, %v1546, 0
          %1565 = vmatpush.bf16.msra.mxu0 0
          %1566 = vmatpush.bf16.msra.mxu0 0
          %1567 = vmatpush.bf16.msra.mxu0 0
          %1568 = vmatpush.bf16.msra.mxu0 0
          %1569 = vmatpush.bf16.msra.mxu0 0
          %1570 = vmatpush.bf16.msra.mxu0 0
          %1571 = vmatpush.bf16.msra.mxu0 %v1559
          %1572 = vmatpush.bf16.msra.mxu0 %v1558
          %1573 = vmatmul.bf16.gmra.mxu0 %v1563
          %v1574 = vpop.f32.mrf.mxu0
          %v1575 = vadd.f32 %v1548, %v1574
          %v1576 = vpop.f32.mrf.mxu0
          %1577 = vdwg.mxu0
          %v1578 = vld [vmem:[%s5] sm:$0xff]
          %v1579 = vld [vmem:[%s29 + $0xa] sm:$0x1]
          %v1580 = vld [vmem:[%s29 + $0xb] sm:$0x1]
          %v1581 = vld [vmem:[%s29 + $0xc] sm:$0x1]
          %v1582 = vld [vmem:[%s29 + $0xd] sm:$0x1]
          %v1583 = vld [vmem:[%s29 + $0xe] sm:$0x1]
          %vm1584 = vcmask 195584
          %v1585 = vsel %vm1584, %v1578, 0.0
          %1586 = vadd.xlane.f32.xlu0 %v1585
          %v1587 = vpop.xlane.xlu0 %1586
          %v1588 = vrcp.pop 24.0
          %v1589 = vmul.f32 24.0, %v1588
          %v1590 = vsub.f32 1.0, %v1589
          %v1591 = vmul.f32 %v1588, %v1590
          %v1592 = vadd.f32 %v1588, %v1591
          %vm1593 = vweird.f32 %v1588
          %v1594 = vsel %vm1593, %v1588, %v1592
          %v1595 = vmul.f32 %v1587, %v1594
          %v1596 = vsub.f32 %v1578, %v1595
          %v1597 = vmul.f32 %v1596, %v1596
          %v1598 = vsel %vm1584, %v1597, 0.0
          %1599 = vadd.xlane.f32.xlu0 %v1598
          %v1600 = vpop.xlane.xlu0 %1599
          %v1601 = vmul.f32 %v1600, %v1594
          %v1602 = vadd.f32 %v1601, 1e-05
          %v1603 = vrsqrt.pop %v1602
          %v1604 = vmul.f32 %v1603, %v1602
          %v1605 = vmul.f32 %v1604, %v1603
          %v1606 = vmul.f32 0.5, %v1605
          %v1607 = vsub.f32 1.5, %v1606
          %v1608 = vmul.f32 %v1603, %v1607
          %vm1609 = vweird.f32 %v1602
          %vm1610 = vweird.f32 %v1603
          %vm1611 = vmor %vm1609, %vm1610
          %v1612 = vsel %vm1611, %v1603, %v1608
          %v1613 = vmul.f32 %v1596, %v1612
          %v1615 = vperm.slane %v1579, 0
          %v1617 = vmul.f32 %v1613, %v1615
          %v1619 = vperm.slane %v1580, 0
          %v1621 = vadd.f32 %v1617, %v1619
          %v1622 = vld [vmem:[%s23] sm:$0xf]
          %v1623 = vld [vmem:[%s23 + $0x4] sm:$0xf]
          %v1624 = vld [vmem:[%s23 + $0x8] sm:$0xf]
          %v1625 = vpack.c.bf16 %v1621, %v1621
          %v1627 = vperm.slane %v1581, 0
          %v1632 = vunpack.c.l.b16 %v1622
          %v1633 = vunpack.c.l.b16 %v1623
          %v1634 = vunpack.c.l.b16 %v1624
          %v1635 = vpack.c.b16 %v1633, %v1632
          %v1636 = vpack.c.b16 %v1634, %v1634
          %v1639 = vsel %vm1584, %v1625, 0
          %vm1641 = vcmask 1043456
          %v1643 = vsel %vm1641, %v1636, 0
          %1645 = vmatpush.bf16.msra.mxu0 0
          %1646 = vmatpush.bf16.msra.mxu0 0
          %1647 = vmatpush.bf16.msra.mxu0 0
          %1648 = vmatpush.bf16.msra.mxu0 0
          %1649 = vmatpush.bf16.msra.mxu0 0
          %1650 = vmatpush.bf16.msra.mxu0 0
          %1651 = vmatpush.bf16.msra.mxu0 %v1643
          %1652 = vmatpush.bf16.msra.mxu0 %v1635
          %1653 = vmatmul.bf16.gmra.mxu0 %v1639
          %v1654 = vpop.f32.mrf.mxu0
          %v1655 = vadd.f32 %v1627, %v1654
          %v1656 = vpop.f32.mrf.mxu0
          %1657 = vdwg.mxu0
          %v1658 = vmax.f32 %v1655, 0.0
          %v1659 = vld [vmem:[%s25] sm:$0xf]
          %v1660 = vld [vmem:[%s25 + $0x4] sm:$0xf]
          %v1661 = vld [vmem:[%s25 + $0x8] sm:$0xf]
          %v1662 = vld [vmem:[%s25 + $0xc] sm:$0xf]
          %v1663 = vld [vmem:[%s25 + $0x10] sm:$0xf]
          %v1664 = vld [vmem:[%s25 + $0x14] sm:$0xf]
          %v1665 = vpack.c.bf16 %v1658, %v1658
          %v1667 = vperm.slane %v1582, 0
          %v1675 = vunpack.c.l.b16 %v1659
          %v1676 = vunpack.c.l.b16 %v1660
          %v1677 = vunpack.c.l.b16 %v1661
          %v1678 = vunpack.c.l.b16 %v1662
          %v1679 = vunpack.c.l.b16 %v1663
          %v1680 = vunpack.c.l.b16 %v1664
          %v1681 = vpack.c.b16 %v1676, %v1675
          %v1682 = vpack.c.b16 %v1678, %v1677
          %v1683 = vpack.c.b16 %v1680, %v1679
          %vm1687 = vcmask 392192
          %v1689 = vsel %vm1687, %v1665, 0
          %1691 = vmatpush.bf16.msra.mxu0 0
          %1692 = vmatpush.bf16.msra.mxu0 0
          %1693 = vmatpush.bf16.msra.mxu0 0
          %1694 = vmatpush.bf16.msra.mxu0 0
          %1695 = vmatpush.bf16.msra.mxu0 0
          %1696 = vmatpush.bf16.msra.mxu0 %v1683
          %1697 = vmatpush.bf16.msra.mxu0 %v1682
          %1698 = vmatpush.bf16.msra.mxu0 %v1681
          %1699 = vmatmul.bf16.gmra.mxu0 %v1689
          %v1700 = vpop.f32.mrf.mxu0
          %v1701 = vadd.f32 %v1667, %v1700
          %v1702 = vpop.f32.mrf.mxu0
          %1703 = vdwg.mxu0
          %v1704 = vmax.f32 %v1701, 0.0
          %v1705 = vld [vmem:[%s27] sm:$0xf]
          %v1706 = vld [vmem:[%s27 + $0x4] sm:$0xf]
          %v1707 = vld [vmem:[%s27 + $0x8] sm:$0xf]
          %v1708 = vpack.c.bf16 %v1704, %v1704
          %v1710 = vperm.slane %v1583, 0
          %v1715 = vunpack.c.l.b16 %v1705
          %v1716 = vunpack.c.l.b16 %v1706
          %v1717 = vunpack.c.l.b16 %v1707
          %v1718 = vpack.c.b16 %v1716, %v1715
          %v1719 = vpack.c.b16 %v1717, %v1717
          %v1722 = vsel %vm1584, %v1708, 0
          %v1725 = vsel %vm1641, %v1719, 0
          %1727 = vmatpush.bf16.msra.mxu0 0
          %1728 = vmatpush.bf16.msra.mxu0 0
          %1729 = vmatpush.bf16.msra.mxu0 0
          %1730 = vmatpush.bf16.msra.mxu0 0
          %1731 = vmatpush.bf16.msra.mxu0 0
          %1732 = vmatpush.bf16.msra.mxu0 0
          %1733 = vmatpush.bf16.msra.mxu0 %v1725
          %1734 = vmatpush.bf16.msra.mxu0 %v1718
          %1735 = vmatmul.bf16.gmra.mxu0 %v1722
          %v1736 = vpop.f32.mrf.mxu0
          %v1737 = vadd.f32 %v1710, %v1736
          %v1738 = vpop.f32.mrf.mxu0
          %1739 = vdwg.mxu0
          %v1740 = vld [vmem:[%s7] sm:$0xff]
          %v1741 = vld [vmem:[%s37] sm:$0x1]
          %v1742 = vld [vmem:[%s37 + $0x1] sm:$0x1]
          %v1743 = vld [vmem:[%s37 + $0x2] sm:$0x1]
          %v1744 = vld [vmem:[%s37 + $0x3] sm:$0x1]
          %v1745 = vld [vmem:[%s37 + $0x4] sm:$0x3]
          %vm1746 = vcmask 64512
          %v1747 = vsel %vm1746, %v1737, 0.0
          %1748 = vadd.xlane.f32.xlu0 %v1747
          %v1749 = vpop.xlane.xlu0 %1748
          %v1750 = vadd.f32 %v1749, 0.0
          %v1751 = vsel %vm1746, %v1740, 0.0
          %1752 = vadd.xlane.f32.xlu0 %v1751
          %v1753 = vpop.xlane.xlu0 %1752
          %v1754 = vadd.f32 %v1750, %v1753
          %v1755 = vsel %vm1746, %v1405, 0.0
          %1756 = vadd.xlane.f32.xlu0 %v1755
          %v1757 = vpop.xlane.xlu0 %1756
          %v1758 = vadd.f32 %v1754, %v1757
          %v1759 = vsel %vm1746, %v1575, 0.0
          %1760 = vadd.xlane.f32.xlu0 %v1759
          %v1761 = vpop.xlane.xlu0 %1760
          %v1762 = vadd.f32 %v1758, %v1761
          %v1763 = vmul.f32 %v1762, 0.03125
          %v1764 = vsub.f32 %v1737, %v1763
          %v1765 = vmul.f32 %v1764, %v1764
          %v1766 = vsel %vm1746, %v1765, 0.0
          %1767 = vadd.xlane.f32.xlu0 %v1766
          %v1768 = vpop.xlane.xlu0 %1767
          %v1769 = vadd.f32 %v1768, 0.0
          %v1770 = vsub.f32 %v1740, %v1763
          %v1771 = vmul.f32 %v1770, %v1770
          %v1772 = vsel %vm1746, %v1771, 0.0
          %1773 = vadd.xlane.f32.xlu0 %v1772
          %v1774 = vpop.xlane.xlu0 %1773
          %v1775 = vadd.f32 %v1769, %v1774
          %v1776 = vsub.f32 %v1405, %v1763
          %v1777 = vmul.f32 %v1776, %v1776
          %v1778 = vsel %vm1746, %v1777, 0.0
          %1779 = vadd.xlane.f32.xlu0 %v1778
          %v1780 = vpop.xlane.xlu0 %1779
          %v1781 = vadd.f32 %v1775, %v1780
          %v1782 = vsub.f32 %v1575, %v1763
          %v1783 = vmul.f32 %v1782, %v1782
          %v1784 = vsel %vm1746, %v1783, 0.0
          %1785 = vadd.xlane.f32.xlu0 %v1784
          %v1786 = vpop.xlane.xlu0 %1785
          %v1787 = vadd.f32 %v1781, %v1786
          %v1788 = vmul.f32 %v1787, 0.03125
          %v1789 = vadd.f32 %v1788, 1e-05
          %v1790 = vrsqrt.pop %v1789
          %v1791 = vmul.f32 %v1790, %v1789
          %v1792 = vmul.f32 %v1791, %v1790
          %v1793 = vmul.f32 0.5, %v1792
          %v1794 = vsub.f32 1.5, %v1793
          %v1795 = vmul.f32 %v1790, %v1794
          %vm1796 = vweird.f32 %v1789
          %vm1797 = vweird.f32 %v1790
          %vm1798 = vmor %vm1796, %vm1797
          %v1799 = vsel %vm1798, %v1790, %v1795
          %v1800 = vmul.f32 %v1764, %v1799
          %v1802 = vperm.slane %v1741, 0
          %v1804 = vmul.f32 %v1800, %v1802
          %v1806 = vperm.slane %v1742, 0
          %v1808 = vadd.f32 %v1804, %v1806
          %v1809 = vld [vmem:[%s31] sm:$0xf]
          %v1810 = vpack.c.bf16 %v1808, %v1808
          %v1812 = vsel %vm1746, %v1810, 0
          %v1815 = vsel %vm1641, %v1809, 0
          %1817 = vmatpush.bf16.msra.mxu0 0
          %1818 = vmatpush.bf16.msra.mxu0 0
          %1819 = vmatpush.bf16.msra.mxu0 0
          %1820 = vmatpush.bf16.msra.mxu0 0
          %1821 = vmatpush.bf16.msra.mxu0 0
          %1822 = vmatpush.bf16.msra.mxu0 0
          %1823 = vmatpush.bf16.msra.mxu0 0
          %1824 = vmatpush.bf16.msra.mxu0 %v1815
          %1825 = vmatmul.bf16.gmra.mxu0 %v1812
          %v1826 = vpop.f32.mrf.mxu0
          %v1827 = vadd.f32 0.0, %v1826
          %v1828 = vpop.f32.mrf.mxu0
          %1829 = vdwg.mxu0
          %v1831 = vperm.slane %v1743, 0
          %v1833 = vadd.f32 %v1831, %v1827
          %v1834 = vmul.f32 %v1770, %v1799
          %1835 = vrot.lane.b32.xlu0 %v1802, 120
          %v1836 = vpop.permute.xlu0 %1835
          %v1838 = vmul.f32 %v1834, %v1836
          %1839 = vrot.lane.b32.xlu0 %v1806, 120
          %v1840 = vpop.permute.xlu0 %1839
          %v1842 = vadd.f32 %v1838, %v1840
          %s1843 = scalar_lea.vmem %s31, 4
          %v1844 = vld [vmem:[%s1843] sm:$0xf]
          %v1845 = vpack.c.bf16 %v1842, %v1842
          %v1847 = vsel %vm1746, %v1845, 0
          %v1850 = vsel %vm1641, %v1844, 0
          %1852 = vmatpush.bf16.msra.mxu0 0
          %1853 = vmatpush.bf16.msra.mxu0 0
          %1854 = vmatpush.bf16.msra.mxu0 0
          %1855 = vmatpush.bf16.msra.mxu0 0
          %1856 = vmatpush.bf16.msra.mxu0 0
          %1857 = vmatpush.bf16.msra.mxu0 0
          %1858 = vmatpush.bf16.msra.mxu0 0
          %1859 = vmatpush.bf16.msra.mxu0 %v1850
          %1860 = vmatmul.bf16.gmra.mxu0 %v1847
          %v1861 = vpop.f32.mrf.mxu0
          %v1862 = vadd.f32 0.0, %v1861
          %v1863 = vpop.f32.mrf.mxu0
          %1864 = vdwg.mxu0
          %v1865 = vadd.f32 %v1833, %v1862
          %v1866 = vmul.f32 %v1776, %v1799
          %1867 = vrot.lane.b32.xlu0 %v1802, 112
          %v1868 = vpop.permute.xlu0 %1867
          %v1870 = vmul.f32 %v1866, %v1868
          %1871 = vrot.lane.b32.xlu0 %v1806, 112
          %v1872 = vpop.permute.xlu0 %1871
          %v1874 = vadd.f32 %v1870, %v1872
          %s1875 = scalar_lea.vmem %s31, 8
          %v1876 = vld [vmem:[%s1875] sm:$0xf]
          %v1877 = vpack.c.bf16 %v1874, %v1874
          %v1879 = vsel %vm1746, %v1877, 0
          %v1882 = vsel %vm1641, %v1876, 0
          %1884 = vmatpush.bf16.msra.mxu0 0
          %1885 = vmatpush.bf16.msra.mxu0 0
          %1886 = vmatpush.bf16.msra.mxu0 0
          %1887 = vmatpush.bf16.msra.mxu0 0
          %1888 = vmatpush.bf16.msra.mxu0 0
          %1889 = vmatpush.bf16.msra.mxu0 0
          %1890 = vmatpush.bf16.msra.mxu0 0
          %1891 = vmatpush.bf16.msra.mxu0 %v1882
          %1892 = vmatmul.bf16.gmra.mxu0 %v1879
          %v1893 = vpop.f32.mrf.mxu0
          %v1894 = vadd.f32 0.0, %v1893
          %v1895 = vpop.f32.mrf.mxu0
          %1896 = vdwg.mxu0
          %v1897 = vadd.f32 %v1865, %v1894
          %v1898 = vmul.f32 %v1782, %v1799
          %1899 = vrot.lane.b32.xlu0 %v1802, 104
          %v1900 = vpop.permute.xlu0 %1899
          %v1902 = vmul.f32 %v1898, %v1900
          %1903 = vrot.lane.b32.xlu0 %v1806, 104
          %v1904 = vpop.permute.xlu0 %1903
          %v1906 = vadd.f32 %v1902, %v1904
          %s1907 = scalar_lea.vmem %s31, 12
          %v1908 = vld [vmem:[%s1907] sm:$0xf]
          %v1909 = vpack.c.bf16 %v1906, %v1906
          %v1911 = vsel %vm1746, %v1909, 0
          %v1914 = vsel %vm1641, %v1908, 0
          %1916 = vmatpush.bf16.msra.mxu0 0
          %1917 = vmatpush.bf16.msra.mxu0 0
          %1918 = vmatpush.bf16.msra.mxu0 0
          %1919 = vmatpush.bf16.msra.mxu0 0
          %1920 = vmatpush.bf16.msra.mxu0 0
          %1921 = vmatpush.bf16.msra.mxu0 0
          %1922 = vmatpush.bf16.msra.mxu0 0
          %1923 = vmatpush.bf16.msra.mxu0 %v1914
          %1924 = vmatmul.bf16.gmra.mxu0 %v1911
          %v1925 = vpop.f32.mrf.mxu0
          %v1926 = vadd.f32 0.0, %v1925
          %v1927 = vpop.f32.mrf.mxu0
          %1928 = vdwg.mxu0
          %v1929 = vadd.f32 %v1897, %v1926
          %v1930 = vmax.f32 %v1929, 0.0
          %v1931 = vld [vmem:[%s33] sm:$0xf]
          %v1932 = vld [vmem:[%s33 + $0x4] sm:$0xf]
          %v1933 = vld [vmem:[%s33 + $0x8] sm:$0xf]
          %v1934 = vld [vmem:[%s33 + $0xc] sm:$0xf]
          %v1935 = vld [vmem:[%s33 + $0x10] sm:$0xf]
          %v1936 = vld [vmem:[%s33 + $0x14] sm:$0xf]
          %v1937 = vld [vmem:[%s33 + $0x18] sm:$0xf]
          %v1938 = vld [vmem:[%s33 + $0x1c] sm:$0xf]
          %v1939 = vpack.c.bf16 %v1930, %v1930
          %v1941 = vperm.slane %v1744, 0
          %v1951 = vunpack.c.l.b16 %v1931
          %v1952 = vunpack.c.l.b16 %v1932
          %v1953 = vunpack.c.l.b16 %v1933
          %v1954 = vunpack.c.l.b16 %v1934
          %v1955 = vunpack.c.l.b16 %v1935
          %v1956 = vunpack.c.l.b16 %v1936
          %v1957 = vunpack.c.l.b16 %v1937
          %v1958 = vunpack.c.l.b16 %v1938
          %v1959 = vpack.c.b16 %v1952, %v1951
          %v1960 = vpack.c.b16 %v1954, %v1953
          %v1961 = vpack.c.b16 %v1956, %v1955
          %v1962 = vpack.c.b16 %v1958, %v1957
          %v1968 = vsel %vm1524, %v1939, 0
          %1970 = vmatpush.bf16.msra.mxu0 0
          %1971 = vmatpush.bf16.msra.mxu0 0
          %1972 = vmatpush.bf16.msra.mxu0 0
          %1973 = vmatpush.bf16.msra.mxu0 0
          %1974 = vmatpush.bf16.msra.mxu0 %v1962
          %1975 = vmatpush.bf16.msra.mxu0 %v1961
          %1976 = vmatpush.bf16.msra.mxu0 %v1960
          %1977 = vmatpush.bf16.msra.mxu0 %v1959
          %1978 = vmatmul.bf16.gmra.mxu0 %v1968
          %v1979 = vpop.f32.mrf.mxu0
          %v1980 = vadd.f32 %v1941, %v1979
          %v1981 = vpop.f32.mrf.mxu0
          %1982 = vdwg.mxu0
          %v1983 = vmax.f32 %v1980, 0.0
          %v1984 = vld [vmem:[%s35] sm:$0xff]
          %v1985 = vld [vmem:[%s35 + $0x8] sm:$0xff]
          %v1986 = vld [vmem:[%s35 + $0x10] sm:$0xff]
          %v1987 = vld [vmem:[%s35 + $0x18] sm:$0xff]
          %v1988 = vpack.c.bf16 %v1983, %v1983
          %v1990 = vperm.slane %v1745, 0
          %v1991 = vperm.slane %v1745, 1
          %v1998 = vunpack.c.l.b16 %v1984
          %v1999 = vunpack.c.h.b16 %v1984
          %v2000 = vunpack.c.l.b16 %v1985
          %v2001 = vunpack.c.h.b16 %v1985
          %v2002 = vunpack.c.l.b16 %v1986
          %v2003 = vunpack.c.h.b16 %v1986
          %v2004 = vunpack.c.l.b16 %v1987
          %v2005 = vunpack.c.h.b16 %v1987
          %v2006 = vpack.c.b16 %v2000, %v1998
          %v2007 = vpack.c.b16 %v2001, %v1999
          %v2008 = vpack.c.b16 %v2004, %v2002
          %v2009 = vpack.c.b16 %v2005, %v2003
          %v2015 = vsel %vm1362, %v1988, 0
          %2017 = vmatpush.bf16.msra.mxu0 0
          %2018 = vmatpush.bf16.msra.mxu0 0
          %2019 = vmatpush.bf16.msra.mxu0 0
          %2020 = vmatpush.bf16.msra.mxu0 0
          %2021 = vmatpush.bf16.msra.mxu0 0
          %2022 = vmatpush.bf16.msra.mxu0 0
          %2023 = vmatpush.bf16.msra.mxu0 %v2008
          %2024 = vmatpush.bf16.msra.mxu0 %v2006
          %2025 = vmatmul.bf16.gmra.mxu0 %v2015
          %v2026 = vpop.f32.mrf.mxu0
          %v2027 = vadd.f32 %v1990, %v2026
          %v2028 = vpop.f32.mrf.mxu0
          %2029 = vdwg.mxu0
          %2030 = vmatpush.bf16.msra.mxu0 0
          %2031 = vmatpush.bf16.msra.mxu0 0
          %2032 = vmatpush.bf16.msra.mxu0 0
          %2033 = vmatpush.bf16.msra.mxu0 0
          %2034 = vmatpush.bf16.msra.mxu0 0
          %2035 = vmatpush.bf16.msra.mxu0 0
          %2036 = vmatpush.bf16.msra.mxu0 %v2009
          %2037 = vmatpush.bf16.msra.mxu0 %v2007
          %2038 = vmatmul.bf16.gmra.mxu0 %v2015
          %v2039 = vpop.f32.mrf.mxu0
          %v2040 = vadd.f32 %v1991, %v2039
          %v2041 = vpop.f32.mrf.mxu0
          %2042 = vdwg.mxu0
          %2043 = vst [vmem:[#allocation3] sm:$0xff] %v2027
          %2044 = vst [vmem:[#allocation3 + $0x8] sm:$0xff] %v2040
          %2045 = vst [vmem:[#allocation2] sm:$0xff] %v2027
          %2046 = vst [vmem:[#allocation2 + $0x8] sm:$0xff] %v2040
        $region180: #{block_forward.1} parent=143 // pred_fallthru
          _
        %v2047 = vld [vmem:[#allocation2] sm:$0xff]
        %v2048 = vld [vmem:[#allocation2 + $0x8] sm:$0xff]
        %v2049 = vld [vmem:[%s9] sm:$0xff]
        %v2050 = vld [vmem:[%s9 + $0x8] sm:$0xff]
        %v2051 = vld [vmem:[%s1076] sm:$0xff]
        %v2052 = vld [vmem:[%s1076 + $0x8] sm:$0xff]
        %v2053 = vld [vmem:[%s1076 + $0x10] sm:$0xff]
        %v2054 = vld [vmem:[%s1076 + $0x18] sm:$0xff]
        %v2055 = vld [vmem:[%s1076 + $0x20] sm:$0xff]
        %v2056 = vld [vmem:[%s1076 + $0x28] sm:$0xff]
        %v2057 = vld [vmem:[%s1076 + $0x30] sm:$0xff]
        %v2058 = vld [vmem:[%s1076 + $0x38] sm:$0xff]
        %v2059 = vld [vmem:[%s1076 + $0x40] sm:$0xff]
        %v2060 = vld [vmem:[%s1076 + $0x48] sm:$0xff]
        %v2061 = vld [vmem:[%s1076 + $0x50] sm:$0xff]
        %v2062 = vld [vmem:[%s1076 + $0x58] sm:$0xff]
        %v2063 = vld [vmem:[%s1076 + $0x60] sm:$0xff]
        %v2064 = vld [vmem:[%s1076 + $0x68] sm:$0xff]
        %v2065 = vld [vmem:[%s1076 + $0x70] sm:$0xff]
        %v2066 = vld [vmem:[%s1076 + $0x78] sm:$0xff]
        %v2067 = vld [vmem:[%s1076 + $0x80] sm:$0xff]
        %v2068 = vld [vmem:[%s1076 + $0x88] sm:$0xff]
        %v2069 = vld [vmem:[%s1076 + $0x90] sm:$0xff]
        %v2070 = vld [vmem:[%s1076 + $0x98] sm:$0xff]
        %v2071 = vld [vmem:[%s1076 + $0xa0] sm:$0xff]
        %v2072 = vld [vmem:[%s1076 + $0xa8] sm:$0xff]
        %v2073 = vld [vmem:[%s1076 + $0xb0] sm:$0xff]
        %v2074 = vld [vmem:[%s1076 + $0xb8] sm:$0xff]
        %v2075 = vld [vmem:[%s1076 + $0xc0] sm:$0xff]
        %v2076 = vld [vmem:[%s1076 + $0xc8] sm:$0xff]
        %v2077 = vld [vmem:[%s1076 + $0xd0] sm:$0xff]
        %v2078 = vld [vmem:[%s1076 + $0xd8] sm:$0xff]
        %v2079 = vld [vmem:[%s1076 + $0xe0] sm:$0xff]
        %v2080 = vld [vmem:[%s1076 + $0xe8] sm:$0xff]
        %v2081 = vld [vmem:[%s1076 + $0xf0] sm:$0xff]
        %v2082 = vld [vmem:[%s1076 + $0xf8] sm:$0xff]
        %v2083 = vld [vmem:[%s1076 + $0x100] sm:$0xff]
        %v2084 = vld [vmem:[%s1076 + $0x108] sm:$0xff]
        %v2085 = vld [vmem:[%s1076 + $0x110] sm:$0xff]
        %v2086 = vld [vmem:[%s1076 + $0x118] sm:$0xff]
        %v2087 = vld [vmem:[%s1076 + $0x120] sm:$0xff]
        %v2088 = vld [vmem:[%s1076 + $0x128] sm:$0xff]
        %v2089 = vld [vmem:[%s1076 + $0x130] sm:$0xff]
        %v2090 = vld [vmem:[%s1076 + $0x138] sm:$0xff]
        %v2091 = vld [vmem:[%s1076 + $0x140] sm:$0xff]
        %v2092 = vld [vmem:[%s1076 + $0x148] sm:$0xff]
        %v2093 = vld [vmem:[%s1076 + $0x150] sm:$0xff]
        %v2094 = vld [vmem:[%s1076 + $0x158] sm:$0xff]
        %v2095 = vld [vmem:[%s1076 + $0x160] sm:$0xff]
        %v2096 = vld [vmem:[%s1076 + $0x168] sm:$0xff]
        %v2097 = vld [vmem:[%s1076 + $0x170] sm:$0xff]
        %v2098 = vld [vmem:[%s1076 + $0x178] sm:$0xff]
        %v2099 = vld [vmem:[%s1076 + $0x180] sm:$0xff]
        %v2100 = vld [vmem:[%s1076 + $0x188] sm:$0xff]
        %v2101 = vld [vmem:[%s1076 + $0x190] sm:$0xff]
        %v2102 = vld [vmem:[%s1076 + $0x198] sm:$0xff]
        %v2103 = vld [vmem:[%s1076 + $0x1a0] sm:$0xff]
        %v2104 = vld [vmem:[%s1076 + $0x1a8] sm:$0xff]
        %v2105 = vld [vmem:[%s1076 + $0x1b0] sm:$0xff]
        %v2106 = vld [vmem:[%s1076 + $0x1b8] sm:$0xff]
        %v2107 = vld [vmem:[%s1076 + $0x1c0] sm:$0xff]
        %v2108 = vld [vmem:[%s1076 + $0x1c8] sm:$0xff]
        %v2109 = vld [vmem:[%s1076 + $0x1d0] sm:$0xff]
        %v2110 = vld [vmem:[%s1076 + $0x1d8] sm:$0xff]
        %v2111 = vld [vmem:[%s1076 + $0x1e0] sm:$0xff]
        %v2112 = vld [vmem:[%s1076 + $0x1e8] sm:$0xff]
        %v2113 = vld [vmem:[%s1076 + $0x1f0] sm:$0xff]
        %v2114 = vld [vmem:[%s1076 + $0x1f8] sm:$0xff]
        %v2115 = vld [vmem:[%s1076 + $0x200] sm:$0xff]
        %v2116 = vld [vmem:[%s1076 + $0x208] sm:$0xff]
        %v2117 = vld [vmem:[%s1076 + $0x210] sm:$0xff]
        %v2118 = vld [vmem:[%s1076 + $0x218] sm:$0xff]
        %v2119 = vld [vmem:[%s1076 + $0x220] sm:$0xff]
        %v2120 = vld [vmem:[%s1076 + $0x228] sm:$0xff]
        %v2121 = vld [vmem:[%s1076 + $0x230] sm:$0xff]
        %v2122 = vld [vmem:[%s1076 + $0x238] sm:$0xff]
        %v2123 = vld [vmem:[%s1076 + $0x240] sm:$0xff]
        %v2124 = vld [vmem:[%s1076 + $0x248] sm:$0xff]
        %v2125 = vld [vmem:[%s1076 + $0x250] sm:$0xff]
        %v2126 = vld [vmem:[%s1076 + $0x258] sm:$0xff]
        %v2127 = vld [vmem:[%s1076 + $0x260] sm:$0xff]
        %v2128 = vld [vmem:[%s1076 + $0x268] sm:$0xff]
        %v2129 = vld [vmem:[%s1076 + $0x270] sm:$0xff]
        %v2130 = vld [vmem:[%s1076 + $0x278] sm:$0xff]
        %v2131 = vld [vmem:[%s1076 + $0x280] sm:$0xff]
        %v2132 = vld [vmem:[%s1076 + $0x288] sm:$0xff]
        %v2133 = vld [vmem:[%s1076 + $0x290] sm:$0xff]
        %v2134 = vld [vmem:[%s1076 + $0x298] sm:$0xff]
        %v2135 = vld [vmem:[%s1076 + $0x2a0] sm:$0xff]
        %v2136 = vld [vmem:[%s1076 + $0x2a8] sm:$0xff]
        %v2137 = vld [vmem:[%s1076 + $0x2b0] sm:$0xff]
        %v2138 = vld [vmem:[%s1076 + $0x2b8] sm:$0xff]
        %v2139 = vld [vmem:[%s1076 + $0x2c0] sm:$0xff]
        %v2140 = vld [vmem:[%s1076 + $0x2c8] sm:$0xff]
        %v2141 = vld [vmem:[%s1076 + $0x2d0] sm:$0xff]
        %v2142 = vld [vmem:[%s1076 + $0x2d8] sm:$0xff]
        %v2143 = vld [vmem:[%s1076 + $0x2e0] sm:$0xff]
        %v2144 = vld [vmem:[%s1076 + $0x2e8] sm:$0xff]
        %v2145 = vld [vmem:[%s1076 + $0x2f0] sm:$0xff]
        %v2146 = vld [vmem:[%s1076 + $0x2f8] sm:$0xff]
        %v2147 = vpack.c.bf16 %v2047, %v2047
        %v2148 = vpack.c.bf16 %v2048, %v2048
        %v2245 = vunpack.c.l.b16 %v2051
        %v2246 = vunpack.c.h.b16 %v2051
        %v2247 = vunpack.c.l.b16 %v2052
        %v2248 = vunpack.c.h.b16 %v2052
        %v2249 = vunpack.c.l.b16 %v2053
        %v2250 = vunpack.c.h.b16 %v2053
        %v2251 = vunpack.c.l.b16 %v2054
        %v2252 = vunpack.c.h.b16 %v2054
        %v2253 = vunpack.c.l.b16 %v2055
        %v2254 = vunpack.c.h.b16 %v2055
        %v2255 = vunpack.c.l.b16 %v2056
        %v2256 = vunpack.c.h.b16 %v2056
        %v2257 = vunpack.c.l.b16 %v2057
        %v2258 = vunpack.c.h.b16 %v2057
        %v2259 = vunpack.c.l.b16 %v2058
        %v2260 = vunpack.c.h.b16 %v2058
        %v2261 = vunpack.c.l.b16 %v2059
        %v2262 = vunpack.c.h.b16 %v2059
        %v2263 = vunpack.c.l.b16 %v2060
        %v2264 = vunpack.c.h.b16 %v2060
        %v2265 = vunpack.c.l.b16 %v2061
        %v2266 = vunpack.c.h.b16 %v2061
        %v2267 = vunpack.c.l.b16 %v2062
        %v2268 = vunpack.c.h.b16 %v2062
        %v2269 = vunpack.c.l.b16 %v2063
        %v2270 = vunpack.c.h.b16 %v2063
        %v2271 = vunpack.c.l.b16 %v2064
        %v2272 = vunpack.c.h.b16 %v2064
        %v2273 = vunpack.c.l.b16 %v2065
        %v2274 = vunpack.c.h.b16 %v2065
        %v2275 = vunpack.c.l.b16 %v2066
        %v2276 = vunpack.c.h.b16 %v2066
        %v2277 = vunpack.c.l.b16 %v2067
        %v2278 = vunpack.c.h.b16 %v2067
        %v2279 = vunpack.c.l.b16 %v2068
        %v2280 = vunpack.c.h.b16 %v2068
        %v2281 = vunpack.c.l.b16 %v2069
        %v2282 = vunpack.c.h.b16 %v2069
        %v2283 = vunpack.c.l.b16 %v2070
        %v2284 = vunpack.c.h.b16 %v2070
        %v2285 = vunpack.c.l.b16 %v2071
        %v2286 = vunpack.c.h.b16 %v2071
        %v2287 = vunpack.c.l.b16 %v2072
        %v2288 = vunpack.c.h.b16 %v2072
        %v2289 = vunpack.c.l.b16 %v2073
        %v2290 = vunpack.c.h.b16 %v2073
        %v2291 = vunpack.c.l.b16 %v2074
        %v2292 = vunpack.c.h.b16 %v2074
        %v2293 = vunpack.c.l.b16 %v2075
        %v2294 = vunpack.c.h.b16 %v2075
        %v2295 = vunpack.c.l.b16 %v2076
        %v2296 = vunpack.c.h.b16 %v2076
        %v2297 = vunpack.c.l.b16 %v2077
        %v2298 = vunpack.c.h.b16 %v2077
        %v2299 = vunpack.c.l.b16 %v2078
        %v2300 = vunpack.c.h.b16 %v2078
        %v2301 = vunpack.c.l.b16 %v2079
        %v2302 = vunpack.c.h.b16 %v2079
        %v2303 = vunpack.c.l.b16 %v2080
        %v2304 = vunpack.c.h.b16 %v2080
        %v2305 = vunpack.c.l.b16 %v2081
        %v2306 = vunpack.c.h.b16 %v2081
        %v2307 = vunpack.c.l.b16 %v2082
        %v2308 = vunpack.c.h.b16 %v2082
        %v2309 = vunpack.c.l.b16 %v2083
        %v2310 = vunpack.c.h.b16 %v2083
        %v2311 = vunpack.c.l.b16 %v2084
        %v2312 = vunpack.c.h.b16 %v2084
        %v2313 = vunpack.c.l.b16 %v2085
        %v2314 = vunpack.c.h.b16 %v2085
        %v2315 = vunpack.c.l.b16 %v2086
        %v2316 = vunpack.c.h.b16 %v2086
        %v2317 = vunpack.c.l.b16 %v2087
        %v2318 = vunpack.c.h.b16 %v2087
        %v2319 = vunpack.c.l.b16 %v2088
        %v2320 = vunpack.c.h.b16 %v2088
        %v2321 = vunpack.c.l.b16 %v2089
        %v2322 = vunpack.c.h.b16 %v2089
        %v2323 = vunpack.c.l.b16 %v2090
        %v2324 = vunpack.c.h.b16 %v2090
        %v2325 = vunpack.c.l.b16 %v2091
        %v2326 = vunpack.c.h.b16 %v2091
        %v2327 = vunpack.c.l.b16 %v2092
        %v2328 = vunpack.c.h.b16 %v2092
        %v2329 = vunpack.c.l.b16 %v2093
        %v2330 = vunpack.c.h.b16 %v2093
        %v2331 = vunpack.c.l.b16 %v2094
        %v2332 = vunpack.c.h.b16 %v2094
        %v2333 = vunpack.c.l.b16 %v2095
        %v2334 = vunpack.c.h.b16 %v2095
        %v2335 = vunpack.c.l.b16 %v2096
        %v2336 = vunpack.c.h.b16 %v2096
        %v2337 = vunpack.c.l.b16 %v2097
        %v2338 = vunpack.c.h.b16 %v2097
        %v2339 = vunpack.c.l.b16 %v2098
        %v2340 = vunpack.c.h.b16 %v2098
        %v2341 = vunpack.c.l.b16 %v2099
        %v2342 = vunpack.c.h.b16 %v2099
        %v2343 = vunpack.c.l.b16 %v2100
        %v2344 = vunpack.c.h.b16 %v2100
        %v2345 = vunpack.c.l.b16 %v2101
        %v2346 = vunpack.c.h.b16 %v2101
        %v2347 = vunpack.c.l.b16 %v2102
        %v2348 = vunpack.c.h.b16 %v2102
        %v2349 = vunpack.c.l.b16 %v2103
        %v2350 = vunpack.c.h.b16 %v2103
        %v2351 = vunpack.c.l.b16 %v2104
        %v2352 = vunpack.c.h.b16 %v2104
        %v2353 = vunpack.c.l.b16 %v2105
        %v2354 = vunpack.c.h.b16 %v2105
        %v2355 = vunpack.c.l.b16 %v2106
        %v2356 = vunpack.c.h.b16 %v2106
        %v2357 = vunpack.c.l.b16 %v2107
        %v2358 = vunpack.c.h.b16 %v2107
        %v2359 = vunpack.c.l.b16 %v2108
        %v2360 = vunpack.c.h.b16 %v2108
        %v2361 = vunpack.c.l.b16 %v2109
        %v2362 = vunpack.c.h.b16 %v2109
        %v2363 = vunpack.c.l.b16 %v2110
        %v2364 = vunpack.c.h.b16 %v2110
        %v2365 = vunpack.c.l.b16 %v2111
        %v2366 = vunpack.c.h.b16 %v2111
        %v2367 = vunpack.c.l.b16 %v2112
        %v2368 = vunpack.c.h.b16 %v2112
        %v2369 = vunpack.c.l.b16 %v2113
        %v2370 = vunpack.c.h.b16 %v2113
        %v2371 = vunpack.c.l.b16 %v2114
        %v2372 = vunpack.c.h.b16 %v2114
        %v2373 = vunpack.c.l.b16 %v2115
        %v2374 = vunpack.c.h.b16 %v2115
        %v2375 = vunpack.c.l.b16 %v2116
        %v2376 = vunpack.c.h.b16 %v2116
        %v2377 = vunpack.c.l.b16 %v2117
        %v2378 = vunpack.c.h.b16 %v2117
        %v2379 = vunpack.c.l.b16 %v2118
        %v2380 = vunpack.c.h.b16 %v2118
        %v2381 = vunpack.c.l.b16 %v2119
        %v2382 = vunpack.c.h.b16 %v2119
        %v2383 = vunpack.c.l.b16 %v2120
        %v2384 = vunpack.c.h.b16 %v2120
        %v2385 = vunpack.c.l.b16 %v2121
        %v2386 = vunpack.c.h.b16 %v2121
        %v2387 = vunpack.c.l.b16 %v2122
        %v2388 = vunpack.c.h.b16 %v2122
        %v2389 = vunpack.c.l.b16 %v2123
        %v2390 = vunpack.c.h.b16 %v2123
        %v2391 = vunpack.c.l.b16 %v2124
        %v2392 = vunpack.c.h.b16 %v2124
        %v2393 = vunpack.c.l.b16 %v2125
        %v2394 = vunpack.c.h.b16 %v2125
        %v2395 = vunpack.c.l.b16 %v2126
        %v2396 = vunpack.c.h.b16 %v2126
        %v2397 = vunpack.c.l.b16 %v2127
        %v2398 = vunpack.c.h.b16 %v2127
        %v2399 = vunpack.c.l.b16 %v2128
        %v2400 = vunpack.c.h.b16 %v2128
        %v2401 = vunpack.c.l.b16 %v2129
        %v2402 = vunpack.c.h.b16 %v2129
        %v2403 = vunpack.c.l.b16 %v2130
        %v2404 = vunpack.c.h.b16 %v2130
        %v2405 = vunpack.c.l.b16 %v2131
        %v2406 = vunpack.c.h.b16 %v2131
        %v2407 = vunpack.c.l.b16 %v2132
        %v2408 = vunpack.c.h.b16 %v2132
        %v2409 = vunpack.c.l.b16 %v2133
        %v2410 = vunpack.c.h.b16 %v2133
        %v2411 = vunpack.c.l.b16 %v2134
        %v2412 = vunpack.c.h.b16 %v2134
        %v2413 = vunpack.c.l.b16 %v2135
        %v2414 = vunpack.c.h.b16 %v2135
        %v2415 = vunpack.c.l.b16 %v2136
        %v2416 = vunpack.c.h.b16 %v2136
        %v2417 = vunpack.c.l.b16 %v2137
        %v2418 = vunpack.c.h.b16 %v2137
        %v2419 = vunpack.c.l.b16 %v2138
        %v2420 = vunpack.c.h.b16 %v2138
        %v2421 = vunpack.c.l.b16 %v2139
        %v2422 = vunpack.c.h.b16 %v2139
        %v2423 = vunpack.c.l.b16 %v2140
        %v2424 = vunpack.c.h.b16 %v2140
        %v2425 = vunpack.c.l.b16 %v2141
        %v2426 = vunpack.c.h.b16 %v2141
        %v2427 = vunpack.c.l.b16 %v2142
        %v2428 = vunpack.c.h.b16 %v2142
        %v2429 = vunpack.c.l.b16 %v2143
        %v2430 = vunpack.c.h.b16 %v2143
        %v2431 = vunpack.c.l.b16 %v2144
        %v2432 = vunpack.c.h.b16 %v2144
        %v2433 = vunpack.c.l.b16 %v2145
        %v2434 = vunpack.c.h.b16 %v2145
        %v2435 = vunpack.c.l.b16 %v2146
        %v2436 = vunpack.c.h.b16 %v2146
        %v2437 = vpack.c.b16 %v2251, %v2245
        %v2438 = vpack.c.b16 %v2252, %v2246
        %v2439 = vpack.c.b16 %v2253, %v2247
        %v2440 = vpack.c.b16 %v2254, %v2248
        %v2441 = vpack.c.b16 %v2255, %v2249
        %v2442 = vpack.c.b16 %v2256, %v2250
        %v2443 = vpack.c.b16 %v2263, %v2257
        %v2444 = vpack.c.b16 %v2264, %v2258
        %v2445 = vpack.c.b16 %v2265, %v2259
        %v2446 = vpack.c.b16 %v2266, %v2260
        %v2447 = vpack.c.b16 %v2267, %v2261
        %v2448 = vpack.c.b16 %v2268, %v2262
        %v2449 = vpack.c.b16 %v2275, %v2269
        %v2450 = vpack.c.b16 %v2276, %v2270
        %v2451 = vpack.c.b16 %v2277, %v2271
        %v2452 = vpack.c.b16 %v2278, %v2272
        %v2453 = vpack.c.b16 %v2279, %v2273
        %v2454 = vpack.c.b16 %v2280, %v2274
        %v2455 = vpack.c.b16 %v2287, %v2281
        %v2456 = vpack.c.b16 %v2288, %v2282
        %v2457 = vpack.c.b16 %v2289, %v2283
        %v2458 = vpack.c.b16 %v2290, %v2284
        %v2459 = vpack.c.b16 %v2291, %v2285
        %v2460 = vpack.c.b16 %v2292, %v2286
        %v2461 = vpack.c.b16 %v2299, %v2293
        %v2462 = vpack.c.b16 %v2300, %v2294
        %v2463 = vpack.c.b16 %v2301, %v2295
        %v2464 = vpack.c.b16 %v2302, %v2296
        %v2465 = vpack.c.b16 %v2303, %v2297
        %v2466 = vpack.c.b16 %v2304, %v2298
        %v2467 = vpack.c.b16 %v2311, %v2305
        %v2468 = vpack.c.b16 %v2312, %v2306
        %v2469 = vpack.c.b16 %v2313, %v2307
        %v2470 = vpack.c.b16 %v2314, %v2308
        %v2471 = vpack.c.b16 %v2315, %v2309
        %v2472 = vpack.c.b16 %v2316, %v2310
        %v2473 = vpack.c.b16 %v2323, %v2317
        %v2474 = vpack.c.b16 %v2324, %v2318
        %v2475 = vpack.c.b16 %v2325, %v2319
        %v2476 = vpack.c.b16 %v2326, %v2320
        %v2477 = vpack.c.b16 %v2327, %v2321
        %v2478 = vpack.c.b16 %v2328, %v2322
        %v2479 = vpack.c.b16 %v2335, %v2329
        %v2480 = vpack.c.b16 %v2336, %v2330
        %v2481 = vpack.c.b16 %v2337, %v2331
        %v2482 = vpack.c.b16 %v2338, %v2332
        %v2483 = vpack.c.b16 %v2339, %v2333
        %v2484 = vpack.c.b16 %v2340, %v2334
        %v2485 = vpack.c.b16 %v2347, %v2341
        %v2486 = vpack.c.b16 %v2348, %v2342
        %v2487 = vpack.c.b16 %v2349, %v2343
        %v2488 = vpack.c.b16 %v2350, %v2344
        %v2489 = vpack.c.b16 %v2351, %v2345
        %v2490 = vpack.c.b16 %v2352, %v2346
        %v2491 = vpack.c.b16 %v2359, %v2353
        %v2492 = vpack.c.b16 %v2360, %v2354
        %v2493 = vpack.c.b16 %v2361, %v2355
        %v2494 = vpack.c.b16 %v2362, %v2356
        %v2495 = vpack.c.b16 %v2363, %v2357
        %v2496 = vpack.c.b16 %v2364, %v2358
        %v2497 = vpack.c.b16 %v2371, %v2365
        %v2498 = vpack.c.b16 %v2372, %v2366
        %v2499 = vpack.c.b16 %v2373, %v2367
        %v2500 = vpack.c.b16 %v2374, %v2368
        %v2501 = vpack.c.b16 %v2375, %v2369
        %v2502 = vpack.c.b16 %v2376, %v2370
        %v2503 = vpack.c.b16 %v2383, %v2377
        %v2504 = vpack.c.b16 %v2384, %v2378
        %v2505 = vpack.c.b16 %v2385, %v2379
        %v2506 = vpack.c.b16 %v2386, %v2380
        %v2507 = vpack.c.b16 %v2387, %v2381
        %v2508 = vpack.c.b16 %v2388, %v2382
        %v2509 = vpack.c.b16 %v2395, %v2389
        %v2510 = vpack.c.b16 %v2396, %v2390
        %v2511 = vpack.c.b16 %v2397, %v2391
        %v2512 = vpack.c.b16 %v2398, %v2392
        %v2513 = vpack.c.b16 %v2399, %v2393
        %v2514 = vpack.c.b16 %v2400, %v2394
        %v2515 = vpack.c.b16 %v2407, %v2401
        %v2516 = vpack.c.b16 %v2408, %v2402
        %v2517 = vpack.c.b16 %v2409, %v2403
        %v2518 = vpack.c.b16 %v2410, %v2404
        %v2519 = vpack.c.b16 %v2411, %v2405
        %v2520 = vpack.c.b16 %v2412, %v2406
        %v2521 = vpack.c.b16 %v2419, %v2413
        %v2522 = vpack.c.b16 %v2420, %v2414
        %v2523 = vpack.c.b16 %v2421, %v2415
        %v2524 = vpack.c.b16 %v2422, %v2416
        %v2525 = vpack.c.b16 %v2423, %v2417
        %v2526 = vpack.c.b16 %v2424, %v2418
        %v2527 = vpack.c.b16 %v2431, %v2425
        %v2528 = vpack.c.b16 %v2432, %v2426
        %v2529 = vpack.c.b16 %v2433, %v2427
        %v2530 = vpack.c.b16 %v2434, %v2428
        %v2531 = vpack.c.b16 %v2435, %v2429
        %v2532 = vpack.c.b16 %v2436, %v2430
        %2629 = vmatpush.bf16.msra.mxu0 %v2479
        %2630 = vmatpush.bf16.msra.mxu0 %v2473
        %2631 = vmatpush.bf16.msra.mxu0 %v2467
        %2632 = vmatpush.bf16.msra.mxu0 %v2461
        %2633 = vmatpush.bf16.msra.mxu0 %v2455
        %2634 = vmatpush.bf16.msra.mxu0 %v2449
        %2635 = vmatpush.bf16.msra.mxu0 %v2443
        %2636 = vmatpush.bf16.msra.mxu0 %v2437
        %2637 = vmatmul.bf16.gmra.mxu0 %v2147
        %v2638 = vpop.f32.mrf.mxu0
        %v2639 = vadd.f32 0.0, %v2638
        %v2640 = vpop.f32.mrf.mxu0
        %2641 = vdwg.mxu0
        %2642 = vmatpush.bf16.msra.mxu0 %v2527
        %2643 = vmatpush.bf16.msra.mxu0 %v2521
        %2644 = vmatpush.bf16.msra.mxu0 %v2515
        %2645 = vmatpush.bf16.msra.mxu0 %v2509
        %2646 = vmatpush.bf16.msra.mxu0 %v2503
        %2647 = vmatpush.bf16.msra.mxu0 %v2497
        %2648 = vmatpush.bf16.msra.mxu0 %v2491
        %2649 = vmatpush.bf16.msra.mxu0 %v2485
        %2650 = vmatmul.bf16.gmra.mxu0 %v2148
        %v2651 = vpop.f32.mrf.mxu0
        %v2652 = vadd.f32 %v2639, %v2651
        %v2653 = vpop.f32.mrf.mxu0
        %2654 = vdwg.mxu0
        %2655 = vmatpush.bf16.msra.mxu0 %v2480
        %2656 = vmatpush.bf16.msra.mxu0 %v2474
        %2657 = vmatpush.bf16.msra.mxu0 %v2468
        %2658 = vmatpush.bf16.msra.mxu0 %v2462
        %2659 = vmatpush.bf16.msra.mxu0 %v2456
        %2660 = vmatpush.bf16.msra.mxu0 %v2450
        %2661 = vmatpush.bf16.msra.mxu0 %v2444
        %2662 = vmatpush.bf16.msra.mxu0 %v2438
        %2663 = vmatmul.bf16.gmra.mxu0 %v2147
        %v2664 = vpop.f32.mrf.mxu0
        %v2665 = vadd.f32 0.0, %v2664
        %v2666 = vpop.f32.mrf.mxu0
        %2667 = vdwg.mxu0
        %2668 = vmatpush.bf16.msra.mxu0 %v2528
        %2669 = vmatpush.bf16.msra.mxu0 %v2522
        %2670 = vmatpush.bf16.msra.mxu0 %v2516
        %2671 = vmatpush.bf16.msra.mxu0 %v2510
        %2672 = vmatpush.bf16.msra.mxu0 %v2504
        %2673 = vmatpush.bf16.msra.mxu0 %v2498
        %2674 = vmatpush.bf16.msra.mxu0 %v2492
        %2675 = vmatpush.bf16.msra.mxu0 %v2486
        %2676 = vmatmul.bf16.gmra.mxu0 %v2148
        %v2677 = vpop.f32.mrf.mxu0
        %v2678 = vadd.f32 %v2665, %v2677
        %v2679 = vpop.f32.mrf.mxu0
        %2680 = vdwg.mxu0
        %2681 = vmatpush.bf16.msra.mxu0 %v2481
        %2682 = vmatpush.bf16.msra.mxu0 %v2475
        %2683 = vmatpush.bf16.msra.mxu0 %v2469
        %2684 = vmatpush.bf16.msra.mxu0 %v2463
        %2685 = vmatpush.bf16.msra.mxu0 %v2457
        %2686 = vmatpush.bf16.msra.mxu0 %v2451
        %2687 = vmatpush.bf16.msra.mxu0 %v2445
        %2688 = vmatpush.bf16.msra.mxu0 %v2439
        %2689 = vmatmul.bf16.gmra.mxu0 %v2147
        %v2690 = vpop.f32.mrf.mxu0
        %v2691 = vadd.f32 0.0, %v2690
        %v2692 = vpop.f32.mrf.mxu0
        %2693 = vdwg.mxu0
        %2694 = vmatpush.bf16.msra.mxu0 %v2529
        %2695 = vmatpush.bf16.msra.mxu0 %v2523
        %2696 = vmatpush.bf16.msra.mxu0 %v2517
        %2697 = vmatpush.bf16.msra.mxu0 %v2511
        %2698 = vmatpush.bf16.msra.mxu0 %v2505
        %2699 = vmatpush.bf16.msra.mxu0 %v2499
        %2700 = vmatpush.bf16.msra.mxu0 %v2493
        %2701 = vmatpush.bf16.msra.mxu0 %v2487
        %2702 = vmatmul.bf16.gmra.mxu0 %v2148
        %v2703 = vpop.f32.mrf.mxu0
        %v2704 = vadd.f32 %v2691, %v2703
        %v2705 = vpop.f32.mrf.mxu0
        %2706 = vdwg.mxu0
        %2707 = vmatpush.bf16.msra.mxu0 %v2482
        %2708 = vmatpush.bf16.msra.mxu0 %v2476
        %2709 = vmatpush.bf16.msra.mxu0 %v2470
        %2710 = vmatpush.bf16.msra.mxu0 %v2464
        %2711 = vmatpush.bf16.msra.mxu0 %v2458
        %2712 = vmatpush.bf16.msra.mxu0 %v2452
        %2713 = vmatpush.bf16.msra.mxu0 %v2446
        %2714 = vmatpush.bf16.msra.mxu0 %v2440
        %2715 = vmatmul.bf16.gmra.mxu0 %v2147
        %v2716 = vpop.f32.mrf.mxu0
        %v2717 = vadd.f32 0.0, %v2716
        %v2718 = vpop.f32.mrf.mxu0
        %2719 = vdwg.mxu0
        %2720 = vmatpush.bf16.msra.mxu0 %v2530
        %2721 = vmatpush.bf16.msra.mxu0 %v2524
        %2722 = vmatpush.bf16.msra.mxu0 %v2518
        %2723 = vmatpush.bf16.msra.mxu0 %v2512
        %2724 = vmatpush.bf16.msra.mxu0 %v2506
        %2725 = vmatpush.bf16.msra.mxu0 %v2500
        %2726 = vmatpush.bf16.msra.mxu0 %v2494
        %2727 = vmatpush.bf16.msra.mxu0 %v2488
        %2728 = vmatmul.bf16.gmra.mxu0 %v2148
        %v2729 = vpop.f32.mrf.mxu0
        %v2730 = vadd.f32 %v2717, %v2729
        %v2731 = vpop.f32.mrf.mxu0
        %2732 = vdwg.mxu0
        %2733 = vmatpush.bf16.msra.mxu0 %v2483
        %2734 = vmatpush.bf16.msra.mxu0 %v2477
        %2735 = vmatpush.bf16.msra.mxu0 %v2471
        %2736 = vmatpush.bf16.msra.mxu0 %v2465
        %2737 = vmatpush.bf16.msra.mxu0 %v2459
        %2738 = vmatpush.bf16.msra.mxu0 %v2453
        %2739 = vmatpush.bf16.msra.mxu0 %v2447
        %2740 = vmatpush.bf16.msra.mxu0 %v2441
        %2741 = vmatmul.bf16.gmra.mxu0 %v2147
        %v2742 = vpop.f32.mrf.mxu0
        %v2743 = vadd.f32 0.0, %v2742
        %v2744 = vpop.f32.mrf.mxu0
        %2745 = vdwg.mxu0
        %2746 = vmatpush.bf16.msra.mxu0 %v2531
        %2747 = vmatpush.bf16.msra.mxu0 %v2525
        %2748 = vmatpush.bf16.msra.mxu0 %v2519
        %2749 = vmatpush.bf16.msra.mxu0 %v2513
        %2750 = vmatpush.bf16.msra.mxu0 %v2507
        %2751 = vmatpush.bf16.msra.mxu0 %v2501
        %2752 = vmatpush.bf16.msra.mxu0 %v2495
        %2753 = vmatpush.bf16.msra.mxu0 %v2489
        %2754 = vmatmul.bf16.gmra.mxu0 %v2148
        %v2755 = vpop.f32.mrf.mxu0
        %v2756 = vadd.f32 %v2743, %v2755
        %v2757 = vpop.f32.mrf.mxu0
        %2758 = vdwg.mxu0
        %2759 = vmatpush.bf16.msra.mxu0 %v2484
        %2760 = vmatpush.bf16.msra.mxu0 %v2478
        %2761 = vmatpush.bf16.msra.mxu0 %v2472
        %2762 = vmatpush.bf16.msra.mxu0 %v2466
        %2763 = vmatpush.bf16.msra.mxu0 %v2460
        %2764 = vmatpush.bf16.msra.mxu0 %v2454
        %2765 = vmatpush.bf16.msra.mxu0 %v2448
        %2766 = vmatpush.bf16.msra.mxu0 %v2442
        %2767 = vmatmul.bf16.gmra.mxu0 %v2147
        %v2768 = vpop.f32.mrf.mxu0
        %v2769 = vadd.f32 0.0, %v2768
        %v2770 = vpop.f32.mrf.mxu0
        %2771 = vdwg.mxu0
        %2772 = vmatpush.bf16.msra.mxu0 %v2532
        %2773 = vmatpush.bf16.msra.mxu0 %v2526
        %2774 = vmatpush.bf16.msra.mxu0 %v2520
        %2775 = vmatpush.bf16.msra.mxu0 %v2514
        %2776 = vmatpush.bf16.msra.mxu0 %v2508
        %2777 = vmatpush.bf16.msra.mxu0 %v2502
        %2778 = vmatpush.bf16.msra.mxu0 %v2496
        %2779 = vmatpush.bf16.msra.mxu0 %v2490
        %2780 = vmatmul.bf16.gmra.mxu0 %v2148
        %v2781 = vpop.f32.mrf.mxu0
        %v2782 = vadd.f32 %v2769, %v2781
        %v2783 = vpop.f32.mrf.mxu0
        %2784 = vdwg.mxu0
        %v2785 = vld [vmem:[%s1259] ss:$8 sm:$0x3]
        %v2787 = vperm.slane %v2785, 0
        %v2788 = vperm.slane %v2785, 1
        %v2791 = vadd.f32 %v2652, %v2787
        %v2792 = vadd.f32 %v2678, %v2788
        %s2793 = scalar_lea.vmem %s1259, 1
        %v2794 = vld [vmem:[%s2793] ss:$8 sm:$0x3]
        %v2796 = vperm.slane %v2794, 0
        %v2797 = vperm.slane %v2794, 1
        %v2800 = vadd.f32 %v2704, %v2796
        %v2801 = vadd.f32 %v2730, %v2797
        %s2802 = scalar_lea.vmem %s1259, 2
        %v2803 = vld [vmem:[%s2802] ss:$8 sm:$0x3]
        %v2805 = vperm.slane %v2803, 0
        %v2806 = vperm.slane %v2803, 1
        %v2809 = vadd.f32 %v2756, %v2805
        %v2810 = vadd.f32 %v2782, %v2806
        %2811 = vmatpush.xpose.msra.mxu0 0.0
        %2812 = vmatpush.xpose.msra.mxu0 0.0
        %2813 = vmatpush.xpose.msra.mxu0 0.0
        %2814 = vmatpush.xpose.msra.mxu0 0.0
        %2815 = vmatpush.xpose.msra.mxu0 0.0
        %2816 = vmatpush.xpose.msra.mxu0 0.0
        %2817 = vmatpush.xpose.msra.mxu0 0.0
        %2818 = vmatpush.xpose.msra.mxu0 0.0
        %2819 = vmatpush.xpose.msra.mxu0 0.0
        %2820 = vmatpush.xpose.msra.mxu0 0.0
        %2821 = vmatpush.xpose.msra.mxu0 0.0
        %2822 = vmatpush.xpose.msra.mxu0 0.0
        %2823 = vmatpush.xpose.msra.mxu0 0.0
        %2824 = vmatpush.xpose.msra.mxu0 0.0
        %2825 = vmatpush.xpose.msra.mxu0 0.0
        %2826 = vmatpush.xpose.msra.mxu0 %v2800
        %2827 = vmatmul.f32.gmra.mxu0 %v2791
        %v2828 = vpop.f32.mrf.mxu0
        %v2829 = vadd.f32 0.0, %v2828
        %2830 = vdwg.mxu0
        %2831 = vmatpush.xpose.msra.mxu0 0.0
        %2832 = vmatpush.xpose.msra.mxu0 0.0
        %2833 = vmatpush.xpose.msra.mxu0 0.0
        %2834 = vmatpush.xpose.msra.mxu0 0.0
        %2835 = vmatpush.xpose.msra.mxu0 0.0
        %2836 = vmatpush.xpose.msra.mxu0 0.0
        %2837 = vmatpush.xpose.msra.mxu0 0.0
        %2838 = vmatpush.xpose.msra.mxu0 0.0
        %2839 = vmatpush.xpose.msra.mxu0 0.0
        %2840 = vmatpush.xpose.msra.mxu0 0.0
        %2841 = vmatpush.xpose.msra.mxu0 0.0
        %2842 = vmatpush.xpose.msra.mxu0 0.0
        %2843 = vmatpush.xpose.msra.mxu0 0.0
        %2844 = vmatpush.xpose.msra.mxu0 0.0
        %2845 = vmatpush.xpose.msra.mxu0 0.0
        %2846 = vmatpush.xpose.msra.mxu0 %v2801
        %2847 = vmatmul.f32.gmra.mxu0 %v2792
        %v2848 = vpop.f32.mrf.mxu0
        %v2849 = vadd.f32 %v2829, %v2848
        %2850 = vdwg.mxu0
        %vm2851 = vcmask 64512
        %v2852 = vsel %vm2851, %v2849, -inf
        %2853 = vmax.xlane.f32.xlu0 %v2852
        %v2854 = vpop.xlane.xlu0 %2853
        %v2855 = vsub.f32 %v2849, %v2854
        %v2856 = vmul.f32 %v2855, 1.442695
        %v2857 = vpow.pop %v2856
        %v2858 = vsel %vm2851, %v2857, 0.0
        %2859 = vadd.xlane.f32.xlu0 %v2858
        %v2860 = vpop.xlane.xlu0 %2859
        %v2861 = vrcp.pop %v2860
        %v2862 = vmul.f32 %v2860, %v2861
        %v2863 = vsub.f32 1.0, %v2862
        %v2864 = vmul.f32 %v2861, %v2863
        %v2865 = vadd.f32 %v2861, %v2864
        %vm2866 = vweird.f32 %v2860
        %vm2867 = vweird.f32 %v2861
        %vm2868 = vmor %vm2866, %vm2867
        %v2869 = vsel %vm2868, %v2861, %v2865
        %v2870 = vand.u32 2147483647, %v2860
        %vm2871 = vcmp.eq.f32.partialorder %v2870, 8.507059e+37
        %v2872 = vand.u32 %v2860, 2147483648
        %v2873 = vor.u32 1.1754944e-38, %v2872
        %v2874 = vsel %vm2871, %v2873, %v2869
        %v2875 = vmul.f32 %v2857, %v2874
        %v2877 = vsel %vm2851, %v2875, 0
        %2879 = vmatpush.msra.mxu0 0.0
        %2880 = vmatpush.msra.mxu0 0.0
        %2881 = vmatpush.msra.mxu0 0.0
        %2882 = vmatpush.msra.mxu0 0.0
        %2883 = vmatpush.msra.mxu0 0.0
        %2884 = vmatpush.msra.mxu0 0.0
        %2885 = vmatpush.msra.mxu0 0.0
        %2886 = vmatpush.msra.mxu0 0.0
        %2887 = vmatpush.msra.mxu0 0.0
        %2888 = vmatpush.msra.mxu0 0.0
        %2889 = vmatpush.msra.mxu0 0.0
        %2890 = vmatpush.msra.mxu0 0.0
        %2891 = vmatpush.msra.mxu0 0.0
        %2892 = vmatpush.msra.mxu0 0.0
        %2893 = vmatpush.msra.mxu0 0.0
        %2894 = vmatpush.msra.mxu0 %v2809
        %2895 = vmatmul.f32.gmra.mxu0 %v2877
        %v2896 = vpop.f32.mrf.mxu0
        %v2897 = vadd.f32 0.0, %v2896
        %2898 = vdwg.mxu0
        %2899 = vmatpush.msra.mxu0 0.0
        %2900 = vmatpush.msra.mxu0 0.0
        %2901 = vmatpush.msra.mxu0 0.0
        %2902 = vmatpush.msra.mxu0 0.0
        %2903 = vmatpush.msra.mxu0 0.0
        %2904 = vmatpush.msra.mxu0 0.0
        %2905 = vmatpush.msra.mxu0 0.0
        %2906 = vmatpush.msra.mxu0 0.0
        %2907 = vmatpush.msra.mxu0 0.0
        %2908 = vmatpush.msra.mxu0 0.0
        %2909 = vmatpush.msra.mxu0 0.0
        %2910 = vmatpush.msra.mxu0 0.0
        %2911 = vmatpush.msra.mxu0 0.0
        %2912 = vmatpush.msra.mxu0 0.0
        %2913 = vmatpush.msra.mxu0 0.0
        %2914 = vmatpush.msra.mxu0 %v2810
        %2915 = vmatmul.f32.gmra.mxu0 %v2877
        %v2916 = vpop.f32.mrf.mxu0
        %v2917 = vadd.f32 0.0, %v2916
        %2918 = vdwg.mxu0
        %v2919 = vld [vmem:[%s1086] sm:$0xff]
        %v2920 = vld [vmem:[%s1086 + $0x8] sm:$0xff]
        %v2921 = vld [vmem:[%s1086 + $0x10] sm:$0xff]
        %v2922 = vld [vmem:[%s1086 + $0x18] sm:$0xff]
        %v2923 = vld [vmem:[%s1086 + $0x20] sm:$0xff]
        %v2924 = vld [vmem:[%s1086 + $0x28] sm:$0xff]
        %v2925 = vld [vmem:[%s1086 + $0x30] sm:$0xff]
        %v2926 = vld [vmem:[%s1086 + $0x38] sm:$0xff]
        %v2927 = vld [vmem:[%s1086 + $0x40] sm:$0xff]
        %v2928 = vld [vmem:[%s1086 + $0x48] sm:$0xff]
        %v2929 = vld [vmem:[%s1086 + $0x50] sm:$0xff]
        %v2930 = vld [vmem:[%s1086 + $0x58] sm:$0xff]
        %v2931 = vld [vmem:[%s1086 + $0x60] sm:$0xff]
        %v2932 = vld [vmem:[%s1086 + $0x68] sm:$0xff]
        %v2933 = vld [vmem:[%s1086 + $0x70] sm:$0xff]
        %v2934 = vld [vmem:[%s1086 + $0x78] sm:$0xff]
        %v2935 = vld [vmem:[%s1086 + $0x80] sm:$0xff]
        %v2936 = vld [vmem:[%s1086 + $0x88] sm:$0xff]
        %v2937 = vld [vmem:[%s1086 + $0x90] sm:$0xff]
        %v2938 = vld [vmem:[%s1086 + $0x98] sm:$0xff]
        %v2939 = vld [vmem:[%s1086 + $0xa0] sm:$0xff]
        %v2940 = vld [vmem:[%s1086 + $0xa8] sm:$0xff]
        %v2941 = vld [vmem:[%s1086 + $0xb0] sm:$0xff]
        %v2942 = vld [vmem:[%s1086 + $0xb8] sm:$0xff]
        %v2943 = vld [vmem:[%s1086 + $0xc0] sm:$0xff]
        %v2944 = vld [vmem:[%s1086 + $0xc8] sm:$0xff]
        %v2945 = vld [vmem:[%s1086 + $0xd0] sm:$0xff]
        %v2946 = vld [vmem:[%s1086 + $0xd8] sm:$0xff]
        %v2947 = vld [vmem:[%s1086 + $0xe0] sm:$0xff]
        %v2948 = vld [vmem:[%s1086 + $0xe8] sm:$0xff]
        %v2949 = vld [vmem:[%s1086 + $0xf0] sm:$0xff]
        %v2950 = vld [vmem:[%s1086 + $0xf8] sm:$0xff]
        %v2951 = vpack.c.bf16 %v2897, %v2897
        %v2952 = vpack.c.bf16 %v2917, %v2917
        %s2953 = scalar_lea.vmem %s1259, 3
        %v2954 = vld [vmem:[%s2953] ss:$8 sm:$0x3]
        %v2956 = vperm.slane %v2954, 0
        %v2957 = vperm.slane %v2954, 1
        %v2992 = vunpack.c.l.b16 %v2919
        %v2993 = vunpack.c.h.b16 %v2919
        %v2994 = vunpack.c.l.b16 %v2920
        %v2995 = vunpack.c.h.b16 %v2920
        %v2996 = vunpack.c.l.b16 %v2921
        %v2997 = vunpack.c.h.b16 %v2921
        %v2998 = vunpack.c.l.b16 %v2922
        %v2999 = vunpack.c.h.b16 %v2922
        %v3000 = vunpack.c.l.b16 %v2923
        %v3001 = vunpack.c.h.b16 %v2923
        %v3002 = vunpack.c.l.b16 %v2924
        %v3003 = vunpack.c.h.b16 %v2924
        %v3004 = vunpack.c.l.b16 %v2925
        %v3005 = vunpack.c.h.b16 %v2925
        %v3006 = vunpack.c.l.b16 %v2926
        %v3007 = vunpack.c.h.b16 %v2926
        %v3008 = vunpack.c.l.b16 %v2927
        %v3009 = vunpack.c.h.b16 %v2927
        %v3010 = vunpack.c.l.b16 %v2928
        %v3011 = vunpack.c.h.b16 %v2928
        %v3012 = vunpack.c.l.b16 %v2929
        %v3013 = vunpack.c.h.b16 %v2929
        %v3014 = vunpack.c.l.b16 %v2930
        %v3015 = vunpack.c.h.b16 %v2930
        %v3016 = vunpack.c.l.b16 %v2931
        %v3017 = vunpack.c.h.b16 %v2931
        %v3018 = vunpack.c.l.b16 %v2932
        %v3019 = vunpack.c.h.b16 %v2932
        %v3020 = vunpack.c.l.b16 %v2933
        %v3021 = vunpack.c.h.b16 %v2933
        %v3022 = vunpack.c.l.b16 %v2934
        %v3023 = vunpack.c.h.b16 %v2934
        %v3024 = vunpack.c.l.b16 %v2935
        %v3025 = vunpack.c.h.b16 %v2935
        %v3026 = vunpack.c.l.b16 %v2936
        %v3027 = vunpack.c.h.b16 %v2936
        %v3028 = vunpack.c.l.b16 %v2937
        %v3029 = vunpack.c.h.b16 %v2937
        %v3030 = vunpack.c.l.b16 %v2938
        %v3031 = vunpack.c.h.b16 %v2938
        %v3032 = vunpack.c.l.b16 %v2939
        %v3033 = vunpack.c.h.b16 %v2939
        %v3034 = vunpack.c.l.b16 %v2940
        %v3035 = vunpack.c.h.b16 %v2940
        %v3036 = vunpack.c.l.b16 %v2941
        %v3037 = vunpack.c.h.b16 %v2941
        %v3038 = vunpack.c.l.b16 %v2942
        %v3039 = vunpack.c.h.b16 %v2942
        %v3040 = vunpack.c.l.b16 %v2943
        %v3041 = vunpack.c.h.b16 %v2943
        %v3042 = vunpack.c.l.b16 %v2944
        %v3043 = vunpack.c.h.b16 %v2944
        %v3044 = vunpack.c.l.b16 %v2945
        %v3045 = vunpack.c.h.b16 %v2945
        %v3046 = vunpack.c.l.b16 %v2946
        %v3047 = vunpack.c.h.b16 %v2946
        %v3048 = vunpack.c.l.b16 %v2947
        %v3049 = vunpack.c.h.b16 %v2947
        %v3050 = vunpack.c.l.b16 %v2948
        %v3051 = vunpack.c.h.b16 %v2948
        %v3052 = vunpack.c.l.b16 %v2949
        %v3053 = vunpack.c.h.b16 %v2949
        %v3054 = vunpack.c.l.b16 %v2950
        %v3055 = vunpack.c.h.b16 %v2950
        %v3056 = vpack.c.b16 %v2994, %v2992
        %v3057 = vpack.c.b16 %v2995, %v2993
        %v3058 = vpack.c.b16 %v2998, %v2996
        %v3059 = vpack.c.b16 %v2999, %v2997
        %v3060 = vpack.c.b16 %v3002, %v3000
        %v3061 = vpack.c.b16 %v3003, %v3001
        %v3062 = vpack.c.b16 %v3006, %v3004
        %v3063 = vpack.c.b16 %v3007, %v3005
        %v3064 = vpack.c.b16 %v3010, %v3008
        %v3065 = vpack.c.b16 %v3011, %v3009
        %v3066 = vpack.c.b16 %v3014, %v3012
        %v3067 = vpack.c.b16 %v3015, %v3013
        %v3068 = vpack.c.b16 %v3018, %v3016
        %v3069 = vpack.c.b16 %v3019, %v3017
        %v3070 = vpack.c.b16 %v3022, %v3020
        %v3071 = vpack.c.b16 %v3023, %v3021
        %v3072 = vpack.c.b16 %v3026, %v3024
        %v3073 = vpack.c.b16 %v3027, %v3025
        %v3074 = vpack.c.b16 %v3030, %v3028
        %v3075 = vpack.c.b16 %v3031, %v3029
        %v3076 = vpack.c.b16 %v3034, %v3032
        %v3077 = vpack.c.b16 %v3035, %v3033
        %v3078 = vpack.c.b16 %v3038, %v3036
        %v3079 = vpack.c.b16 %v3039, %v3037
        %v3080 = vpack.c.b16 %v3042, %v3040
        %v3081 = vpack.c.b16 %v3043, %v3041
        %v3082 = vpack.c.b16 %v3046, %v3044
        %v3083 = vpack.c.b16 %v3047, %v3045
        %v3084 = vpack.c.b16 %v3050, %v3048
        %v3085 = vpack.c.b16 %v3051, %v3049
        %v3086 = vpack.c.b16 %v3054, %v3052
        %v3087 = vpack.c.b16 %v3055, %v3053
        %3120 = vmatpush.bf16.msra.mxu0 %v3070
        %3121 = vmatpush.bf16.msra.mxu0 %v3068
        %3122 = vmatpush.bf16.msra.mxu0 %v3066
        %3123 = vmatpush.bf16.msra.mxu0 %v3064
        %3124 = vmatpush.bf16.msra.mxu0 %v3062
        %3125 = vmatpush.bf16.msra.mxu0 %v3060
        %3126 = vmatpush.bf16.msra.mxu0 %v3058
        %3127 = vmatpush.bf16.msra.mxu0 %v3056
        %3128 = vmatmul.bf16.gmra.mxu0 %v2951
        %v3129 = vpop.f32.mrf.mxu0
        %v3130 = vadd.f32 %v2956, %v3129
        %v3131 = vpop.f32.mrf.mxu0
        %3132 = vdwg.mxu0
        %3133 = vmatpush.bf16.msra.mxu0 %v3086
        %3134 = vmatpush.bf16.msra.mxu0 %v3084
        %3135 = vmatpush.bf16.msra.mxu0 %v3082
        %3136 = vmatpush.bf16.msra.mxu0 %v3080
        %3137 = vmatpush.bf16.msra.mxu0 %v3078
        %3138 = vmatpush.bf16.msra.mxu0 %v3076
        %3139 = vmatpush.bf16.msra.mxu0 %v3074
        %3140 = vmatpush.bf16.msra.mxu0 %v3072
        %3141 = vmatmul.bf16.gmra.mxu0 %v2952
        %v3142 = vpop.f32.mrf.mxu0
        %v3143 = vadd.f32 %v3130, %v3142
        %v3144 = vpop.f32.mrf.mxu0
        %3145 = vdwg.mxu0
        %3146 = vmatpush.bf16.msra.mxu0 %v3071
        %3147 = vmatpush.bf16.msra.mxu0 %v3069
        %3148 = vmatpush.bf16.msra.mxu0 %v3067
        %3149 = vmatpush.bf16.msra.mxu0 %v3065
        %3150 = vmatpush.bf16.msra.mxu0 %v3063
        %3151 = vmatpush.bf16.msra.mxu0 %v3061
        %3152 = vmatpush.bf16.msra.mxu0 %v3059
        %3153 = vmatpush.bf16.msra.mxu0 %v3057
        %3154 = vmatmul.bf16.gmra.mxu0 %v2951
        %v3155 = vpop.f32.mrf.mxu0
        %v3156 = vadd.f32 %v2957, %v3155
        %v3157 = vpop.f32.mrf.mxu0
        %3158 = vdwg.mxu0
        %3159 = vmatpush.bf16.msra.mxu0 %v3087
        %3160 = vmatpush.bf16.msra.mxu0 %v3085
        %3161 = vmatpush.bf16.msra.mxu0 %v3083
        %3162 = vmatpush.bf16.msra.mxu0 %v3081
        %3163 = vmatpush.bf16.msra.mxu0 %v3079
        %3164 = vmatpush.bf16.msra.mxu0 %v3077
        %3165 = vmatpush.bf16.msra.mxu0 %v3075
        %3166 = vmatpush.bf16.msra.mxu0 %v3073
        %3167 = vmatmul.bf16.gmra.mxu0 %v2952
        %v3168 = vpop.f32.mrf.mxu0
        %v3169 = vadd.f32 %v3156, %v3168
        %v3170 = vpop.f32.mrf.mxu0
        %3171 = vdwg.mxu0
        %v3172 = vadd.f32 %v2047, %v3143
        %v3173 = vadd.f32 %v2048, %v3169
        %s3174 = scalar_lea.vmem %s1259, 4
        %v3175 = vld [vmem:[%s3174] ss:$8 sm:$0x3]
        %s3176 = scalar_lea.vmem %s1259, 5
        %v3177 = vld [vmem:[%s3176] ss:$8 sm:$0x3]
        %v3178 = vadd.f32 %v3172, %v3173
        %3179 = vadd.xlane.f32.xlu0 %v3178
        %v3180 = vpop.xlane.xlu0 %3179
        %v3181 = vrcp.pop 256.0
        %v3182 = vmul.f32 256.0, %v3181
        %v3183 = vsub.f32 1.0, %v3182
        %v3184 = vmul.f32 %v3181, %v3183
        %v3185 = vadd.f32 %v3181, %v3184
        %vm3186 = vweird.f32 %v3181
        %v3187 = vsel %vm3186, %v3181, %v3185
        %v3188 = vmul.f32 %v3180, %v3187
        %v3189 = vsub.f32 %v3172, %v3188
        %v3190 = vsub.f32 %v3173, %v3188
        %v3191 = vmul.f32 %v3189, %v3189
        %v3192 = vmul.f32 %v3190, %v3190
        %v3193 = vadd.f32 %v3191, %v3192
        %3194 = vadd.xlane.f32.xlu0 %v3193
        %v3195 = vpop.xlane.xlu0 %3194
        %v3196 = vmul.f32 %v3195, %v3187
        %v3197 = vadd.f32 %v3196, 1e-05
        %v3198 = vrsqrt.pop %v3197
        %v3199 = vmul.f32 %v3198, %v3197
        %v3200 = vmul.f32 %v3199, %v3198
        %v3201 = vmul.f32 0.5, %v3200
        %v3202 = vsub.f32 1.5, %v3201
        %v3203 = vmul.f32 %v3198, %v3202
        %vm3204 = vweird.f32 %v3197
        %vm3205 = vweird.f32 %v3198
        %vm3206 = vmor %vm3204, %vm3205
        %v3207 = vsel %vm3206, %v3198, %v3203
        %v3208 = vmul.f32 %v3189, %v3207
        %v3209 = vmul.f32 %v3190, %v3207
        %v3211 = vperm.slane %v3175, 0
        %v3212 = vperm.slane %v3175, 1
        %v3215 = vmul.f32 %v3208, %v3211
        %v3216 = vmul.f32 %v3209, %v3212
        %v3218 = vperm.slane %v3177, 0
        %v3219 = vperm.slane %v3177, 1
        %v3222 = vadd.f32 %v3215, %v3218
        %v3223 = vadd.f32 %v3216, %v3219
        %v3224 = vld [vmem:[%s1096] sm:$0xff]
        %v3225 = vld [vmem:[%s1096 + $0x8] sm:$0xff]
        %v3226 = vld [vmem:[%s1096 + $0x10] sm:$0xff]
        %v3227 = vld [vmem:[%s1096 + $0x18] sm:$0xff]
        %v3228 = vld [vmem:[%s1096 + $0x20] sm:$0xff]
        %v3229 = vld [vmem:[%s1096 + $0x28] sm:$0xff]
        %v3230 = vld [vmem:[%s1096 + $0x30] sm:$0xff]
        %v3231 = vld [vmem:[%s1096 + $0x38] sm:$0xff]
        %v3232 = vld [vmem:[%s1096 + $0x40] sm:$0xff]
        %v3233 = vld [vmem:[%s1096 + $0x48] sm:$0xff]
        %v3234 = vld [vmem:[%s1096 + $0x50] sm:$0xff]
        %v3235 = vld [vmem:[%s1096 + $0x58] sm:$0xff]
        %v3236 = vld [vmem:[%s1096 + $0x60] sm:$0xff]
        %v3237 = vld [vmem:[%s1096 + $0x68] sm:$0xff]
        %v3238 = vld [vmem:[%s1096 + $0x70] sm:$0xff]
        %v3239 = vld [vmem:[%s1096 + $0x78] sm:$0xff]
        %v3240 = vld [vmem:[%s1096 + $0x80] sm:$0xff]
        %v3241 = vld [vmem:[%s1096 + $0x88] sm:$0xff]
        %v3242 = vld [vmem:[%s1096 + $0x90] sm:$0xff]
        %v3243 = vld [vmem:[%s1096 + $0x98] sm:$0xff]
        %v3244 = vld [vmem:[%s1096 + $0xa0] sm:$0xff]
        %v3245 = vld [vmem:[%s1096 + $0xa8] sm:$0xff]
        %v3246 = vld [vmem:[%s1096 + $0xb0] sm:$0xff]
        %v3247 = vld [vmem:[%s1096 + $0xb8] sm:$0xff]
        %v3248 = vld [vmem:[%s1096 + $0xc0] sm:$0xff]
        %v3249 = vld [vmem:[%s1096 + $0xc8] sm:$0xff]
        %v3250 = vld [vmem:[%s1096 + $0xd0] sm:$0xff]
        %v3251 = vld [vmem:[%s1096 + $0xd8] sm:$0xff]
        %v3252 = vld [vmem:[%s1096 + $0xe0] sm:$0xff]
        %v3253 = vld [vmem:[%s1096 + $0xe8] sm:$0xff]
        %v3254 = vld [vmem:[%s1096 + $0xf0] sm:$0xff]
        %v3255 = vld [vmem:[%s1096 + $0xf8] sm:$0xff]
        %v3256 = vpack.c.bf16 %v3222, %v3222
        %v3257 = vpack.c.bf16 %v3223, %v3223
        %s3258 = scalar_lea.vmem %s1259, 6
        %v3259 = vld [vmem:[%s3258] ss:$8 sm:$0x3]
        %v3261 = vperm.slane %v3259, 0
        %v3262 = vperm.slane %v3259, 1
        %v3297 = vunpack.c.l.b16 %v3224
        %v3298 = vunpack.c.h.b16 %v3224
        %v3299 = vunpack.c.l.b16 %v3225
        %v3300 = vunpack.c.h.b16 %v3225
        %v3301 = vunpack.c.l.b16 %v3226
        %v3302 = vunpack.c.h.b16 %v3226
        %v3303 = vunpack.c.l.b16 %v3227
        %v3304 = vunpack.c.h.b16 %v3227
        %v3305 = vunpack.c.l.b16 %v3228
        %v3306 = vunpack.c.h.b16 %v3228
        %v3307 = vunpack.c.l.b16 %v3229
        %v3308 = vunpack.c.h.b16 %v3229
        %v3309 = vunpack.c.l.b16 %v3230
        %v3310 = vunpack.c.h.b16 %v3230
        %v3311 = vunpack.c.l.b16 %v3231
        %v3312 = vunpack.c.h.b16 %v3231
        %v3313 = vunpack.c.l.b16 %v3232
        %v3314 = vunpack.c.h.b16 %v3232
        %v3315 = vunpack.c.l.b16 %v3233
        %v3316 = vunpack.c.h.b16 %v3233
        %v3317 = vunpack.c.l.b16 %v3234
        %v3318 = vunpack.c.h.b16 %v3234
        %v3319 = vunpack.c.l.b16 %v3235
        %v3320 = vunpack.c.h.b16 %v3235
        %v3321 = vunpack.c.l.b16 %v3236
        %v3322 = vunpack.c.h.b16 %v3236
        %v3323 = vunpack.c.l.b16 %v3237
        %v3324 = vunpack.c.h.b16 %v3237
        %v3325 = vunpack.c.l.b16 %v3238
        %v3326 = vunpack.c.h.b16 %v3238
        %v3327 = vunpack.c.l.b16 %v3239
        %v3328 = vunpack.c.h.b16 %v3239
        %v3329 = vunpack.c.l.b16 %v3240
        %v3330 = vunpack.c.h.b16 %v3240
        %v3331 = vunpack.c.l.b16 %v3241
        %v3332 = vunpack.c.h.b16 %v3241
        %v3333 = vunpack.c.l.b16 %v3242
        %v3334 = vunpack.c.h.b16 %v3242
        %v3335 = vunpack.c.l.b16 %v3243
        %v3336 = vunpack.c.h.b16 %v3243
        %v3337 = vunpack.c.l.b16 %v3244
        %v3338 = vunpack.c.h.b16 %v3244
        %v3339 = vunpack.c.l.b16 %v3245
        %v3340 = vunpack.c.h.b16 %v3245
        %v3341 = vunpack.c.l.b16 %v3246
        %v3342 = vunpack.c.h.b16 %v3246
        %v3343 = vunpack.c.l.b16 %v3247
        %v3344 = vunpack.c.h.b16 %v3247
        %v3345 = vunpack.c.l.b16 %v3248
        %v3346 = vunpack.c.h.b16 %v3248
        %v3347 = vunpack.c.l.b16 %v3249
        %v3348 = vunpack.c.h.b16 %v3249
        %v3349 = vunpack.c.l.b16 %v3250
        %v3350 = vunpack.c.h.b16 %v3250
        %v3351 = vunpack.c.l.b16 %v3251
        %v3352 = vunpack.c.h.b16 %v3251
        %v3353 = vunpack.c.l.b16 %v3252
        %v3354 = vunpack.c.h.b16 %v3252
        %v3355 = vunpack.c.l.b16 %v3253
        %v3356 = vunpack.c.h.b16 %v3253
        %v3357 = vunpack.c.l.b16 %v3254
        %v3358 = vunpack.c.h.b16 %v3254
        %v3359 = vunpack.c.l.b16 %v3255
        %v3360 = vunpack.c.h.b16 %v3255
        %v3361 = vpack.c.b16 %v3299, %v3297
        %v3362 = vpack.c.b16 %v3300, %v3298
        %v3363 = vpack.c.b16 %v3303, %v3301
        %v3364 = vpack.c.b16 %v3304, %v3302
        %v3365 = vpack.c.b16 %v3307, %v3305
        %v3366 = vpack.c.b16 %v3308, %v3306
        %v3367 = vpack.c.b16 %v3311, %v3309
        %v3368 = vpack.c.b16 %v3312, %v3310
        %v3369 = vpack.c.b16 %v3315, %v3313
        %v3370 = vpack.c.b16 %v3316, %v3314
        %v3371 = vpack.c.b16 %v3319, %v3317
        %v3372 = vpack.c.b16 %v3320, %v3318
        %v3373 = vpack.c.b16 %v3323, %v3321
        %v3374 = vpack.c.b16 %v3324, %v3322
        %v3375 = vpack.c.b16 %v3327, %v3325
        %v3376 = vpack.c.b16 %v3328, %v3326
        %v3377 = vpack.c.b16 %v3331, %v3329
        %v3378 = vpack.c.b16 %v3332, %v3330
        %v3379 = vpack.c.b16 %v3335, %v3333
        %v3380 = vpack.c.b16 %v3336, %v3334
        %v3381 = vpack.c.b16 %v3339, %v3337
        %v3382 = vpack.c.b16 %v3340, %v3338
        %v3383 = vpack.c.b16 %v3343, %v3341
        %v3384 = vpack.c.b16 %v3344, %v3342
        %v3385 = vpack.c.b16 %v3347, %v3345
        %v3386 = vpack.c.b16 %v3348, %v3346
        %v3387 = vpack.c.b16 %v3351, %v3349
        %v3388 = vpack.c.b16 %v3352, %v3350
        %v3389 = vpack.c.b16 %v3355, %v3353
        %v3390 = vpack.c.b16 %v3356, %v3354
        %v3391 = vpack.c.b16 %v3359, %v3357
        %v3392 = vpack.c.b16 %v3360, %v3358
        %3425 = vmatpush.bf16.msra.mxu0 %v3375
        %3426 = vmatpush.bf16.msra.mxu0 %v3373
        %3427 = vmatpush.bf16.msra.mxu0 %v3371
        %3428 = vmatpush.bf16.msra.mxu0 %v3369
        %3429 = vmatpush.bf16.msra.mxu0 %v3367
        %3430 = vmatpush.bf16.msra.mxu0 %v3365
        %3431 = vmatpush.bf16.msra.mxu0 %v3363
        %3432 = vmatpush.bf16.msra.mxu0 %v3361
        %3433 = vmatmul.bf16.gmra.mxu0 %v3256
        %v3434 = vpop.f32.mrf.mxu0
        %v3435 = vadd.f32 %v3261, %v3434
        %v3436 = vpop.f32.mrf.mxu0
        %3437 = vdwg.mxu0
        %3438 = vmatpush.bf16.msra.mxu0 %v3391
        %3439 = vmatpush.bf16.msra.mxu0 %v3389
        %3440 = vmatpush.bf16.msra.mxu0 %v3387
        %3441 = vmatpush.bf16.msra.mxu0 %v3385
        %3442 = vmatpush.bf16.msra.mxu0 %v3383
        %3443 = vmatpush.bf16.msra.mxu0 %v3381
        %3444 = vmatpush.bf16.msra.mxu0 %v3379
        %3445 = vmatpush.bf16.msra.mxu0 %v3377
        %3446 = vmatmul.bf16.gmra.mxu0 %v3257
        %v3447 = vpop.f32.mrf.mxu0
        %v3448 = vadd.f32 %v3435, %v3447
        %v3449 = vpop.f32.mrf.mxu0
        %3450 = vdwg.mxu0
        %3451 = vmatpush.bf16.msra.mxu0 %v3376
        %3452 = vmatpush.bf16.msra.mxu0 %v3374
        %3453 = vmatpush.bf16.msra.mxu0 %v3372
        %3454 = vmatpush.bf16.msra.mxu0 %v3370
        %3455 = vmatpush.bf16.msra.mxu0 %v3368
        %3456 = vmatpush.bf16.msra.mxu0 %v3366
        %3457 = vmatpush.bf16.msra.mxu0 %v3364
        %3458 = vmatpush.bf16.msra.mxu0 %v3362
        %3459 = vmatmul.bf16.gmra.mxu0 %v3256
        %v3460 = vpop.f32.mrf.mxu0
        %v3461 = vadd.f32 %v3262, %v3460
        %v3462 = vpop.f32.mrf.mxu0
        %3463 = vdwg.mxu0
        %3464 = vmatpush.bf16.msra.mxu0 %v3392
        %3465 = vmatpush.bf16.msra.mxu0 %v3390
        %3466 = vmatpush.bf16.msra.mxu0 %v3388
        %3467 = vmatpush.bf16.msra.mxu0 %v3386
        %3468 = vmatpush.bf16.msra.mxu0 %v3384
        %3469 = vmatpush.bf16.msra.mxu0 %v3382
        %3470 = vmatpush.bf16.msra.mxu0 %v3380
        %3471 = vmatpush.bf16.msra.mxu0 %v3378
        %3472 = vmatmul.bf16.gmra.mxu0 %v3257
        %v3473 = vpop.f32.mrf.mxu0
        %v3474 = vadd.f32 %v3461, %v3473
        %v3475 = vpop.f32.mrf.mxu0
        %3476 = vdwg.mxu0
        %v3477 = vld [vmem:[%s1106] sm:$0xff]
        %v3478 = vld [vmem:[%s1106 + $0x8] sm:$0xff]
        %v3479 = vld [vmem:[%s1106 + $0x10] sm:$0xff]
        %v3480 = vld [vmem:[%s1106 + $0x18] sm:$0xff]
        %v3481 = vld [vmem:[%s1106 + $0x20] sm:$0xff]
        %v3482 = vld [vmem:[%s1106 + $0x28] sm:$0xff]
        %v3483 = vld [vmem:[%s1106 + $0x30] sm:$0xff]
        %v3484 = vld [vmem:[%s1106 + $0x38] sm:$0xff]
        %v3485 = vld [vmem:[%s1106 + $0x40] sm:$0xff]
        %v3486 = vld [vmem:[%s1106 + $0x48] sm:$0xff]
        %v3487 = vld [vmem:[%s1106 + $0x50] sm:$0xff]
        %v3488 = vld [vmem:[%s1106 + $0x58] sm:$0xff]
        %v3489 = vld [vmem:[%s1106 + $0x60] sm:$0xff]
        %v3490 = vld [vmem:[%s1106 + $0x68] sm:$0xff]
        %v3491 = vld [vmem:[%s1106 + $0x70] sm:$0xff]
        %v3492 = vld [vmem:[%s1106 + $0x78] sm:$0xff]
        %v3493 = vld [vmem:[%s1106 + $0x80] sm:$0xff]
        %v3494 = vld [vmem:[%s1106 + $0x88] sm:$0xff]
        %v3495 = vld [vmem:[%s1106 + $0x90] sm:$0xff]
        %v3496 = vld [vmem:[%s1106 + $0x98] sm:$0xff]
        %v3497 = vld [vmem:[%s1106 + $0xa0] sm:$0xff]
        %v3498 = vld [vmem:[%s1106 + $0xa8] sm:$0xff]
        %v3499 = vld [vmem:[%s1106 + $0xb0] sm:$0xff]
        %v3500 = vld [vmem:[%s1106 + $0xb8] sm:$0xff]
        %v3501 = vld [vmem:[%s1106 + $0xc0] sm:$0xff]
        %v3502 = vld [vmem:[%s1106 + $0xc8] sm:$0xff]
        %v3503 = vld [vmem:[%s1106 + $0xd0] sm:$0xff]
        %v3504 = vld [vmem:[%s1106 + $0xd8] sm:$0xff]
        %v3505 = vld [vmem:[%s1106 + $0xe0] sm:$0xff]
        %v3506 = vld [vmem:[%s1106 + $0xe8] sm:$0xff]
        %v3507 = vld [vmem:[%s1106 + $0xf0] sm:$0xff]
        %v3508 = vld [vmem:[%s1106 + $0xf8] sm:$0xff]
        %v3509 = vld [vmem:[%s1106 + $0x100] sm:$0xff]
        %v3510 = vld [vmem:[%s1106 + $0x108] sm:$0xff]
        %v3511 = vld [vmem:[%s1106 + $0x110] sm:$0xff]
        %v3512 = vld [vmem:[%s1106 + $0x118] sm:$0xff]
        %v3513 = vld [vmem:[%s1106 + $0x120] sm:$0xff]
        %v3514 = vld [vmem:[%s1106 + $0x128] sm:$0xff]
        %v3515 = vld [vmem:[%s1106 + $0x130] sm:$0xff]
        %v3516 = vld [vmem:[%s1106 + $0x138] sm:$0xff]
        %v3517 = vld [vmem:[%s1106 + $0x140] sm:$0xff]
        %v3518 = vld [vmem:[%s1106 + $0x148] sm:$0xff]
        %v3519 = vld [vmem:[%s1106 + $0x150] sm:$0xff]
        %v3520 = vld [vmem:[%s1106 + $0x158] sm:$0xff]
        %v3521 = vld [vmem:[%s1106 + $0x160] sm:$0xff]
        %v3522 = vld [vmem:[%s1106 + $0x168] sm:$0xff]
        %v3523 = vld [vmem:[%s1106 + $0x170] sm:$0xff]
        %v3524 = vld [vmem:[%s1106 + $0x178] sm:$0xff]
        %v3525 = vld [vmem:[%s1106 + $0x180] sm:$0xff]
        %v3526 = vld [vmem:[%s1106 + $0x188] sm:$0xff]
        %v3527 = vld [vmem:[%s1106 + $0x190] sm:$0xff]
        %v3528 = vld [vmem:[%s1106 + $0x198] sm:$0xff]
        %v3529 = vld [vmem:[%s1106 + $0x1a0] sm:$0xff]
        %v3530 = vld [vmem:[%s1106 + $0x1a8] sm:$0xff]
        %v3531 = vld [vmem:[%s1106 + $0x1b0] sm:$0xff]
        %v3532 = vld [vmem:[%s1106 + $0x1b8] sm:$0xff]
        %v3533 = vld [vmem:[%s1106 + $0x1c0] sm:$0xff]
        %v3534 = vld [vmem:[%s1106 + $0x1c8] sm:$0xff]
        %v3535 = vld [vmem:[%s1106 + $0x1d0] sm:$0xff]
        %v3536 = vld [vmem:[%s1106 + $0x1d8] sm:$0xff]
        %v3537 = vld [vmem:[%s1106 + $0x1e0] sm:$0xff]
        %v3538 = vld [vmem:[%s1106 + $0x1e8] sm:$0xff]
        %v3539 = vld [vmem:[%s1106 + $0x1f0] sm:$0xff]
        %v3540 = vld [vmem:[%s1106 + $0x1f8] sm:$0xff]
        %v3541 = vpack.c.bf16 %v2049, %v2049
        %v3542 = vpack.c.bf16 %v2050, %v2050
        %v3607 = vunpack.c.l.b16 %v3477
        %v3608 = vunpack.c.h.b16 %v3477
        %v3609 = vunpack.c.l.b16 %v3478
        %v3610 = vunpack.c.h.b16 %v3478
        %v3611 = vunpack.c.l.b16 %v3479
        %v3612 = vunpack.c.h.b16 %v3479
        %v3613 = vunpack.c.l.b16 %v3480
        %v3614 = vunpack.c.h.b16 %v3480
        %v3615 = vunpack.c.l.b16 %v3481
        %v3616 = vunpack.c.h.b16 %v3481
        %v3617 = vunpack.c.l.b16 %v3482
        %v3618 = vunpack.c.h.b16 %v3482
        %v3619 = vunpack.c.l.b16 %v3483
        %v3620 = vunpack.c.h.b16 %v3483
        %v3621 = vunpack.c.l.b16 %v3484
        %v3622 = vunpack.c.h.b16 %v3484
        %v3623 = vunpack.c.l.b16 %v3485
        %v3624 = vunpack.c.h.b16 %v3485
        %v3625 = vunpack.c.l.b16 %v3486
        %v3626 = vunpack.c.h.b16 %v3486
        %v3627 = vunpack.c.l.b16 %v3487
        %v3628 = vunpack.c.h.b16 %v3487
        %v3629 = vunpack.c.l.b16 %v3488
        %v3630 = vunpack.c.h.b16 %v3488
        %v3631 = vunpack.c.l.b16 %v3489
        %v3632 = vunpack.c.h.b16 %v3489
        %v3633 = vunpack.c.l.b16 %v3490
        %v3634 = vunpack.c.h.b16 %v3490
        %v3635 = vunpack.c.l.b16 %v3491
        %v3636 = vunpack.c.h.b16 %v3491
        %v3637 = vunpack.c.l.b16 %v3492
        %v3638 = vunpack.c.h.b16 %v3492
        %v3639 = vunpack.c.l.b16 %v3493
        %v3640 = vunpack.c.h.b16 %v3493
        %v3641 = vunpack.c.l.b16 %v3494
        %v3642 = vunpack.c.h.b16 %v3494
        %v3643 = vunpack.c.l.b16 %v3495
        %v3644 = vunpack.c.h.b16 %v3495
        %v3645 = vunpack.c.l.b16 %v3496
        %v3646 = vunpack.c.h.b16 %v3496
        %v3647 = vunpack.c.l.b16 %v3497
        %v3648 = vunpack.c.h.b16 %v3497
        %v3649 = vunpack.c.l.b16 %v3498
        %v3650 = vunpack.c.h.b16 %v3498
        %v3651 = vunpack.c.l.b16 %v3499
        %v3652 = vunpack.c.h.b16 %v3499
        %v3653 = vunpack.c.l.b16 %v3500
        %v3654 = vunpack.c.h.b16 %v3500
        %v3655 = vunpack.c.l.b16 %v3501
        %v3656 = vunpack.c.h.b16 %v3501
        %v3657 = vunpack.c.l.b16 %v3502
        %v3658 = vunpack.c.h.b16 %v3502
        %v3659 = vunpack.c.l.b16 %v3503
        %v3660 = vunpack.c.h.b16 %v3503
        %v3661 = vunpack.c.l.b16 %v3504
        %v3662 = vunpack.c.h.b16 %v3504
        %v3663 = vunpack.c.l.b16 %v3505
        %v3664 = vunpack.c.h.b16 %v3505
        %v3665 = vunpack.c.l.b16 %v3506
        %v3666 = vunpack.c.h.b16 %v3506
        %v3667 = vunpack.c.l.b16 %v3507
        %v3668 = vunpack.c.h.b16 %v3507
        %v3669 = vunpack.c.l.b16 %v3508
        %v3670 = vunpack.c.h.b16 %v3508
        %v3671 = vunpack.c.l.b16 %v3509
        %v3672 = vunpack.c.h.b16 %v3509
        %v3673 = vunpack.c.l.b16 %v3510
        %v3674 = vunpack.c.h.b16 %v3510
        %v3675 = vunpack.c.l.b16 %v3511
        %v3676 = vunpack.c.h.b16 %v3511
        %v3677 = vunpack.c.l.b16 %v3512
        %v3678 = vunpack.c.h.b16 %v3512
        %v3679 = vunpack.c.l.b16 %v3513
        %v3680 = vunpack.c.h.b16 %v3513
        %v3681 = vunpack.c.l.b16 %v3514
        %v3682 = vunpack.c.h.b16 %v3514
        %v3683 = vunpack.c.l.b16 %v3515
        %v3684 = vunpack.c.h.b16 %v3515
        %v3685 = vunpack.c.l.b16 %v3516
        %v3686 = vunpack.c.h.b16 %v3516
        %v3687 = vunpack.c.l.b16 %v3517
        %v3688 = vunpack.c.h.b16 %v3517
        %v3689 = vunpack.c.l.b16 %v3518
        %v3690 = vunpack.c.h.b16 %v3518
        %v3691 = vunpack.c.l.b16 %v3519
        %v3692 = vunpack.c.h.b16 %v3519
        %v3693 = vunpack.c.l.b16 %v3520
        %v3694 = vunpack.c.h.b16 %v3520
        %v3695 = vunpack.c.l.b16 %v3521
        %v3696 = vunpack.c.h.b16 %v3521
        %v3697 = vunpack.c.l.b16 %v3522
        %v3698 = vunpack.c.h.b16 %v3522
        %v3699 = vunpack.c.l.b16 %v3523
        %v3700 = vunpack.c.h.b16 %v3523
        %v3701 = vunpack.c.l.b16 %v3524
        %v3702 = vunpack.c.h.b16 %v3524
        %v3703 = vunpack.c.l.b16 %v3525
        %v3704 = vunpack.c.h.b16 %v3525
        %v3705 = vunpack.c.l.b16 %v3526
        %v3706 = vunpack.c.h.b16 %v3526
        %v3707 = vunpack.c.l.b16 %v3527
        %v3708 = vunpack.c.h.b16 %v3527
        %v3709 = vunpack.c.l.b16 %v3528
        %v3710 = vunpack.c.h.b16 %v3528
        %v3711 = vunpack.c.l.b16 %v3529
        %v3712 = vunpack.c.h.b16 %v3529
        %v3713 = vunpack.c.l.b16 %v3530
        %v3714 = vunpack.c.h.b16 %v3530
        %v3715 = vunpack.c.l.b16 %v3531
        %v3716 = vunpack.c.h.b16 %v3531
        %v3717 = vunpack.c.l.b16 %v3532
        %v3718 = vunpack.c.h.b16 %v3532
        %v3719 = vunpack.c.l.b16 %v3533
        %v3720 = vunpack.c.h.b16 %v3533
        %v3721 = vunpack.c.l.b16 %v3534
        %v3722 = vunpack.c.h.b16 %v3534
        %v3723 = vunpack.c.l.b16 %v3535
        %v3724 = vunpack.c.h.b16 %v3535
        %v3725 = vunpack.c.l.b16 %v3536
        %v3726 = vunpack.c.h.b16 %v3536
        %v3727 = vunpack.c.l.b16 %v3537
        %v3728 = vunpack.c.h.b16 %v3537
        %v3729 = vunpack.c.l.b16 %v3538
        %v3730 = vunpack.c.h.b16 %v3538
        %v3731 = vunpack.c.l.b16 %v3539
        %v3732 = vunpack.c.h.b16 %v3539
        %v3733 = vunpack.c.l.b16 %v3540
        %v3734 = vunpack.c.h.b16 %v3540
        %v3735 = vpack.c.b16 %v3611, %v3607
        %v3736 = vpack.c.b16 %v3612, %v3608
        %v3737 = vpack.c.b16 %v3613, %v3609
        %v3738 = vpack.c.b16 %v3614, %v3610
        %v3739 = vpack.c.b16 %v3619, %v3615
        %v3740 = vpack.c.b16 %v3620, %v3616
        %v3741 = vpack.c.b16 %v3621, %v3617
        %v3742 = vpack.c.b16 %v3622, %v3618
        %v3743 = vpack.c.b16 %v3627, %v3623
        %v3744 = vpack.c.b16 %v3628, %v3624
        %v3745 = vpack.c.b16 %v3629, %v3625
        %v3746 = vpack.c.b16 %v3630, %v3626
        %v3747 = vpack.c.b16 %v3635, %v3631
        %v3748 = vpack.c.b16 %v3636, %v3632
        %v3749 = vpack.c.b16 %v3637, %v3633
        %v3750 = vpack.c.b16 %v3638, %v3634
        %v3751 = vpack.c.b16 %v3643, %v3639
        %v3752 = vpack.c.b16 %v3644, %v3640
        %v3753 = vpack.c.b16 %v3645, %v3641
        %v3754 = vpack.c.b16 %v3646, %v3642
        %v3755 = vpack.c.b16 %v3651, %v3647
        %v3756 = vpack.c.b16 %v3652, %v3648
        %v3757 = vpack.c.b16 %v3653, %v3649
        %v3758 = vpack.c.b16 %v3654, %v3650
        %v3759 = vpack.c.b16 %v3659, %v3655
        %v3760 = vpack.c.b16 %v3660, %v3656
        %v3761 = vpack.c.b16 %v3661, %v3657
        %v3762 = vpack.c.b16 %v3662, %v3658
        %v3763 = vpack.c.b16 %v3667, %v3663
        %v3764 = vpack.c.b16 %v3668, %v3664
        %v3765 = vpack.c.b16 %v3669, %v3665
        %v3766 = vpack.c.b16 %v3670, %v3666
        %v3767 = vpack.c.b16 %v3675, %v3671
        %v3768 = vpack.c.b16 %v3676, %v3672
        %v3769 = vpack.c.b16 %v3677, %v3673
        %v3770 = vpack.c.b16 %v3678, %v3674
        %v3771 = vpack.c.b16 %v3683, %v3679
        %v3772 = vpack.c.b16 %v3684, %v3680
        %v3773 = vpack.c.b16 %v3685, %v3681
        %v3774 = vpack.c.b16 %v3686, %v3682
        %v3775 = vpack.c.b16 %v3691, %v3687
        %v3776 = vpack.c.b16 %v3692, %v3688
        %v3777 = vpack.c.b16 %v3693, %v3689
        %v3778 = vpack.c.b16 %v3694, %v3690
        %v3779 = vpack.c.b16 %v3699, %v3695
        %v3780 = vpack.c.b16 %v3700, %v3696
        %v3781 = vpack.c.b16 %v3701, %v3697
        %v3782 = vpack.c.b16 %v3702, %v3698
        %v3783 = vpack.c.b16 %v3707, %v3703
        %v3784 = vpack.c.b16 %v3708, %v3704
        %v3785 = vpack.c.b16 %v3709, %v3705
        %v3786 = vpack.c.b16 %v3710, %v3706
        %v3787 = vpack.c.b16 %v3715, %v3711
        %v3788 = vpack.c.b16 %v3716, %v3712
        %v3789 = vpack.c.b16 %v3717, %v3713
        %v3790 = vpack.c.b16 %v3718, %v3714
        %v3791 = vpack.c.b16 %v3723, %v3719
        %v3792 = vpack.c.b16 %v3724, %v3720
        %v3793 = vpack.c.b16 %v3725, %v3721
        %v3794 = vpack.c.b16 %v3726, %v3722
        %v3795 = vpack.c.b16 %v3731, %v3727
        %v3796 = vpack.c.b16 %v3732, %v3728
        %v3797 = vpack.c.b16 %v3733, %v3729
        %v3798 = vpack.c.b16 %v3734, %v3730
        %3863 = vmatpush.bf16.msra.mxu0 %v3763
        %3864 = vmatpush.bf16.msra.mxu0 %v3759
        %3865 = vmatpush.bf16.msra.mxu0 %v3755
        %3866 = vmatpush.bf16.msra.mxu0 %v3751
        %3867 = vmatpush.bf16.msra.mxu0 %v3747
        %3868 = vmatpush.bf16.msra.mxu0 %v3743
        %3869 = vmatpush.bf16.msra.mxu0 %v3739
        %3870 = vmatpush.bf16.msra.mxu0 %v3735
        %3871 = vmatmul.bf16.gmra.mxu0 %v3541
        %v3872 = vpop.f32.mrf.mxu0
        %v3873 = vadd.f32 0.0, %v3872
        %v3874 = vpop.f32.mrf.mxu0
        %3875 = vdwg.mxu0
        %3876 = vmatpush.bf16.msra.mxu0 %v3795
        %3877 = vmatpush.bf16.msra.mxu0 %v3791
        %3878 = vmatpush.bf16.msra.mxu0 %v3787
        %3879 = vmatpush.bf16.msra.mxu0 %v3783
        %3880 = vmatpush.bf16.msra.mxu0 %v3779
        %3881 = vmatpush.bf16.msra.mxu0 %v3775
        %3882 = vmatpush.bf16.msra.mxu0 %v3771
        %3883 = vmatpush.bf16.msra.mxu0 %v3767
        %3884 = vmatmul.bf16.gmra.mxu0 %v3542
        %v3885 = vpop.f32.mrf.mxu0
        %v3886 = vadd.f32 %v3873, %v3885
        %v3887 = vpop.f32.mrf.mxu0
        %3888 = vdwg.mxu0
        %3889 = vmatpush.bf16.msra.mxu0 %v3764
        %3890 = vmatpush.bf16.msra.mxu0 %v3760
        %3891 = vmatpush.bf16.msra.mxu0 %v3756
        %3892 = vmatpush.bf16.msra.mxu0 %v3752
        %3893 = vmatpush.bf16.msra.mxu0 %v3748
        %3894 = vmatpush.bf16.msra.mxu0 %v3744
        %3895 = vmatpush.bf16.msra.mxu0 %v3740
        %3896 = vmatpush.bf16.msra.mxu0 %v3736
        %3897 = vmatmul.bf16.gmra.mxu0 %v3541
        %v3898 = vpop.f32.mrf.mxu0
        %v3899 = vadd.f32 0.0, %v3898
        %v3900 = vpop.f32.mrf.mxu0
        %3901 = vdwg.mxu0
        %3902 = vmatpush.bf16.msra.mxu0 %v3796
        %3903 = vmatpush.bf16.msra.mxu0 %v3792
        %3904 = vmatpush.bf16.msra.mxu0 %v3788
        %3905 = vmatpush.bf16.msra.mxu0 %v3784
        %3906 = vmatpush.bf16.msra.mxu0 %v3780
        %3907 = vmatpush.bf16.msra.mxu0 %v3776
        %3908 = vmatpush.bf16.msra.mxu0 %v3772
        %3909 = vmatpush.bf16.msra.mxu0 %v3768
        %3910 = vmatmul.bf16.gmra.mxu0 %v3542
        %v3911 = vpop.f32.mrf.mxu0
        %v3912 = vadd.f32 %v3899, %v3911
        %v3913 = vpop.f32.mrf.mxu0
        %3914 = vdwg.mxu0
        %3915 = vmatpush.bf16.msra.mxu0 %v3765
        %3916 = vmatpush.bf16.msra.mxu0 %v3761
        %3917 = vmatpush.bf16.msra.mxu0 %v3757
        %3918 = vmatpush.bf16.msra.mxu0 %v3753
        %3919 = vmatpush.bf16.msra.mxu0 %v3749
        %3920 = vmatpush.bf16.msra.mxu0 %v3745
        %3921 = vmatpush.bf16.msra.mxu0 %v3741
        %3922 = vmatpush.bf16.msra.mxu0 %v3737
        %3923 = vmatmul.bf16.gmra.mxu0 %v3541
        %v3924 = vpop.f32.mrf.mxu0
        %v3925 = vadd.f32 0.0, %v3924
        %v3926 = vpop.f32.mrf.mxu0
        %3927 = vdwg.mxu0
        %3928 = vmatpush.bf16.msra.mxu0 %v3797
        %3929 = vmatpush.bf16.msra.mxu0 %v3793
        %3930 = vmatpush.bf16.msra.mxu0 %v3789
        %3931 = vmatpush.bf16.msra.mxu0 %v3785
        %3932 = vmatpush.bf16.msra.mxu0 %v3781
        %3933 = vmatpush.bf16.msra.mxu0 %v3777
        %3934 = vmatpush.bf16.msra.mxu0 %v3773
        %3935 = vmatpush.bf16.msra.mxu0 %v3769
        %3936 = vmatmul.bf16.gmra.mxu0 %v3542
        %v3937 = vpop.f32.mrf.mxu0
        %v3938 = vadd.f32 %v3925, %v3937
        %v3939 = vpop.f32.mrf.mxu0
        %3940 = vdwg.mxu0
        %3941 = vmatpush.bf16.msra.mxu0 %v3766
        %3942 = vmatpush.bf16.msra.mxu0 %v3762
        %3943 = vmatpush.bf16.msra.mxu0 %v3758
        %3944 = vmatpush.bf16.msra.mxu0 %v3754
        %3945 = vmatpush.bf16.msra.mxu0 %v3750
        %3946 = vmatpush.bf16.msra.mxu0 %v3746
        %3947 = vmatpush.bf16.msra.mxu0 %v3742
        %3948 = vmatpush.bf16.msra.mxu0 %v3738
        %3949 = vmatmul.bf16.gmra.mxu0 %v3541
        %v3950 = vpop.f32.mrf.mxu0
        %v3951 = vadd.f32 0.0, %v3950
        %v3952 = vpop.f32.mrf.mxu0
        %3953 = vdwg.mxu0
        %3954 = vmatpush.bf16.msra.mxu0 %v3798
        %3955 = vmatpush.bf16.msra.mxu0 %v3794
        %3956 = vmatpush.bf16.msra.mxu0 %v3790
        %3957 = vmatpush.bf16.msra.mxu0 %v3786
        %3958 = vmatpush.bf16.msra.mxu0 %v3782
        %3959 = vmatpush.bf16.msra.mxu0 %v3778
        %3960 = vmatpush.bf16.msra.mxu0 %v3774
        %3961 = vmatpush.bf16.msra.mxu0 %v3770
        %3962 = vmatmul.bf16.gmra.mxu0 %v3542
        %v3963 = vpop.f32.mrf.mxu0
        %v3964 = vadd.f32 %v3951, %v3963
        %v3965 = vpop.f32.mrf.mxu0
        %3966 = vdwg.mxu0
        %s3967 = scalar_lea.vmem %s1259, 7
        %v3968 = vld [vmem:[%s3967] ss:$8 sm:$0x3]
        %v3970 = vperm.slane %v3968, 0
        %v3971 = vperm.slane %v3968, 1
        %v3974 = vadd.f32 %v3886, %v3970
        %v3975 = vadd.f32 %v3912, %v3971
        %s3976 = scalar_lea.vmem %s1259, 16
        %v3977 = vld [vmem:[%s3976] ss:$8 sm:$0x3]
        %v3979 = vperm.slane %v3977, 0
        %v3980 = vperm.slane %v3977, 1
        %v3983 = vadd.f32 %v3938, %v3979
        %v3984 = vadd.f32 %v3964, %v3980
        %3985 = vmatpush.xpose.msra.mxu0 0.0
        %3986 = vmatpush.xpose.msra.mxu0 0.0
        %3987 = vmatpush.xpose.msra.mxu0 0.0
        %3988 = vmatpush.xpose.msra.mxu0 0.0
        %3989 = vmatpush.xpose.msra.mxu0 0.0
        %3990 = vmatpush.xpose.msra.mxu0 0.0
        %3991 = vmatpush.xpose.msra.mxu0 0.0
        %3992 = vmatpush.xpose.msra.mxu0 0.0
        %3993 = vmatpush.xpose.msra.mxu0 0.0
        %3994 = vmatpush.xpose.msra.mxu0 0.0
        %3995 = vmatpush.xpose.msra.mxu0 0.0
        %3996 = vmatpush.xpose.msra.mxu0 0.0
        %3997 = vmatpush.xpose.msra.mxu0 0.0
        %3998 = vmatpush.xpose.msra.mxu0 0.0
        %3999 = vmatpush.xpose.msra.mxu0 0.0
        %4000 = vmatpush.xpose.msra.mxu0 %v3974
        %4001 = vmatmul.f32.gmra.mxu0 %v3448
        %v4002 = vpop.f32.mrf.mxu0
        %v4003 = vadd.f32 0.0, %v4002
        %4004 = vdwg.mxu0
        %4005 = vmatpush.xpose.msra.mxu0 0.0
        %4006 = vmatpush.xpose.msra.mxu0 0.0
        %4007 = vmatpush.xpose.msra.mxu0 0.0
        %4008 = vmatpush.xpose.msra.mxu0 0.0
        %4009 = vmatpush.xpose.msra.mxu0 0.0
        %4010 = vmatpush.xpose.msra.mxu0 0.0
        %4011 = vmatpush.xpose.msra.mxu0 0.0
        %4012 = vmatpush.xpose.msra.mxu0 0.0
        %4013 = vmatpush.xpose.msra.mxu0 0.0
        %4014 = vmatpush.xpose.msra.mxu0 0.0
        %4015 = vmatpush.xpose.msra.mxu0 0.0
        %4016 = vmatpush.xpose.msra.mxu0 0.0
        %4017 = vmatpush.xpose.msra.mxu0 0.0
        %4018 = vmatpush.xpose.msra.mxu0 0.0
        %4019 = vmatpush.xpose.msra.mxu0 0.0
        %4020 = vmatpush.xpose.msra.mxu0 %v3975
        %4021 = vmatmul.f32.gmra.mxu0 %v3474
        %v4022 = vpop.f32.mrf.mxu0
        %v4023 = vadd.f32 %v4003, %v4022
        %4024 = vdwg.mxu0
        %v4025 = vsel %vm2851, %v4023, -inf
        %4026 = vmax.xlane.f32.xlu0 %v4025
        %v4027 = vpop.xlane.xlu0 %4026
        %v4028 = vsub.f32 %v4023, %v4027
        %v4029 = vmul.f32 %v4028, 1.442695
        %v4030 = vpow.pop %v4029
        %v4031 = vsel %vm2851, %v4030, 0.0
        %4032 = vadd.xlane.f32.xlu0 %v4031
        %v4033 = vpop.xlane.xlu0 %4032
        %v4034 = vrcp.pop %v4033
        %v4035 = vmul.f32 %v4033, %v4034
        %v4036 = vsub.f32 1.0, %v4035
        %v4037 = vmul.f32 %v4034, %v4036
        %v4038 = vadd.f32 %v4034, %v4037
        %vm4039 = vweird.f32 %v4033
        %vm4040 = vweird.f32 %v4034
        %vm4041 = vmor %vm4039, %vm4040
        %v4042 = vsel %vm4041, %v4034, %v4038
        %v4043 = vand.u32 2147483647, %v4033
        %vm4044 = vcmp.eq.f32.partialorder %v4043, 8.507059e+37
        %v4045 = vand.u32 %v4033, 2147483648
        %v4046 = vor.u32 1.1754944e-38, %v4045
        %v4047 = vsel %vm4044, %v4046, %v4042
        %v4048 = vmul.f32 %v4030, %v4047
        %v4050 = vsel %vm2851, %v4048, 0
        %4052 = vmatpush.msra.mxu0 0.0
        %4053 = vmatpush.msra.mxu0 0.0
        %4054 = vmatpush.msra.mxu0 0.0
        %4055 = vmatpush.msra.mxu0 0.0
        %4056 = vmatpush.msra.mxu0 0.0
        %4057 = vmatpush.msra.mxu0 0.0
        %4058 = vmatpush.msra.mxu0 0.0
        %4059 = vmatpush.msra.mxu0 0.0
        %4060 = vmatpush.msra.mxu0 0.0
        %4061 = vmatpush.msra.mxu0 0.0
        %4062 = vmatpush.msra.mxu0 0.0
        %4063 = vmatpush.msra.mxu0 0.0
        %4064 = vmatpush.msra.mxu0 0.0
        %4065 = vmatpush.msra.mxu0 0.0
        %4066 = vmatpush.msra.mxu0 0.0
        %4067 = vmatpush.msra.mxu0 %v3983
        %4068 = vmatmul.f32.gmra.mxu0 %v4050
        %v4069 = vpop.f32.mrf.mxu0
        %v4070 = vadd.f32 0.0, %v4069
        %4071 = vdwg.mxu0
        %4072 = vmatpush.msra.mxu0 0.0
        %4073 = vmatpush.msra.mxu0 0.0
        %4074 = vmatpush.msra.mxu0 0.0
        %4075 = vmatpush.msra.mxu0 0.0
        %4076 = vmatpush.msra.mxu0 0.0
        %4077 = vmatpush.msra.mxu0 0.0
        %4078 = vmatpush.msra.mxu0 0.0
        %4079 = vmatpush.msra.mxu0 0.0
        %4080 = vmatpush.msra.mxu0 0.0
        %4081 = vmatpush.msra.mxu0 0.0
        %4082 = vmatpush.msra.mxu0 0.0
        %4083 = vmatpush.msra.mxu0 0.0
        %4084 = vmatpush.msra.mxu0 0.0
        %4085 = vmatpush.msra.mxu0 0.0
        %4086 = vmatpush.msra.mxu0 0.0
        %4087 = vmatpush.msra.mxu0 %v3984
        %4088 = vmatmul.f32.gmra.mxu0 %v4050
        %v4089 = vpop.f32.mrf.mxu0
        %v4090 = vadd.f32 0.0, %v4089
        %4091 = vdwg.mxu0
        %v4092 = vld [vmem:[%s1116] sm:$0xff]
        %v4093 = vld [vmem:[%s1116 + $0x8] sm:$0xff]
        %v4094 = vld [vmem:[%s1116 + $0x10] sm:$0xff]
        %v4095 = vld [vmem:[%s1116 + $0x18] sm:$0xff]
        %v4096 = vld [vmem:[%s1116 + $0x20] sm:$0xff]
        %v4097 = vld [vmem:[%s1116 + $0x28] sm:$0xff]
        %v4098 = vld [vmem:[%s1116 + $0x30] sm:$0xff]
        %v4099 = vld [vmem:[%s1116 + $0x38] sm:$0xff]
        %v4100 = vld [vmem:[%s1116 + $0x40] sm:$0xff]
        %v4101 = vld [vmem:[%s1116 + $0x48] sm:$0xff]
        %v4102 = vld [vmem:[%s1116 + $0x50] sm:$0xff]
        %v4103 = vld [vmem:[%s1116 + $0x58] sm:$0xff]
        %v4104 = vld [vmem:[%s1116 + $0x60] sm:$0xff]
        %v4105 = vld [vmem:[%s1116 + $0x68] sm:$0xff]
        %v4106 = vld [vmem:[%s1116 + $0x70] sm:$0xff]
        %v4107 = vld [vmem:[%s1116 + $0x78] sm:$0xff]
        %v4108 = vld [vmem:[%s1116 + $0x80] sm:$0xff]
        %v4109 = vld [vmem:[%s1116 + $0x88] sm:$0xff]
        %v4110 = vld [vmem:[%s1116 + $0x90] sm:$0xff]
        %v4111 = vld [vmem:[%s1116 + $0x98] sm:$0xff]
        %v4112 = vld [vmem:[%s1116 + $0xa0] sm:$0xff]
        %v4113 = vld [vmem:[%s1116 + $0xa8] sm:$0xff]
        %v4114 = vld [vmem:[%s1116 + $0xb0] sm:$0xff]
        %v4115 = vld [vmem:[%s1116 + $0xb8] sm:$0xff]
        %v4116 = vld [vmem:[%s1116 + $0xc0] sm:$0xff]
        %v4117 = vld [vmem:[%s1116 + $0xc8] sm:$0xff]
        %v4118 = vld [vmem:[%s1116 + $0xd0] sm:$0xff]
        %v4119 = vld [vmem:[%s1116 + $0xd8] sm:$0xff]
        %v4120 = vld [vmem:[%s1116 + $0xe0] sm:$0xff]
        %v4121 = vld [vmem:[%s1116 + $0xe8] sm:$0xff]
        %v4122 = vld [vmem:[%s1116 + $0xf0] sm:$0xff]
        %v4123 = vld [vmem:[%s1116 + $0xf8] sm:$0xff]
        %v4124 = vpack.c.bf16 %v4070, %v4070
        %v4125 = vpack.c.bf16 %v4090, %v4090
        %s4126 = scalar_lea.vmem %s1259, 17
        %v4127 = vld [vmem:[%s4126] ss:$8 sm:$0x3]
        %v4129 = vperm.slane %v4127, 0
        %v4130 = vperm.slane %v4127, 1
        %v4165 = vunpack.c.l.b16 %v4092
        %v4166 = vunpack.c.h.b16 %v4092
        %v4167 = vunpack.c.l.b16 %v4093
        %v4168 = vunpack.c.h.b16 %v4093
        %v4169 = vunpack.c.l.b16 %v4094
        %v4170 = vunpack.c.h.b16 %v4094
        %v4171 = vunpack.c.l.b16 %v4095
        %v4172 = vunpack.c.h.b16 %v4095
        %v4173 = vunpack.c.l.b16 %v4096
        %v4174 = vunpack.c.h.b16 %v4096
        %v4175 = vunpack.c.l.b16 %v4097
        %v4176 = vunpack.c.h.b16 %v4097
        %v4177 = vunpack.c.l.b16 %v4098
        %v4178 = vunpack.c.h.b16 %v4098
        %v4179 = vunpack.c.l.b16 %v4099
        %v4180 = vunpack.c.h.b16 %v4099
        %v4181 = vunpack.c.l.b16 %v4100
        %v4182 = vunpack.c.h.b16 %v4100
        %v4183 = vunpack.c.l.b16 %v4101
        %v4184 = vunpack.c.h.b16 %v4101
        %v4185 = vunpack.c.l.b16 %v4102
        %v4186 = vunpack.c.h.b16 %v4102
        %v4187 = vunpack.c.l.b16 %v4103
        %v4188 = vunpack.c.h.b16 %v4103
        %v4189 = vunpack.c.l.b16 %v4104
        %v4190 = vunpack.c.h.b16 %v4104
        %v4191 = vunpack.c.l.b16 %v4105
        %v4192 = vunpack.c.h.b16 %v4105
        %v4193 = vunpack.c.l.b16 %v4106
        %v4194 = vunpack.c.h.b16 %v4106
        %v4195 = vunpack.c.l.b16 %v4107
        %v4196 = vunpack.c.h.b16 %v4107
        %v4197 = vunpack.c.l.b16 %v4108
        %v4198 = vunpack.c.h.b16 %v4108
        %v4199 = vunpack.c.l.b16 %v4109
        %v4200 = vunpack.c.h.b16 %v4109
        %v4201 = vunpack.c.l.b16 %v4110
        %v4202 = vunpack.c.h.b16 %v4110
        %v4203 = vunpack.c.l.b16 %v4111
        %v4204 = vunpack.c.h.b16 %v4111
        %v4205 = vunpack.c.l.b16 %v4112
        %v4206 = vunpack.c.h.b16 %v4112
        %v4207 = vunpack.c.l.b16 %v4113
        %v4208 = vunpack.c.h.b16 %v4113
        %v4209 = vunpack.c.l.b16 %v4114
        %v4210 = vunpack.c.h.b16 %v4114
        %v4211 = vunpack.c.l.b16 %v4115
        %v4212 = vunpack.c.h.b16 %v4115
        %v4213 = vunpack.c.l.b16 %v4116
        %v4214 = vunpack.c.h.b16 %v4116
        %v4215 = vunpack.c.l.b16 %v4117
        %v4216 = vunpack.c.h.b16 %v4117
        %v4217 = vunpack.c.l.b16 %v4118
        %v4218 = vunpack.c.h.b16 %v4118
        %v4219 = vunpack.c.l.b16 %v4119
        %v4220 = vunpack.c.h.b16 %v4119
        %v4221 = vunpack.c.l.b16 %v4120
        %v4222 = vunpack.c.h.b16 %v4120
        %v4223 = vunpack.c.l.b16 %v4121
        %v4224 = vunpack.c.h.b16 %v4121
        %v4225 = vunpack.c.l.b16 %v4122
        %v4226 = vunpack.c.h.b16 %v4122
        %v4227 = vunpack.c.l.b16 %v4123
        %v4228 = vunpack.c.h.b16 %v4123
        %v4229 = vpack.c.b16 %v4167, %v4165
        %v4230 = vpack.c.b16 %v4168, %v4166
        %v4231 = vpack.c.b16 %v4171, %v4169
        %v4232 = vpack.c.b16 %v4172, %v4170
        %v4233 = vpack.c.b16 %v4175, %v4173
        %v4234 = vpack.c.b16 %v4176, %v4174
        %v4235 = vpack.c.b16 %v4179, %v4177
        %v4236 = vpack.c.b16 %v4180, %v4178
        %v4237 = vpack.c.b16 %v4183, %v4181
        %v4238 = vpack.c.b16 %v4184, %v4182
        %v4239 = vpack.c.b16 %v4187, %v4185
        %v4240 = vpack.c.b16 %v4188, %v4186
        %v4241 = vpack.c.b16 %v4191, %v4189
        %v4242 = vpack.c.b16 %v4192, %v4190
        %v4243 = vpack.c.b16 %v4195, %v4193
        %v4244 = vpack.c.b16 %v4196, %v4194
        %v4245 = vpack.c.b16 %v4199, %v4197
        %v4246 = vpack.c.b16 %v4200, %v4198
        %v4247 = vpack.c.b16 %v4203, %v4201
        %v4248 = vpack.c.b16 %v4204, %v4202
        %v4249 = vpack.c.b16 %v4207, %v4205
        %v4250 = vpack.c.b16 %v4208, %v4206
        %v4251 = vpack.c.b16 %v4211, %v4209
        %v4252 = vpack.c.b16 %v4212, %v4210
        %v4253 = vpack.c.b16 %v4215, %v4213
        %v4254 = vpack.c.b16 %v4216, %v4214
        %v4255 = vpack.c.b16 %v4219, %v4217
        %v4256 = vpack.c.b16 %v4220, %v4218
        %v4257 = vpack.c.b16 %v4223, %v4221
        %v4258 = vpack.c.b16 %v4224, %v4222
        %v4259 = vpack.c.b16 %v4227, %v4225
        %v4260 = vpack.c.b16 %v4228, %v4226
        %4293 = vmatpush.bf16.msra.mxu0 %v4243
        %4294 = vmatpush.bf16.msra.mxu0 %v4241
        %4295 = vmatpush.bf16.msra.mxu0 %v4239
        %4296 = vmatpush.bf16.msra.mxu0 %v4237
        %4297 = vmatpush.bf16.msra.mxu0 %v4235
        %4298 = vmatpush.bf16.msra.mxu0 %v4233
        %4299 = vmatpush.bf16.msra.mxu0 %v4231
        %4300 = vmatpush.bf16.msra.mxu0 %v4229
        %4301 = vmatmul.bf16.gmra.mxu0 %v4124
        %v4302 = vpop.f32.mrf.mxu0
        %v4303 = vadd.f32 %v4129, %v4302
        %v4304 = vpop.f32.mrf.mxu0
        %4305 = vdwg.mxu0
        %4306 = vmatpush.bf16.msra.mxu0 %v4259
        %4307 = vmatpush.bf16.msra.mxu0 %v4257
        %4308 = vmatpush.bf16.msra.mxu0 %v4255
        %4309 = vmatpush.bf16.msra.mxu0 %v4253
        %4310 = vmatpush.bf16.msra.mxu0 %v4251
        %4311 = vmatpush.bf16.msra.mxu0 %v4249
        %4312 = vmatpush.bf16.msra.mxu0 %v4247
        %4313 = vmatpush.bf16.msra.mxu0 %v4245
        %4314 = vmatmul.bf16.gmra.mxu0 %v4125
        %v4315 = vpop.f32.mrf.mxu0
        %v4316 = vadd.f32 %v4303, %v4315
        %v4317 = vpop.f32.mrf.mxu0
        %4318 = vdwg.mxu0
        %4319 = vmatpush.bf16.msra.mxu0 %v4244
        %4320 = vmatpush.bf16.msra.mxu0 %v4242
        %4321 = vmatpush.bf16.msra.mxu0 %v4240
        %4322 = vmatpush.bf16.msra.mxu0 %v4238
        %4323 = vmatpush.bf16.msra.mxu0 %v4236
        %4324 = vmatpush.bf16.msra.mxu0 %v4234
        %4325 = vmatpush.bf16.msra.mxu0 %v4232
        %4326 = vmatpush.bf16.msra.mxu0 %v4230
        %4327 = vmatmul.bf16.gmra.mxu0 %v4124
        %v4328 = vpop.f32.mrf.mxu0
        %v4329 = vadd.f32 %v4130, %v4328
        %v4330 = vpop.f32.mrf.mxu0
        %4331 = vdwg.mxu0
        %4332 = vmatpush.bf16.msra.mxu0 %v4260
        %4333 = vmatpush.bf16.msra.mxu0 %v4258
        %4334 = vmatpush.bf16.msra.mxu0 %v4256
        %4335 = vmatpush.bf16.msra.mxu0 %v4254
        %4336 = vmatpush.bf16.msra.mxu0 %v4252
        %4337 = vmatpush.bf16.msra.mxu0 %v4250
        %4338 = vmatpush.bf16.msra.mxu0 %v4248
        %4339 = vmatpush.bf16.msra.mxu0 %v4246
        %4340 = vmatmul.bf16.gmra.mxu0 %v4125
        %v4341 = vpop.f32.mrf.mxu0
        %v4342 = vadd.f32 %v4329, %v4341
        %v4343 = vpop.f32.mrf.mxu0
        %4344 = vdwg.mxu0
        %v4345 = vadd.f32 %v3222, %v4316
        %v4346 = vadd.f32 %v3223, %v4342
        %s4347 = scalar_lea.vmem %s1259, 18
        %v4348 = vld [vmem:[%s4347] ss:$8 sm:$0x3]
        %s4349 = scalar_lea.vmem %s1259, 19
        %v4350 = vld [vmem:[%s4349] ss:$8 sm:$0x3]
        %v4351 = vadd.f32 %v4345, %v4346
        %4352 = vadd.xlane.f32.xlu0 %v4351
        %v4353 = vpop.xlane.xlu0 %4352
        %v4354 = vmul.f32 %v4353, %v3187
        %v4355 = vsub.f32 %v4345, %v4354
        %v4356 = vsub.f32 %v4346, %v4354
        %v4357 = vmul.f32 %v4355, %v4355
        %v4358 = vmul.f32 %v4356, %v4356
        %v4359 = vadd.f32 %v4357, %v4358
        %4360 = vadd.xlane.f32.xlu0 %v4359
        %v4361 = vpop.xlane.xlu0 %4360
        %v4362 = vmul.f32 %v4361, %v3187
        %v4363 = vadd.f32 %v4362, 1e-05
        %v4364 = vrsqrt.pop %v4363
        %v4365 = vmul.f32 %v4364, %v4363
        %v4366 = vmul.f32 %v4365, %v4364
        %v4367 = vmul.f32 0.5, %v4366
        %v4368 = vsub.f32 1.5, %v4367
        %v4369 = vmul.f32 %v4364, %v4368
        %vm4370 = vweird.f32 %v4363
        %vm4371 = vweird.f32 %v4364
        %vm4372 = vmor %vm4370, %vm4371
        %v4373 = vsel %vm4372, %v4364, %v4369
        %v4374 = vmul.f32 %v4355, %v4373
        %v4375 = vmul.f32 %v4356, %v4373
        %v4377 = vperm.slane %v4348, 0
        %v4378 = vperm.slane %v4348, 1
        %v4381 = vmul.f32 %v4374, %v4377
        %v4382 = vmul.f32 %v4375, %v4378
        %v4384 = vperm.slane %v4350, 0
        %v4385 = vperm.slane %v4350, 1
        %v4388 = vadd.f32 %v4381, %v4384
        %v4389 = vadd.f32 %v4382, %v4385
        %v4390 = vld [vmem:[%s1126] sm:$0xff]
        %v4391 = vld [vmem:[%s1126 + $0x8] sm:$0xff]
        %v4392 = vld [vmem:[%s1126 + $0x10] sm:$0xff]
        %v4393 = vld [vmem:[%s1126 + $0x18] sm:$0xff]
        %v4394 = vld [vmem:[%s1126 + $0x20] sm:$0xff]
        %v4395 = vld [vmem:[%s1126 + $0x28] sm:$0xff]
        %v4396 = vld [vmem:[%s1126 + $0x30] sm:$0xff]
        %v4397 = vld [vmem:[%s1126 + $0x38] sm:$0xff]
        %v4398 = vld [vmem:[%s1126 + $0x40] sm:$0xff]
        %v4399 = vld [vmem:[%s1126 + $0x48] sm:$0xff]
        %v4400 = vld [vmem:[%s1126 + $0x50] sm:$0xff]
        %v4401 = vld [vmem:[%s1126 + $0x58] sm:$0xff]
        %v4402 = vld [vmem:[%s1126 + $0x60] sm:$0xff]
        %v4403 = vld [vmem:[%s1126 + $0x68] sm:$0xff]
        %v4404 = vld [vmem:[%s1126 + $0x70] sm:$0xff]
        %v4405 = vld [vmem:[%s1126 + $0x78] sm:$0xff]
        %v4406 = vld [vmem:[%s1126 + $0x80] sm:$0xff]
        %v4407 = vld [vmem:[%s1126 + $0x88] sm:$0xff]
        %v4408 = vld [vmem:[%s1126 + $0x90] sm:$0xff]
        %v4409 = vld [vmem:[%s1126 + $0x98] sm:$0xff]
        %v4410 = vld [vmem:[%s1126 + $0xa0] sm:$0xff]
        %v4411 = vld [vmem:[%s1126 + $0xa8] sm:$0xff]
        %v4412 = vld [vmem:[%s1126 + $0xb0] sm:$0xff]
        %v4413 = vld [vmem:[%s1126 + $0xb8] sm:$0xff]
        %v4414 = vld [vmem:[%s1126 + $0xc0] sm:$0xff]
        %v4415 = vld [vmem:[%s1126 + $0xc8] sm:$0xff]
        %v4416 = vld [vmem:[%s1126 + $0xd0] sm:$0xff]
        %v4417 = vld [vmem:[%s1126 + $0xd8] sm:$0xff]
        %v4418 = vld [vmem:[%s1126 + $0xe0] sm:$0xff]
        %v4419 = vld [vmem:[%s1126 + $0xe8] sm:$0xff]
        %v4420 = vld [vmem:[%s1126 + $0xf0] sm:$0xff]
        %v4421 = vld [vmem:[%s1126 + $0xf8] sm:$0xff]
        %v4422 = vld [vmem:[%s1126 + $0x100] sm:$0xff]
        %v4423 = vld [vmem:[%s1126 + $0x108] sm:$0xff]
        %v4424 = vld [vmem:[%s1126 + $0x110] sm:$0xff]
        %v4425 = vld [vmem:[%s1126 + $0x118] sm:$0xff]
        %v4426 = vld [vmem:[%s1126 + $0x120] sm:$0xff]
        %v4427 = vld [vmem:[%s1126 + $0x128] sm:$0xff]
        %v4428 = vld [vmem:[%s1126 + $0x130] sm:$0xff]
        %v4429 = vld [vmem:[%s1126 + $0x138] sm:$0xff]
        %v4430 = vld [vmem:[%s1126 + $0x140] sm:$0xff]
        %v4431 = vld [vmem:[%s1126 + $0x148] sm:$0xff]
        %v4432 = vld [vmem:[%s1126 + $0x150] sm:$0xff]
        %v4433 = vld [vmem:[%s1126 + $0x158] sm:$0xff]
        %v4434 = vld [vmem:[%s1126 + $0x160] sm:$0xff]
        %v4435 = vld [vmem:[%s1126 + $0x168] sm:$0xff]
        %v4436 = vld [vmem:[%s1126 + $0x170] sm:$0xff]
        %v4437 = vld [vmem:[%s1126 + $0x178] sm:$0xff]
        %v4438 = vld [vmem:[%s1126 + $0x180] sm:$0xff]
        %v4439 = vld [vmem:[%s1126 + $0x188] sm:$0xff]
        %v4440 = vld [vmem:[%s1126 + $0x190] sm:$0xff]
        %v4441 = vld [vmem:[%s1126 + $0x198] sm:$0xff]
        %v4442 = vld [vmem:[%s1126 + $0x1a0] sm:$0xff]
        %v4443 = vld [vmem:[%s1126 + $0x1a8] sm:$0xff]
        %v4444 = vld [vmem:[%s1126 + $0x1b0] sm:$0xff]
        %v4445 = vld [vmem:[%s1126 + $0x1b8] sm:$0xff]
        %v4446 = vld [vmem:[%s1126 + $0x1c0] sm:$0xff]
        %v4447 = vld [vmem:[%s1126 + $0x1c8] sm:$0xff]
        %v4448 = vld [vmem:[%s1126 + $0x1d0] sm:$0xff]
        %v4449 = vld [vmem:[%s1126 + $0x1d8] sm:$0xff]
        %v4450 = vld [vmem:[%s1126 + $0x1e0] sm:$0xff]
        %v4451 = vld [vmem:[%s1126 + $0x1e8] sm:$0xff]
        %v4452 = vld [vmem:[%s1126 + $0x1f0] sm:$0xff]
        %v4453 = vld [vmem:[%s1126 + $0x1f8] sm:$0xff]
        %v4454 = vld [vmem:[%s1126 + $0x200] sm:$0xff]
        %v4455 = vld [vmem:[%s1126 + $0x208] sm:$0xff]
        %v4456 = vld [vmem:[%s1126 + $0x210] sm:$0xff]
        %v4457 = vld [vmem:[%s1126 + $0x218] sm:$0xff]
        %v4458 = vld [vmem:[%s1126 + $0x220] sm:$0xff]
        %v4459 = vld [vmem:[%s1126 + $0x228] sm:$0xff]
        %v4460 = vld [vmem:[%s1126 + $0x230] sm:$0xff]
        %v4461 = vld [vmem:[%s1126 + $0x238] sm:$0xff]
        %v4462 = vld [vmem:[%s1126 + $0x240] sm:$0xff]
        %v4463 = vld [vmem:[%s1126 + $0x248] sm:$0xff]
        %v4464 = vld [vmem:[%s1126 + $0x250] sm:$0xff]
        %v4465 = vld [vmem:[%s1126 + $0x258] sm:$0xff]
        %v4466 = vld [vmem:[%s1126 + $0x260] sm:$0xff]
        %v4467 = vld [vmem:[%s1126 + $0x268] sm:$0xff]
        %v4468 = vld [vmem:[%s1126 + $0x270] sm:$0xff]
        %v4469 = vld [vmem:[%s1126 + $0x278] sm:$0xff]
        %v4470 = vld [vmem:[%s1126 + $0x280] sm:$0xff]
        %v4471 = vld [vmem:[%s1126 + $0x288] sm:$0xff]
        %v4472 = vld [vmem:[%s1126 + $0x290] sm:$0xff]
        %v4473 = vld [vmem:[%s1126 + $0x298] sm:$0xff]
        %v4474 = vld [vmem:[%s1126 + $0x2a0] sm:$0xff]
        %v4475 = vld [vmem:[%s1126 + $0x2a8] sm:$0xff]
        %v4476 = vld [vmem:[%s1126 + $0x2b0] sm:$0xff]
        %v4477 = vld [vmem:[%s1126 + $0x2b8] sm:$0xff]
        %v4478 = vld [vmem:[%s1126 + $0x2c0] sm:$0xff]
        %v4479 = vld [vmem:[%s1126 + $0x2c8] sm:$0xff]
        %v4480 = vld [vmem:[%s1126 + $0x2d0] sm:$0xff]
        %v4481 = vld [vmem:[%s1126 + $0x2d8] sm:$0xff]
        %v4482 = vld [vmem:[%s1126 + $0x2e0] sm:$0xff]
        %v4483 = vld [vmem:[%s1126 + $0x2e8] sm:$0xff]
        %v4484 = vld [vmem:[%s1126 + $0x2f0] sm:$0xff]
        %v4485 = vld [vmem:[%s1126 + $0x2f8] sm:$0xff]
        %v4486 = vld [vmem:[%s1126 + $0x300] sm:$0xff]
        %v4487 = vld [vmem:[%s1126 + $0x308] sm:$0xff]
        %v4488 = vld [vmem:[%s1126 + $0x310] sm:$0xff]
        %v4489 = vld [vmem:[%s1126 + $0x318] sm:$0xff]
        %v4490 = vld [vmem:[%s1126 + $0x320] sm:$0xff]
        %v4491 = vld [vmem:[%s1126 + $0x328] sm:$0xff]
        %v4492 = vld [vmem:[%s1126 + $0x330] sm:$0xff]
        %v4493 = vld [vmem:[%s1126 + $0x338] sm:$0xff]
        %v4494 = vld [vmem:[%s1126 + $0x340] sm:$0xff]
        %v4495 = vld [vmem:[%s1126 + $0x348] sm:$0xff]
        %v4496 = vld [vmem:[%s1126 + $0x350] sm:$0xff]
        %v4497 = vld [vmem:[%s1126 + $0x358] sm:$0xff]
        %v4498 = vld [vmem:[%s1126 + $0x360] sm:$0xff]
        %v4499 = vld [vmem:[%s1126 + $0x368] sm:$0xff]
        %v4500 = vld [vmem:[%s1126 + $0x370] sm:$0xff]
        %v4501 = vld [vmem:[%s1126 + $0x378] sm:$0xff]
        %v4502 = vld [vmem:[%s1126 + $0x380] sm:$0xff]
        %v4503 = vld [vmem:[%s1126 + $0x388] sm:$0xff]
        %v4504 = vld [vmem:[%s1126 + $0x390] sm:$0xff]
        %v4505 = vld [vmem:[%s1126 + $0x398] sm:$0xff]
        %v4506 = vld [vmem:[%s1126 + $0x3a0] sm:$0xff]
        %v4507 = vld [vmem:[%s1126 + $0x3a8] sm:$0xff]
        %v4508 = vld [vmem:[%s1126 + $0x3b0] sm:$0xff]
        %v4509 = vld [vmem:[%s1126 + $0x3b8] sm:$0xff]
        %v4510 = vld [vmem:[%s1126 + $0x3c0] sm:$0xff]
        %v4511 = vld [vmem:[%s1126 + $0x3c8] sm:$0xff]
        %v4512 = vld [vmem:[%s1126 + $0x3d0] sm:$0xff]
        %v4513 = vld [vmem:[%s1126 + $0x3d8] sm:$0xff]
        %v4514 = vld [vmem:[%s1126 + $0x3e0] sm:$0xff]
        %v4515 = vld [vmem:[%s1126 + $0x3e8] sm:$0xff]
        %v4516 = vld [vmem:[%s1126 + $0x3f0] sm:$0xff]
        %v4517 = vld [vmem:[%s1126 + $0x3f8] sm:$0xff]
        %v4518 = vpack.c.bf16 %v4388, %v4388
        %v4519 = vpack.c.bf16 %v4389, %v4389
        %v4520 = vld [vmem:[%s1263] sm:$0xff]
        %v4522 = vperm.slane %v4520, 0
        %v4523 = vperm.slane %v4520, 1
        %v4524 = vperm.slane %v4520, 2
        %v4525 = vperm.slane %v4520, 3
        %v4526 = vperm.slane %v4520, 4
        %v4527 = vperm.slane %v4520, 5
        %v4528 = vperm.slane %v4520, 6
        %v4529 = vperm.slane %v4520, 7
        %v4666 = vunpack.c.l.b16 %v4390
        %v4667 = vunpack.c.h.b16 %v4390
        %v4668 = vunpack.c.l.b16 %v4391
        %v4669 = vunpack.c.h.b16 %v4391
        %v4670 = vunpack.c.l.b16 %v4392
        %v4671 = vunpack.c.h.b16 %v4392
        %v4672 = vunpack.c.l.b16 %v4393
        %v4673 = vunpack.c.h.b16 %v4393
        %v4674 = vunpack.c.l.b16 %v4394
        %v4675 = vunpack.c.h.b16 %v4394
        %v4676 = vunpack.c.l.b16 %v4395
        %v4677 = vunpack.c.h.b16 %v4395
        %v4678 = vunpack.c.l.b16 %v4396
        %v4679 = vunpack.c.h.b16 %v4396
        %v4680 = vunpack.c.l.b16 %v4397
        %v4681 = vunpack.c.h.b16 %v4397
        %v4682 = vunpack.c.l.b16 %v4398
        %v4683 = vunpack.c.h.b16 %v4398
        %v4684 = vunpack.c.l.b16 %v4399
        %v4685 = vunpack.c.h.b16 %v4399
        %v4686 = vunpack.c.l.b16 %v4400
        %v4687 = vunpack.c.h.b16 %v4400
        %v4688 = vunpack.c.l.b16 %v4401
        %v4689 = vunpack.c.h.b16 %v4401
        %v4690 = vunpack.c.l.b16 %v4402
        %v4691 = vunpack.c.h.b16 %v4402
        %v4692 = vunpack.c.l.b16 %v4403
        %v4693 = vunpack.c.h.b16 %v4403
        %v4694 = vunpack.c.l.b16 %v4404
        %v4695 = vunpack.c.h.b16 %v4404
        %v4696 = vunpack.c.l.b16 %v4405
        %v4697 = vunpack.c.h.b16 %v4405
        %v4698 = vunpack.c.l.b16 %v4406
        %v4699 = vunpack.c.h.b16 %v4406
        %v4700 = vunpack.c.l.b16 %v4407
        %v4701 = vunpack.c.h.b16 %v4407
        %v4702 = vunpack.c.l.b16 %v4408
        %v4703 = vunpack.c.h.b16 %v4408
        %v4704 = vunpack.c.l.b16 %v4409
        %v4705 = vunpack.c.h.b16 %v4409
        %v4706 = vunpack.c.l.b16 %v4410
        %v4707 = vunpack.c.h.b16 %v4410
        %v4708 = vunpack.c.l.b16 %v4411
        %v4709 = vunpack.c.h.b16 %v4411
        %v4710 = vunpack.c.l.b16 %v4412
        %v4711 = vunpack.c.h.b16 %v4412
        %v4712 = vunpack.c.l.b16 %v4413
        %v4713 = vunpack.c.h.b16 %v4413
        %v4714 = vunpack.c.l.b16 %v4414
        %v4715 = vunpack.c.h.b16 %v4414
        %v4716 = vunpack.c.l.b16 %v4415
        %v4717 = vunpack.c.h.b16 %v4415
        %v4718 = vunpack.c.l.b16 %v4416
        %v4719 = vunpack.c.h.b16 %v4416
        %v4720 = vunpack.c.l.b16 %v4417
        %v4721 = vunpack.c.h.b16 %v4417
        %v4722 = vunpack.c.l.b16 %v4418
        %v4723 = vunpack.c.h.b16 %v4418
        %v4724 = vunpack.c.l.b16 %v4419
        %v4725 = vunpack.c.h.b16 %v4419
        %v4726 = vunpack.c.l.b16 %v4420
        %v4727 = vunpack.c.h.b16 %v4420
        %v4728 = vunpack.c.l.b16 %v4421
        %v4729 = vunpack.c.h.b16 %v4421
        %v4730 = vunpack.c.l.b16 %v4422
        %v4731 = vunpack.c.h.b16 %v4422
        %v4732 = vunpack.c.l.b16 %v4423
        %v4733 = vunpack.c.h.b16 %v4423
        %v4734 = vunpack.c.l.b16 %v4424
        %v4735 = vunpack.c.h.b16 %v4424
        %v4736 = vunpack.c.l.b16 %v4425
        %v4737 = vunpack.c.h.b16 %v4425
        %v4738 = vunpack.c.l.b16 %v4426
        %v4739 = vunpack.c.h.b16 %v4426
        %v4740 = vunpack.c.l.b16 %v4427
        %v4741 = vunpack.c.h.b16 %v4427
        %v4742 = vunpack.c.l.b16 %v4428
        %v4743 = vunpack.c.h.b16 %v4428
        %v4744 = vunpack.c.l.b16 %v4429
        %v4745 = vunpack.c.h.b16 %v4429
        %v4746 = vunpack.c.l.b16 %v4430
        %v4747 = vunpack.c.h.b16 %v4430
        %v4748 = vunpack.c.l.b16 %v4431
        %v4749 = vunpack.c.h.b16 %v4431
        %v4750 = vunpack.c.l.b16 %v4432
        %v4751 = vunpack.c.h.b16 %v4432
        %v4752 = vunpack.c.l.b16 %v4433
        %v4753 = vunpack.c.h.b16 %v4433
        %v4754 = vunpack.c.l.b16 %v4434
        %v4755 = vunpack.c.h.b16 %v4434
        %v4756 = vunpack.c.l.b16 %v4435
        %v4757 = vunpack.c.h.b16 %v4435
        %v4758 = vunpack.c.l.b16 %v4436
        %v4759 = vunpack.c.h.b16 %v4436
        %v4760 = vunpack.c.l.b16 %v4437
        %v4761 = vunpack.c.h.b16 %v4437
        %v4762 = vunpack.c.l.b16 %v4438
        %v4763 = vunpack.c.h.b16 %v4438
        %v4764 = vunpack.c.l.b16 %v4439
        %v4765 = vunpack.c.h.b16 %v4439
        %v4766 = vunpack.c.l.b16 %v4440
        %v4767 = vunpack.c.h.b16 %v4440
        %v4768 = vunpack.c.l.b16 %v4441
        %v4769 = vunpack.c.h.b16 %v4441
        %v4770 = vunpack.c.l.b16 %v4442
        %v4771 = vunpack.c.h.b16 %v4442
        %v4772 = vunpack.c.l.b16 %v4443
        %v4773 = vunpack.c.h.b16 %v4443
        %v4774 = vunpack.c.l.b16 %v4444
        %v4775 = vunpack.c.h.b16 %v4444
        %v4776 = vunpack.c.l.b16 %v4445
        %v4777 = vunpack.c.h.b16 %v4445
        %v4778 = vunpack.c.l.b16 %v4446
        %v4779 = vunpack.c.h.b16 %v4446
        %v4780 = vunpack.c.l.b16 %v4447
        %v4781 = vunpack.c.h.b16 %v4447
        %v4782 = vunpack.c.l.b16 %v4448
        %v4783 = vunpack.c.h.b16 %v4448
        %v4784 = vunpack.c.l.b16 %v4449
        %v4785 = vunpack.c.h.b16 %v4449
        %v4786 = vunpack.c.l.b16 %v4450
        %v4787 = vunpack.c.h.b16 %v4450
        %v4788 = vunpack.c.l.b16 %v4451
        %v4789 = vunpack.c.h.b16 %v4451
        %v4790 = vunpack.c.l.b16 %v4452
        %v4791 = vunpack.c.h.b16 %v4452
        %v4792 = vunpack.c.l.b16 %v4453
        %v4793 = vunpack.c.h.b16 %v4453
        %v4794 = vunpack.c.l.b16 %v4454
        %v4795 = vunpack.c.h.b16 %v4454
        %v4796 = vunpack.c.l.b16 %v4455
        %v4797 = vunpack.c.h.b16 %v4455
        %v4798 = vunpack.c.l.b16 %v4456
        %v4799 = vunpack.c.h.b16 %v4456
        %v4800 = vunpack.c.l.b16 %v4457
        %v4801 = vunpack.c.h.b16 %v4457
        %v4802 = vunpack.c.l.b16 %v4458
        %v4803 = vunpack.c.h.b16 %v4458
        %v4804 = vunpack.c.l.b16 %v4459
        %v4805 = vunpack.c.h.b16 %v4459
        %v4806 = vunpack.c.l.b16 %v4460
        %v4807 = vunpack.c.h.b16 %v4460
        %v4808 = vunpack.c.l.b16 %v4461
        %v4809 = vunpack.c.h.b16 %v4461
        %v4810 = vunpack.c.l.b16 %v4462
        %v4811 = vunpack.c.h.b16 %v4462
        %v4812 = vunpack.c.l.b16 %v4463
        %v4813 = vunpack.c.h.b16 %v4463
        %v4814 = vunpack.c.l.b16 %v4464
        %v4815 = vunpack.c.h.b16 %v4464
        %v4816 = vunpack.c.l.b16 %v4465
        %v4817 = vunpack.c.h.b16 %v4465
        %v4818 = vunpack.c.l.b16 %v4466
        %v4819 = vunpack.c.h.b16 %v4466
        %v4820 = vunpack.c.l.b16 %v4467
        %v4821 = vunpack.c.h.b16 %v4467
        %v4822 = vunpack.c.l.b16 %v4468
        %v4823 = vunpack.c.h.b16 %v4468
        %v4824 = vunpack.c.l.b16 %v4469
        %v4825 = vunpack.c.h.b16 %v4469
        %v4826 = vunpack.c.l.b16 %v4470
        %v4827 = vunpack.c.h.b16 %v4470
        %v4828 = vunpack.c.l.b16 %v4471
        %v4829 = vunpack.c.h.b16 %v4471
        %v4830 = vunpack.c.l.b16 %v4472
        %v4831 = vunpack.c.h.b16 %v4472
        %v4832 = vunpack.c.l.b16 %v4473
        %v4833 = vunpack.c.h.b16 %v4473
        %v4834 = vunpack.c.l.b16 %v4474
        %v4835 = vunpack.c.h.b16 %v4474
        %v4836 = vunpack.c.l.b16 %v4475
        %v4837 = vunpack.c.h.b16 %v4475
        %v4838 = vunpack.c.l.b16 %v4476
        %v4839 = vunpack.c.h.b16 %v4476
        %v4840 = vunpack.c.l.b16 %v4477
        %v4841 = vunpack.c.h.b16 %v4477
        %v4842 = vunpack.c.l.b16 %v4478
        %v4843 = vunpack.c.h.b16 %v4478
        %v4844 = vunpack.c.l.b16 %v4479
        %v4845 = vunpack.c.h.b16 %v4479
        %v4846 = vunpack.c.l.b16 %v4480
        %v4847 = vunpack.c.h.b16 %v4480
        %v4848 = vunpack.c.l.b16 %v4481
        %v4849 = vunpack.c.h.b16 %v4481
        %v4850 = vunpack.c.l.b16 %v4482
        %v4851 = vunpack.c.h.b16 %v4482
        %v4852 = vunpack.c.l.b16 %v4483
        %v4853 = vunpack.c.h.b16 %v4483
        %v4854 = vunpack.c.l.b16 %v4484
        %v4855 = vunpack.c.h.b16 %v4484
        %v4856 = vunpack.c.l.b16 %v4485
        %v4857 = vunpack.c.h.b16 %v4485
        %v4858 = vunpack.c.l.b16 %v4486
        %v4859 = vunpack.c.h.b16 %v4486
        %v4860 = vunpack.c.l.b16 %v4487
        %v4861 = vunpack.c.h.b16 %v4487
        %v4862 = vunpack.c.l.b16 %v4488
        %v4863 = vunpack.c.h.b16 %v4488
        %v4864 = vunpack.c.l.b16 %v4489
        %v4865 = vunpack.c.h.b16 %v4489
        %v4866 = vunpack.c.l.b16 %v4490
        %v4867 = vunpack.c.h.b16 %v4490
        %v4868 = vunpack.c.l.b16 %v4491
        %v4869 = vunpack.c.h.b16 %v4491
        %v4870 = vunpack.c.l.b16 %v4492
        %v4871 = vunpack.c.h.b16 %v4492
        %v4872 = vunpack.c.l.b16 %v4493
        %v4873 = vunpack.c.h.b16 %v4493
        %v4874 = vunpack.c.l.b16 %v4494
        %v4875 = vunpack.c.h.b16 %v4494
        %v4876 = vunpack.c.l.b16 %v4495
        %v4877 = vunpack.c.h.b16 %v4495
        %v4878 = vunpack.c.l.b16 %v4496
        %v4879 = vunpack.c.h.b16 %v4496
        %v4880 = vunpack.c.l.b16 %v4497
        %v4881 = vunpack.c.h.b16 %v4497
        %v4882 = vunpack.c.l.b16 %v4498
        %v4883 = vunpack.c.h.b16 %v4498
        %v4884 = vunpack.c.l.b16 %v4499
        %v4885 = vunpack.c.h.b16 %v4499
        %v4886 = vunpack.c.l.b16 %v4500
        %v4887 = vunpack.c.h.b16 %v4500
        %v4888 = vunpack.c.l.b16 %v4501
        %v4889 = vunpack.c.h.b16 %v4501
        %v4890 = vunpack.c.l.b16 %v4502
        %v4891 = vunpack.c.h.b16 %v4502
        %v4892 = vunpack.c.l.b16 %v4503
        %v4893 = vunpack.c.h.b16 %v4503
        %v4894 = vunpack.c.l.b16 %v4504
        %v4895 = vunpack.c.h.b16 %v4504
        %v4896 = vunpack.c.l.b16 %v4505
        %v4897 = vunpack.c.h.b16 %v4505
        %v4898 = vunpack.c.l.b16 %v4506
        %v4899 = vunpack.c.h.b16 %v4506
        %v4900 = vunpack.c.l.b16 %v4507
        %v4901 = vunpack.c.h.b16 %v4507
        %v4902 = vunpack.c.l.b16 %v4508
        %v4903 = vunpack.c.h.b16 %v4508
        %v4904 = vunpack.c.l.b16 %v4509
        %v4905 = vunpack.c.h.b16 %v4509
        %v4906 = vunpack.c.l.b16 %v4510
        %v4907 = vunpack.c.h.b16 %v4510
        %v4908 = vunpack.c.l.b16 %v4511
        %v4909 = vunpack.c.h.b16 %v4511
        %v4910 = vunpack.c.l.b16 %v4512
        %v4911 = vunpack.c.h.b16 %v4512
        %v4912 = vunpack.c.l.b16 %v4513
        %v4913 = vunpack.c.h.b16 %v4513
        %v4914 = vunpack.c.l.b16 %v4514
        %v4915 = vunpack.c.h.b16 %v4514
        %v4916 = vunpack.c.l.b16 %v4515
        %v4917 = vunpack.c.h.b16 %v4515
        %v4918 = vunpack.c.l.b16 %v4516
        %v4919 = vunpack.c.h.b16 %v4516
        %v4920 = vunpack.c.l.b16 %v4517
        %v4921 = vunpack.c.h.b16 %v4517
        %v4922 = vpack.c.b16 %v4674, %v4666
        %v4923 = vpack.c.b16 %v4675, %v4667
        %v4924 = vpack.c.b16 %v4676, %v4668
        %v4925 = vpack.c.b16 %v4677, %v4669
        %v4926 = vpack.c.b16 %v4678, %v4670
        %v4927 = vpack.c.b16 %v4679, %v4671
        %v4928 = vpack.c.b16 %v4680, %v4672
        %v4929 = vpack.c.b16 %v4681, %v4673
        %v4930 = vpack.c.b16 %v4690, %v4682
        %v4931 = vpack.c.b16 %v4691, %v4683
        %v4932 = vpack.c.b16 %v4692, %v4684
        %v4933 = vpack.c.b16 %v4693, %v4685
        %v4934 = vpack.c.b16 %v4694, %v4686
        %v4935 = vpack.c.b16 %v4695, %v4687
        %v4936 = vpack.c.b16 %v4696, %v4688
        %v4937 = vpack.c.b16 %v4697, %v4689
        %v4938 = vpack.c.b16 %v4706, %v4698
        %v4939 = vpack.c.b16 %v4707, %v4699
        %v4940 = vpack.c.b16 %v4708, %v4700
        %v4941 = vpack.c.b16 %v4709, %v4701
        %v4942 = vpack.c.b16 %v4710, %v4702
        %v4943 = vpack.c.b16 %v4711, %v4703
        %v4944 = vpack.c.b16 %v4712, %v4704
        %v4945 = vpack.c.b16 %v4713, %v4705
        %v4946 = vpack.c.b16 %v4722, %v4714
        %v4947 = vpack.c.b16 %v4723, %v4715
        %v4948 = vpack.c.b16 %v4724, %v4716
        %v4949 = vpack.c.b16 %v4725, %v4717
        %v4950 = vpack.c.b16 %v4726, %v4718
        %v4951 = vpack.c.b16 %v4727, %v4719
        %v4952 = vpack.c.b16 %v4728, %v4720
        %v4953 = vpack.c.b16 %v4729, %v4721
        %v4954 = vpack.c.b16 %v4738, %v4730
        %v4955 = vpack.c.b16 %v4739, %v4731
        %v4956 = vpack.c.b16 %v4740, %v4732
        %v4957 = vpack.c.b16 %v4741, %v4733
        %v4958 = vpack.c.b16 %v4742, %v4734
        %v4959 = vpack.c.b16 %v4743, %v4735
        %v4960 = vpack.c.b16 %v4744, %v4736
        %v4961 = vpack.c.b16 %v4745, %v4737
        %v4962 = vpack.c.b16 %v4754, %v4746
        %v4963 = vpack.c.b16 %v4755, %v4747
        %v4964 = vpack.c.b16 %v4756, %v4748
        %v4965 = vpack.c.b16 %v4757, %v4749
        %v4966 = vpack.c.b16 %v4758, %v4750
        %v4967 = vpack.c.b16 %v4759, %v4751
        %v4968 = vpack.c.b16 %v4760, %v4752
        %v4969 = vpack.c.b16 %v4761, %v4753
        %v4970 = vpack.c.b16 %v4770, %v4762
        %v4971 = vpack.c.b16 %v4771, %v4763
        %v4972 = vpack.c.b16 %v4772, %v4764
        %v4973 = vpack.c.b16 %v4773, %v4765
        %v4974 = vpack.c.b16 %v4774, %v4766
        %v4975 = vpack.c.b16 %v4775, %v4767
        %v4976 = vpack.c.b16 %v4776, %v4768
        %v4977 = vpack.c.b16 %v4777, %v4769
        %v4978 = vpack.c.b16 %v4786, %v4778
        %v4979 = vpack.c.b16 %v4787, %v4779
        %v4980 = vpack.c.b16 %v4788, %v4780
        %v4981 = vpack.c.b16 %v4789, %v4781
        %v4982 = vpack.c.b16 %v4790, %v4782
        %v4983 = vpack.c.b16 %v4791, %v4783
        %v4984 = vpack.c.b16 %v4792, %v4784
        %v4985 = vpack.c.b16 %v4793, %v4785
        %v4986 = vpack.c.b16 %v4802, %v4794
        %v4987 = vpack.c.b16 %v4803, %v4795
        %v4988 = vpack.c.b16 %v4804, %v4796
        %v4989 = vpack.c.b16 %v4805, %v4797
        %v4990 = vpack.c.b16 %v4806, %v4798
        %v4991 = vpack.c.b16 %v4807, %v4799
        %v4992 = vpack.c.b16 %v4808, %v4800
        %v4993 = vpack.c.b16 %v4809, %v4801
        %v4994 = vpack.c.b16 %v4818, %v4810
        %v4995 = vpack.c.b16 %v4819, %v4811
        %v4996 = vpack.c.b16 %v4820, %v4812
        %v4997 = vpack.c.b16 %v4821, %v4813
        %v4998 = vpack.c.b16 %v4822, %v4814
        %v4999 = vpack.c.b16 %v4823, %v4815
        %v5000 = vpack.c.b16 %v4824, %v4816
        %v5001 = vpack.c.b16 %v4825, %v4817
        %v5002 = vpack.c.b16 %v4834, %v4826
        %v5003 = vpack.c.b16 %v4835, %v4827
        %v5004 = vpack.c.b16 %v4836, %v4828
        %v5005 = vpack.c.b16 %v4837, %v4829
        %v5006 = vpack.c.b16 %v4838, %v4830
        %v5007 = vpack.c.b16 %v4839, %v4831
        %v5008 = vpack.c.b16 %v4840, %v4832
        %v5009 = vpack.c.b16 %v4841, %v4833
        %v5010 = vpack.c.b16 %v4850, %v4842
        %v5011 = vpack.c.b16 %v4851, %v4843
        %v5012 = vpack.c.b16 %v4852, %v4844
        %v5013 = vpack.c.b16 %v4853, %v4845
        %v5014 = vpack.c.b16 %v4854, %v4846
        %v5015 = vpack.c.b16 %v4855, %v4847
        %v5016 = vpack.c.b16 %v4856, %v4848
        %v5017 = vpack.c.b16 %v4857, %v4849
        %v5018 = vpack.c.b16 %v4866, %v4858
        %v5019 = vpack.c.b16 %v4867, %v4859
        %v5020 = vpack.c.b16 %v4868, %v4860
        %v5021 = vpack.c.b16 %v4869, %v4861
        %v5022 = vpack.c.b16 %v4870, %v4862
        %v5023 = vpack.c.b16 %v4871, %v4863
        %v5024 = vpack.c.b16 %v4872, %v4864
        %v5025 = vpack.c.b16 %v4873, %v4865
        %v5026 = vpack.c.b16 %v4882, %v4874
        %v5027 = vpack.c.b16 %v4883, %v4875
        %v5028 = vpack.c.b16 %v4884, %v4876
        %v5029 = vpack.c.b16 %v4885, %v4877
        %v5030 = vpack.c.b16 %v4886, %v4878
        %v5031 = vpack.c.b16 %v4887, %v4879
        %v5032 = vpack.c.b16 %v4888, %v4880
        %v5033 = vpack.c.b16 %v4889, %v4881
        %v5034 = vpack.c.b16 %v4898, %v4890
        %v5035 = vpack.c.b16 %v4899, %v4891
        %v5036 = vpack.c.b16 %v4900, %v4892
        %v5037 = vpack.c.b16 %v4901, %v4893
        %v5038 = vpack.c.b16 %v4902, %v4894
        %v5039 = vpack.c.b16 %v4903, %v4895
        %v5040 = vpack.c.b16 %v4904, %v4896
        %v5041 = vpack.c.b16 %v4905, %v4897
        %v5042 = vpack.c.b16 %v4914, %v4906
        %v5043 = vpack.c.b16 %v4915, %v4907
        %v5044 = vpack.c.b16 %v4916, %v4908
        %v5045 = vpack.c.b16 %v4917, %v4909
        %v5046 = vpack.c.b16 %v4918, %v4910
        %v5047 = vpack.c.b16 %v4919, %v4911
        %v5048 = vpack.c.b16 %v4920, %v4912
        %v5049 = vpack.c.b16 %v4921, %v4913
        %5178 = vmatpush.bf16.msra.mxu0 %v4978
        %5179 = vmatpush.bf16.msra.mxu0 %v4970
        %5180 = vmatpush.bf16.msra.mxu0 %v4962
        %5181 = vmatpush.bf16.msra.mxu0 %v4954
        %5182 = vmatpush.bf16.msra.mxu0 %v4946
        %5183 = vmatpush.bf16.msra.mxu0 %v4938
        %5184 = vmatpush.bf16.msra.mxu0 %v4930
        %5185 = vmatpush.bf16.msra.mxu0 %v4922
        %5186 = vmatmul.bf16.gmra.mxu0 %v4518
        %v5187 = vpop.f32.mrf.mxu0
        %v5188 = vadd.f32 %v4522, %v5187
        %v5189 = vpop.f32.mrf.mxu0
        %5190 = vdwg.mxu0
        %5191 = vmatpush.bf16.msra.mxu0 %v5042
        %5192 = vmatpush.bf16.msra.mxu0 %v5034
        %5193 = vmatpush.bf16.msra.mxu0 %v5026
        %5194 = vmatpush.bf16.msra.mxu0 %v5018
        %5195 = vmatpush.bf16.msra.mxu0 %v5010
        %5196 = vmatpush.bf16.msra.mxu0 %v5002
        %5197 = vmatpush.bf16.msra.mxu0 %v4994
        %5198 = vmatpush.bf16.msra.mxu0 %v4986
        %5199 = vmatmul.bf16.gmra.mxu0 %v4519
        %v5200 = vpop.f32.mrf.mxu0
        %v5201 = vadd.f32 %v5188, %v5200
        %v5202 = vpop.f32.mrf.mxu0
        %5203 = vdwg.mxu0
        %5204 = vmatpush.bf16.msra.mxu0 %v4979
        %5205 = vmatpush.bf16.msra.mxu0 %v4971
        %5206 = vmatpush.bf16.msra.mxu0 %v4963
        %5207 = vmatpush.bf16.msra.mxu0 %v4955
        %5208 = vmatpush.bf16.msra.mxu0 %v4947
        %5209 = vmatpush.bf16.msra.mxu0 %v4939
        %5210 = vmatpush.bf16.msra.mxu0 %v4931
        %5211 = vmatpush.bf16.msra.mxu0 %v4923
        %5212 = vmatmul.bf16.gmra.mxu0 %v4518
        %v5213 = vpop.f32.mrf.mxu0
        %v5214 = vadd.f32 %v4523, %v5213
        %v5215 = vpop.f32.mrf.mxu0
        %5216 = vdwg.mxu0
        %5217 = vmatpush.bf16.msra.mxu0 %v5043
        %5218 = vmatpush.bf16.msra.mxu0 %v5035
        %5219 = vmatpush.bf16.msra.mxu0 %v5027
        %5220 = vmatpush.bf16.msra.mxu0 %v5019
        %5221 = vmatpush.bf16.msra.mxu0 %v5011
        %5222 = vmatpush.bf16.msra.mxu0 %v5003
        %5223 = vmatpush.bf16.msra.mxu0 %v4995
        %5224 = vmatpush.bf16.msra.mxu0 %v4987
        %5225 = vmatmul.bf16.gmra.mxu0 %v4519
        %v5226 = vpop.f32.mrf.mxu0
        %v5227 = vadd.f32 %v5214, %v5226
        %v5228 = vpop.f32.mrf.mxu0
        %5229 = vdwg.mxu0
        %5230 = vmatpush.bf16.msra.mxu0 %v4980
        %5231 = vmatpush.bf16.msra.mxu0 %v4972
        %5232 = vmatpush.bf16.msra.mxu0 %v4964
        %5233 = vmatpush.bf16.msra.mxu0 %v4956
        %5234 = vmatpush.bf16.msra.mxu0 %v4948
        %5235 = vmatpush.bf16.msra.mxu0 %v4940
        %5236 = vmatpush.bf16.msra.mxu0 %v4932
        %5237 = vmatpush.bf16.msra.mxu0 %v4924
        %5238 = vmatmul.bf16.gmra.mxu0 %v4518
        %v5239 = vpop.f32.mrf.mxu0
        %v5240 = vadd.f32 %v4524, %v5239
        %v5241 = vpop.f32.mrf.mxu0
        %5242 = vdwg.mxu0
        %5243 = vmatpush.bf16.msra.mxu0 %v5044
        %5244 = vmatpush.bf16.msra.mxu0 %v5036
        %5245 = vmatpush.bf16.msra.mxu0 %v5028
        %5246 = vmatpush.bf16.msra.mxu0 %v5020
        %5247 = vmatpush.bf16.msra.mxu0 %v5012
        %5248 = vmatpush.bf16.msra.mxu0 %v5004
        %5249 = vmatpush.bf16.msra.mxu0 %v4996
        %5250 = vmatpush.bf16.msra.mxu0 %v4988
        %5251 = vmatmul.bf16.gmra.mxu0 %v4519
        %v5252 = vpop.f32.mrf.mxu0
        %v5253 = vadd.f32 %v5240, %v5252
        %v5254 = vpop.f32.mrf.mxu0
        %5255 = vdwg.mxu0
        %5256 = vmatpush.bf16.msra.mxu0 %v4981
        %5257 = vmatpush.bf16.msra.mxu0 %v4973
        %5258 = vmatpush.bf16.msra.mxu0 %v4965
        %5259 = vmatpush.bf16.msra.mxu0 %v4957
        %5260 = vmatpush.bf16.msra.mxu0 %v4949
        %5261 = vmatpush.bf16.msra.mxu0 %v4941
        %5262 = vmatpush.bf16.msra.mxu0 %v4933
        %5263 = vmatpush.bf16.msra.mxu0 %v4925
        %5264 = vmatmul.bf16.gmra.mxu0 %v4518
        %v5265 = vpop.f32.mrf.mxu0
        %v5266 = vadd.f32 %v4525, %v5265
        %v5267 = vpop.f32.mrf.mxu0
        %5268 = vdwg.mxu0
        %5269 = vmatpush.bf16.msra.mxu0 %v5045
        %5270 = vmatpush.bf16.msra.mxu0 %v5037
        %5271 = vmatpush.bf16.msra.mxu0 %v5029
        %5272 = vmatpush.bf16.msra.mxu0 %v5021
        %5273 = vmatpush.bf16.msra.mxu0 %v5013
        %5274 = vmatpush.bf16.msra.mxu0 %v5005
        %5275 = vmatpush.bf16.msra.mxu0 %v4997
        %5276 = vmatpush.bf16.msra.mxu0 %v4989
        %5277 = vmatmul.bf16.gmra.mxu0 %v4519
        %v5278 = vpop.f32.mrf.mxu0
        %v5279 = vadd.f32 %v5266, %v5278
        %v5280 = vpop.f32.mrf.mxu0
        %5281 = vdwg.mxu0
        %5282 = vmatpush.bf16.msra.mxu0 %v4982
        %5283 = vmatpush.bf16.msra.mxu0 %v4974
        %5284 = vmatpush.bf16.msra.mxu0 %v4966
        %5285 = vmatpush.bf16.msra.mxu0 %v4958
        %5286 = vmatpush.bf16.msra.mxu0 %v4950
        %5287 = vmatpush.bf16.msra.mxu0 %v4942
        %5288 = vmatpush.bf16.msra.mxu0 %v4934
        %5289 = vmatpush.bf16.msra.mxu0 %v4926
        %5290 = vmatmul.bf16.gmra.mxu0 %v4518
        %v5291 = vpop.f32.mrf.mxu0
        %v5292 = vadd.f32 %v4526, %v5291
        %v5293 = vpop.f32.mrf.mxu0
        %5294 = vdwg.mxu0
        %5295 = vmatpush.bf16.msra.mxu0 %v5046
        %5296 = vmatpush.bf16.msra.mxu0 %v5038
        %5297 = vmatpush.bf16.msra.mxu0 %v5030
        %5298 = vmatpush.bf16.msra.mxu0 %v5022
        %5299 = vmatpush.bf16.msra.mxu0 %v5014
        %5300 = vmatpush.bf16.msra.mxu0 %v5006
        %5301 = vmatpush.bf16.msra.mxu0 %v4998
        %5302 = vmatpush.bf16.msra.mxu0 %v4990
        %5303 = vmatmul.bf16.gmra.mxu0 %v4519
        %v5304 = vpop.f32.mrf.mxu0
        %v5305 = vadd.f32 %v5292, %v5304
        %v5306 = vpop.f32.mrf.mxu0
        %5307 = vdwg.mxu0
        %5308 = vmatpush.bf16.msra.mxu0 %v4983
        %5309 = vmatpush.bf16.msra.mxu0 %v4975
        %5310 = vmatpush.bf16.msra.mxu0 %v4967
        %5311 = vmatpush.bf16.msra.mxu0 %v4959
        %5312 = vmatpush.bf16.msra.mxu0 %v4951
        %5313 = vmatpush.bf16.msra.mxu0 %v4943
        %5314 = vmatpush.bf16.msra.mxu0 %v4935
        %5315 = vmatpush.bf16.msra.mxu0 %v4927
        %5316 = vmatmul.bf16.gmra.mxu0 %v4518
        %v5317 = vpop.f32.mrf.mxu0
        %v5318 = vadd.f32 %v4527, %v5317
        %v5319 = vpop.f32.mrf.mxu0
        %5320 = vdwg.mxu0
        %5321 = vmatpush.bf16.msra.mxu0 %v5047
        %5322 = vmatpush.bf16.msra.mxu0 %v5039
        %5323 = vmatpush.bf16.msra.mxu0 %v5031
        %5324 = vmatpush.bf16.msra.mxu0 %v5023
        %5325 = vmatpush.bf16.msra.mxu0 %v5015
        %5326 = vmatpush.bf16.msra.mxu0 %v5007
        %5327 = vmatpush.bf16.msra.mxu0 %v4999
        %5328 = vmatpush.bf16.msra.mxu0 %v4991
        %5329 = vmatmul.bf16.gmra.mxu0 %v4519
        %v5330 = vpop.f32.mrf.mxu0
        %v5331 = vadd.f32 %v5318, %v5330
        %v5332 = vpop.f32.mrf.mxu0
        %5333 = vdwg.mxu0
        %5334 = vmatpush.bf16.msra.mxu0 %v4984
        %5335 = vmatpush.bf16.msra.mxu0 %v4976
        %5336 = vmatpush.bf16.msra.mxu0 %v4968
        %5337 = vmatpush.bf16.msra.mxu0 %v4960
        %5338 = vmatpush.bf16.msra.mxu0 %v4952
        %5339 = vmatpush.bf16.msra.mxu0 %v4944
        %5340 = vmatpush.bf16.msra.mxu0 %v4936
        %5341 = vmatpush.bf16.msra.mxu0 %v4928
        %5342 = vmatmul.bf16.gmra.mxu0 %v4518
        %v5343 = vpop.f32.mrf.mxu0
        %v5344 = vadd.f32 %v4528, %v5343
        %v5345 = vpop.f32.mrf.mxu0
        %5346 = vdwg.mxu0
        %5347 = vmatpush.bf16.msra.mxu0 %v5048
        %5348 = vmatpush.bf16.msra.mxu0 %v5040
        %5349 = vmatpush.bf16.msra.mxu0 %v5032
        %5350 = vmatpush.bf16.msra.mxu0 %v5024
        %5351 = vmatpush.bf16.msra.mxu0 %v5016
        %5352 = vmatpush.bf16.msra.mxu0 %v5008
        %5353 = vmatpush.bf16.msra.mxu0 %v5000
        %5354 = vmatpush.bf16.msra.mxu0 %v4992
        %5355 = vmatmul.bf16.gmra.mxu0 %v4519
        %v5356 = vpop.f32.mrf.mxu0
        %v5357 = vadd.f32 %v5344, %v5356
        %v5358 = vpop.f32.mrf.mxu0
        %5359 = vdwg.mxu0
        %5360 = vmatpush.bf16.msra.mxu0 %v4985
        %5361 = vmatpush.bf16.msra.mxu0 %v4977
        %5362 = vmatpush.bf16.msra.mxu0 %v4969
        %5363 = vmatpush.bf16.msra.mxu0 %v4961
        %5364 = vmatpush.bf16.msra.mxu0 %v4953
        %5365 = vmatpush.bf16.msra.mxu0 %v4945
        %5366 = vmatpush.bf16.msra.mxu0 %v4937
        %5367 = vmatpush.bf16.msra.mxu0 %v4929
        %5368 = vmatmul.bf16.gmra.mxu0 %v4518
        %v5369 = vpop.f32.mrf.mxu0
        %v5370 = vadd.f32 %v4529, %v5369
        %v5371 = vpop.f32.mrf.mxu0
        %5372 = vdwg.mxu0
        %5373 = vmatpush.bf16.msra.mxu0 %v5049
        %5374 = vmatpush.bf16.msra.mxu0 %v5041
        %5375 = vmatpush.bf16.msra.mxu0 %v5033
        %5376 = vmatpush.bf16.msra.mxu0 %v5025
        %5377 = vmatpush.bf16.msra.mxu0 %v5017
        %5378 = vmatpush.bf16.msra.mxu0 %v5009
        %5379 = vmatpush.bf16.msra.mxu0 %v5001
        %5380 = vmatpush.bf16.msra.mxu0 %v4993
        %5381 = vmatmul.bf16.gmra.mxu0 %v4519
        %v5382 = vpop.f32.mrf.mxu0
        %v5383 = vadd.f32 %v5370, %v5382
        %v5384 = vpop.f32.mrf.mxu0
        %5385 = vdwg.mxu0
        %v5386 = vmax.f32 %v5201, 0.0
        %v5387 = vmax.f32 %v5227, 0.0
        %v5388 = vmax.f32 %v5253, 0.0
        %v5389 = vmax.f32 %v5279, 0.0
        %v5390 = vmax.f32 %v5305, 0.0
        %v5391 = vmax.f32 %v5331, 0.0
        %v5392 = vmax.f32 %v5357, 0.0
        %v5393 = vmax.f32 %v5383, 0.0
        %v5394 = vld [vmem:[%s1136] sm:$0xff]
        %v5395 = vld [vmem:[%s1136 + $0x8] sm:$0xff]
        %v5396 = vld [vmem:[%s1136 + $0x10] sm:$0xff]
        %v5397 = vld [vmem:[%s1136 + $0x18] sm:$0xff]
        %v5398 = vld [vmem:[%s1136 + $0x20] sm:$0xff]
        %v5399 = vld [vmem:[%s1136 + $0x28] sm:$0xff]
        %v5400 = vld [vmem:[%s1136 + $0x30] sm:$0xff]
        %v5401 = vld [vmem:[%s1136 + $0x38] sm:$0xff]
        %v5402 = vld [vmem:[%s1136 + $0x40] sm:$0xff]
        %v5403 = vld [vmem:[%s1136 + $0x48] sm:$0xff]
        %v5404 = vld [vmem:[%s1136 + $0x50] sm:$0xff]
        %v5405 = vld [vmem:[%s1136 + $0x58] sm:$0xff]
        %v5406 = vld [vmem:[%s1136 + $0x60] sm:$0xff]
        %v5407 = vld [vmem:[%s1136 + $0x68] sm:$0xff]
        %v5408 = vld [vmem:[%s1136 + $0x70] sm:$0xff]
        %v5409 = vld [vmem:[%s1136 + $0x78] sm:$0xff]
        %v5410 = vld [vmem:[%s1136 + $0x80] sm:$0xff]
        %v5411 = vld [vmem:[%s1136 + $0x88] sm:$0xff]
        %v5412 = vld [vmem:[%s1136 + $0x90] sm:$0xff]
        %v5413 = vld [vmem:[%s1136 + $0x98] sm:$0xff]
        %v5414 = vld [vmem:[%s1136 + $0xa0] sm:$0xff]
        %v5415 = vld [vmem:[%s1136 + $0xa8] sm:$0xff]
        %v5416 = vld [vmem:[%s1136 + $0xb0] sm:$0xff]
        %v5417 = vld [vmem:[%s1136 + $0xb8] sm:$0xff]
        %v5418 = vld [vmem:[%s1136 + $0xc0] sm:$0xff]
        %v5419 = vld [vmem:[%s1136 + $0xc8] sm:$0xff]
        %v5420 = vld [vmem:[%s1136 + $0xd0] sm:$0xff]
        %v5421 = vld [vmem:[%s1136 + $0xd8] sm:$0xff]
        %v5422 = vld [vmem:[%s1136 + $0xe0] sm:$0xff]
        %v5423 = vld [vmem:[%s1136 + $0xe8] sm:$0xff]
        %v5424 = vld [vmem:[%s1136 + $0xf0] sm:$0xff]
        %v5425 = vld [vmem:[%s1136 + $0xf8] sm:$0xff]
        %v5426 = vld [vmem:[%s1136 + $0x100] sm:$0xff]
        %v5427 = vld [vmem:[%s1136 + $0x108] sm:$0xff]
        %v5428 = vld [vmem:[%s1136 + $0x110] sm:$0xff]
        %v5429 = vld [vmem:[%s1136 + $0x118] sm:$0xff]
        %v5430 = vld [vmem:[%s1136 + $0x120] sm:$0xff]
        %v5431 = vld [vmem:[%s1136 + $0x128] sm:$0xff]
        %v5432 = vld [vmem:[%s1136 + $0x130] sm:$0xff]
        %v5433 = vld [vmem:[%s1136 + $0x138] sm:$0xff]
        %v5434 = vld [vmem:[%s1136 + $0x140] sm:$0xff]
        %v5435 = vld [vmem:[%s1136 + $0x148] sm:$0xff]
        %v5436 = vld [vmem:[%s1136 + $0x150] sm:$0xff]
        %v5437 = vld [vmem:[%s1136 + $0x158] sm:$0xff]
        %v5438 = vld [vmem:[%s1136 + $0x160] sm:$0xff]
        %v5439 = vld [vmem:[%s1136 + $0x168] sm:$0xff]
        %v5440 = vld [vmem:[%s1136 + $0x170] sm:$0xff]
        %v5441 = vld [vmem:[%s1136 + $0x178] sm:$0xff]
        %v5442 = vld [vmem:[%s1136 + $0x180] sm:$0xff]
        %v5443 = vld [vmem:[%s1136 + $0x188] sm:$0xff]
        %v5444 = vld [vmem:[%s1136 + $0x190] sm:$0xff]
        %v5445 = vld [vmem:[%s1136 + $0x198] sm:$0xff]
        %v5446 = vld [vmem:[%s1136 + $0x1a0] sm:$0xff]
        %v5447 = vld [vmem:[%s1136 + $0x1a8] sm:$0xff]
        %v5448 = vld [vmem:[%s1136 + $0x1b0] sm:$0xff]
        %v5449 = vld [vmem:[%s1136 + $0x1b8] sm:$0xff]
        %v5450 = vld [vmem:[%s1136 + $0x1c0] sm:$0xff]
        %v5451 = vld [vmem:[%s1136 + $0x1c8] sm:$0xff]
        %v5452 = vld [vmem:[%s1136 + $0x1d0] sm:$0xff]
        %v5453 = vld [vmem:[%s1136 + $0x1d8] sm:$0xff]
        %v5454 = vld [vmem:[%s1136 + $0x1e0] sm:$0xff]
        %v5455 = vld [vmem:[%s1136 + $0x1e8] sm:$0xff]
        %v5456 = vld [vmem:[%s1136 + $0x1f0] sm:$0xff]
        %v5457 = vld [vmem:[%s1136 + $0x1f8] sm:$0xff]
        %v5458 = vld [vmem:[%s1136 + $0x200] sm:$0xff]
        %v5459 = vld [vmem:[%s1136 + $0x208] sm:$0xff]
        %v5460 = vld [vmem:[%s1136 + $0x210] sm:$0xff]
        %v5461 = vld [vmem:[%s1136 + $0x218] sm:$0xff]
        %v5462 = vld [vmem:[%s1136 + $0x220] sm:$0xff]
        %v5463 = vld [vmem:[%s1136 + $0x228] sm:$0xff]
        %v5464 = vld [vmem:[%s1136 + $0x230] sm:$0xff]
        %v5465 = vld [vmem:[%s1136 + $0x238] sm:$0xff]
        %v5466 = vld [vmem:[%s1136 + $0x240] sm:$0xff]
        %v5467 = vld [vmem:[%s1136 + $0x248] sm:$0xff]
        %v5468 = vld [vmem:[%s1136 + $0x250] sm:$0xff]
        %v5469 = vld [vmem:[%s1136 + $0x258] sm:$0xff]
        %v5470 = vld [vmem:[%s1136 + $0x260] sm:$0xff]
        %v5471 = vld [vmem:[%s1136 + $0x268] sm:$0xff]
        %v5472 = vld [vmem:[%s1136 + $0x270] sm:$0xff]
        %v5473 = vld [vmem:[%s1136 + $0x278] sm:$0xff]
        %v5474 = vld [vmem:[%s1136 + $0x280] sm:$0xff]
        %v5475 = vld [vmem:[%s1136 + $0x288] sm:$0xff]
        %v5476 = vld [vmem:[%s1136 + $0x290] sm:$0xff]
        %v5477 = vld [vmem:[%s1136 + $0x298] sm:$0xff]
        %v5478 = vld [vmem:[%s1136 + $0x2a0] sm:$0xff]
        %v5479 = vld [vmem:[%s1136 + $0x2a8] sm:$0xff]
        %v5480 = vld [vmem:[%s1136 + $0x2b0] sm:$0xff]
        %v5481 = vld [vmem:[%s1136 + $0x2b8] sm:$0xff]
        %v5482 = vld [vmem:[%s1136 + $0x2c0] sm:$0xff]
        %v5483 = vld [vmem:[%s1136 + $0x2c8] sm:$0xff]
        %v5484 = vld [vmem:[%s1136 + $0x2d0] sm:$0xff]
        %v5485 = vld [vmem:[%s1136 + $0x2d8] sm:$0xff]
        %v5486 = vld [vmem:[%s1136 + $0x2e0] sm:$0xff]
        %v5487 = vld [vmem:[%s1136 + $0x2e8] sm:$0xff]
        %v5488 = vld [vmem:[%s1136 + $0x2f0] sm:$0xff]
        %v5489 = vld [vmem:[%s1136 + $0x2f8] sm:$0xff]
        %v5490 = vld [vmem:[%s1136 + $0x300] sm:$0xff]
        %v5491 = vld [vmem:[%s1136 + $0x308] sm:$0xff]
        %v5492 = vld [vmem:[%s1136 + $0x310] sm:$0xff]
        %v5493 = vld [vmem:[%s1136 + $0x318] sm:$0xff]
        %v5494 = vld [vmem:[%s1136 + $0x320] sm:$0xff]
        %v5495 = vld [vmem:[%s1136 + $0x328] sm:$0xff]
        %v5496 = vld [vmem:[%s1136 + $0x330] sm:$0xff]
        %v5497 = vld [vmem:[%s1136 + $0x338] sm:$0xff]
        %v5498 = vld [vmem:[%s1136 + $0x340] sm:$0xff]
        %v5499 = vld [vmem:[%s1136 + $0x348] sm:$0xff]
        %v5500 = vld [vmem:[%s1136 + $0x350] sm:$0xff]
        %v5501 = vld [vmem:[%s1136 + $0x358] sm:$0xff]
        %v5502 = vld [vmem:[%s1136 + $0x360] sm:$0xff]
        %v5503 = vld [vmem:[%s1136 + $0x368] sm:$0xff]
        %v5504 = vld [vmem:[%s1136 + $0x370] sm:$0xff]
        %v5505 = vld [vmem:[%s1136 + $0x378] sm:$0xff]
        %v5506 = vld [vmem:[%s1136 + $0x380] sm:$0xff]
        %v5507 = vld [vmem:[%s1136 + $0x388] sm:$0xff]
        %v5508 = vld [vmem:[%s1136 + $0x390] sm:$0xff]
        %v5509 = vld [vmem:[%s1136 + $0x398] sm:$0xff]
        %v5510 = vld [vmem:[%s1136 + $0x3a0] sm:$0xff]
        %v5511 = vld [vmem:[%s1136 + $0x3a8] sm:$0xff]
        %v5512 = vld [vmem:[%s1136 + $0x3b0] sm:$0xff]
        %v5513 = vld [vmem:[%s1136 + $0x3b8] sm:$0xff]
        %v5514 = vld [vmem:[%s1136 + $0x3c0] sm:$0xff]
        %v5515 = vld [vmem:[%s1136 + $0x3c8] sm:$0xff]
        %v5516 = vld [vmem:[%s1136 + $0x3d0] sm:$0xff]
        %v5517 = vld [vmem:[%s1136 + $0x3d8] sm:$0xff]
        %v5518 = vld [vmem:[%s1136 + $0x3e0] sm:$0xff]
        %v5519 = vld [vmem:[%s1136 + $0x3e8] sm:$0xff]
        %v5520 = vld [vmem:[%s1136 + $0x3f0] sm:$0xff]
        %v5521 = vld [vmem:[%s1136 + $0x3f8] sm:$0xff]
        %v5522 = vpack.c.bf16 %v5386, %v5386
        %v5523 = vpack.c.bf16 %v5387, %v5387
        %v5524 = vpack.c.bf16 %v5388, %v5388
        %v5525 = vpack.c.bf16 %v5389, %v5389
        %v5526 = vpack.c.bf16 %v5390, %v5390
        %v5527 = vpack.c.bf16 %v5391, %v5391
        %v5528 = vpack.c.bf16 %v5392, %v5392
        %v5529 = vpack.c.bf16 %v5393, %v5393
        %s5530 = scalar_lea.vmem %s1259, 20
        %v5531 = vld [vmem:[%s5530] ss:$8 sm:$0x3]
        %v5533 = vperm.slane %v5531, 0
        %v5534 = vperm.slane %v5531, 1
        %v5665 = vunpack.c.l.b16 %v5394
        %v5666 = vunpack.c.h.b16 %v5394
        %v5667 = vunpack.c.l.b16 %v5395
        %v5668 = vunpack.c.h.b16 %v5395
        %v5669 = vunpack.c.l.b16 %v5396
        %v5670 = vunpack.c.h.b16 %v5396
        %v5671 = vunpack.c.l.b16 %v5397
        %v5672 = vunpack.c.h.b16 %v5397
        %v5673 = vunpack.c.l.b16 %v5398
        %v5674 = vunpack.c.h.b16 %v5398
        %v5675 = vunpack.c.l.b16 %v5399
        %v5676 = vunpack.c.h.b16 %v5399
        %v5677 = vunpack.c.l.b16 %v5400
        %v5678 = vunpack.c.h.b16 %v5400
        %v5679 = vunpack.c.l.b16 %v5401
        %v5680 = vunpack.c.h.b16 %v5401
        %v5681 = vunpack.c.l.b16 %v5402
        %v5682 = vunpack.c.h.b16 %v5402
        %v5683 = vunpack.c.l.b16 %v5403
        %v5684 = vunpack.c.h.b16 %v5403
        %v5685 = vunpack.c.l.b16 %v5404
        %v5686 = vunpack.c.h.b16 %v5404
        %v5687 = vunpack.c.l.b16 %v5405
        %v5688 = vunpack.c.h.b16 %v5405
        %v5689 = vunpack.c.l.b16 %v5406
        %v5690 = vunpack.c.h.b16 %v5406
        %v5691 = vunpack.c.l.b16 %v5407
        %v5692 = vunpack.c.h.b16 %v5407
        %v5693 = vunpack.c.l.b16 %v5408
        %v5694 = vunpack.c.h.b16 %v5408
        %v5695 = vunpack.c.l.b16 %v5409
        %v5696 = vunpack.c.h.b16 %v5409
        %v5697 = vunpack.c.l.b16 %v5410
        %v5698 = vunpack.c.h.b16 %v5410
        %v5699 = vunpack.c.l.b16 %v5411
        %v5700 = vunpack.c.h.b16 %v5411
        %v5701 = vunpack.c.l.b16 %v5412
        %v5702 = vunpack.c.h.b16 %v5412
        %v5703 = vunpack.c.l.b16 %v5413
        %v5704 = vunpack.c.h.b16 %v5413
        %v5705 = vunpack.c.l.b16 %v5414
        %v5706 = vunpack.c.h.b16 %v5414
        %v5707 = vunpack.c.l.b16 %v5415
        %v5708 = vunpack.c.h.b16 %v5415
        %v5709 = vunpack.c.l.b16 %v5416
        %v5710 = vunpack.c.h.b16 %v5416
        %v5711 = vunpack.c.l.b16 %v5417
        %v5712 = vunpack.c.h.b16 %v5417
        %v5713 = vunpack.c.l.b16 %v5418
        %v5714 = vunpack.c.h.b16 %v5418
        %v5715 = vunpack.c.l.b16 %v5419
        %v5716 = vunpack.c.h.b16 %v5419
        %v5717 = vunpack.c.l.b16 %v5420
        %v5718 = vunpack.c.h.b16 %v5420
        %v5719 = vunpack.c.l.b16 %v5421
        %v5720 = vunpack.c.h.b16 %v5421
        %v5721 = vunpack.c.l.b16 %v5422
        %v5722 = vunpack.c.h.b16 %v5422
        %v5723 = vunpack.c.l.b16 %v5423
        %v5724 = vunpack.c.h.b16 %v5423
        %v5725 = vunpack.c.l.b16 %v5424
        %v5726 = vunpack.c.h.b16 %v5424
        %v5727 = vunpack.c.l.b16 %v5425
        %v5728 = vunpack.c.h.b16 %v5425
        %v5729 = vunpack.c.l.b16 %v5426
        %v5730 = vunpack.c.h.b16 %v5426
        %v5731 = vunpack.c.l.b16 %v5427
        %v5732 = vunpack.c.h.b16 %v5427
        %v5733 = vunpack.c.l.b16 %v5428
        %v5734 = vunpack.c.h.b16 %v5428
        %v5735 = vunpack.c.l.b16 %v5429
        %v5736 = vunpack.c.h.b16 %v5429
        %v5737 = vunpack.c.l.b16 %v5430
        %v5738 = vunpack.c.h.b16 %v5430
        %v5739 = vunpack.c.l.b16 %v5431
        %v5740 = vunpack.c.h.b16 %v5431
        %v5741 = vunpack.c.l.b16 %v5432
        %v5742 = vunpack.c.h.b16 %v5432
        %v5743 = vunpack.c.l.b16 %v5433
        %v5744 = vunpack.c.h.b16 %v5433
        %v5745 = vunpack.c.l.b16 %v5434
        %v5746 = vunpack.c.h.b16 %v5434
        %v5747 = vunpack.c.l.b16 %v5435
        %v5748 = vunpack.c.h.b16 %v5435
        %v5749 = vunpack.c.l.b16 %v5436
        %v5750 = vunpack.c.h.b16 %v5436
        %v5751 = vunpack.c.l.b16 %v5437
        %v5752 = vunpack.c.h.b16 %v5437
        %v5753 = vunpack.c.l.b16 %v5438
        %v5754 = vunpack.c.h.b16 %v5438
        %v5755 = vunpack.c.l.b16 %v5439
        %v5756 = vunpack.c.h.b16 %v5439
        %v5757 = vunpack.c.l.b16 %v5440
        %v5758 = vunpack.c.h.b16 %v5440
        %v5759 = vunpack.c.l.b16 %v5441
        %v5760 = vunpack.c.h.b16 %v5441
        %v5761 = vunpack.c.l.b16 %v5442
        %v5762 = vunpack.c.h.b16 %v5442
        %v5763 = vunpack.c.l.b16 %v5443
        %v5764 = vunpack.c.h.b16 %v5443
        %v5765 = vunpack.c.l.b16 %v5444
        %v5766 = vunpack.c.h.b16 %v5444
        %v5767 = vunpack.c.l.b16 %v5445
        %v5768 = vunpack.c.h.b16 %v5445
        %v5769 = vunpack.c.l.b16 %v5446
        %v5770 = vunpack.c.h.b16 %v5446
        %v5771 = vunpack.c.l.b16 %v5447
        %v5772 = vunpack.c.h.b16 %v5447
        %v5773 = vunpack.c.l.b16 %v5448
        %v5774 = vunpack.c.h.b16 %v5448
        %v5775 = vunpack.c.l.b16 %v5449
        %v5776 = vunpack.c.h.b16 %v5449
        %v5777 = vunpack.c.l.b16 %v5450
        %v5778 = vunpack.c.h.b16 %v5450
        %v5779 = vunpack.c.l.b16 %v5451
        %v5780 = vunpack.c.h.b16 %v5451
        %v5781 = vunpack.c.l.b16 %v5452
        %v5782 = vunpack.c.h.b16 %v5452
        %v5783 = vunpack.c.l.b16 %v5453
        %v5784 = vunpack.c.h.b16 %v5453
        %v5785 = vunpack.c.l.b16 %v5454
        %v5786 = vunpack.c.h.b16 %v5454
        %v5787 = vunpack.c.l.b16 %v5455
        %v5788 = vunpack.c.h.b16 %v5455
        %v5789 = vunpack.c.l.b16 %v5456
        %v5790 = vunpack.c.h.b16 %v5456
        %v5791 = vunpack.c.l.b16 %v5457
        %v5792 = vunpack.c.h.b16 %v5457
        %v5793 = vunpack.c.l.b16 %v5458
        %v5794 = vunpack.c.h.b16 %v5458
        %v5795 = vunpack.c.l.b16 %v5459
        %v5796 = vunpack.c.h.b16 %v5459
        %v5797 = vunpack.c.l.b16 %v5460
        %v5798 = vunpack.c.h.b16 %v5460
        %v5799 = vunpack.c.l.b16 %v5461
        %v5800 = vunpack.c.h.b16 %v5461
        %v5801 = vunpack.c.l.b16 %v5462
        %v5802 = vunpack.c.h.b16 %v5462
        %v5803 = vunpack.c.l.b16 %v5463
        %v5804 = vunpack.c.h.b16 %v5463
        %v5805 = vunpack.c.l.b16 %v5464
        %v5806 = vunpack.c.h.b16 %v5464
        %v5807 = vunpack.c.l.b16 %v5465
        %v5808 = vunpack.c.h.b16 %v5465
        %v5809 = vunpack.c.l.b16 %v5466
        %v5810 = vunpack.c.h.b16 %v5466
        %v5811 = vunpack.c.l.b16 %v5467
        %v5812 = vunpack.c.h.b16 %v5467
        %v5813 = vunpack.c.l.b16 %v5468
        %v5814 = vunpack.c.h.b16 %v5468
        %v5815 = vunpack.c.l.b16 %v5469
        %v5816 = vunpack.c.h.b16 %v5469
        %v5817 = vunpack.c.l.b16 %v5470
        %v5818 = vunpack.c.h.b16 %v5470
        %v5819 = vunpack.c.l.b16 %v5471
        %v5820 = vunpack.c.h.b16 %v5471
        %v5821 = vunpack.c.l.b16 %v5472
        %v5822 = vunpack.c.h.b16 %v5472
        %v5823 = vunpack.c.l.b16 %v5473
        %v5824 = vunpack.c.h.b16 %v5473
        %v5825 = vunpack.c.l.b16 %v5474
        %v5826 = vunpack.c.h.b16 %v5474
        %v5827 = vunpack.c.l.b16 %v5475
        %v5828 = vunpack.c.h.b16 %v5475
        %v5829 = vunpack.c.l.b16 %v5476
        %v5830 = vunpack.c.h.b16 %v5476
        %v5831 = vunpack.c.l.b16 %v5477
        %v5832 = vunpack.c.h.b16 %v5477
        %v5833 = vunpack.c.l.b16 %v5478
        %v5834 = vunpack.c.h.b16 %v5478
        %v5835 = vunpack.c.l.b16 %v5479
        %v5836 = vunpack.c.h.b16 %v5479
        %v5837 = vunpack.c.l.b16 %v5480
        %v5838 = vunpack.c.h.b16 %v5480
        %v5839 = vunpack.c.l.b16 %v5481
        %v5840 = vunpack.c.h.b16 %v5481
        %v5841 = vunpack.c.l.b16 %v5482
        %v5842 = vunpack.c.h.b16 %v5482
        %v5843 = vunpack.c.l.b16 %v5483
        %v5844 = vunpack.c.h.b16 %v5483
        %v5845 = vunpack.c.l.b16 %v5484
        %v5846 = vunpack.c.h.b16 %v5484
        %v5847 = vunpack.c.l.b16 %v5485
        %v5848 = vunpack.c.h.b16 %v5485
        %v5849 = vunpack.c.l.b16 %v5486
        %v5850 = vunpack.c.h.b16 %v5486
        %v5851 = vunpack.c.l.b16 %v5487
        %v5852 = vunpack.c.h.b16 %v5487
        %v5853 = vunpack.c.l.b16 %v5488
        %v5854 = vunpack.c.h.b16 %v5488
        %v5855 = vunpack.c.l.b16 %v5489
        %v5856 = vunpack.c.h.b16 %v5489
        %v5857 = vunpack.c.l.b16 %v5490
        %v5858 = vunpack.c.h.b16 %v5490
        %v5859 = vunpack.c.l.b16 %v5491
        %v5860 = vunpack.c.h.b16 %v5491
        %v5861 = vunpack.c.l.b16 %v5492
        %v5862 = vunpack.c.h.b16 %v5492
        %v5863 = vunpack.c.l.b16 %v5493
        %v5864 = vunpack.c.h.b16 %v5493
        %v5865 = vunpack.c.l.b16 %v5494
        %v5866 = vunpack.c.h.b16 %v5494
        %v5867 = vunpack.c.l.b16 %v5495
        %v5868 = vunpack.c.h.b16 %v5495
        %v5869 = vunpack.c.l.b16 %v5496
        %v5870 = vunpack.c.h.b16 %v5496
        %v5871 = vunpack.c.l.b16 %v5497
        %v5872 = vunpack.c.h.b16 %v5497
        %v5873 = vunpack.c.l.b16 %v5498
        %v5874 = vunpack.c.h.b16 %v5498
        %v5875 = vunpack.c.l.b16 %v5499
        %v5876 = vunpack.c.h.b16 %v5499
        %v5877 = vunpack.c.l.b16 %v5500
        %v5878 = vunpack.c.h.b16 %v5500
        %v5879 = vunpack.c.l.b16 %v5501
        %v5880 = vunpack.c.h.b16 %v5501
        %v5881 = vunpack.c.l.b16 %v5502
        %v5882 = vunpack.c.h.b16 %v5502
        %v5883 = vunpack.c.l.b16 %v5503
        %v5884 = vunpack.c.h.b16 %v5503
        %v5885 = vunpack.c.l.b16 %v5504
        %v5886 = vunpack.c.h.b16 %v5504
        %v5887 = vunpack.c.l.b16 %v5505
        %v5888 = vunpack.c.h.b16 %v5505
        %v5889 = vunpack.c.l.b16 %v5506
        %v5890 = vunpack.c.h.b16 %v5506
        %v5891 = vunpack.c.l.b16 %v5507
        %v5892 = vunpack.c.h.b16 %v5507
        %v5893 = vunpack.c.l.b16 %v5508
        %v5894 = vunpack.c.h.b16 %v5508
        %v5895 = vunpack.c.l.b16 %v5509
        %v5896 = vunpack.c.h.b16 %v5509
        %v5897 = vunpack.c.l.b16 %v5510
        %v5898 = vunpack.c.h.b16 %v5510
        %v5899 = vunpack.c.l.b16 %v5511
        %v5900 = vunpack.c.h.b16 %v5511
        %v5901 = vunpack.c.l.b16 %v5512
        %v5902 = vunpack.c.h.b16 %v5512
        %v5903 = vunpack.c.l.b16 %v5513
        %v5904 = vunpack.c.h.b16 %v5513
        %v5905 = vunpack.c.l.b16 %v5514
        %v5906 = vunpack.c.h.b16 %v5514
        %v5907 = vunpack.c.l.b16 %v5515
        %v5908 = vunpack.c.h.b16 %v5515
        %v5909 = vunpack.c.l.b16 %v5516
        %v5910 = vunpack.c.h.b16 %v5516
        %v5911 = vunpack.c.l.b16 %v5517
        %v5912 = vunpack.c.h.b16 %v5517
        %v5913 = vunpack.c.l.b16 %v5518
        %v5914 = vunpack.c.h.b16 %v5518
        %v5915 = vunpack.c.l.b16 %v5519
        %v5916 = vunpack.c.h.b16 %v5519
        %v5917 = vunpack.c.l.b16 %v5520
        %v5918 = vunpack.c.h.b16 %v5520
        %v5919 = vunpack.c.l.b16 %v5521
        %v5920 = vunpack.c.h.b16 %v5521
        %v5921 = vpack.c.b16 %v5667, %v5665
        %v5922 = vpack.c.b16 %v5668, %v5666
        %v5923 = vpack.c.b16 %v5671, %v5669
        %v5924 = vpack.c.b16 %v5672, %v5670
        %v5925 = vpack.c.b16 %v5675, %v5673
        %v5926 = vpack.c.b16 %v5676, %v5674
        %v5927 = vpack.c.b16 %v5679, %v5677
        %v5928 = vpack.c.b16 %v5680, %v5678
        %v5929 = vpack.c.b16 %v5683, %v5681
        %v5930 = vpack.c.b16 %v5684, %v5682
        %v5931 = vpack.c.b16 %v5687, %v5685
        %v5932 = vpack.c.b16 %v5688, %v5686
        %v5933 = vpack.c.b16 %v5691, %v5689
        %v5934 = vpack.c.b16 %v5692, %v5690
        %v5935 = vpack.c.b16 %v5695, %v5693
        %v5936 = vpack.c.b16 %v5696, %v5694
        %v5937 = vpack.c.b16 %v5699, %v5697
        %v5938 = vpack.c.b16 %v5700, %v5698
        %v5939 = vpack.c.b16 %v5703, %v5701
        %v5940 = vpack.c.b16 %v5704, %v5702
        %v5941 = vpack.c.b16 %v5707, %v5705
        %v5942 = vpack.c.b16 %v5708, %v5706
        %v5943 = vpack.c.b16 %v5711, %v5709
        %v5944 = vpack.c.b16 %v5712, %v5710
        %v5945 = vpack.c.b16 %v5715, %v5713
        %v5946 = vpack.c.b16 %v5716, %v5714
        %v5947 = vpack.c.b16 %v5719, %v5717
        %v5948 = vpack.c.b16 %v5720, %v5718
        %v5949 = vpack.c.b16 %v5723, %v5721
        %v5950 = vpack.c.b16 %v5724, %v5722
        %v5951 = vpack.c.b16 %v5727, %v5725
        %v5952 = vpack.c.b16 %v5728, %v5726
        %v5953 = vpack.c.b16 %v5731, %v5729
        %v5954 = vpack.c.b16 %v5732, %v5730
        %v5955 = vpack.c.b16 %v5735, %v5733
        %v5956 = vpack.c.b16 %v5736, %v5734
        %v5957 = vpack.c.b16 %v5739, %v5737
        %v5958 = vpack.c.b16 %v5740, %v5738
        %v5959 = vpack.c.b16 %v5743, %v5741
        %v5960 = vpack.c.b16 %v5744, %v5742
        %v5961 = vpack.c.b16 %v5747, %v5745
        %v5962 = vpack.c.b16 %v5748, %v5746
        %v5963 = vpack.c.b16 %v5751, %v5749
        %v5964 = vpack.c.b16 %v5752, %v5750
        %v5965 = vpack.c.b16 %v5755, %v5753
        %v5966 = vpack.c.b16 %v5756, %v5754
        %v5967 = vpack.c.b16 %v5759, %v5757
        %v5968 = vpack.c.b16 %v5760, %v5758
        %v5969 = vpack.c.b16 %v5763, %v5761
        %v5970 = vpack.c.b16 %v5764, %v5762
        %v5971 = vpack.c.b16 %v5767, %v5765
        %v5972 = vpack.c.b16 %v5768, %v5766
        %v5973 = vpack.c.b16 %v5771, %v5769
        %v5974 = vpack.c.b16 %v5772, %v5770
        %v5975 = vpack.c.b16 %v5775, %v5773
        %v5976 = vpack.c.b16 %v5776, %v5774
        %v5977 = vpack.c.b16 %v5779, %v5777
        %v5978 = vpack.c.b16 %v5780, %v5778
        %v5979 = vpack.c.b16 %v5783, %v5781
        %v5980 = vpack.c.b16 %v5784, %v5782
        %v5981 = vpack.c.b16 %v5787, %v5785
        %v5982 = vpack.c.b16 %v5788, %v5786
        %v5983 = vpack.c.b16 %v5791, %v5789
        %v5984 = vpack.c.b16 %v5792, %v5790
        %v5985 = vpack.c.b16 %v5795, %v5793
        %v5986 = vpack.c.b16 %v5796, %v5794
        %v5987 = vpack.c.b16 %v5799, %v5797
        %v5988 = vpack.c.b16 %v5800, %v5798
        %v5989 = vpack.c.b16 %v5803, %v5801
        %v5990 = vpack.c.b16 %v5804, %v5802
        %v5991 = vpack.c.b16 %v5807, %v5805
        %v5992 = vpack.c.b16 %v5808, %v5806
        %v5993 = vpack.c.b16 %v5811, %v5809
        %v5994 = vpack.c.b16 %v5812, %v5810
        %v5995 = vpack.c.b16 %v5815, %v5813
        %v5996 = vpack.c.b16 %v5816, %v5814
        %v5997 = vpack.c.b16 %v5819, %v5817
        %v5998 = vpack.c.b16 %v5820, %v5818
        %v5999 = vpack.c.b16 %v5823, %v5821
        %v6000 = vpack.c.b16 %v5824, %v5822
        %v6001 = vpack.c.b16 %v5827, %v5825
        %v6002 = vpack.c.b16 %v5828, %v5826
        %v6003 = vpack.c.b16 %v5831, %v5829
        %v6004 = vpack.c.b16 %v5832, %v5830
        %v6005 = vpack.c.b16 %v5835, %v5833
        %v6006 = vpack.c.b16 %v5836, %v5834
        %v6007 = vpack.c.b16 %v5839, %v5837
        %v6008 = vpack.c.b16 %v5840, %v5838
        %v6009 = vpack.c.b16 %v5843, %v5841
        %v6010 = vpack.c.b16 %v5844, %v5842
        %v6011 = vpack.c.b16 %v5847, %v5845
        %v6012 = vpack.c.b16 %v5848, %v5846
        %v6013 = vpack.c.b16 %v5851, %v5849
        %v6014 = vpack.c.b16 %v5852, %v5850
        %v6015 = vpack.c.b16 %v5855, %v5853
        %v6016 = vpack.c.b16 %v5856, %v5854
        %v6017 = vpack.c.b16 %v5859, %v5857
        %v6018 = vpack.c.b16 %v5860, %v5858
        %v6019 = vpack.c.b16 %v5863, %v5861
        %v6020 = vpack.c.b16 %v5864, %v5862
        %v6021 = vpack.c.b16 %v5867, %v5865
        %v6022 = vpack.c.b16 %v5868, %v5866
        %v6023 = vpack.c.b16 %v5871, %v5869
        %v6024 = vpack.c.b16 %v5872, %v5870
        %v6025 = vpack.c.b16 %v5875, %v5873
        %v6026 = vpack.c.b16 %v5876, %v5874
        %v6027 = vpack.c.b16 %v5879, %v5877
        %v6028 = vpack.c.b16 %v5880, %v5878
        %v6029 = vpack.c.b16 %v5883, %v5881
        %v6030 = vpack.c.b16 %v5884, %v5882
        %v6031 = vpack.c.b16 %v5887, %v5885
        %v6032 = vpack.c.b16 %v5888, %v5886
        %v6033 = vpack.c.b16 %v5891, %v5889
        %v6034 = vpack.c.b16 %v5892, %v5890
        %v6035 = vpack.c.b16 %v5895, %v5893
        %v6036 = vpack.c.b16 %v5896, %v5894
        %v6037 = vpack.c.b16 %v5899, %v5897
        %v6038 = vpack.c.b16 %v5900, %v5898
        %v6039 = vpack.c.b16 %v5903, %v5901
        %v6040 = vpack.c.b16 %v5904, %v5902
        %v6041 = vpack.c.b16 %v5907, %v5905
        %v6042 = vpack.c.b16 %v5908, %v5906
        %v6043 = vpack.c.b16 %v5911, %v5909
        %v6044 = vpack.c.b16 %v5912, %v5910
        %v6045 = vpack.c.b16 %v5915, %v5913
        %v6046 = vpack.c.b16 %v5916, %v5914
        %v6047 = vpack.c.b16 %v5919, %v5917
        %v6048 = vpack.c.b16 %v5920, %v5918
        %6177 = vmatpush.bf16.msra.mxu0 %v5935
        %6178 = vmatpush.bf16.msra.mxu0 %v5933
        %6179 = vmatpush.bf16.msra.mxu0 %v5931
        %6180 = vmatpush.bf16.msra.mxu0 %v5929
        %6181 = vmatpush.bf16.msra.mxu0 %v5927
        %6182 = vmatpush.bf16.msra.mxu0 %v5925
        %6183 = vmatpush.bf16.msra.mxu0 %v5923
        %6184 = vmatpush.bf16.msra.mxu0 %v5921
        %6185 = vmatmul.bf16.gmra.mxu0 %v5522
        %v6186 = vpop.f32.mrf.mxu0
        %v6187 = vadd.f32 %v5533, %v6186
        %v6188 = vpop.f32.mrf.mxu0
        %6189 = vdwg.mxu0
        %6190 = vmatpush.bf16.msra.mxu0 %v5951
        %6191 = vmatpush.bf16.msra.mxu0 %v5949
        %6192 = vmatpush.bf16.msra.mxu0 %v5947
        %6193 = vmatpush.bf16.msra.mxu0 %v5945
        %6194 = vmatpush.bf16.msra.mxu0 %v5943
        %6195 = vmatpush.bf16.msra.mxu0 %v5941
        %6196 = vmatpush.bf16.msra.mxu0 %v5939
        %6197 = vmatpush.bf16.msra.mxu0 %v5937
        %6198 = vmatmul.bf16.gmra.mxu0 %v5523
        %v6199 = vpop.f32.mrf.mxu0
        %v6200 = vadd.f32 %v6187, %v6199
        %v6201 = vpop.f32.mrf.mxu0
        %6202 = vdwg.mxu0
        %6203 = vmatpush.bf16.msra.mxu0 %v5967
        %6204 = vmatpush.bf16.msra.mxu0 %v5965
        %6205 = vmatpush.bf16.msra.mxu0 %v5963
        %6206 = vmatpush.bf16.msra.mxu0 %v5961
        %6207 = vmatpush.bf16.msra.mxu0 %v5959
        %6208 = vmatpush.bf16.msra.mxu0 %v5957
        %6209 = vmatpush.bf16.msra.mxu0 %v5955
        %6210 = vmatpush.bf16.msra.mxu0 %v5953
        %6211 = vmatmul.bf16.gmra.mxu0 %v5524
        %v6212 = vpop.f32.mrf.mxu0
        %v6213 = vadd.f32 %v6200, %v6212
        %v6214 = vpop.f32.mrf.mxu0
        %6215 = vdwg.mxu0
        %6216 = vmatpush.bf16.msra.mxu0 %v5983
        %6217 = vmatpush.bf16.msra.mxu0 %v5981
        %6218 = vmatpush.bf16.msra.mxu0 %v5979
        %6219 = vmatpush.bf16.msra.mxu0 %v5977
        %6220 = vmatpush.bf16.msra.mxu0 %v5975
        %6221 = vmatpush.bf16.msra.mxu0 %v5973
        %6222 = vmatpush.bf16.msra.mxu0 %v5971
        %6223 = vmatpush.bf16.msra.mxu0 %v5969
        %6224 = vmatmul.bf16.gmra.mxu0 %v5525
        %v6225 = vpop.f32.mrf.mxu0
        %v6226 = vadd.f32 %v6213, %v6225
        %v6227 = vpop.f32.mrf.mxu0
        %6228 = vdwg.mxu0
        %6229 = vmatpush.bf16.msra.mxu0 %v5999
        %6230 = vmatpush.bf16.msra.mxu0 %v5997
        %6231 = vmatpush.bf16.msra.mxu0 %v5995
        %6232 = vmatpush.bf16.msra.mxu0 %v5993
        %6233 = vmatpush.bf16.msra.mxu0 %v5991
        %6234 = vmatpush.bf16.msra.mxu0 %v5989
        %6235 = vmatpush.bf16.msra.mxu0 %v5987
        %6236 = vmatpush.bf16.msra.mxu0 %v5985
        %6237 = vmatmul.bf16.gmra.mxu0 %v5526
        %v6238 = vpop.f32.mrf.mxu0
        %v6239 = vadd.f32 %v6226, %v6238
        %v6240 = vpop.f32.mrf.mxu0
        %6241 = vdwg.mxu0
        %6242 = vmatpush.bf16.msra.mxu0 %v6015
        %6243 = vmatpush.bf16.msra.mxu0 %v6013
        %6244 = vmatpush.bf16.msra.mxu0 %v6011
        %6245 = vmatpush.bf16.msra.mxu0 %v6009
        %6246 = vmatpush.bf16.msra.mxu0 %v6007
        %6247 = vmatpush.bf16.msra.mxu0 %v6005
        %6248 = vmatpush.bf16.msra.mxu0 %v6003
        %6249 = vmatpush.bf16.msra.mxu0 %v6001
        %6250 = vmatmul.bf16.gmra.mxu0 %v5527
        %v6251 = vpop.f32.mrf.mxu0
        %v6252 = vadd.f32 %v6239, %v6251
        %v6253 = vpop.f32.mrf.mxu0
        %6254 = vdwg.mxu0
        %6255 = vmatpush.bf16.msra.mxu0 %v6031
        %6256 = vmatpush.bf16.msra.mxu0 %v6029
        %6257 = vmatpush.bf16.msra.mxu0 %v6027
        %6258 = vmatpush.bf16.msra.mxu0 %v6025
        %6259 = vmatpush.bf16.msra.mxu0 %v6023
        %6260 = vmatpush.bf16.msra.mxu0 %v6021
        %6261 = vmatpush.bf16.msra.mxu0 %v6019
        %6262 = vmatpush.bf16.msra.mxu0 %v6017
        %6263 = vmatmul.bf16.gmra.mxu0 %v5528
        %v6264 = vpop.f32.mrf.mxu0
        %v6265 = vadd.f32 %v6252, %v6264
        %v6266 = vpop.f32.mrf.mxu0
        %6267 = vdwg.mxu0
        %6268 = vmatpush.bf16.msra.mxu0 %v6047
        %6269 = vmatpush.bf16.msra.mxu0 %v6045
        %6270 = vmatpush.bf16.msra.mxu0 %v6043
        %6271 = vmatpush.bf16.msra.mxu0 %v6041
        %6272 = vmatpush.bf16.msra.mxu0 %v6039
        %6273 = vmatpush.bf16.msra.mxu0 %v6037
        %6274 = vmatpush.bf16.msra.mxu0 %v6035
        %6275 = vmatpush.bf16.msra.mxu0 %v6033
        %6276 = vmatmul.bf16.gmra.mxu0 %v5529
        %v6277 = vpop.f32.mrf.mxu0
        %v6278 = vadd.f32 %v6265, %v6277
        %v6279 = vpop.f32.mrf.mxu0
        %6280 = vdwg.mxu0
        %6281 = vmatpush.bf16.msra.mxu0 %v5936
        %6282 = vmatpush.bf16.msra.mxu0 %v5934
        %6283 = vmatpush.bf16.msra.mxu0 %v5932
        %6284 = vmatpush.bf16.msra.mxu0 %v5930
        %6285 = vmatpush.bf16.msra.mxu0 %v5928
        %6286 = vmatpush.bf16.msra.mxu0 %v5926
        %6287 = vmatpush.bf16.msra.mxu0 %v5924
        %6288 = vmatpush.bf16.msra.mxu0 %v5922
        %6289 = vmatmul.bf16.gmra.mxu0 %v5522
        %v6290 = vpop.f32.mrf.mxu0
        %v6291 = vadd.f32 %v5534, %v6290
        %v6292 = vpop.f32.mrf.mxu0
        %6293 = vdwg.mxu0
        %6294 = vmatpush.bf16.msra.mxu0 %v5952
        %6295 = vmatpush.bf16.msra.mxu0 %v5950
        %6296 = vmatpush.bf16.msra.mxu0 %v5948
        %6297 = vmatpush.bf16.msra.mxu0 %v5946
        %6298 = vmatpush.bf16.msra.mxu0 %v5944
        %6299 = vmatpush.bf16.msra.mxu0 %v5942
        %6300 = vmatpush.bf16.msra.mxu0 %v5940
        %6301 = vmatpush.bf16.msra.mxu0 %v5938
        %6302 = vmatmul.bf16.gmra.mxu0 %v5523
        %v6303 = vpop.f32.mrf.mxu0
        %v6304 = vadd.f32 %v6291, %v6303
        %v6305 = vpop.f32.mrf.mxu0
        %6306 = vdwg.mxu0
        %6307 = vmatpush.bf16.msra.mxu0 %v5968
        %6308 = vmatpush.bf16.msra.mxu0 %v5966
        %6309 = vmatpush.bf16.msra.mxu0 %v5964
        %6310 = vmatpush.bf16.msra.mxu0 %v5962
        %6311 = vmatpush.bf16.msra.mxu0 %v5960
        %6312 = vmatpush.bf16.msra.mxu0 %v5958
        %6313 = vmatpush.bf16.msra.mxu0 %v5956
        %6314 = vmatpush.bf16.msra.mxu0 %v5954
        %6315 = vmatmul.bf16.gmra.mxu0 %v5524
        %v6316 = vpop.f32.mrf.mxu0
        %v6317 = vadd.f32 %v6304, %v6316
        %v6318 = vpop.f32.mrf.mxu0
        %6319 = vdwg.mxu0
        %6320 = vmatpush.bf16.msra.mxu0 %v5984
        %6321 = vmatpush.bf16.msra.mxu0 %v5982
        %6322 = vmatpush.bf16.msra.mxu0 %v5980
        %6323 = vmatpush.bf16.msra.mxu0 %v5978
        %6324 = vmatpush.bf16.msra.mxu0 %v5976
        %6325 = vmatpush.bf16.msra.mxu0 %v5974
        %6326 = vmatpush.bf16.msra.mxu0 %v5972
        %6327 = vmatpush.bf16.msra.mxu0 %v5970
        %6328 = vmatmul.bf16.gmra.mxu0 %v5525
        %v6329 = vpop.f32.mrf.mxu0
        %v6330 = vadd.f32 %v6317, %v6329
        %v6331 = vpop.f32.mrf.mxu0
        %6332 = vdwg.mxu0
        %6333 = vmatpush.bf16.msra.mxu0 %v6000
        %6334 = vmatpush.bf16.msra.mxu0 %v5998
        %6335 = vmatpush.bf16.msra.mxu0 %v5996
        %6336 = vmatpush.bf16.msra.mxu0 %v5994
        %6337 = vmatpush.bf16.msra.mxu0 %v5992
        %6338 = vmatpush.bf16.msra.mxu0 %v5990
        %6339 = vmatpush.bf16.msra.mxu0 %v5988
        %6340 = vmatpush.bf16.msra.mxu0 %v5986
        %6341 = vmatmul.bf16.gmra.mxu0 %v5526
        %v6342 = vpop.f32.mrf.mxu0
        %v6343 = vadd.f32 %v6330, %v6342
        %v6344 = vpop.f32.mrf.mxu0
        %6345 = vdwg.mxu0
        %6346 = vmatpush.bf16.msra.mxu0 %v6016
        %6347 = vmatpush.bf16.msra.mxu0 %v6014
        %6348 = vmatpush.bf16.msra.mxu0 %v6012
        %6349 = vmatpush.bf16.msra.mxu0 %v6010
        %6350 = vmatpush.bf16.msra.mxu0 %v6008
        %6351 = vmatpush.bf16.msra.mxu0 %v6006
        %6352 = vmatpush.bf16.msra.mxu0 %v6004
        %6353 = vmatpush.bf16.msra.mxu0 %v6002
        %6354 = vmatmul.bf16.gmra.mxu0 %v5527
        %v6355 = vpop.f32.mrf.mxu0
        %v6356 = vadd.f32 %v6343, %v6355
        %v6357 = vpop.f32.mrf.mxu0
        %6358 = vdwg.mxu0
        %6359 = vmatpush.bf16.msra.mxu0 %v6032
        %6360 = vmatpush.bf16.msra.mxu0 %v6030
        %6361 = vmatpush.bf16.msra.mxu0 %v6028
        %6362 = vmatpush.bf16.msra.mxu0 %v6026
        %6363 = vmatpush.bf16.msra.mxu0 %v6024
        %6364 = vmatpush.bf16.msra.mxu0 %v6022
        %6365 = vmatpush.bf16.msra.mxu0 %v6020
        %6366 = vmatpush.bf16.msra.mxu0 %v6018
        %6367 = vmatmul.bf16.gmra.mxu0 %v5528
        %v6368 = vpop.f32.mrf.mxu0
        %v6369 = vadd.f32 %v6356, %v6368
        %v6370 = vpop.f32.mrf.mxu0
        %6371 = vdwg.mxu0
        %6372 = vmatpush.bf16.msra.mxu0 %v6048
        %6373 = vmatpush.bf16.msra.mxu0 %v6046
        %6374 = vmatpush.bf16.msra.mxu0 %v6044
        %6375 = vmatpush.bf16.msra.mxu0 %v6042
        %6376 = vmatpush.bf16.msra.mxu0 %v6040
        %6377 = vmatpush.bf16.msra.mxu0 %v6038
        %6378 = vmatpush.bf16.msra.mxu0 %v6036
        %6379 = vmatpush.bf16.msra.mxu0 %v6034
        %6380 = vmatmul.bf16.gmra.mxu0 %v5529
        %v6381 = vpop.f32.mrf.mxu0
        %v6382 = vadd.f32 %v6369, %v6381
        %v6383 = vpop.f32.mrf.mxu0
        %6384 = vdwg.mxu0
        %v6385 = vadd.f32 %v4388, %v6278
        %v6386 = vadd.f32 %v4389, %v6382
        %s6387 = scalar_lea.vmem %s1259, 21
        %v6388 = vld [vmem:[%s6387] ss:$8 sm:$0x3]
        %s6389 = scalar_lea.vmem %s1259, 22
        %v6390 = vld [vmem:[%s6389] ss:$8 sm:$0x3]
        %v6391 = vadd.f32 %v6385, %v6386
        %6392 = vadd.xlane.f32.xlu0 %v6391
        %v6393 = vpop.xlane.xlu0 %6392
        %v6394 = vmul.f32 %v6393, %v3187
        %v6395 = vsub.f32 %v6385, %v6394
        %v6396 = vsub.f32 %v6386, %v6394
        %v6397 = vmul.f32 %v6395, %v6395
        %v6398 = vmul.f32 %v6396, %v6396
        %v6399 = vadd.f32 %v6397, %v6398
        %6400 = vadd.xlane.f32.xlu0 %v6399
        %v6401 = vpop.xlane.xlu0 %6400
        %v6402 = vmul.f32 %v6401, %v3187
        %v6403 = vadd.f32 %v6402, 1e-05
        %v6404 = vrsqrt.pop %v6403
        %v6405 = vmul.f32 %v6404, %v6403
        %v6406 = vmul.f32 %v6405, %v6404
        %v6407 = vmul.f32 0.5, %v6406
        %v6408 = vsub.f32 1.5, %v6407
        %v6409 = vmul.f32 %v6404, %v6408
        %vm6410 = vweird.f32 %v6403
        %vm6411 = vweird.f32 %v6404
        %vm6412 = vmor %vm6410, %vm6411
        %v6413 = vsel %vm6412, %v6404, %v6409
        %v6414 = vmul.f32 %v6395, %v6413
        %v6415 = vmul.f32 %v6396, %v6413
        %v6417 = vperm.slane %v6388, 0
        %v6418 = vperm.slane %v6388, 1
        %v6421 = vmul.f32 %v6414, %v6417
        %v6422 = vmul.f32 %v6415, %v6418
        %v6424 = vperm.slane %v6390, 0
        %v6425 = vperm.slane %v6390, 1
        %v6428 = vadd.f32 %v6421, %v6424
        %v6429 = vadd.f32 %v6422, %v6425
        %6430 = vst [vmem:[#allocation2] sm:$0xff] %v6428
        %6431 = vst [vmem:[#allocation2 + $0x8] sm:$0xff] %v6429
        %p6432 = scmp.eq.s32.totalorder %s88, 1
        // Predicated region
        $region181: #{block_forward.1} parent=143 // pred_check
          %p6433 = pneg %p6432
        $region182: #{block_forward.1} parent=143 // pred_check_branch
          %6435 = sbr.rel (%p6433) target = $region184
        $region183: #{block_forward.1} parent=143 // pred_region
          %v6436 = vld [vmem:[%s61] sm:$0x3]
          %v6437 = vld [vmem:[%s61 + $0x2] sm:$0x3]
          %v6438 = vld [vmem:[%s61 + $0x4] sm:$0xf]
          %v6439 = vld [vmem:[%s61 + $0x8] sm:$0x3]
          %v6440 = vld [vmem:[%s61 + $0xa] sm:$0x3]
          %v6441 = vld [vmem:[%s61 + $0xc] sm:$0x1]
          %v6442 = vld [vmem:[#allocation3] sm:$0xff]
          %v6443 = vld [vmem:[#allocation3 + $0x8] sm:$0xff]
          %v6444 = vld [vmem:[#allocation2] sm:$0xff]
          %v6445 = vld [vmem:[#allocation2 + $0x8] sm:$0xff]
          %v6446 = vadd.f32 %v6444, %v6445
          %6447 = vadd.xlane.f32.xlu0 %v6446
          %v6448 = vpop.xlane.xlu0 %6447
          %v6449 = vmul.f32 %v6448, %v3187
          %v6450 = vsub.f32 %v6444, %v6449
          %v6451 = vsub.f32 %v6445, %v6449
          %v6452 = vmul.f32 %v6450, %v6450
          %v6453 = vmul.f32 %v6451, %v6451
          %v6454 = vadd.f32 %v6452, %v6453
          %6455 = vadd.xlane.f32.xlu0 %v6454
          %v6456 = vpop.xlane.xlu0 %6455
          %v6457 = vmul.f32 %v6456, %v3187
          %v6458 = vadd.f32 %v6457, 1e-05
          %v6459 = vrsqrt.pop %v6458
          %v6460 = vmul.f32 %v6459, %v6458
          %v6461 = vmul.f32 %v6460, %v6459
          %v6462 = vmul.f32 0.5, %v6461
          %v6463 = vsub.f32 1.5, %v6462
          %v6464 = vmul.f32 %v6459, %v6463
          %vm6465 = vweird.f32 %v6458
          %vm6466 = vweird.f32 %v6459
          %vm6467 = vmor %vm6465, %vm6466
          %v6468 = vsel %vm6467, %v6459, %v6464
          %v6469 = vmul.f32 %v6450, %v6468
          %v6470 = vmul.f32 %v6451, %v6468
          %v6472 = vperm.slane %v6436, 0
          %v6473 = vperm.slane %v6436, 1
          %v6476 = vmul.f32 %v6469, %v6472
          %v6477 = vmul.f32 %v6470, %v6473
          %v6479 = vperm.slane %v6437, 0
          %v6480 = vperm.slane %v6437, 1
          %v6483 = vadd.f32 %v6476, %v6479
          %v6484 = vadd.f32 %v6477, %v6480
          %v6485 = vld [vmem:[#allocation16] sm:$0xff]
          %v6486 = vld [vmem:[#allocation16 + $0x8] sm:$0xff]
          %v6487 = vld [vmem:[#allocation16 + $0x10] sm:$0xff]
          %v6488 = vld [vmem:[#allocation16 + $0x18] sm:$0xff]
          %v6489 = vld [vmem:[#allocation16 + $0x20] sm:$0xff]
          %v6490 = vld [vmem:[#allocation16 + $0x28] sm:$0xff]
          %v6491 = vld [vmem:[#allocation16 + $0x30] sm:$0xff]
          %v6492 = vld [vmem:[#allocation16 + $0x38] sm:$0xff]
          %v6493 = vld [vmem:[#allocation16 + $0x40] sm:$0xff]
          %v6494 = vld [vmem:[#allocation16 + $0x48] sm:$0xff]
          %v6495 = vld [vmem:[#allocation16 + $0x50] sm:$0xff]
          %v6496 = vld [vmem:[#allocation16 + $0x58] sm:$0xff]
          %v6497 = vld [vmem:[#allocation16 + $0x60] sm:$0xff]
          %v6498 = vld [vmem:[#allocation16 + $0x68] sm:$0xff]
          %v6499 = vld [vmem:[#allocation16 + $0x70] sm:$0xff]
          %v6500 = vld [vmem:[#allocation16 + $0x78] sm:$0xff]
          %v6501 = vld [vmem:[#allocation16 + $0x80] sm:$0xff]
          %v6502 = vld [vmem:[#allocation16 + $0x88] sm:$0xff]
          %v6503 = vld [vmem:[#allocation16 + $0x90] sm:$0xff]
          %v6504 = vld [vmem:[#allocation16 + $0x98] sm:$0xff]
          %v6505 = vld [vmem:[#allocation16 + $0xa0] sm:$0xff]
          %v6506 = vld [vmem:[#allocation16 + $0xa8] sm:$0xff]
          %v6507 = vld [vmem:[#allocation16 + $0xb0] sm:$0xff]
          %v6508 = vld [vmem:[#allocation16 + $0xb8] sm:$0xff]
          %v6509 = vld [vmem:[#allocation16 + $0xc0] sm:$0xff]
          %v6510 = vld [vmem:[#allocation16 + $0xc8] sm:$0xff]
          %v6511 = vld [vmem:[#allocation16 + $0xd0] sm:$0xff]
          %v6512 = vld [vmem:[#allocation16 + $0xd8] sm:$0xff]
          %v6513 = vld [vmem:[#allocation16 + $0xe0] sm:$0xff]
          %v6514 = vld [vmem:[#allocation16 + $0xe8] sm:$0xff]
          %v6515 = vld [vmem:[#allocation16 + $0xf0] sm:$0xff]
          %v6516 = vld [vmem:[#allocation16 + $0xf8] sm:$0xff]
          %v6517 = vld [vmem:[#allocation16 + $0x100] sm:$0xff]
          %v6518 = vld [vmem:[#allocation16 + $0x108] sm:$0xff]
          %v6519 = vld [vmem:[#allocation16 + $0x110] sm:$0xff]
          %v6520 = vld [vmem:[#allocation16 + $0x118] sm:$0xff]
          %v6521 = vld [vmem:[#allocation16 + $0x120] sm:$0xff]
          %v6522 = vld [vmem:[#allocation16 + $0x128] sm:$0xff]
          %v6523 = vld [vmem:[#allocation16 + $0x130] sm:$0xff]
          %v6524 = vld [vmem:[#allocation16 + $0x138] sm:$0xff]
          %v6525 = vld [vmem:[#allocation16 + $0x140] sm:$0xff]
          %v6526 = vld [vmem:[#allocation16 + $0x148] sm:$0xff]
          %v6527 = vld [vmem:[#allocation16 + $0x150] sm:$0xff]
          %v6528 = vld [vmem:[#allocation16 + $0x158] sm:$0xff]
          %v6529 = vld [vmem:[#allocation16 + $0x160] sm:$0xff]
          %v6530 = vld [vmem:[#allocation16 + $0x168] sm:$0xff]
          %v6531 = vld [vmem:[#allocation16 + $0x170] sm:$0xff]
          %v6532 = vld [vmem:[#allocation16 + $0x178] sm:$0xff]
          %v6533 = vld [vmem:[#allocation16 + $0x180] sm:$0xff]
          %v6534 = vld [vmem:[#allocation16 + $0x188] sm:$0xff]
          %v6535 = vld [vmem:[#allocation16 + $0x190] sm:$0xff]
          %v6536 = vld [vmem:[#allocation16 + $0x198] sm:$0xff]
          %v6537 = vld [vmem:[#allocation16 + $0x1a0] sm:$0xff]
          %v6538 = vld [vmem:[#allocation16 + $0x1a8] sm:$0xff]
          %v6539 = vld [vmem:[#allocation16 + $0x1b0] sm:$0xff]
          %v6540 = vld [vmem:[#allocation16 + $0x1b8] sm:$0xff]
          %v6541 = vld [vmem:[#allocation16 + $0x1c0] sm:$0xff]
          %v6542 = vld [vmem:[#allocation16 + $0x1c8] sm:$0xff]
          %v6543 = vld [vmem:[#allocation16 + $0x1d0] sm:$0xff]
          %v6544 = vld [vmem:[#allocation16 + $0x1d8] sm:$0xff]
          %v6545 = vld [vmem:[#allocation16 + $0x1e0] sm:$0xff]
          %v6546 = vld [vmem:[#allocation16 + $0x1e8] sm:$0xff]
          %v6547 = vld [vmem:[#allocation16 + $0x1f0] sm:$0xff]
          %v6548 = vld [vmem:[#allocation16 + $0x1f8] sm:$0xff]
          %v6549 = vpack.c.bf16 %v6483, %v6483
          %v6550 = vpack.c.bf16 %v6484, %v6484
          %v6551 = vld [vmem:[#allocation16 + $0x200] sm:$0xff]
          %v6552 = vld [vmem:[#allocation16 + $0x208] sm:$0xff]
          %v6553 = vld [vmem:[#allocation16 + $0x210] sm:$0xff]
          %v6554 = vld [vmem:[#allocation16 + $0x218] sm:$0xff]
          %v6555 = vld [vmem:[#allocation16 + $0x220] sm:$0xff]
          %v6556 = vld [vmem:[#allocation16 + $0x228] sm:$0xff]
          %v6557 = vld [vmem:[#allocation16 + $0x230] sm:$0xff]
          %v6558 = vld [vmem:[#allocation16 + $0x238] sm:$0xff]
          %v6559 = vld [vmem:[#allocation16 + $0x240] sm:$0xff]
          %v6560 = vld [vmem:[#allocation16 + $0x248] sm:$0xff]
          %v6561 = vld [vmem:[#allocation16 + $0x250] sm:$0xff]
          %v6562 = vld [vmem:[#allocation16 + $0x258] sm:$0xff]
          %v6563 = vld [vmem:[#allocation16 + $0x260] sm:$0xff]
          %v6564 = vld [vmem:[#allocation16 + $0x268] sm:$0xff]
          %v6565 = vld [vmem:[#allocation16 + $0x270] sm:$0xff]
          %v6566 = vld [vmem:[#allocation16 + $0x278] sm:$0xff]
          %v6567 = vld [vmem:[#allocation16 + $0x280] sm:$0xff]
          %v6568 = vld [vmem:[#allocation16 + $0x288] sm:$0xff]
          %v6569 = vld [vmem:[#allocation16 + $0x290] sm:$0xff]
          %v6570 = vld [vmem:[#allocation16 + $0x298] sm:$0xff]
          %v6571 = vld [vmem:[#allocation16 + $0x2a0] sm:$0xff]
          %v6572 = vld [vmem:[#allocation16 + $0x2a8] sm:$0xff]
          %v6573 = vld [vmem:[#allocation16 + $0x2b0] sm:$0xff]
          %v6574 = vld [vmem:[#allocation16 + $0x2b8] sm:$0xff]
          %v6575 = vld [vmem:[#allocation16 + $0x2c0] sm:$0xff]
          %v6576 = vld [vmem:[#allocation16 + $0x2c8] sm:$0xff]
          %v6577 = vld [vmem:[#allocation16 + $0x2d0] sm:$0xff]
          %v6578 = vld [vmem:[#allocation16 + $0x2d8] sm:$0xff]
          %v6579 = vld [vmem:[#allocation16 + $0x2e0] sm:$0xff]
          %v6580 = vld [vmem:[#allocation16 + $0x2e8] sm:$0xff]
          %v6581 = vld [vmem:[#allocation16 + $0x2f0] sm:$0xff]
          %v6582 = vld [vmem:[#allocation16 + $0x2f8] sm:$0xff]
          %v6583 = vld [vmem:[#allocation16 + $0x300] sm:$0xff]
          %v6584 = vld [vmem:[#allocation16 + $0x308] sm:$0xff]
          %v6585 = vld [vmem:[#allocation16 + $0x310] sm:$0xff]
          %v6586 = vld [vmem:[#allocation16 + $0x318] sm:$0xff]
          %v6587 = vld [vmem:[#allocation16 + $0x320] sm:$0xff]
          %v6588 = vld [vmem:[#allocation16 + $0x328] sm:$0xff]
          %v6589 = vld [vmem:[#allocation16 + $0x330] sm:$0xff]
          %v6590 = vld [vmem:[#allocation16 + $0x338] sm:$0xff]
          %v6591 = vld [vmem:[#allocation16 + $0x340] sm:$0xff]
          %v6592 = vld [vmem:[#allocation16 + $0x348] sm:$0xff]
          %v6593 = vld [vmem:[#allocation16 + $0x350] sm:$0xff]
          %v6594 = vld [vmem:[#allocation16 + $0x358] sm:$0xff]
          %v6595 = vld [vmem:[#allocation16 + $0x360] sm:$0xff]
          %v6596 = vld [vmem:[#allocation16 + $0x368] sm:$0xff]
          %v6597 = vld [vmem:[#allocation16 + $0x370] sm:$0xff]
          %v6598 = vld [vmem:[#allocation16 + $0x378] sm:$0xff]
          %v6599 = vld [vmem:[#allocation16 + $0x380] sm:$0xff]
          %v6600 = vld [vmem:[#allocation16 + $0x388] sm:$0xff]
          %v6601 = vld [vmem:[#allocation16 + $0x390] sm:$0xff]
          %v6602 = vld [vmem:[#allocation16 + $0x398] sm:$0xff]
          %v6603 = vld [vmem:[#allocation16 + $0x3a0] sm:$0xff]
          %v6604 = vld [vmem:[#allocation16 + $0x3a8] sm:$0xff]
          %v6605 = vld [vmem:[#allocation16 + $0x3b0] sm:$0xff]
          %v6606 = vld [vmem:[#allocation16 + $0x3b8] sm:$0xff]
          %v6607 = vld [vmem:[#allocation16 + $0x3c0] sm:$0xff]
          %v6608 = vld [vmem:[#allocation16 + $0x3c8] sm:$0xff]
          %v6609 = vld [vmem:[#allocation16 + $0x3d0] sm:$0xff]
          %v6610 = vld [vmem:[#allocation16 + $0x3d8] sm:$0xff]
          %v6611 = vld [vmem:[#allocation16 + $0x3e0] sm:$0xff]
          %v6612 = vld [vmem:[#allocation16 + $0x3e8] sm:$0xff]
          %v6613 = vld [vmem:[#allocation16 + $0x3f0] sm:$0xff]
          %v6614 = vld [vmem:[#allocation16 + $0x3f8] sm:$0xff]
          %v6615 = vpack.c.bf16 %v6442, %v6442
          %v6616 = vpack.c.bf16 %v6443, %v6443
          %v6681 = vunpack.c.l.b16 %v6551
          %v6682 = vunpack.c.h.b16 %v6551
          %v6683 = vunpack.c.l.b16 %v6552
          %v6684 = vunpack.c.h.b16 %v6552
          %v6685 = vunpack.c.l.b16 %v6553
          %v6686 = vunpack.c.h.b16 %v6553
          %v6687 = vunpack.c.l.b16 %v6554
          %v6688 = vunpack.c.h.b16 %v6554
          %v6689 = vunpack.c.l.b16 %v6555
          %v6690 = vunpack.c.h.b16 %v6555
          %v6691 = vunpack.c.l.b16 %v6556
          %v6692 = vunpack.c.h.b16 %v6556
          %v6693 = vunpack.c.l.b16 %v6557
          %v6694 = vunpack.c.h.b16 %v6557
          %v6695 = vunpack.c.l.b16 %v6558
          %v6696 = vunpack.c.h.b16 %v6558
          %v6697 = vunpack.c.l.b16 %v6559
          %v6698 = vunpack.c.h.b16 %v6559
          %v6699 = vunpack.c.l.b16 %v6560
          %v6700 = vunpack.c.h.b16 %v6560
          %v6701 = vunpack.c.l.b16 %v6561
          %v6702 = vunpack.c.h.b16 %v6561
          %v6703 = vunpack.c.l.b16 %v6562
          %v6704 = vunpack.c.h.b16 %v6562
          %v6705 = vunpack.c.l.b16 %v6563
          %v6706 = vunpack.c.h.b16 %v6563
          %v6707 = vunpack.c.l.b16 %v6564
          %v6708 = vunpack.c.h.b16 %v6564
          %v6709 = vunpack.c.l.b16 %v6565
          %v6710 = vunpack.c.h.b16 %v6565
          %v6711 = vunpack.c.l.b16 %v6566
          %v6712 = vunpack.c.h.b16 %v6566
          %v6713 = vunpack.c.l.b16 %v6567
          %v6714 = vunpack.c.h.b16 %v6567
          %v6715 = vunpack.c.l.b16 %v6568
          %v6716 = vunpack.c.h.b16 %v6568
          %v6717 = vunpack.c.l.b16 %v6569
          %v6718 = vunpack.c.h.b16 %v6569
          %v6719 = vunpack.c.l.b16 %v6570
          %v6720 = vunpack.c.h.b16 %v6570
          %v6721 = vunpack.c.l.b16 %v6571
          %v6722 = vunpack.c.h.b16 %v6571
          %v6723 = vunpack.c.l.b16 %v6572
          %v6724 = vunpack.c.h.b16 %v6572
          %v6725 = vunpack.c.l.b16 %v6573
          %v6726 = vunpack.c.h.b16 %v6573
          %v6727 = vunpack.c.l.b16 %v6574
          %v6728 = vunpack.c.h.b16 %v6574
          %v6729 = vunpack.c.l.b16 %v6575
          %v6730 = vunpack.c.h.b16 %v6575
          %v6731 = vunpack.c.l.b16 %v6576
          %v6732 = vunpack.c.h.b16 %v6576
          %v6733 = vunpack.c.l.b16 %v6577
          %v6734 = vunpack.c.h.b16 %v6577
          %v6735 = vunpack.c.l.b16 %v6578
          %v6736 = vunpack.c.h.b16 %v6578
          %v6737 = vunpack.c.l.b16 %v6579
          %v6738 = vunpack.c.h.b16 %v6579
          %v6739 = vunpack.c.l.b16 %v6580
          %v6740 = vunpack.c.h.b16 %v6580
          %v6741 = vunpack.c.l.b16 %v6581
          %v6742 = vunpack.c.h.b16 %v6581
          %v6743 = vunpack.c.l.b16 %v6582
          %v6744 = vunpack.c.h.b16 %v6582
          %v6745 = vunpack.c.l.b16 %v6583
          %v6746 = vunpack.c.h.b16 %v6583
          %v6747 = vunpack.c.l.b16 %v6584
          %v6748 = vunpack.c.h.b16 %v6584
          %v6749 = vunpack.c.l.b16 %v6585
          %v6750 = vunpack.c.h.b16 %v6585
          %v6751 = vunpack.c.l.b16 %v6586
          %v6752 = vunpack.c.h.b16 %v6586
          %v6753 = vunpack.c.l.b16 %v6587
          %v6754 = vunpack.c.h.b16 %v6587
          %v6755 = vunpack.c.l.b16 %v6588
          %v6756 = vunpack.c.h.b16 %v6588
          %v6757 = vunpack.c.l.b16 %v6589
          %v6758 = vunpack.c.h.b16 %v6589
          %v6759 = vunpack.c.l.b16 %v6590
          %v6760 = vunpack.c.h.b16 %v6590
          %v6761 = vunpack.c.l.b16 %v6591
          %v6762 = vunpack.c.h.b16 %v6591
          %v6763 = vunpack.c.l.b16 %v6592
          %v6764 = vunpack.c.h.b16 %v6592
          %v6765 = vunpack.c.l.b16 %v6593
          %v6766 = vunpack.c.h.b16 %v6593
          %v6767 = vunpack.c.l.b16 %v6594
          %v6768 = vunpack.c.h.b16 %v6594
          %v6769 = vunpack.c.l.b16 %v6595
          %v6770 = vunpack.c.h.b16 %v6595
          %v6771 = vunpack.c.l.b16 %v6596
          %v6772 = vunpack.c.h.b16 %v6596
          %v6773 = vunpack.c.l.b16 %v6597
          %v6774 = vunpack.c.h.b16 %v6597
          %v6775 = vunpack.c.l.b16 %v6598
          %v6776 = vunpack.c.h.b16 %v6598
          %v6777 = vunpack.c.l.b16 %v6599
          %v6778 = vunpack.c.h.b16 %v6599
          %v6779 = vunpack.c.l.b16 %v6600
          %v6780 = vunpack.c.h.b16 %v6600
          %v6781 = vunpack.c.l.b16 %v6601
          %v6782 = vunpack.c.h.b16 %v6601
          %v6783 = vunpack.c.l.b16 %v6602
          %v6784 = vunpack.c.h.b16 %v6602
          %v6785 = vunpack.c.l.b16 %v6603
          %v6786 = vunpack.c.h.b16 %v6603
          %v6787 = vunpack.c.l.b16 %v6604
          %v6788 = vunpack.c.h.b16 %v6604
          %v6789 = vunpack.c.l.b16 %v6605
          %v6790 = vunpack.c.h.b16 %v6605
          %v6791 = vunpack.c.l.b16 %v6606
          %v6792 = vunpack.c.h.b16 %v6606
          %v6793 = vunpack.c.l.b16 %v6607
          %v6794 = vunpack.c.h.b16 %v6607
          %v6795 = vunpack.c.l.b16 %v6608
          %v6796 = vunpack.c.h.b16 %v6608
          %v6797 = vunpack.c.l.b16 %v6609
          %v6798 = vunpack.c.h.b16 %v6609
          %v6799 = vunpack.c.l.b16 %v6610
          %v6800 = vunpack.c.h.b16 %v6610
          %v6801 = vunpack.c.l.b16 %v6611
          %v6802 = vunpack.c.h.b16 %v6611
          %v6803 = vunpack.c.l.b16 %v6612
          %v6804 = vunpack.c.h.b16 %v6612
          %v6805 = vunpack.c.l.b16 %v6613
          %v6806 = vunpack.c.h.b16 %v6613
          %v6807 = vunpack.c.l.b16 %v6614
          %v6808 = vunpack.c.h.b16 %v6614
          %v6809 = vpack.c.b16 %v6685, %v6681
          %v6810 = vpack.c.b16 %v6686, %v6682
          %v6811 = vpack.c.b16 %v6687, %v6683
          %v6812 = vpack.c.b16 %v6688, %v6684
          %v6813 = vpack.c.b16 %v6693, %v6689
          %v6814 = vpack.c.b16 %v6694, %v6690
          %v6815 = vpack.c.b16 %v6695, %v6691
          %v6816 = vpack.c.b16 %v6696, %v6692
          %v6817 = vpack.c.b16 %v6701, %v6697
          %v6818 = vpack.c.b16 %v6702, %v6698
          %v6819 = vpack.c.b16 %v6703, %v6699
          %v6820 = vpack.c.b16 %v6704, %v6700
          %v6821 = vpack.c.b16 %v6709, %v6705
          %v6822 = vpack.c.b16 %v6710, %v6706
          %v6823 = vpack.c.b16 %v6711, %v6707
          %v6824 = vpack.c.b16 %v6712, %v6708
          %v6825 = vpack.c.b16 %v6717, %v6713
          %v6826 = vpack.c.b16 %v6718, %v6714
          %v6827 = vpack.c.b16 %v6719, %v6715
          %v6828 = vpack.c.b16 %v6720, %v6716
          %v6829 = vpack.c.b16 %v6725, %v6721
          %v6830 = vpack.c.b16 %v6726, %v6722
          %v6831 = vpack.c.b16 %v6727, %v6723
          %v6832 = vpack.c.b16 %v6728, %v6724
          %v6833 = vpack.c.b16 %v6733, %v6729
          %v6834 = vpack.c.b16 %v6734, %v6730
          %v6835 = vpack.c.b16 %v6735, %v6731
          %v6836 = vpack.c.b16 %v6736, %v6732
          %v6837 = vpack.c.b16 %v6741, %v6737
          %v6838 = vpack.c.b16 %v6742, %v6738
          %v6839 = vpack.c.b16 %v6743, %v6739
          %v6840 = vpack.c.b16 %v6744, %v6740
          %v6841 = vpack.c.b16 %v6749, %v6745
          %v6842 = vpack.c.b16 %v6750, %v6746
          %v6843 = vpack.c.b16 %v6751, %v6747
          %v6844 = vpack.c.b16 %v6752, %v6748
          %v6845 = vpack.c.b16 %v6757, %v6753
          %v6846 = vpack.c.b16 %v6758, %v6754
          %v6847 = vpack.c.b16 %v6759, %v6755
          %v6848 = vpack.c.b16 %v6760, %v6756
          %v6849 = vpack.c.b16 %v6765, %v6761
          %v6850 = vpack.c.b16 %v6766, %v6762
          %v6851 = vpack.c.b16 %v6767, %v6763
          %v6852 = vpack.c.b16 %v6768, %v6764
          %v6853 = vpack.c.b16 %v6773, %v6769
          %v6854 = vpack.c.b16 %v6774, %v6770
          %v6855 = vpack.c.b16 %v6775, %v6771
          %v6856 = vpack.c.b16 %v6776, %v6772
          %v6857 = vpack.c.b16 %v6781, %v6777
          %v6858 = vpack.c.b16 %v6782, %v6778
          %v6859 = vpack.c.b16 %v6783, %v6779
          %v6860 = vpack.c.b16 %v6784, %v6780
          %v6861 = vpack.c.b16 %v6789, %v6785
          %v6862 = vpack.c.b16 %v6790, %v6786
          %v6863 = vpack.c.b16 %v6791, %v6787
          %v6864 = vpack.c.b16 %v6792, %v6788
          %v6865 = vpack.c.b16 %v6797, %v6793
          %v6866 = vpack.c.b16 %v6798, %v6794
          %v6867 = vpack.c.b16 %v6799, %v6795
          %v6868 = vpack.c.b16 %v6800, %v6796
          %v6869 = vpack.c.b16 %v6805, %v6801
          %v6870 = vpack.c.b16 %v6806, %v6802
          %v6871 = vpack.c.b16 %v6807, %v6803
          %v6872 = vpack.c.b16 %v6808, %v6804
          %6937 = vmatpush.bf16.msra.mxu0 %v6837
          %6938 = vmatpush.bf16.msra.mxu0 %v6833
          %6939 = vmatpush.bf16.msra.mxu0 %v6829
          %6940 = vmatpush.bf16.msra.mxu0 %v6825
          %6941 = vmatpush.bf16.msra.mxu0 %v6821
          %6942 = vmatpush.bf16.msra.mxu0 %v6817
          %6943 = vmatpush.bf16.msra.mxu0 %v6813
          %6944 = vmatpush.bf16.msra.mxu0 %v6809
          %6945 = vmatmul.bf16.gmra.mxu0 %v6615
          %v6946 = vpop.f32.mrf.mxu0
          %v6947 = vadd.f32 0.0, %v6946
          %v6948 = vpop.f32.mrf.mxu0
          %6949 = vdwg.mxu0
          %6950 = vmatpush.bf16.msra.mxu0 %v6869
          %6951 = vmatpush.bf16.msra.mxu0 %v6865
          %6952 = vmatpush.bf16.msra.mxu0 %v6861
          %6953 = vmatpush.bf16.msra.mxu0 %v6857
          %6954 = vmatpush.bf16.msra.mxu0 %v6853
          %6955 = vmatpush.bf16.msra.mxu0 %v6849
          %6956 = vmatpush.bf16.msra.mxu0 %v6845
          %6957 = vmatpush.bf16.msra.mxu0 %v6841
          %6958 = vmatmul.bf16.gmra.mxu0 %v6616
          %v6959 = vpop.f32.mrf.mxu0
          %v6960 = vadd.f32 %v6947, %v6959
          %v6961 = vpop.f32.mrf.mxu0
          %6962 = vdwg.mxu0
          %6963 = vmatpush.bf16.msra.mxu0 %v6838
          %6964 = vmatpush.bf16.msra.mxu0 %v6834
          %6965 = vmatpush.bf16.msra.mxu0 %v6830
          %6966 = vmatpush.bf16.msra.mxu0 %v6826
          %6967 = vmatpush.bf16.msra.mxu0 %v6822
          %6968 = vmatpush.bf16.msra.mxu0 %v6818
          %6969 = vmatpush.bf16.msra.mxu0 %v6814
          %6970 = vmatpush.bf16.msra.mxu0 %v6810
          %6971 = vmatmul.bf16.gmra.mxu0 %v6615
          %v6972 = vpop.f32.mrf.mxu0
          %v6973 = vadd.f32 0.0, %v6972
          %v6974 = vpop.f32.mrf.mxu0
          %6975 = vdwg.mxu0
          %6976 = vmatpush.bf16.msra.mxu0 %v6870
          %6977 = vmatpush.bf16.msra.mxu0 %v6866
          %6978 = vmatpush.bf16.msra.mxu0 %v6862
          %6979 = vmatpush.bf16.msra.mxu0 %v6858
          %6980 = vmatpush.bf16.msra.mxu0 %v6854
          %6981 = vmatpush.bf16.msra.mxu0 %v6850
          %6982 = vmatpush.bf16.msra.mxu0 %v6846
          %6983 = vmatpush.bf16.msra.mxu0 %v6842
          %6984 = vmatmul.bf16.gmra.mxu0 %v6616
          %v6985 = vpop.f32.mrf.mxu0
          %v6986 = vadd.f32 %v6973, %v6985
          %v6987 = vpop.f32.mrf.mxu0
          %6988 = vdwg.mxu0
          %6989 = vmatpush.bf16.msra.mxu0 %v6839
          %6990 = vmatpush.bf16.msra.mxu0 %v6835
          %6991 = vmatpush.bf16.msra.mxu0 %v6831
          %6992 = vmatpush.bf16.msra.mxu0 %v6827
          %6993 = vmatpush.bf16.msra.mxu0 %v6823
          %6994 = vmatpush.bf16.msra.mxu0 %v6819
          %6995 = vmatpush.bf16.msra.mxu0 %v6815
          %6996 = vmatpush.bf16.msra.mxu0 %v6811
          %6997 = vmatmul.bf16.gmra.mxu0 %v6615
          %v6998 = vpop.f32.mrf.mxu0
          %v6999 = vadd.f32 0.0, %v6998
          %v7000 = vpop.f32.mrf.mxu0
          %7001 = vdwg.mxu0
          %7002 = vmatpush.bf16.msra.mxu0 %v6871
          %7003 = vmatpush.bf16.msra.mxu0 %v6867
          %7004 = vmatpush.bf16.msra.mxu0 %v6863
          %7005 = vmatpush.bf16.msra.mxu0 %v6859
          %7006 = vmatpush.bf16.msra.mxu0 %v6855
          %7007 = vmatpush.bf16.msra.mxu0 %v6851
          %7008 = vmatpush.bf16.msra.mxu0 %v6847
          %7009 = vmatpush.bf16.msra.mxu0 %v6843
          %7010 = vmatmul.bf16.gmra.mxu0 %v6616
          %v7011 = vpop.f32.mrf.mxu0
          %v7012 = vadd.f32 %v6999, %v7011
          %v7013 = vpop.f32.mrf.mxu0
          %7014 = vdwg.mxu0
          %7015 = vmatpush.bf16.msra.mxu0 %v6840
          %7016 = vmatpush.bf16.msra.mxu0 %v6836
          %7017 = vmatpush.bf16.msra.mxu0 %v6832
          %7018 = vmatpush.bf16.msra.mxu0 %v6828
          %7019 = vmatpush.bf16.msra.mxu0 %v6824
          %7020 = vmatpush.bf16.msra.mxu0 %v6820
          %7021 = vmatpush.bf16.msra.mxu0 %v6816
          %7022 = vmatpush.bf16.msra.mxu0 %v6812
          %7023 = vmatmul.bf16.gmra.mxu0 %v6615
          %v7024 = vpop.f32.mrf.mxu0
          %v7025 = vadd.f32 0.0, %v7024
          %v7026 = vpop.f32.mrf.mxu0
          %7027 = vdwg.mxu0
          %7028 = vmatpush.bf16.msra.mxu0 %v6872
          %7029 = vmatpush.bf16.msra.mxu0 %v6868
          %7030 = vmatpush.bf16.msra.mxu0 %v6864
          %7031 = vmatpush.bf16.msra.mxu0 %v6860
          %7032 = vmatpush.bf16.msra.mxu0 %v6856
          %7033 = vmatpush.bf16.msra.mxu0 %v6852
          %7034 = vmatpush.bf16.msra.mxu0 %v6848
          %7035 = vmatpush.bf16.msra.mxu0 %v6844
          %7036 = vmatmul.bf16.gmra.mxu0 %v6616
          %v7037 = vpop.f32.mrf.mxu0
          %v7038 = vadd.f32 %v7025, %v7037
          %v7039 = vpop.f32.mrf.mxu0
          %7040 = vdwg.mxu0
          %v7105 = vunpack.c.l.b16 %v6485
          %v7106 = vunpack.c.h.b16 %v6485
          %v7107 = vunpack.c.l.b16 %v6486
          %v7108 = vunpack.c.h.b16 %v6486
          %v7109 = vunpack.c.l.b16 %v6487
          %v7110 = vunpack.c.h.b16 %v6487
          %v7111 = vunpack.c.l.b16 %v6488
          %v7112 = vunpack.c.h.b16 %v6488
          %v7113 = vunpack.c.l.b16 %v6489
          %v7114 = vunpack.c.h.b16 %v6489
          %v7115 = vunpack.c.l.b16 %v6490
          %v7116 = vunpack.c.h.b16 %v6490
          %v7117 = vunpack.c.l.b16 %v6491
          %v7118 = vunpack.c.h.b16 %v6491
          %v7119 = vunpack.c.l.b16 %v6492
          %v7120 = vunpack.c.h.b16 %v6492
          %v7121 = vunpack.c.l.b16 %v6493
          %v7122 = vunpack.c.h.b16 %v6493
          %v7123 = vunpack.c.l.b16 %v6494
          %v7124 = vunpack.c.h.b16 %v6494
          %v7125 = vunpack.c.l.b16 %v6495
          %v7126 = vunpack.c.h.b16 %v6495
          %v7127 = vunpack.c.l.b16 %v6496
          %v7128 = vunpack.c.h.b16 %v6496
          %v7129 = vunpack.c.l.b16 %v6497
          %v7130 = vunpack.c.h.b16 %v6497
          %v7131 = vunpack.c.l.b16 %v6498
          %v7132 = vunpack.c.h.b16 %v6498
          %v7133 = vunpack.c.l.b16 %v6499
          %v7134 = vunpack.c.h.b16 %v6499
          %v7135 = vunpack.c.l.b16 %v6500
          %v7136 = vunpack.c.h.b16 %v6500
          %v7137 = vunpack.c.l.b16 %v6501
          %v7138 = vunpack.c.h.b16 %v6501
          %v7139 = vunpack.c.l.b16 %v6502
          %v7140 = vunpack.c.h.b16 %v6502
          %v7141 = vunpack.c.l.b16 %v6503
          %v7142 = vunpack.c.h.b16 %v6503
          %v7143 = vunpack.c.l.b16 %v6504
          %v7144 = vunpack.c.h.b16 %v6504
          %v7145 = vunpack.c.l.b16 %v6505
          %v7146 = vunpack.c.h.b16 %v6505
          %v7147 = vunpack.c.l.b16 %v6506
          %v7148 = vunpack.c.h.b16 %v6506
          %v7149 = vunpack.c.l.b16 %v6507
          %v7150 = vunpack.c.h.b16 %v6507
          %v7151 = vunpack.c.l.b16 %v6508
          %v7152 = vunpack.c.h.b16 %v6508
          %v7153 = vunpack.c.l.b16 %v6509
          %v7154 = vunpack.c.h.b16 %v6509
          %v7155 = vunpack.c.l.b16 %v6510
          %v7156 = vunpack.c.h.b16 %v6510
          %v7157 = vunpack.c.l.b16 %v6511
          %v7158 = vunpack.c.h.b16 %v6511
          %v7159 = vunpack.c.l.b16 %v6512
          %v7160 = vunpack.c.h.b16 %v6512
          %v7161 = vunpack.c.l.b16 %v6513
          %v7162 = vunpack.c.h.b16 %v6513
          %v7163 = vunpack.c.l.b16 %v6514
          %v7164 = vunpack.c.h.b16 %v6514
          %v7165 = vunpack.c.l.b16 %v6515
          %v7166 = vunpack.c.h.b16 %v6515
          %v7167 = vunpack.c.l.b16 %v6516
          %v7168 = vunpack.c.h.b16 %v6516
          %v7169 = vunpack.c.l.b16 %v6517
          %v7170 = vunpack.c.h.b16 %v6517
          %v7171 = vunpack.c.l.b16 %v6518
          %v7172 = vunpack.c.h.b16 %v6518
          %v7173 = vunpack.c.l.b16 %v6519
          %v7174 = vunpack.c.h.b16 %v6519
          %v7175 = vunpack.c.l.b16 %v6520
          %v7176 = vunpack.c.h.b16 %v6520
          %v7177 = vunpack.c.l.b16 %v6521
          %v7178 = vunpack.c.h.b16 %v6521
          %v7179 = vunpack.c.l.b16 %v6522
          %v7180 = vunpack.c.h.b16 %v6522
          %v7181 = vunpack.c.l.b16 %v6523
          %v7182 = vunpack.c.h.b16 %v6523
          %v7183 = vunpack.c.l.b16 %v6524
          %v7184 = vunpack.c.h.b16 %v6524
          %v7185 = vunpack.c.l.b16 %v6525
          %v7186 = vunpack.c.h.b16 %v6525
          %v7187 = vunpack.c.l.b16 %v6526
          %v7188 = vunpack.c.h.b16 %v6526
          %v7189 = vunpack.c.l.b16 %v6527
          %v7190 = vunpack.c.h.b16 %v6527
          %v7191 = vunpack.c.l.b16 %v6528
          %v7192 = vunpack.c.h.b16 %v6528
          %v7193 = vunpack.c.l.b16 %v6529
          %v7194 = vunpack.c.h.b16 %v6529
          %v7195 = vunpack.c.l.b16 %v6530
          %v7196 = vunpack.c.h.b16 %v6530
          %v7197 = vunpack.c.l.b16 %v6531
          %v7198 = vunpack.c.h.b16 %v6531
          %v7199 = vunpack.c.l.b16 %v6532
          %v7200 = vunpack.c.h.b16 %v6532
          %v7201 = vunpack.c.l.b16 %v6533
          %v7202 = vunpack.c.h.b16 %v6533
          %v7203 = vunpack.c.l.b16 %v6534
          %v7204 = vunpack.c.h.b16 %v6534
          %v7205 = vunpack.c.l.b16 %v6535
          %v7206 = vunpack.c.h.b16 %v6535
          %v7207 = vunpack.c.l.b16 %v6536
          %v7208 = vunpack.c.h.b16 %v6536
          %v7209 = vunpack.c.l.b16 %v6537
          %v7210 = vunpack.c.h.b16 %v6537
          %v7211 = vunpack.c.l.b16 %v6538
          %v7212 = vunpack.c.h.b16 %v6538
          %v7213 = vunpack.c.l.b16 %v6539
          %v7214 = vunpack.c.h.b16 %v6539
          %v7215 = vunpack.c.l.b16 %v6540
          %v7216 = vunpack.c.h.b16 %v6540
          %v7217 = vunpack.c.l.b16 %v6541
          %v7218 = vunpack.c.h.b16 %v6541
          %v7219 = vunpack.c.l.b16 %v6542
          %v7220 = vunpack.c.h.b16 %v6542
          %v7221 = vunpack.c.l.b16 %v6543
          %v7222 = vunpack.c.h.b16 %v6543
          %v7223 = vunpack.c.l.b16 %v6544
          %v7224 = vunpack.c.h.b16 %v6544
          %v7225 = vunpack.c.l.b16 %v6545
          %v7226 = vunpack.c.h.b16 %v6545
          %v7227 = vunpack.c.l.b16 %v6546
          %v7228 = vunpack.c.h.b16 %v6546
          %v7229 = vunpack.c.l.b16 %v6547
          %v7230 = vunpack.c.h.b16 %v6547
          %v7231 = vunpack.c.l.b16 %v6548
          %v7232 = vunpack.c.h.b16 %v6548
          %v7233 = vpack.c.b16 %v7109, %v7105
          %v7234 = vpack.c.b16 %v7110, %v7106
          %v7235 = vpack.c.b16 %v7111, %v7107
          %v7236 = vpack.c.b16 %v7112, %v7108
          %v7237 = vpack.c.b16 %v7117, %v7113
          %v7238 = vpack.c.b16 %v7118, %v7114
          %v7239 = vpack.c.b16 %v7119, %v7115
          %v7240 = vpack.c.b16 %v7120, %v7116
          %v7241 = vpack.c.b16 %v7125, %v7121
          %v7242 = vpack.c.b16 %v7126, %v7122
          %v7243 = vpack.c.b16 %v7127, %v7123
          %v7244 = vpack.c.b16 %v7128, %v7124
          %v7245 = vpack.c.b16 %v7133, %v7129
          %v7246 = vpack.c.b16 %v7134, %v7130
          %v7247 = vpack.c.b16 %v7135, %v7131
          %v7248 = vpack.c.b16 %v7136, %v7132
          %v7249 = vpack.c.b16 %v7141, %v7137
          %v7250 = vpack.c.b16 %v7142, %v7138
          %v7251 = vpack.c.b16 %v7143, %v7139
          %v7252 = vpack.c.b16 %v7144, %v7140
          %v7253 = vpack.c.b16 %v7149, %v7145
          %v7254 = vpack.c.b16 %v7150, %v7146
          %v7255 = vpack.c.b16 %v7151, %v7147
          %v7256 = vpack.c.b16 %v7152, %v7148
          %v7257 = vpack.c.b16 %v7157, %v7153
          %v7258 = vpack.c.b16 %v7158, %v7154
          %v7259 = vpack.c.b16 %v7159, %v7155
          %v7260 = vpack.c.b16 %v7160, %v7156
          %v7261 = vpack.c.b16 %v7165, %v7161
          %v7262 = vpack.c.b16 %v7166, %v7162
          %v7263 = vpack.c.b16 %v7167, %v7163
          %v7264 = vpack.c.b16 %v7168, %v7164
          %v7265 = vpack.c.b16 %v7173, %v7169
          %v7266 = vpack.c.b16 %v7174, %v7170
          %v7267 = vpack.c.b16 %v7175, %v7171
          %v7268 = vpack.c.b16 %v7176, %v7172
          %v7269 = vpack.c.b16 %v7181, %v7177
          %v7270 = vpack.c.b16 %v7182, %v7178
          %v7271 = vpack.c.b16 %v7183, %v7179
          %v7272 = vpack.c.b16 %v7184, %v7180
          %v7273 = vpack.c.b16 %v7189, %v7185
          %v7274 = vpack.c.b16 %v7190, %v7186
          %v7275 = vpack.c.b16 %v7191, %v7187
          %v7276 = vpack.c.b16 %v7192, %v7188
          %v7277 = vpack.c.b16 %v7197, %v7193
          %v7278 = vpack.c.b16 %v7198, %v7194
          %v7279 = vpack.c.b16 %v7199, %v7195
          %v7280 = vpack.c.b16 %v7200, %v7196
          %v7281 = vpack.c.b16 %v7205, %v7201
          %v7282 = vpack.c.b16 %v7206, %v7202
          %v7283 = vpack.c.b16 %v7207, %v7203
          %v7284 = vpack.c.b16 %v7208, %v7204
          %v7285 = vpack.c.b16 %v7213, %v7209
          %v7286 = vpack.c.b16 %v7214, %v7210
          %v7287 = vpack.c.b16 %v7215, %v7211
          %v7288 = vpack.c.b16 %v7216, %v7212
          %v7289 = vpack.c.b16 %v7221, %v7217
          %v7290 = vpack.c.b16 %v7222, %v7218
          %v7291 = vpack.c.b16 %v7223, %v7219
          %v7292 = vpack.c.b16 %v7224, %v7220
          %v7293 = vpack.c.b16 %v7229, %v7225
          %v7294 = vpack.c.b16 %v7230, %v7226
          %v7295 = vpack.c.b16 %v7231, %v7227
          %v7296 = vpack.c.b16 %v7232, %v7228
          %7361 = vmatpush.bf16.msra.mxu0 %v7261
          %7362 = vmatpush.bf16.msra.mxu0 %v7257
          %7363 = vmatpush.bf16.msra.mxu0 %v7253
          %7364 = vmatpush.bf16.msra.mxu0 %v7249
          %7365 = vmatpush.bf16.msra.mxu0 %v7245
          %7366 = vmatpush.bf16.msra.mxu0 %v7241
          %7367 = vmatpush.bf16.msra.mxu0 %v7237
          %7368 = vmatpush.bf16.msra.mxu0 %v7233
          %7369 = vmatmul.bf16.gmra.mxu0 %v6549
          %v7370 = vpop.f32.mrf.mxu0
          %v7371 = vadd.f32 %v6960, %v7370
          %v7372 = vpop.f32.mrf.mxu0
          %7373 = vdwg.mxu0
          %7374 = vmatpush.bf16.msra.mxu0 %v7293
          %7375 = vmatpush.bf16.msra.mxu0 %v7289
          %7376 = vmatpush.bf16.msra.mxu0 %v7285
          %7377 = vmatpush.bf16.msra.mxu0 %v7281
          %7378 = vmatpush.bf16.msra.mxu0 %v7277
          %7379 = vmatpush.bf16.msra.mxu0 %v7273
          %7380 = vmatpush.bf16.msra.mxu0 %v7269
          %7381 = vmatpush.bf16.msra.mxu0 %v7265
          %7382 = vmatmul.bf16.gmra.mxu0 %v6550
          %v7383 = vpop.f32.mrf.mxu0
          %v7384 = vadd.f32 %v7371, %v7383
          %v7385 = vpop.f32.mrf.mxu0
          %7386 = vdwg.mxu0
          %7387 = vmatpush.bf16.msra.mxu0 %v7262
          %7388 = vmatpush.bf16.msra.mxu0 %v7258
          %7389 = vmatpush.bf16.msra.mxu0 %v7254
          %7390 = vmatpush.bf16.msra.mxu0 %v7250
          %7391 = vmatpush.bf16.msra.mxu0 %v7246
          %7392 = vmatpush.bf16.msra.mxu0 %v7242
          %7393 = vmatpush.bf16.msra.mxu0 %v7238
          %7394 = vmatpush.bf16.msra.mxu0 %v7234
          %7395 = vmatmul.bf16.gmra.mxu0 %v6549
          %v7396 = vpop.f32.mrf.mxu0
          %v7397 = vadd.f32 %v6986, %v7396
          %v7398 = vpop.f32.mrf.mxu0
          %7399 = vdwg.mxu0
          %7400 = vmatpush.bf16.msra.mxu0 %v7294
          %7401 = vmatpush.bf16.msra.mxu0 %v7290
          %7402 = vmatpush.bf16.msra.mxu0 %v7286
          %7403 = vmatpush.bf16.msra.mxu0 %v7282
          %7404 = vmatpush.bf16.msra.mxu0 %v7278
          %7405 = vmatpush.bf16.msra.mxu0 %v7274
          %7406 = vmatpush.bf16.msra.mxu0 %v7270
          %7407 = vmatpush.bf16.msra.mxu0 %v7266
          %7408 = vmatmul.bf16.gmra.mxu0 %v6550
          %v7409 = vpop.f32.mrf.mxu0
          %v7410 = vadd.f32 %v7397, %v7409
          %v7411 = vpop.f32.mrf.mxu0
          %7412 = vdwg.mxu0
          %7413 = vmatpush.bf16.msra.mxu0 %v7263
          %7414 = vmatpush.bf16.msra.mxu0 %v7259
          %7415 = vmatpush.bf16.msra.mxu0 %v7255
          %7416 = vmatpush.bf16.msra.mxu0 %v7251
          %7417 = vmatpush.bf16.msra.mxu0 %v7247
          %7418 = vmatpush.bf16.msra.mxu0 %v7243
          %7419 = vmatpush.bf16.msra.mxu0 %v7239
          %7420 = vmatpush.bf16.msra.mxu0 %v7235
          %7421 = vmatmul.bf16.gmra.mxu0 %v6549
          %v7422 = vpop.f32.mrf.mxu0
          %v7423 = vadd.f32 %v7012, %v7422
          %v7424 = vpop.f32.mrf.mxu0
          %7425 = vdwg.mxu0
          %7426 = vmatpush.bf16.msra.mxu0 %v7295
          %7427 = vmatpush.bf16.msra.mxu0 %v7291
          %7428 = vmatpush.bf16.msra.mxu0 %v7287
          %7429 = vmatpush.bf16.msra.mxu0 %v7283
          %7430 = vmatpush.bf16.msra.mxu0 %v7279
          %7431 = vmatpush.bf16.msra.mxu0 %v7275
          %7432 = vmatpush.bf16.msra.mxu0 %v7271
          %7433 = vmatpush.bf16.msra.mxu0 %v7267
          %7434 = vmatmul.bf16.gmra.mxu0 %v6550
          %v7435 = vpop.f32.mrf.mxu0
          %v7436 = vadd.f32 %v7423, %v7435
          %v7437 = vpop.f32.mrf.mxu0
          %7438 = vdwg.mxu0
          %7439 = vmatpush.bf16.msra.mxu0 %v7264
          %7440 = vmatpush.bf16.msra.mxu0 %v7260
          %7441 = vmatpush.bf16.msra.mxu0 %v7256
          %7442 = vmatpush.bf16.msra.mxu0 %v7252
          %7443 = vmatpush.bf16.msra.mxu0 %v7248
          %7444 = vmatpush.bf16.msra.mxu0 %v7244
          %7445 = vmatpush.bf16.msra.mxu0 %v7240
          %7446 = vmatpush.bf16.msra.mxu0 %v7236
          %7447 = vmatmul.bf16.gmra.mxu0 %v6549
          %v7448 = vpop.f32.mrf.mxu0
          %v7449 = vadd.f32 %v7038, %v7448
          %v7450 = vpop.f32.mrf.mxu0
          %7451 = vdwg.mxu0
          %7452 = vmatpush.bf16.msra.mxu0 %v7296
          %7453 = vmatpush.bf16.msra.mxu0 %v7292
          %7454 = vmatpush.bf16.msra.mxu0 %v7288
          %7455 = vmatpush.bf16.msra.mxu0 %v7284
          %7456 = vmatpush.bf16.msra.mxu0 %v7280
          %7457 = vmatpush.bf16.msra.mxu0 %v7276
          %7458 = vmatpush.bf16.msra.mxu0 %v7272
          %7459 = vmatpush.bf16.msra.mxu0 %v7268
          %7460 = vmatmul.bf16.gmra.mxu0 %v6550
          %v7461 = vpop.f32.mrf.mxu0
          %v7462 = vadd.f32 %v7449, %v7461
          %v7463 = vpop.f32.mrf.mxu0
          %7464 = vdwg.mxu0
          %v7466 = vperm.slane %v6438, 0
          %v7467 = vperm.slane %v6438, 1
          %v7468 = vperm.slane %v6438, 2
          %v7469 = vperm.slane %v6438, 3
          %v7474 = vadd.f32 %v7384, %v7466
          %v7475 = vadd.f32 %v7410, %v7467
          %v7476 = vadd.f32 %v7436, %v7468
          %v7477 = vadd.f32 %v7462, %v7469
          %v7478 = vmul.f32 %v7476, 0.5
          %v7479 = vmul.f32 %v7477, 0.5
          %v7480 = vtanh.pop %v7478
          %v7481 = vtanh.pop %v7479
          %v7482 = vadd.f32 %v7480, 1.0
          %v7483 = vadd.f32 %v7481, 1.0
          %v7484 = vmul.f32 %v7482, 0.5
          %v7485 = vmul.f32 %v7483, 0.5
          %v7486 = vmul.f32 %v7474, %v7484
          %v7487 = vmul.f32 %v7475, %v7485
          %v7488 = vadd.f32 %v7486, %v7487
          %7489 = vadd.xlane.f32.xlu0 %v7488
          %v7490 = vpop.xlane.xlu0 %7489
          %v7491 = vmul.f32 %v7490, %v3187
          %v7492 = vsub.f32 %v7486, %v7491
          %v7493 = vsub.f32 %v7487, %v7491
          %v7494 = vmul.f32 %v7492, %v7492
          %v7495 = vmul.f32 %v7493, %v7493
          %v7496 = vadd.f32 %v7494, %v7495
          %7497 = vadd.xlane.f32.xlu0 %v7496
          %v7498 = vpop.xlane.xlu0 %7497
          %v7499 = vmul.f32 %v7498, %v3187
          %v7500 = vadd.f32 %v7499, 1e-05
          %v7501 = vrsqrt.pop %v7500
          %v7502 = vmul.f32 %v7501, %v7500
          %v7503 = vmul.f32 %v7502, %v7501
          %v7504 = vmul.f32 0.5, %v7503
          %v7505 = vsub.f32 1.5, %v7504
          %v7506 = vmul.f32 %v7501, %v7505
          %vm7507 = vweird.f32 %v7500
          %vm7508 = vweird.f32 %v7501
          %vm7509 = vmor %vm7507, %vm7508
          %v7510 = vsel %vm7509, %v7501, %v7506
          %v7511 = vmul.f32 %v7492, %v7510
          %v7512 = vmul.f32 %v7493, %v7510
          %v7514 = vperm.slane %v6439, 0
          %v7515 = vperm.slane %v6439, 1
          %v7518 = vmul.f32 %v7511, %v7514
          %v7519 = vmul.f32 %v7512, %v7515
          %v7521 = vperm.slane %v6440, 0
          %v7522 = vperm.slane %v6440, 1
          %v7525 = vadd.f32 %v7518, %v7521
          %v7526 = vadd.f32 %v7519, %v7522
          %v7527 = vadd.f32 %v6442, %v7525
          %v7528 = vadd.f32 %v6443, %v7526
          %v7529 = vld [vmem:[%s59] sm:$0xf]
          %v7530 = vld [vmem:[%s59 + $0x4] sm:$0xf]
          %v7531 = vld [vmem:[%s59 + $0x8] sm:$0xf]
          %v7532 = vld [vmem:[%s59 + $0xc] sm:$0xf]
          %v7533 = vld [vmem:[%s59 + $0x10] sm:$0xf]
          %v7534 = vld [vmem:[%s59 + $0x14] sm:$0xf]
          %v7535 = vld [vmem:[%s59 + $0x18] sm:$0xf]
          %v7536 = vld [vmem:[%s59 + $0x1c] sm:$0xf]
          %v7537 = vld [vmem:[%s59 + $0x20] sm:$0xf]
          %v7538 = vld [vmem:[%s59 + $0x24] sm:$0xf]
          %v7539 = vld [vmem:[%s59 + $0x28] sm:$0xf]
          %v7540 = vld [vmem:[%s59 + $0x2c] sm:$0xf]
          %v7541 = vld [vmem:[%s59 + $0x30] sm:$0xf]
          %v7542 = vld [vmem:[%s59 + $0x34] sm:$0xf]
          %v7543 = vld [vmem:[%s59 + $0x38] sm:$0xf]
          %v7544 = vld [vmem:[%s59 + $0x3c] sm:$0xf]
          %v7545 = vld [vmem:[%s59 + $0x40] sm:$0xf]
          %v7546 = vld [vmem:[%s59 + $0x44] sm:$0xf]
          %v7547 = vld [vmem:[%s59 + $0x48] sm:$0xf]
          %v7548 = vld [vmem:[%s59 + $0x4c] sm:$0xf]
          %v7549 = vld [vmem:[%s59 + $0x50] sm:$0xf]
          %v7550 = vld [vmem:[%s59 + $0x54] sm:$0xf]
          %v7551 = vld [vmem:[%s59 + $0x58] sm:$0xf]
          %v7552 = vld [vmem:[%s59 + $0x5c] sm:$0xf]
          %v7553 = vld [vmem:[%s59 + $0x60] sm:$0xf]
          %v7554 = vld [vmem:[%s59 + $0x64] sm:$0xf]
          %v7555 = vld [vmem:[%s59 + $0x68] sm:$0xf]
          %v7556 = vld [vmem:[%s59 + $0x6c] sm:$0xf]
          %v7557 = vld [vmem:[%s59 + $0x70] sm:$0xf]
          %v7558 = vld [vmem:[%s59 + $0x74] sm:$0xf]
          %v7559 = vld [vmem:[%s59 + $0x78] sm:$0xf]
          %v7560 = vld [vmem:[%s59 + $0x7c] sm:$0xf]
          %v7561 = vpack.c.bf16 %v7527, %v7527
          %v7562 = vpack.c.bf16 %v7528, %v7528
          %v7564 = vperm.slane %v6441, 0
          %v7598 = vunpack.c.l.b16 %v7529
          %v7599 = vunpack.c.l.b16 %v7530
          %v7600 = vunpack.c.l.b16 %v7531
          %v7601 = vunpack.c.l.b16 %v7532
          %v7602 = vunpack.c.l.b16 %v7533
          %v7603 = vunpack.c.l.b16 %v7534
          %v7604 = vunpack.c.l.b16 %v7535
          %v7605 = vunpack.c.l.b16 %v7536
          %v7606 = vunpack.c.l.b16 %v7537
          %v7607 = vunpack.c.l.b16 %v7538
          %v7608 = vunpack.c.l.b16 %v7539
          %v7609 = vunpack.c.l.b16 %v7540
          %v7610 = vunpack.c.l.b16 %v7541
          %v7611 = vunpack.c.l.b16 %v7542
          %v7612 = vunpack.c.l.b16 %v7543
          %v7613 = vunpack.c.l.b16 %v7544
          %v7614 = vunpack.c.l.b16 %v7545
          %v7615 = vunpack.c.l.b16 %v7546
          %v7616 = vunpack.c.l.b16 %v7547
          %v7617 = vunpack.c.l.b16 %v7548
          %v7618 = vunpack.c.l.b16 %v7549
          %v7619 = vunpack.c.l.b16 %v7550
          %v7620 = vunpack.c.l.b16 %v7551
          %v7621 = vunpack.c.l.b16 %v7552
          %v7622 = vunpack.c.l.b16 %v7553
          %v7623 = vunpack.c.l.b16 %v7554
          %v7624 = vunpack.c.l.b16 %v7555
          %v7625 = vunpack.c.l.b16 %v7556
          %v7626 = vunpack.c.l.b16 %v7557
          %v7627 = vunpack.c.l.b16 %v7558
          %v7628 = vunpack.c.l.b16 %v7559
          %v7629 = vunpack.c.l.b16 %v7560
          %v7630 = vpack.c.b16 %v7599, %v7598
          %v7631 = vpack.c.b16 %v7601, %v7600
          %v7632 = vpack.c.b16 %v7603, %v7602
          %v7633 = vpack.c.b16 %v7605, %v7604
          %v7634 = vpack.c.b16 %v7607, %v7606
          %v7635 = vpack.c.b16 %v7609, %v7608
          %v7636 = vpack.c.b16 %v7611, %v7610
          %v7637 = vpack.c.b16 %v7613, %v7612
          %v7638 = vpack.c.b16 %v7615, %v7614
          %v7639 = vpack.c.b16 %v7617, %v7616
          %v7640 = vpack.c.b16 %v7619, %v7618
          %v7641 = vpack.c.b16 %v7621, %v7620
          %v7642 = vpack.c.b16 %v7623, %v7622
          %v7643 = vpack.c.b16 %v7625, %v7624
          %v7644 = vpack.c.b16 %v7627, %v7626
          %v7645 = vpack.c.b16 %v7629, %v7628
          %7662 = vmatpush.bf16.msra.mxu0 %v7637
          %7663 = vmatpush.bf16.msra.mxu0 %v7636
          %7664 = vmatpush.bf16.msra.mxu0 %v7635
          %7665 = vmatpush.bf16.msra.mxu0 %v7634
          %7666 = vmatpush.bf16.msra.mxu0 %v7633
          %7667 = vmatpush.bf16.msra.mxu0 %v7632
          %7668 = vmatpush.bf16.msra.mxu0 %v7631
          %7669 = vmatpush.bf16.msra.mxu0 %v7630
          %7670 = vmatmul.bf16.gmra.mxu0 %v7561
          %v7671 = vpop.f32.mrf.mxu0
          %v7672 = vadd.f32 %v7564, %v7671
          %v7673 = vpop.f32.mrf.mxu0
          %7674 = vdwg.mxu0
          %7675 = vmatpush.bf16.msra.mxu0 %v7645
          %7676 = vmatpush.bf16.msra.mxu0 %v7644
          %7677 = vmatpush.bf16.msra.mxu0 %v7643
          %7678 = vmatpush.bf16.msra.mxu0 %v7642
          %7679 = vmatpush.bf16.msra.mxu0 %v7641
          %7680 = vmatpush.bf16.msra.mxu0 %v7640
          %7681 = vmatpush.bf16.msra.mxu0 %v7639
          %7682 = vmatpush.bf16.msra.mxu0 %v7638
          %7683 = vmatmul.bf16.gmra.mxu0 %v7562
          %v7684 = vpop.f32.mrf.mxu0
          %v7685 = vadd.f32 %v7672, %v7684
          %v7686 = vpop.f32.mrf.mxu0
          %7687 = vdwg.mxu0
          %7688 = vst.msk [vmem:[#allocation18] sm:$0xff] %vm2851, %v7685
        $region184: #{block_forward.1} parent=143 // pred_fallthru
          _
        // Predicated region
        $region185: #{block_forward.1} parent=143 // pred_check
          %p7689 = pneg %p797
        $region186: #{block_forward.1} parent=143 // pred_check_branch
          %7691 = sbr.rel (%p7689) target = $region188
        $region187: #{block_forward.1} parent=143 // pred_region
          %7693 = vsyncadd [#allocation6], 0
          %s7695 = sshll.u32 [#allocation18], 4
          %s7696 = int_to_ptr.vmem [resolvable:$true] %s7695
          %s7697 = sshll.u32 %s63, 4
          %s7698 = int_to_ptr.hbm [resolvable:$true] %s7697
          %7700 = dma.vmem_to_hbm [thread:$0]  %s7696, 128, %s7698, [#allocation6]
        $region188: #{block_forward.1} parent=143 // pred_fallthru
          _
        // Predicated region
        $region189: #{block_forward.1} parent=143 // pred_check
          %p7701 = pneg %p797
        $region190: #{block_forward.1} parent=143 // pred_check_branch
          %7703 = sbr.rel (%p7701) target = $region192
        $region191: #{block_forward.1} parent=143 // pred_region
          %7705 = dma.done [#allocation6], 128
        $region192: #{block_forward.1} parent=143 // pred_fallthru
          _
      $region144: #{block_forward.1} parent=5 // pred_fallthru
        _
      %p7706 = scmp.le.s32.totalorder 2, %s83
      // Predicated region
      $region193: #{block_forward.1} parent=5 // pred_check
        %p7707 = pneg %p7706
      $region194: #{block_forward.1} parent=5 // pred_check_branch
        %7709 = sbr.rel (%p7707) target = $region196
      $region195: #{block_forward.1} parent=5 // pred_region
        %s7710 = ssub.s32 %s83, 2
      $region196: #{block_forward.1} parent=5 // pred_fallthru
        _
    $region6: #{block_forward.1} parent=1 // loop_footer
      %s87 = sadd.s32 1, %s83
    $region7: #{block_forward.1} parent=1 // loop_footer_branch
      %82 = sbr.rel target = $region3
    $region8: #{block_forward.1} parent=1 // loop_exit
      _
    %7711 = vsyncpa [#allocation5], 1
    %s7712 = scalar_lea.sflag [#allocation5], 1
    %7713 = vsyncpa %s7712, 1
    %7714 = vsyncpa [#allocation8], 1
    %s7715 = scalar_lea.sflag [#allocation8], 1
    %7716 = vsyncpa %s7715, 1
    %7717 = vsyncpa [#allocation11], 1
    %s7718 = scalar_lea.sflag [#allocation11], 1
    %7719 = vsyncpa %s7718, 1
    %7720 = vsyncpa [#allocation14], 1
    %s7721 = scalar_lea.sflag [#allocation14], 1
    %7722 = vsyncpa %s7721, 1
    %7723 = vsyncpa [#allocation17], 1
    %7724 = vsyncpa [#allocation6], 1
    %s7725 = scalar_lea.sflag [#allocation6], 1
    %7726 = vsyncpa %s7725, 1

</llo_original>
